<compile_context>
chip_gen: v7x
topology: tpu7x:2x2x1
jax: 0.10.0
libtpu: 0.0.40
codegen_flags: <defaults>
</compile_context>

<pallas_src>
import jax
import jax.numpy as jnp
from jax import lax
from jax.experimental import pallas as pl
from jax.experimental.pallas import tpu as pltpu

_EPS = 1e-5  # nn.BatchNorm2d default


def _round_up(x, m):
    return (x + m - 1) // m * m


def _cdiv(a, b):
    return (a + b - 1) // b


def _vmem_limit_bytes():
    """Per-generation VMEM budget: ~3/4 of physical, capped at 100 MiB."""
    try:
        cap = int(pltpu.get_tpu_info().vmem_capacity_bytes)
    except Exception:
        cap = 64 * 1024 * 1024          # conservative fallback (v7x-sized)
    return int(min(100 * 1024 * 1024, cap * 3 // 4))


# ----------------------------- Pallas kernels -------------------------------

def _stats8(acc, m):
    """Sublane-dense (8, tn) BN partial-stats block: row0 = sum, row1 = sumsq."""
    tn = acc.shape[1]
    s0 = jnp.sum(acc * m, axis=0, keepdims=True)
    s1 = jnp.sum(acc * acc * m, axis=0, keepdims=True)
    rows = lax.broadcasted_iota(jnp.int32, (8, tn), 0)
    s0b = jnp.broadcast_to(s0, (8, tn))
    s1b = jnp.broadcast_to(s1, (8, tn))
    return jnp.where(rows == 0, s0b, jnp.where(rows == 1, s1b, 0.0))


def _make_conv_kernel(offsets, tm, has_shortcut):
    """Implicit-im2col conv GEMM (+ optional fused 1x1 shortcut) + BN stats.

    Grid = (batch, cout_blocks, row_blocks).  The whole per-image slab stays
    resident in VMEM across the cout/row axes; each tap is a constant row
    offset contracted on the MXU in bf16 with f32 accumulation into a VMEM
    scratch accumulator.
    """

    def body(x_ref, w_ref, m_ref, ws_ref, o_ref, st_ref, os_ref, sts_ref, acc_ref):
        jr = pl.program_id(2)
        base = (jr + 1) * tm            # +tm: the slab has a tm-row front guard
        sc_acc = None
        for t, off in enumerate(offsets):
            start = base + off
            if off % 8 == 0:            # dx==0 taps are sublane aligned (wg % 8 == 0)
                start = pl.multiple_of(start, 8)
            a = x_ref[pl.ds(start, tm), :].astype(jnp.bfloat16)
            d = jnp.dot(a, w_ref[t], preferred_element_type=jnp.float32)
            if t == 0:
                acc_ref[...] = d
            else:
                acc_ref[...] += d
            if has_shortcut and off == 0:
                # fused 1x1 projection shortcut: reuse the resident tap-0 slice
                sc_acc = jnp.dot(a, ws_ref[0], preferred_element_type=jnp.float32)
        acc = acc_ref[...]
        m = m_ref[...]                  # (tm, 1) row-validity mask
        o_ref[...] = acc.astype(o_ref.dtype)
        st_ref[...] = _stats8(acc, m)
        if has_shortcut:
            os_ref[...] = sc_acc.astype(os_ref.dtype)
            sts_ref[...] = _stats8(sc_acc, m)

    if has_shortcut:
        def kernel(x_ref, w_ref, m_ref, ws_ref, o_ref, st_ref, os_ref, sts_ref, acc_ref):
            body(x_ref, w_ref, m_ref, ws_ref, o_ref, st_ref, os_ref, sts_ref, acc_ref)
    else:
        def kernel(x_ref, w_ref, m_ref, o_ref, st_ref, acc_ref):
            body(x_ref, w_ref, m_ref, None, o_ref, st_ref, None, None, acc_ref)
    return kernel


def _bn_relu_mask_kernel(x_ref, s_ref, b_ref, m_ref, o_ref):
    # relu(x * scale + bias) on valid rows, exact 0 on pad/guard rows so the
    # result can be consumed directly as the next conv's padded-grid slab.
    x = x_ref[...].astype(jnp.float32)
    y = jnp.maximum(x * s_ref[...] + b_ref[...], 0.0)
    y = jnp.where(m_ref[...] > 0.5, y, 0.0)
    o_ref[...] = y.astype(o_ref.dtype)


def _bn_add_bn_relu_kernel(x_ref, sx_ref, bx_ref, r_ref, sr_ref, br_ref, o_ref):
    # out = relu(BN2(conv2) + BN_s(shortcut))
    y = x_ref[...].astype(jnp.float32) * sx_ref[...] + bx_ref[...]
    y = y + r_ref[...].astype(jnp.float32) * sr_ref[...] + br_ref[...]
    o_ref[...] = jnp.maximum(y, 0.0)


# ----------------------------- Pallas wrappers -------------------------------

def _conv_gemm(slab, w_taps, mask_out, offsets, *, tm, tn, n_grid, vmem_limit,
               w_sc=None):
    """Conv GEMM over the slab; optionally also the fused 1x1 shortcut GEMM."""
    n, r, k = slab.shape
    n_taps, _, cp = w_taps.shape
    r_out = n_grid * tm
    n_cb = cp // tn
    has_sc = w_sc is not None
    if has_sc:
        assert 0 in offsets
    kernel = _make_conv_kernel(offsets, tm, has_sc)

    out_shapes = [
        jax.ShapeDtypeStruct((n, r_out, cp), jnp.bfloat16),        # conv out
        jax.ShapeDtypeStruct((n, n_grid, 8, cp), jnp.float32),     # BN stats
    ]
    out_specs = [
        pl.BlockSpec((None, tm, tn), lambda b, jc, jr: (b, jr, jc)),
        pl.BlockSpec((None, None, 8, tn), lambda b, jc, jr: (b, jr, 0, jc)),
    ]
    in_specs = [
        # whole per-image slab resident across the cout/row grid axes
        pl.BlockSpec((None, r, k), lambda b, jc, jr: (b, 0, 0)),
        pl.BlockSpec((n_taps, k, tn), lambda b, jc, jr: (0, 0, jc)),
        pl.BlockSpec((tm, 1), lambda b, jc, jr: (jr, 0)),
    ]
    args = [slab, w_taps, mask_out]
    if has_sc:
        in_specs.append(pl.BlockSpec((1, k, tn), lambda b, jc, jr: (0, 0, jc)))
        args.append(w_sc)
        out_shapes += [
            jax.ShapeDtypeStruct((n, r_out, cp), jnp.bfloat16),
            jax.ShapeDtypeStruct((n, n_grid, 8, cp), jnp.float32),
        ]
        out_specs += [
            pl.BlockSpec((None, tm, tn), lambda b, jc, jr: (b, jr, jc)),
            pl.BlockSpec((None, None, 8, tn), lambda b, jc, jr: (b, jr, 0, jc)),
        ]

    return pl.pallas_call(
        kernel,
        out_shape=tuple(out_shapes),
        grid_spec=pltpu.PrefetchScalarGridSpec(
            num_scalar_prefetch=0,
            grid=(n, n_cb, n_grid),
            in_specs=in_specs,
            out_specs=out_specs,
            scratch_shapes=[pltpu.VMEM((tm, tn), jnp.float32)],
        ),
        compiler_params=pltpu.CompilerParams(
            # batch / cout are the megacore-shardable axes; the row axis shares
            # the resident slab so it stays "arbitrary".
            dimension_semantics=("parallel", "parallel", "arbitrary"),
            vmem_limit_bytes=vmem_limit),
    )(*args)


def _bn_relu_to_slab(y, scale, bias, mask_slab, *, tm, n_grid, vmem_limit):
    """BN+ReLU on conv output, written into the guarded padded-grid slab (f32)."""
    n, _, c = y.shape
    r = mask_slab.shape[0]
    nb = r // tm
    return pl.pallas_call(
        _bn_relu_mask_kernel,
        out_shape=jax.ShapeDtypeStruct((n, r, c), jnp.float32),
        grid_spec=pltpu.PrefetchScalarGridSpec(
            num_scalar_prefetch=0,
            grid=(n, nb),
            in_specs=[
                pl.BlockSpec(
                    (None, tm, c),
                    lambda b, j: (b, jnp.clip(j - 1, 0, n_grid - 1), 0)),
                pl.BlockSpec((1, c), lambda b, j: (0, 0)),
                pl.BlockSpec((1, c), lambda b, j: (0, 0)),
                pl.BlockSpec((tm, 1), lambda b, j: (j, 0)),
            ],
            out_specs=pl.BlockSpec((None, tm, c), lambda b, j: (b, j, 0)),
        ),
        compiler_params=pltpu.CompilerParams(
            dimension_semantics=("parallel", "parallel"),
            vmem_limit_bytes=vmem_limit),
    )(y, scale, bias, mask_slab)


def _bn_add_bn_relu(c2, s2, b2, res, sr, br, *, tm, n_grid, res_block_offset,
                    vmem_limit):
    n, r_out, c = c2.shape
    assert res.shape[2] == c
    return pl.pallas_call(
        _bn_add_bn_relu_kernel,
        out_shape=jax.ShapeDtypeStruct((n, r_out, c), jnp.float32),
        grid_spec=pltpu.PrefetchScalarGridSpec(
            num_scalar_prefetch=0,
            grid=(n, n_grid),
            in_specs=[
                pl.BlockSpec((None, tm, c), lambda b, j: (b, j, 0)),
                pl.BlockSpec((1, c), lambda b, j: (0, 0)),
                pl.BlockSpec((1, c), lambda b, j: (0, 0)),
                pl.BlockSpec((None, tm, c),
                             lambda b, j: (b, j + res_block_offset, 0)),
                pl.BlockSpec((1, c), lambda b, j: (0, 0)),
                pl.BlockSpec((1, c), lambda b, j: (0, 0)),
            ],
            out_specs=pl.BlockSpec((None, tm, c), lambda b, j: (b, j, 0)),
        ),
        compiler_params=pltpu.CompilerParams(
            dimension_semantics=("parallel", "parallel"),
            vmem_limit_bytes=vmem_limit),
    )(c2, s2, b2, res, sr, br)


# ------------------------------ JAX glue (tiny) ------------------------------

def _taps_3x3_s1(w, k_pad, cout_pad, wg):
    """3x3 stride-1 conv: 9 taps with offsets (dy-1)*wg + (dx-1)."""
    cout, cin = w.shape[0], w.shape[1]
    wt = jnp.transpose(w, (2, 3, 1, 0)).reshape(9, cin, cout)
    wt = jnp.pad(wt, ((0, 0), (0, k_pad - cin), (0, cout_pad - cout)))
    offs = tuple((dy - 1) * wg + (dx - 1) for dy in range(3) for dx in range(3))
    return offs, wt


def _taps_3x3_s2(w, cin, k_pad, cout_pad, wg):
    """3x3 stride-2 conv as a stride-1 conv on space-to-depth input (4 taps)."""
    cout = w.shape[0]
    amap = {0: (-1, 1), 1: (0, 0), 2: (0, 1)}     # tap index -> (coarse, parity)
    taps = ((-1, -1), (-1, 0), (0, -1), (0, 0))
    wt = jnp.zeros((4, k_pad, cout_pad), jnp.float32)
    for dy in range(3):
        for dx in range(3):
            ay, py = amap[dy]
            ax, px = amap[dx]
            ti = taps.index((ay, ax))
            ch0 = (py * 2 + px) * cin
            wt = wt.at[ti, ch0:ch0 + cin, :cout].set(w[:, :, dy, dx].T)
    offs = tuple(ay * wg + ax for ay, ax in taps)
    return offs, wt


def _fold_bn(stats, gamma, beta, count, c_pad):
    """Training-mode BN fold from fused per-block sum / sum-of-squares."""
    s = jnp.sum(stats, axis=(0, 1))                       # (8, c_pad)
    mean = s[0] / count
    var = jnp.maximum(s[1] / count - mean * mean, 0.0)    # biased, as PyTorch
    g = jnp.pad(gamma, (0, c_pad - gamma.shape[0]))
    b = jnp.pad(beta, (0, c_pad - beta.shape[0]))
    scale = g * lax.rsqrt(var + _EPS)
    bias = b - mean * scale
    return scale.reshape(1, c_pad), bias.reshape(1, c_pad)


def basic_block_forward(x_nchw, params, stride):
    """ResNet BasicBlock forward (training-mode BN), NCHW in / NCHW out."""
    n, cin, h, w = x_nchw.shape
    planes = params["w1"].shape[0]
    vmem_limit = _vmem_limit_bytes()
    x = jnp.transpose(x_nchw, (0, 2, 3, 1)).astype(jnp.float32)       # NHWC

    if stride == 1:
        ho, wo = h, w
        xin, cin_eff = x, cin
    elif stride == 2:
        assert h % 2 == 0 and w % 2 == 0
        ho, wo = h // 2, w // 2
        xin = x.reshape(n, ho, 2, wo, 2, cin)
        xin = jnp.transpose(xin, (0, 1, 3, 2, 4, 5)).reshape(n, ho, wo, 4 * cin)
        cin_eff = 4 * cin
    else:
        raise ValueError("stride must be 1 or 2")

    hg = ho + 2
    wg = _round_up(wo + 2, 8)              # 8-aligned grid width (aligned dy taps)
    tm = max(256, _round_up(wg + 2, 8))    # row tile (must exceed grid width + 1)
    if hg * wg >= 2048 and vmem_limit >= 80 * 1024 * 1024:
        tm = 512                           # bigger tiles on big-VMEM parts
    n_grid = _cdiv(hg * wg, tm)
    r_out, r = n_grid * tm, (n_grid + 2) * tm       # +2 guard row-blocks
    k1 = _round_up(cin_eff, 128)
    cp = _round_up(planes, 128)
    tn = 256 if cp % 256 == 0 else 128
    count = jnp.float32(n * ho * wo)

    # row-validity masks over flattened padded-grid rows
    mg = jnp.zeros((hg, wg), jnp.float32).at[1:ho + 1, 1:wo + 1].set(1.0)
    mg = mg.reshape(hg * wg)
    mask_out = jnp.pad(mg, (0, r_out - hg * wg)).reshape(r_out, 1)
    mask_slab = jnp.pad(mg, (tm, r - tm - hg * wg)).reshape(r, 1)

    # conv1 input slab: spatial pad, channel pad to k1, + tm guard rows (f32)
    # TODO(synk): build this slab (NCHW->NHWC + pad + space-to-depth) in a
    # Pallas prolog kernel instead of XLA layout ops to save one HBM round trip.
    xp = jnp.pad(xin, ((0, 0), (1, hg - ho - 1), (1, wg - wo - 1),
                       (0, k1 - cin_eff)))
    slab1 = jnp.pad(xp.reshape(n, hg * wg, k1),
                    ((0, 0), (tm, r - tm - hg * wg), (0, 0)))

    has_proj = "ws" in params

    # conv1 (+ fused BN1 statistics, + fused 1x1 projection shortcut if any)
    if stride == 1:
        offs1, w1t = _taps_3x3_s1(params["w1"], k1, cp, wg)
    else:
        offs1, w1t = _taps_3x3_s2(params["w1"], cin, k1, cp, wg)
    w1t = w1t.astype(jnp.bfloat16)

    if has_proj:
        wst = jnp.zeros((1, k1, cp), jnp.float32)
        wst = wst.at[0, :cin, :planes].set(params["ws"][:, :, 0, 0].T)
        wst = wst.astype(jnp.bfloat16)
        c1, st1, cs, sts = _conv_gemm(slab1, w1t, mask_out, offs1, tm=tm, tn=tn,
                                      n_grid=n_grid, vmem_limit=vmem_limit,
                                      w_sc=wst)
        ss, bs = _fold_bn(sts, params["gs"], params["bs"], count, cp)
    else:
        c1, st1 = _conv_gemm(slab1, w1t, mask_out, offs1, tm=tm, tn=tn,
                             n_grid=n_grid, vmem_limit=vmem_limit)
    s1, b1 = _fold_bn(st1, params["g1"], params["b1"], count, cp)

    # BN1 + ReLU, written directly as conv2's padded-grid input slab
    slab2 = _bn_relu_to_slab(c1, s1, b1, mask_slab, tm=tm, n_grid=n_grid,
                             vmem_limit=vmem_limit)

    # conv2 (3x3 stride 1, fused BN2 statistics)
    offs2, w2t = _taps_3x3_s1(params["w2"], cp, cp, wg)
    w2t = w2t.astype(jnp.bfloat16)
    c2, st2 = _conv_gemm(slab2, w2t, mask_out, offs2, tm=tm, tn=tn,
                         n_grid=n_grid, vmem_limit=vmem_limit)
    s2, b2 = _fold_bn(st2, params["g2"], params["b2"], count, cp)

    # residual add + final ReLU
    if has_proj:
        out = _bn_add_bn_relu(c2, s2, b2, cs, ss, bs, tm=tm, n_grid=n_grid,
                              res_block_offset=0, vmem_limit=vmem_limit)
    else:
        # identity shortcut: read x straight out of conv1's (f32) input slab
        assert k1 == cp, "identity shortcut requires cin == planes padding"
        ss = jnp.ones((1, cp), jnp.float32)
        bs = jnp.zeros((1, cp), jnp.float32)
        out = _bn_add_bn_relu(c2, s2, b2, slab1, ss, bs, tm=tm, n_grid=n_grid,
                              res_block_offset=1, vmem_limit=vmem_limit)

    # crop the valid interior of the padded grid and return NCHW
    out = out[:, :hg * wg, :planes].reshape(n, hg, wg, planes)
    out = out[:, 1:ho + 1, 1:wo + 1, :]
    return jnp.transpose(out, (0, 3, 1, 2))


# ------------------------- pure-JAX reference (check) ------------------------

def reference_forward(x, params, stride):
    def conv(x, w, s, pad):
        return lax.conv_general_dilated(
            x, w, (s, s), ((pad, pad), (pad, pad)),
            dimension_numbers=("NCHW", "OIHW", "NCHW"))

    def bn(y, g, b):
        m = y.mean(axis=(0, 2, 3), keepdims=True)
        v = ((y - m) ** 2).mean(axis=(0, 2, 3), keepdims=True)
        return (y - m) * lax.rsqrt(v + _EPS) * g.reshape(1, -1, 1, 1) \
            + b.reshape(1, -1, 1, 1)

    out = jax.nn.relu(bn(conv(x, params["w1"], stride, 1),
                         params["g1"], params["b1"]))
    out = bn(conv(out, params["w2"], 1, 1), params["g2"], params["b2"])
    if "ws" in params:
        sc = bn(conv(x, params["ws"], stride, 0), params["gs"], params["bs"])
    else:
        sc = x
    return jax.nn.relu(out + sc)


# ----------------------------------- main ------------------------------------

if __name__ == "__main__":
    def make_params(key, in_planes, planes, stride):
        ks = jax.random.split(key, 9)
        p = {
            "w1": 0.1 * jax.random.normal(ks[0], (planes, in_planes, 3, 3), jnp.float32),
            "g1": 1.0 + 0.1 * jax.random.normal(ks[1], (planes,), jnp.float32),
            "b1": 0.1 * jax.random.normal(ks[2], (planes,), jnp.float32),
            "w2": 0.1 * jax.random.normal(ks[3], (planes, planes, 3, 3), jnp.float32),
            "g2": 1.0 + 0.1 * jax.random.normal(ks[4], (planes,), jnp.float32),
            "b2": 0.1 * jax.random.normal(ks[5], (planes,), jnp.float32),
        }
        if stride != 1 or in_planes != planes:
            p["ws"] = 0.1 * jax.random.normal(ks[6], (planes, in_planes, 1, 1), jnp.float32)
            p["gs"] = 1.0 + 0.1 * jax.random.normal(ks[7], (planes,), jnp.float32)
            p["bs"] = 0.1 * jax.random.normal(ks[8], (planes,), jnp.float32)
        return p

    fwd = jax.jit(basic_block_forward, static_argnums=(2,))

    key = jax.random.PRNGKey(0)
    configs = [
        dict(n=2, in_planes=4, planes=8, h=16, w=16, stride=2),   # projection, s=2
        dict(n=2, in_planes=8, planes=8, h=16, w=16, stride=1),   # identity
        dict(n=2, in_planes=4, planes=8, h=16, w=16, stride=1),   # projection, s=1
    ]
    for i, cfg in enumerate(configs):
        kp, kx, key = jax.random.split(key, 3)
        params = make_params(kp, cfg["in_planes"], cfg["planes"], cfg["stride"])
        x = jax.random.normal(
            kx, (cfg["n"], cfg["in_planes"], cfg["h"], cfg["w"]), jnp.float32)

        out = jax.block_until_ready(fwd(x, params, cfg["stride"]))
        ref = reference_forward(x, params, cfg["stride"])

        assert out.shape == ref.shape, (out.shape, ref.shape)
        max_err = float(jnp.max(jnp.abs(out - ref)))
        # bf16 MXU operands -> relaxed tolerance vs. the f32 reference
        assert max_err < 6e-2, f"config {i}: mismatch vs reference: {max_err}"

    print("KERNEL_OK")
</pallas_src>

<mosaic_0001>
module attributes {stable_mosaic.version = 11 : i64} {
  func.func @kernel(%arg0: i32, %arg1: i32, %arg2: i32, %arg3: memref<1x768x128xf32, #tpu.memory_space<vmem>>, %arg4: memref<4x128x128xbf16, #tpu.memory_space<vmem>>, %arg5: memref<256x1xf32, #tpu.memory_space<vmem>>, %arg6: memref<1x128x128xbf16, #tpu.memory_space<vmem>>, %arg7: memref<1x256x128xbf16, #tpu.memory_space<vmem>>, %arg8: memref<1x1x8x128xf32, #tpu.memory_space<vmem>>, %arg9: memref<1x256x128xbf16, #tpu.memory_space<vmem>>, %arg10: memref<1x1x8x128xf32, #tpu.memory_space<vmem>>, %arg11: memref<256x128xf32, #tpu.memory_space<vmem>>) attributes {dimension_semantics = [#tpu.dimension_semantics<parallel>, #tpu.dimension_semantics<parallel>, #tpu.dimension_semantics<arbitrary>], iteration_bounds = array<i64: 2, 1, 1>, scalar_prefetch = 0 : i64, scratch_operands = 1 : i64, tpu.core_type = #tpu.core_type<tc>, window_params = [{transform_indices = @transform_0, window_bounds = array<i64: 1, 768, 128>}, {transform_indices = @transform_1, window_bounds = array<i64: 4, 128, 128>}, {transform_indices = @transform_2, window_bounds = array<i64: 256, 1>}, {transform_indices = @transform_3, window_bounds = array<i64: 1, 128, 128>}, {transform_indices = @transform_4, window_bounds = array<i64: 1, 256, 128>}, {transform_indices = @transform_5, window_bounds = array<i64: 1, 1, 8, 128>}, {transform_indices = @transform_6, window_bounds = array<i64: 1, 256, 128>}, {transform_indices = @transform_7, window_bounds = array<i64: 1, 1, 8, 128>}]} {
    %c1_i32 = arith.constant 1 : i32
    %0 = arith.addi %arg2, %c1_i32 : i32
    %c256_i32 = arith.constant 256 : i32
    %1 = arith.muli %0, %c256_i32 : i32
    %c-17_i32 = arith.constant -17 : i32
    %2 = arith.addi %1, %c-17_i32 : i32
    %c0 = arith.constant 0 : index
    %3 = arith.index_cast %2 : i32 to index
    %c0_0 = arith.constant 0 : index
    %4 = vector.load %arg3[%c0, %3, %c0_0] : memref<1x768x128xf32, #tpu.memory_space<vmem>>, vector<1x256x128xf32>
    %5 = vector.shape_cast %4 : vector<1x256x128xf32> to vector<256x128xf32>
    %6 = arith.truncf %5 : vector<256x128xf32> to vector<256x128xbf16>
    %c0_1 = arith.constant 0 : index
    %c0_2 = arith.constant 0 : index
    %c0_3 = arith.constant 0 : index
    %7 = vector.load %arg4[%c0_1, %c0_2, %c0_3] : memref<4x128x128xbf16, #tpu.memory_space<vmem>>, vector<1x128x128xbf16>
    %8 = vector.shape_cast %7 : vector<1x128x128xbf16> to vector<128x128xbf16>
    %cst = arith.constant dense<0.000000e+00> : vector<256x128xf32>
    %9 = tpu.matmul %6, %8, %cst {dimension_numbers = #tpu.dot_dimension_numbers<[1], [0], [0], [1], [0, 0, 1, 1], [], []>} : vector<256x128xbf16>, vector<128x128xbf16>, vector<256x128xf32> -> vector<256x128xf32>
    %c0_4 = arith.constant 0 : index
    %c0_5 = arith.constant 0 : index
    %10 = vector.load %arg11[%c0_4, %c0_5] : memref<256x128xf32, #tpu.memory_space<vmem>>, vector<256x128xf32>
    tpu.vector_store %arg11[%c0_4, %c0_5], %9 {strides = array<i32>} : memref<256x128xf32, #tpu.memory_space<vmem>>, vector<256x128xf32>,
    %c-16_i32 = arith.constant -16 : i32
    %11 = arith.addi %1, %c-16_i32 : i32
    %12 = tpu.assume_multiple %11, 8 : i32
    %c0_6 = arith.constant 0 : index
    %13 = arith.index_cast %12 : i32 to index
    %c0_7 = arith.constant 0 : index
    %14 = vector.load %arg3[%c0_6, %13, %c0_7] : memref<1x768x128xf32, #tpu.memory_space<vmem>>, vector<1x256x128xf32>
    %15 = vector.shape_cast %14 : vector<1x256x128xf32> to vector<256x128xf32>
    %16 = arith.truncf %15 : vector<256x128xf32> to vector<256x128xbf16>
    %c1 = arith.constant 1 : index
    %c0_8 = arith.constant 0 : index
    %c0_9 = arith.constant 0 : index
    %17 = vector.load %arg4[%c1, %c0_8, %c0_9] : memref<4x128x128xbf16, #tpu.memory_space<vmem>>, vector<1x128x128xbf16>
    %18 = vector.shape_cast %17 : vector<1x128x128xbf16> to vector<128x128xbf16>
    %cst_10 = arith.constant dense<0.000000e+00> : vector<256x128xf32>
    %19 = tpu.matmul %16, %18, %cst_10 {dimension_numbers = #tpu.dot_dimension_numbers<[1], [0], [0], [1], [0, 0, 1, 1], [], []>} : vector<256x128xbf16>, vector<128x128xbf16>, vector<256x128xf32> -> vector<256x128xf32>
    %c0_11 = arith.constant 0 : index
    %c0_12 = arith.constant 0 : index
    %20 = vector.load %arg11[%c0_11, %c0_12] : memref<256x128xf32, #tpu.memory_space<vmem>>, vector<256x128xf32>
    %21 = arith.addf %20, %19 : vector<256x128xf32>
    %c0_13 = arith.constant 0 : index
    %c0_14 = arith.constant 0 : index
    %22 = vector.load %arg11[%c0_13, %c0_14] : memref<256x128xf32, #tpu.memory_space<vmem>>, vector<256x128xf32>
    tpu.vector_store %arg11[%c0_13, %c0_14], %21 {strides = array<i32>} : memref<256x128xf32, #tpu.memory_space<vmem>>, vector<256x128xf32>,
    %c-1_i32 = arith.constant -1 : i32
    %23 = arith.addi %1, %c-1_i32 : i32
    %c0_15 = arith.constant 0 : index
    %24 = arith.index_cast %23 : i32 to index
    %c0_16 = arith.constant 0 : index
    %25 = vector.load %arg3[%c0_15, %24, %c0_16] : memref<1x768x128xf32, #tpu.memory_space<vmem>>, vector<1x256x128xf32>
    %26 = vector.shape_cast %25 : vector<1x256x128xf32> to vector<256x128xf32>
    %27 = arith.truncf %26 : vector<256x128xf32> to vector<256x128xbf16>
    %c2 = arith.constant 2 : index
    %c0_17 = arith.constant 0 : index
    %c0_18 = arith.constant 0 : index
    %28 = vector.load %arg4[%c2, %c0_17, %c0_18] : memref<4x128x128xbf16, #tpu.memory_space<vmem>>, vector<1x128x128xbf16>
    %29 = vector.shape_cast %28 : vector<1x128x128xbf16> to vector<128x128xbf16>
    %cst_19 = arith.constant dense<0.000000e+00> : vector<256x128xf32>
    %30 = tpu.matmul %27, %29, %cst_19 {dimension_numbers = #tpu.dot_dimension_numbers<[1], [0], [0], [1], [0, 0, 1, 1], [], []>} : vector<256x128xbf16>, vector<128x128xbf16>, vector<256x128xf32> -> vector<256x128xf32>
    %c0_20 = arith.constant 0 : index
    %c0_21 = arith.constant 0 : index
    %31 = vector.load %arg11[%c0_20, %c0_21] : memref<256x128xf32, #tpu.memory_space<vmem>>, vector<256x128xf32>
    %32 = arith.addf %31, %30 : vector<256x128xf32>
    %c0_22 = arith.constant 0 : index
    %c0_23 = arith.constant 0 : index
    %33 = vector.load %arg11[%c0_22, %c0_23] : memref<256x128xf32, #tpu.memory_space<vmem>>, vector<256x128xf32>
    tpu.vector_store %arg11[%c0_22, %c0_23], %32 {strides = array<i32>} : memref<256x128xf32, #tpu.memory_space<vmem>>, vector<256x128xf32>,
    %c0_i32 = arith.constant 0 : i32
    %34 = arith.addi %1, %c0_i32 : i32
    %35 = tpu.assume_multiple %34, 8 : i32
    %c0_24 = arith.constant 0 : index
    %36 = arith.index_cast %35 : i32 to index
    %c0_25 = arith.constant 0 : index
    %37 = vector.load %arg3[%c0_24, %36, %c0_25] : memref<1x768x128xf32, #tpu.memory_space<vmem>>, vector<1x256x128xf32>
    %38 = vector.shape_cast %37 : vector<1x256x128xf32> to vector<256x128xf32>
    %39 = arith.truncf %38 : vector<256x128xf32> to vector<256x128xbf16>
    %c3 = arith.constant 3 : index
    %c0_26 = arith.constant 0 : index
    %c0_27 = arith.constant 0 : index
    %40 = vector.load %arg4[%c3, %c0_26, %c0_27] : memref<4x128x128xbf16, #tpu.memory_space<vmem>>, vector<1x128x128xbf16>
    %41 = vector.shape_cast %40 : vector<1x128x128xbf16> to vector<128x128xbf16>
    %cst_28 = arith.constant dense<0.000000e+00> : vector<256x128xf32>
    %42 = tpu.matmul %39, %41, %cst_28 {dimension_numbers = #tpu.dot_dimension_numbers<[1], [0], [0], [1], [0, 0, 1, 1], [], []>} : vector<256x128xbf16>, vector<128x128xbf16>, vector<256x128xf32> -> vector<256x128xf32>
    %c0_29 = arith.constant 0 : index
    %c0_30 = arith.constant 0 : index
    %43 = vector.load %arg11[%c0_29, %c0_30] : memref<256x128xf32, #tpu.memory_space<vmem>>, vector<256x128xf32>
    %44 = arith.addf %43, %42 : vector<256x128xf32>
    %c0_31 = arith.constant 0 : index
    %c0_32 = arith.constant 0 : index
    %45 = vector.load %arg11[%c0_31, %c0_32] : memref<256x128xf32, #tpu.memory_space<vmem>>, vector<256x128xf32>
    tpu.vector_store %arg11[%c0_31, %c0_32], %44 {strides = array<i32>} : memref<256x128xf32, #tpu.memory_space<vmem>>, vector<256x128xf32>,
    %c0_33 = arith.constant 0 : index
    %c0_34 = arith.constant 0 : index
    %c0_35 = arith.constant 0 : index
    %46 = vector.load %arg6[%c0_33, %c0_34, %c0_35] : memref<1x128x128xbf16, #tpu.memory_space<vmem>>, vector<1x128x128xbf16>
    %47 = vector.shape_cast %46 : vector<1x128x128xbf16> to vector<128x128xbf16>
    %cst_36 = arith.constant dense<0.000000e+00> : vector<256x128xf32>
    %48 = tpu.matmul %39, %47, %cst_36 {dimension_numbers = #tpu.dot_dimension_numbers<[1], [0], [0], [1], [0, 0, 1, 1], [], []>} : vector<256x128xbf16>, vector<128x128xbf16>, vector<256x128xf32> -> vector<256x128xf32>
    %c0_37 = arith.constant 0 : index
    %c0_38 = arith.constant 0 : index
    %49 = vector.load %arg11[%c0_37, %c0_38] : memref<256x128xf32, #tpu.memory_space<vmem>>, vector<256x128xf32>
    %c0_39 = arith.constant 0 : index
    %c0_40 = arith.constant 0 : index
    %50 = vector.load %arg5[%c0_39, %c0_40] : memref<256x1xf32, #tpu.memory_space<vmem>>, vector<256x1xf32>
    %51 = arith.truncf %49 : vector<256x128xf32> to vector<256x128xbf16>
    %c0_41 = arith.constant 0 : index
    %c0_42 = arith.constant 0 : index
    %c0_43 = arith.constant 0 : index
    %52 = vector.load %arg7[%c0_41, %c0_42, %c0_43] : memref<1x256x128xbf16, #tpu.memory_space<vmem>>, vector<1x256x128xbf16>
    %53 = vector.shape_cast %52 : vector<1x256x128xbf16> to vector<256x128xbf16>
    %54 = vector.shape_cast %51 : vector<256x128xbf16> to vector<1x256x128xbf16>
    tpu.vector_store %arg7[%c0_41, %c0_42, %c0_43], %54 {strides = array<i32>} : memref<1x256x128xbf16, #tpu.memory_space<vmem>>, vector<1x256x128xbf16>,
    %55 = vector.broadcast %50 : vector<256x1xf32> to vector<256x128xf32>
    %56 = arith.mulf %49, %55 : vector<256x128xf32>
    %cst_44 = arith.constant dense<0.000000e+00> : vector<128xf32>
    %57 = vector.multi_reduction <add>, %56, %cst_44 [0] : vector<256x128xf32> to vector<128xf32>
    %58 = vector.shape_cast %57 : vector<128xf32> to vector<1x128xf32>
    %59 = arith.mulf %49, %49 : vector<256x128xf32>
    %60 = vector.broadcast %50 : vector<256x1xf32> to vector<256x128xf32>
    %61 = arith.mulf %59, %60 : vector<256x128xf32>
    %cst_45 = arith.constant dense<0.000000e+00> : vector<128xf32>
    %62 = vector.multi_reduction <add>, %61, %cst_45 [0] : vector<256x128xf32> to vector<128xf32>
    %63 = vector.shape_cast %62 : vector<128xf32> to vector<1x128xf32>
    %64 = tpu.iota {dimensions = array<i32: 0>} : vector<8x128xi32>
    %65 = vector.shape_cast %58 : vector<1x128xf32> to vector<1x128xf32>
    %66 = vector.broadcast %65 : vector<1x128xf32> to vector<8x128xf32>
    %67 = vector.shape_cast %63 : vector<1x128xf32> to vector<1x128xf32>
    %68 = vector.broadcast %67 : vector<1x128xf32> to vector<8x128xf32>
    %c0_i32_46 = arith.constant 0 : i32
    %69 = vector.broadcast %c0_i32_46 : i32 to vector<8x128xi32>
    %70 = arith.cmpi eq, %64, %69 : vector<8x128xi32>
    %c1_i32_47 = arith.constant 1 : i32
    %71 = vector.broadcast %c1_i32_47 : i32 to vector<8x128xi32>
    %72 = arith.cmpi eq, %64, %71 : vector<8x128xi32>
    %cst_48 = arith.constant 0.000000e+00 : f32
    %73 = vector.broadcast %cst_48 : f32 to vector<8x128xf32>
    %74 = arith.select %72, %68, %73 : vector<8x128xi1>, vector<8x128xf32>
    %75 = arith.select %70, %66, %74 : vector<8x128xi1>, vector<8x128xf32>
    %c0_49 = arith.constant 0 : index
    %c0_50 = arith.constant 0 : index
    %c0_51 = arith.constant 0 : index
    %c0_52 = arith.constant 0 : index
    %76 = vector.load %arg8[%c0_49, %c0_50, %c0_51, %c0_52] : memref<1x1x8x128xf32, #tpu.memory_space<vmem>>, vector<1x1x8x128xf32>
    %77 = vector.shape_cast %76 : vector<1x1x8x128xf32> to vector<8x128xf32>
    %78 = vector.shape_cast %75 : vector<8x128xf32> to vector<1x1x8x128xf32>
    tpu.vector_store %arg8[%c0_49, %c0_50, %c0_51, %c0_52], %78 {strides = array<i32>} : memref<1x1x8x128xf32, #tpu.memory_space<vmem>>, vector<1x1x8x128xf32>,
    %79 = arith.truncf %48 : vector<256x128xf32> to vector<256x128xbf16>
    %c0_53 = arith.constant 0 : index
    %c0_54 = arith.constant 0 : index
    %c0_55 = arith.constant 0 : index
    %80 = vector.load %arg9[%c0_53, %c0_54, %c0_55] : memref<1x256x128xbf16, #tpu.memory_space<vmem>>, vector<1x256x128xbf16>
    %81 = vector.shape_cast %80 : vector<1x256x128xbf16> to vector<256x128xbf16>
    %82 = vector.shape_cast %79 : vector<256x128xbf16> to vector<1x256x128xbf16>
    tpu.vector_store %arg9[%c0_53, %c0_54, %c0_55], %82 {strides = array<i32>} : memref<1x256x128xbf16, #tpu.memory_space<vmem>>, vector<1x256x128xbf16>,
    %83 = vector.broadcast %50 : vector<256x1xf32> to vector<256x128xf32>
    %84 = arith.mulf %48, %83 : vector<256x128xf32>
    %cst_56 = arith.constant dense<0.000000e+00> : vector<128xf32>
    %85 = vector.multi_reduction <add>, %84, %cst_56 [0] : vector<256x128xf32> to vector<128xf32>
    %86 = vector.shape_cast %85 : vector<128xf32> to vector<1x128xf32>
    %87 = arith.mulf %48, %48 : vector<256x128xf32>
    %88 = vector.broadcast %50 : vector<256x1xf32> to vector<256x128xf32>
    %89 = arith.mulf %87, %88 : vector<256x128xf32>
    %cst_57 = arith.constant dense<0.000000e+00> : vector<128xf32>
    %90 = vector.multi_reduction <add>, %89, %cst_57 [0] : vector<256x128xf32> to vector<128xf32>
    %91 = vector.shape_cast %90 : vector<128xf32> to vector<1x128xf32>
    %92 = tpu.iota {dimensions = array<i32: 0>} : vector<8x128xi32>
    %93 = vector.shape_cast %86 : vector<1x128xf32> to vector<1x128xf32>
    %94 = vector.broadcast %93 : vector<1x128xf32> to vector<8x128xf32>
    %95 = vector.shape_cast %91 : vector<1x128xf32> to vector<1x128xf32>
    %96 = vector.broadcast %95 : vector<1x128xf32> to vector<8x128xf32>
    %c0_i32_58 = arith.constant 0 : i32
    %97 = vector.broadcast %c0_i32_58 : i32 to vector<8x128xi32>
    %98 = arith.cmpi eq, %92, %97 : vector<8x128xi32>
    %c1_i32_59 = arith.constant 1 : i32
    %99 = vector.broadcast %c1_i32_59 : i32 to vector<8x128xi32>
    %100 = arith.cmpi eq, %92, %99 : vector<8x128xi32>
    %cst_60 = arith.constant 0.000000e+00 : f32
    %101 = vector.broadcast %cst_60 : f32 to vector<8x128xf32>
    %102 = arith.select %100, %96, %101 : vector<8x128xi1>, vector<8x128xf32>
    %103 = arith.select %98, %94, %102 : vector<8x128xi1>, vector<8x128xf32>
    %c0_61 = arith.constant 0 : index
    %c0_62 = arith.constant 0 : index
    %c0_63 = arith.constant 0 : index
    %c0_64 = arith.constant 0 : index
    %104 = vector.load %arg10[%c0_61, %c0_62, %c0_63, %c0_64] : memref<1x1x8x128xf32, #tpu.memory_space<vmem>>, vector<1x1x8x128xf32>
    %105 = vector.shape_cast %104 : vector<1x1x8x128xf32> to vector<8x128xf32>
    %106 = vector.shape_cast %103 : vector<8x128xf32> to vector<1x1x8x128xf32>
    tpu.vector_store %arg10[%c0_61, %c0_62, %c0_63, %c0_64], %106 {strides = array<i32>} : memref<1x1x8x128xf32, #tpu.memory_space<vmem>>, vector<1x1x8x128xf32>,
    return
  }
  func.func @transform_0(%arg0: i32, %arg1: i32, %arg2: i32) -> (i32, i32, i32) {
    %c0_i32 = arith.constant 0 : i32
    %c0_i32_0 = arith.constant 0 : i32
    %c0_i32_1 = arith.constant 0 : i32
    return %arg0, %c0_i32, %c0_i32_0 : i32, i32, i32
  }
  func.func @transform_1(%arg0: i32, %arg1: i32, %arg2: i32) -> (i32, i32, i32) {
    %c0_i32 = arith.constant 0 : i32
    %c0_i32_0 = arith.constant 0 : i32
    %c0_i32_1 = arith.constant 0 : i32
    return %c0_i32, %c0_i32_0, %arg1 : i32, i32, i32
  }
  func.func @transform_2(%arg0: i32, %arg1: i32, %arg2: i32) -> (i32, i32) {
    %c0_i32 = arith.constant 0 : i32
    %c0_i32_0 = arith.constant 0 : i32
    return %arg2, %c0_i32 : i32, i32
  }
  func.func @transform_3(%arg0: i32, %arg1: i32, %arg2: i32) -> (i32, i32, i32) {
    %c0_i32 = arith.constant 0 : i32
    %c0_i32_0 = arith.constant 0 : i32
    %c0_i32_1 = arith.constant 0 : i32
    return %c0_i32, %c0_i32_0, %arg1 : i32, i32, i32
  }
  func.func @transform_4(%arg0: i32, %arg1: i32, %arg2: i32) -> (i32, i32, i32) {
    %c0_i32 = arith.constant 0 : i32
    return %arg0, %arg2, %arg1 : i32, i32, i32
  }
  func.func @transform_5(%arg0: i32, %arg1: i32, %arg2: i32) -> (i32, i32, i32, i32) {
    %c0_i32 = arith.constant 0 : i32
    %c0_i32_0 = arith.constant 0 : i32
    return %arg0, %arg2, %c0_i32, %arg1 : i32, i32, i32, i32
  }
  func.func @transform_6(%arg0: i32, %arg1: i32, %arg2: i32) -> (i32, i32, i32) {
    %c0_i32 = arith.constant 0 : i32
    return %arg0, %arg2, %arg1 : i32, i32, i32
  }
  func.func @transform_7(%arg0: i32, %arg1: i32, %arg2: i32) -> (i32, i32, i32, i32) {
    %c0_i32 = arith.constant 0 : i32
    %c0_i32_0 = arith.constant 0 : i32
    return %arg0, %arg2, %c0_i32, %arg1 : i32, i32, i32, i32
  }
}

module attributes {stable_mosaic.version = 11 : i64} {
  func.func @_bn_relu_mask_kernel(%arg0: i32, %arg1: i32, %arg2: memref<1x256x128xbf16, #tpu.memory_space<vmem>>, %arg3: memref<1x128xf32, #tpu.memory_space<vmem>>, %arg4: memref<1x128xf32, #tpu.memory_space<vmem>>, %arg5: memref<256x1xf32, #tpu.memory_space<vmem>>, %arg6: memref<1x256x128xf32, #tpu.memory_space<vmem>>) attributes {dimension_semantics = [#tpu.dimension_semantics<parallel>, #tpu.dimension_semantics<parallel>], iteration_bounds = array<i64: 2, 3>, scalar_prefetch = 0 : i64, scratch_operands = 0 : i64, tpu.core_type = #tpu.core_type<tc>, window_params = [{transform_indices = @transform_0, window_bounds = array<i64: 1, 256, 128>}, {pipeline_mode = #tpu.pipeline_mode<synchronous>, transform_indices = @transform_1, window_bounds = array<i64: 1, 128>}, {pipeline_mode = #tpu.pipeline_mode<synchronous>, transform_indices = @transform_2, window_bounds = array<i64: 1, 128>}, {transform_indices = @transform_3, window_bounds = array<i64: 256, 1>}, {transform_indices = @transform_4, window_bounds = array<i64: 1, 256, 128>}]} {
    %c0 = arith.constant 0 : index
    %c0_0 = arith.constant 0 : index
    %c0_1 = arith.constant 0 : index
    %0 = vector.load %arg2[%c0, %c0_0, %c0_1] : memref<1x256x128xbf16, #tpu.memory_space<vmem>>, vector<1x256x128xbf16>
    %1 = vector.shape_cast %0 : vector<1x256x128xbf16> to vector<256x128xbf16>
    %2 = arith.extf %1 : vector<256x128xbf16> to vector<256x128xf32>
    %c0_2 = arith.constant 0 : index
    %c0_3 = arith.constant 0 : index
    %3 = vector.load %arg3[%c0_2, %c0_3] : memref<1x128xf32, #tpu.memory_space<vmem>>, vector<1x128xf32>
    %4 = vector.broadcast %3 : vector<1x128xf32> to vector<256x128xf32>
    %5 = arith.mulf %2, %4 : vector<256x128xf32>
    %c0_4 = arith.constant 0 : index
    %c0_5 = arith.constant 0 : index
    %6 = vector.load %arg4[%c0_4, %c0_5] : memref<1x128xf32, #tpu.memory_space<vmem>>, vector<1x128xf32>
    %7 = vector.broadcast %6 : vector<1x128xf32> to vector<256x128xf32>
    %8 = arith.addf %5, %7 : vector<256x128xf32>
    %cst = arith.constant 0.000000e+00 : f32
    %9 = vector.broadcast %cst : f32 to vector<256x128xf32>
    %10 = arith.maximumf %8, %9 : vector<256x128xf32>
    %c0_6 = arith.constant 0 : index
    %c0_7 = arith.constant 0 : index
    %11 = vector.load %arg5[%c0_6, %c0_7] : memref<256x1xf32, #tpu.memory_space<vmem>>, vector<256x1xf32>
    %cst_8 = arith.constant 5.000000e-01 : f32
    %12 = vector.broadcast %cst_8 : f32 to vector<256x1xf32>
    %13 = arith.cmpf ogt, %11, %12 : vector<256x1xf32>
    %cst_9 = arith.constant 0.000000e+00 : f32
    %14 = vector.shape_cast %13 : vector<256x1xi1> to vector<256x1xi1>
    %15 = vector.broadcast %14 : vector<256x1xi1> to vector<256x128xi1>
    %16 = vector.broadcast %cst_9 : f32 to vector<256x128xf32>
    %17 = arith.select %15, %10, %16 : vector<256x128xi1>, vector<256x128xf32>
    %c0_10 = arith.constant 0 : index
    %c0_11 = arith.constant 0 : index
    %c0_12 = arith.constant 0 : index
    %18 = vector.load %arg6[%c0_10, %c0_11, %c0_12] : memref<1x256x128xf32, #tpu.memory_space<vmem>>, vector<1x256x128xf32>
    %19 = vector.shape_cast %18 : vector<1x256x128xf32> to vector<256x128xf32>
    %20 = vector.shape_cast %17 : vector<256x128xf32> to vector<1x256x128xf32>
    tpu.vector_store %arg6[%c0_10, %c0_11, %c0_12], %20 {strides = array<i32>} : memref<1x256x128xf32, #tpu.memory_space<vmem>>, vector<1x256x128xf32>,
    return
  }
  func.func @transform_0(%arg0: i32, %arg1: i32) -> (i32, i32, i32) {
    %c1_i32 = arith.constant 1 : i32
    %0 = arith.subi %arg1, %c1_i32 : i32
    %c0_i32 = arith.constant 0 : i32
    %c0_i32_0 = arith.constant 0 : i32
    %1 = arith.maxsi %c0_i32, %0 : i32
    %2 = arith.minsi %c0_i32_0, %1 : i32
    %c0_i32_1 = arith.constant 0 : i32
    %c0_i32_2 = arith.constant 0 : i32
    return %arg0, %2, %c0_i32_1 : i32, i32, i32
  }
  func.func @transform_1(%arg0: i32, %arg1: i32) -> (i32, i32) {
    %c0_i32 = arith.constant 0 : i32
    %c0_i32_0 = arith.constant 0 : i32
    %c0_i32_1 = arith.constant 0 : i32
    return %c0_i32, %c0_i32_0 : i32, i32
  }
  func.func @transform_2(%arg0: i32, %arg1: i32) -> (i32, i32) {
    %c0_i32 = arith.constant 0 : i32
    %c0_i32_0 = arith.constant 0 : i32
    %c0_i32_1 = arith.constant 0 : i32
    return %c0_i32, %c0_i32_0 : i32, i32
  }
  func.func @transform_3(%arg0: i32, %arg1: i32) -> (i32, i32) {
    %c0_i32 = arith.constant 0 : i32
    %c0_i32_0 = arith.constant 0 : i32
    return %arg1, %c0_i32 : i32, i32
  }
  func.func @transform_4(%arg0: i32, %arg1: i32) -> (i32, i32, i32) {
    %c0_i32 = arith.constant 0 : i32
    %c0_i32_0 = arith.constant 0 : i32
    return %arg0, %arg1, %c0_i32 : i32, i32, i32
  }
}

module attributes {stable_mosaic.version = 11 : i64} {
  func.func @kernel(%arg0: i32, %arg1: i32, %arg2: i32, %arg3: memref<1x768x128xf32, #tpu.memory_space<vmem>>, %arg4: memref<9x128x128xbf16, #tpu.memory_space<vmem>>, %arg5: memref<256x1xf32, #tpu.memory_space<vmem>>, %arg6: memref<1x256x128xbf16, #tpu.memory_space<vmem>>, %arg7: memref<1x1x8x128xf32, #tpu.memory_space<vmem>>, %arg8: memref<256x128xf32, #tpu.memory_space<vmem>>) attributes {dimension_semantics = [#tpu.dimension_semantics<parallel>, #tpu.dimension_semantics<parallel>, #tpu.dimension_semantics<arbitrary>], iteration_bounds = array<i64: 2, 1, 1>, scalar_prefetch = 0 : i64, scratch_operands = 1 : i64, tpu.core_type = #tpu.core_type<tc>, window_params = [{transform_indices = @transform_0, window_bounds = array<i64: 1, 768, 128>}, {transform_indices = @transform_1, window_bounds = array<i64: 9, 128, 128>}, {transform_indices = @transform_2, window_bounds = array<i64: 256, 1>}, {transform_indices = @transform_3, window_bounds = array<i64: 1, 256, 128>}, {transform_indices = @transform_4, window_bounds = array<i64: 1, 1, 8, 128>}]} {
    %c1_i32 = arith.constant 1 : i32
    %0 = arith.addi %arg2, %c1_i32 : i32
    %c256_i32 = arith.constant 256 : i32
    %1 = arith.muli %0, %c256_i32 : i32
    %c-17_i32 = arith.constant -17 : i32
    %2 = arith.addi %1, %c-17_i32 : i32
    %c0 = arith.constant 0 : index
    %3 = arith.index_cast %2 : i32 to index
    %c0_0 = arith.constant 0 : index
    %4 = vector.load %arg3[%c0, %3, %c0_0] : memref<1x768x128xf32, #tpu.memory_space<vmem>>, vector<1x256x128xf32>
    %5 = vector.shape_cast %4 : vector<1x256x128xf32> to vector<256x128xf32>
    %6 = arith.truncf %5 : vector<256x128xf32> to vector<256x128xbf16>
    %c0_1 = arith.constant 0 : index
    %c0_2 = arith.constant 0 : index
    %c0_3 = arith.constant 0 : index
    %7 = vector.load %arg4[%c0_1, %c0_2, %c0_3] : memref<9x128x128xbf16, #tpu.memory_space<vmem>>, vector<1x128x128xbf16>
    %8 = vector.shape_cast %7 : vector<1x128x128xbf16> to vector<128x128xbf16>
    %cst = arith.constant dense<0.000000e+00> : vector<256x128xf32>
    %9 = tpu.matmul %6, %8, %cst {dimension_numbers = #tpu.dot_dimension_numbers<[1], [0], [0], [1], [0, 0, 1, 1], [], []>} : vector<256x128xbf16>, vector<128x128xbf16>, vector<256x128xf32> -> vector<256x128xf32>
    %c0_4 = arith.constant 0 : index
    %c0_5 = arith.constant 0 : index
    %10 = vector.load %arg8[%c0_4, %c0_5] : memref<256x128xf32, #tpu.memory_space<vmem>>, vector<256x128xf32>
    tpu.vector_store %arg8[%c0_4, %c0_5], %9 {strides = array<i32>} : memref<256x128xf32, #tpu.memory_space<vmem>>, vector<256x128xf32>,
    %c-16_i32 = arith.constant -16 : i32
    %11 = arith.addi %1, %c-16_i32 : i32
    %12 = tpu.assume_multiple %11, 8 : i32
    %c0_6 = arith.constant 0 : index
    %13 = arith.index_cast %12 : i32 to index
    %c0_7 = arith.constant 0 : index
    %14 = vector.load %arg3[%c0_6, %13, %c0_7] : memref<1x768x128xf32, #tpu.memory_space<vmem>>, vector<1x256x128xf32>
    %15 = vector.shape_cast %14 : vector<1x256x128xf32> to vector<256x128xf32>
    %16 = arith.truncf %15 : vector<256x128xf32> to vector<256x128xbf16>
    %c1 = arith.constant 1 : index
    %c0_8 = arith.constant 0 : index
    %c0_9 = arith.constant 0 : index
    %17 = vector.load %arg4[%c1, %c0_8, %c0_9] : memref<9x128x128xbf16, #tpu.memory_space<vmem>>, vector<1x128x128xbf16>
    %18 = vector.shape_cast %17 : vector<1x128x128xbf16> to vector<128x128xbf16>
    %cst_10 = arith.constant dense<0.000000e+00> : vector<256x128xf32>
    %19 = tpu.matmul %16, %18, %cst_10 {dimension_numbers = #tpu.dot_dimension_numbers<[1], [0], [0], [1], [0, 0, 1, 1], [], []>} : vector<256x128xbf16>, vector<128x128xbf16>, vector<256x128xf32> -> vector<256x128xf32>
    %c0_11 = arith.constant 0 : index
    %c0_12 = arith.constant 0 : index
    %20 = vector.load %arg8[%c0_11, %c0_12] : memref<256x128xf32, #tpu.memory_space<vmem>>, vector<256x128xf32>
    %21 = arith.addf %20, %19 : vector<256x128xf32>
    %c0_13 = arith.constant 0 : index
    %c0_14 = arith.constant 0 : index
    %22 = vector.load %arg8[%c0_13, %c0_14] : memref<256x128xf32, #tpu.memory_space<vmem>>, vector<256x128xf32>
    tpu.vector_store %arg8[%c0_13, %c0_14], %21 {strides = array<i32>} : memref<256x128xf32, #tpu.memory_space<vmem>>, vector<256x128xf32>,
    %c-15_i32 = arith.constant -15 : i32
    %23 = arith.addi %1, %c-15_i32 : i32
    %c0_15 = arith.constant 0 : index
    %24 = arith.index_cast %23 : i32 to index
    %c0_16 = arith.constant 0 : index
    %25 = vector.load %arg3[%c0_15, %24, %c0_16] : memref<1x768x128xf32, #tpu.memory_space<vmem>>, vector<1x256x128xf32>
    %26 = vector.shape_cast %25 : vector<1x256x128xf32> to vector<256x128xf32>
    %27 = arith.truncf %26 : vector<256x128xf32> to vector<256x128xbf16>
    %c2 = arith.constant 2 : index
    %c0_17 = arith.constant 0 : index
    %c0_18 = arith.constant 0 : index
    %28 = vector.load %arg4[%c2, %c0_17, %c0_18] : memref<9x128x128xbf16, #tpu.memory_space<vmem>>, vector<1x128x128xbf16>
    %29 = vector.shape_cast %28 : vector<1x128x128xbf16> to vector<128x128xbf16>
    %cst_19 = arith.constant dense<0.000000e+00> : vector<256x128xf32>
    %30 = tpu.matmul %27, %29, %cst_19 {dimension_numbers = #tpu.dot_dimension_numbers<[1], [0], [0], [1], [0, 0, 1, 1], [], []>} : vector<256x128xbf16>, vector<128x128xbf16>, vector<256x128xf32> -> vector<256x128xf32>
    %c0_20 = arith.constant 0 : index
    %c0_21 = arith.constant 0 : index
    %31 = vector.load %arg8[%c0_20, %c0_21] : memref<256x128xf32, #tpu.memory_space<vmem>>, vector<256x128xf32>
    %32 = arith.addf %31, %30 : vector<256x128xf32>
    %c0_22 = arith.constant 0 : index
    %c0_23 = arith.constant 0 : index
    %33 = vector.load %arg8[%c0_22, %c0_23] : memref<256x128xf32, #tpu.memory_space<vmem>>, vector<256x128xf32>
    tpu.vector_store %arg8[%c0_22, %c0_23], %32 {strides = array<i32>} : memref<256x128xf32, #tpu.memory_space<vmem>>, vector<256x128xf32>,
    %c-1_i32 = arith.constant -1 : i32
    %34 = arith.addi %1, %c-1_i32 : i32
    %c0_24 = arith.constant 0 : index
    %35 = arith.index_cast %34 : i32 to index
    %c0_25 = arith.constant 0 : index
    %36 = vector.load %arg3[%c0_24, %35, %c0_25] : memref<1x768x128xf32, #tpu.memory_space<vmem>>, vector<1x256x128xf32>
    %37 = vector.shape_cast %36 : vector<1x256x128xf32> to vector<256x128xf32>
    %38 = arith.truncf %37 : vector<256x128xf32> to vector<256x128xbf16>
    %c3 = arith.constant 3 : index
    %c0_26 = arith.constant 0 : index
    %c0_27 = arith.constant 0 : index
    %39 = vector.load %arg4[%c3, %c0_26, %c0_27] : memref<9x128x128xbf16, #tpu.memory_space<vmem>>, vector<1x128x128xbf16>
    %40 = vector.shape_cast %39 : vector<1x128x128xbf16> to vector<128x128xbf16>
    %cst_28 = arith.constant dense<0.000000e+00> : vector<256x128xf32>
    %41 = tpu.matmul %38, %40, %cst_28 {dimension_numbers = #tpu.dot_dimension_numbers<[1], [0], [0], [1], [0, 0, 1, 1], [], []>} : vector<256x128xbf16>, vector<128x128xbf16>, vector<256x128xf32> -> vector<256x128xf32>
    %c0_29 = arith.constant 0 : index
    %c0_30 = arith.constant 0 : index
    %42 = vector.load %arg8[%c0_29, %c0_30] : memref<256x128xf32, #tpu.memory_space<vmem>>, vector<256x128xf32>
    %43 = arith.addf %42, %41 : vector<256x128xf32>
    %c0_31 = arith.constant 0 : index
    %c0_32 = arith.constant 0 : index
    %44 = vector.load %arg8[%c0_31, %c0_32] : memref<256x128xf32, #tpu.memory_space<vmem>>, vector<256x128xf32>
    tpu.vector_store %arg8[%c0_31, %c0_32], %43 {strides = array<i32>} : memref<256x128xf32, #tpu.memory_space<vmem>>, vector<256x128xf32>,
    %c0_i32 = arith.constant 0 : i32
    %45 = arith.addi %1, %c0_i32 : i32
    %46 = tpu.assume_multiple %45, 8 : i32
    %c0_33 = arith.constant 0 : index
    %47 = arith.index_cast %46 : i32 to index
    %c0_34 = arith.constant 0 : index
    %48 = vector.load %arg3[%c0_33, %47, %c0_34] : memref<1x768x128xf32, #tpu.memory_space<vmem>>, vector<1x256x128xf32>
    %49 = vector.shape_cast %48 : vector<1x256x128xf32> to vector<256x128xf32>
    %50 = arith.truncf %49 : vector<256x128xf32> to vector<256x128xbf16>
    %c4 = arith.constant 4 : index
    %c0_35 = arith.constant 0 : index
    %c0_36 = arith.constant 0 : index
    %51 = vector.load %arg4[%c4, %c0_35, %c0_36] : memref<9x128x128xbf16, #tpu.memory_space<vmem>>, vector<1x128x128xbf16>
    %52 = vector.shape_cast %51 : vector<1x128x128xbf16> to vector<128x128xbf16>
    %cst_37 = arith.constant dense<0.000000e+00> : vector<256x128xf32>
    %53 = tpu.matmul %50, %52, %cst_37 {dimension_numbers = #tpu.dot_dimension_numbers<[1], [0], [0], [1], [0, 0, 1, 1], [], []>} : vector<256x128xbf16>, vector<128x128xbf16>, vector<256x128xf32> -> vector<256x128xf32>
    %c0_38 = arith.constant 0 : index
    %c0_39 = arith.constant 0 : index
    %54 = vector.load %arg8[%c0_38, %c0_39] : memref<256x128xf32, #tpu.memory_space<vmem>>, vector<256x128xf32>
    %55 = arith.addf %54, %53 : vector<256x128xf32>
    %c0_40 = arith.constant 0 : index
    %c0_41 = arith.constant 0 : index
    %56 = vector.load %arg8[%c0_40, %c0_41] : memref<256x128xf32, #tpu.memory_space<vmem>>, vector<256x128xf32>
    tpu.vector_store %arg8[%c0_40, %c0_41], %55 {strides = array<i32>} : memref<256x128xf32, #tpu.memory_space<vmem>>, vector<256x128xf32>,
    %c1_i32_42 = arith.constant 1 : i32
    %57 = arith.addi %1, %c1_i32_42 : i32
    %c0_43 = arith.constant 0 : index
    %58 = arith.index_cast %57 : i32 to index
    %c0_44 = arith.constant 0 : index
    %59 = vector.load %arg3[%c0_43, %58, %c0_44] : memref<1x768x128xf32, #tpu.memory_space<vmem>>, vector<1x256x128xf32>
    %60 = vector.shape_cast %59 : vector<1x256x128xf32> to vector<256x128xf32>
    %61 = arith.truncf %60 : vector<256x128xf32> to vector<256x128xbf16>
    %c5 = arith.constant 5 : index
    %c0_45 = arith.constant 0 : index
    %c0_46 = arith.constant 0 : index
    %62 = vector.load %arg4[%c5, %c0_45, %c0_46] : memref<9x128x128xbf16, #tpu.memory_space<vmem>>, vector<1x128x128xbf16>
    %63 = vector.shape_cast %62 : vector<1x128x128xbf16> to vector<128x128xbf16>
    %cst_47 = arith.constant dense<0.000000e+00> : vector<256x128xf32>
    %64 = tpu.matmul %61, %63, %cst_47 {dimension_numbers = #tpu.dot_dimension_numbers<[1], [0], [0], [1], [0, 0, 1, 1], [], []>} : vector<256x128xbf16>, vector<128x128xbf16>, vector<256x128xf32> -> vector<256x128xf32>
    %c0_48 = arith.constant 0 : index
    %c0_49 = arith.constant 0 : index
    %65 = vector.load %arg8[%c0_48, %c0_49] : memref<256x128xf32, #tpu.memory_space<vmem>>, vector<256x128xf32>
    %66 = arith.addf %65, %64 : vector<256x128xf32>
    %c0_50 = arith.constant 0 : index
    %c0_51 = arith.constant 0 : index
    %67 = vector.load %arg8[%c0_50, %c0_51] : memref<256x128xf32, #tpu.memory_space<vmem>>, vector<256x128xf32>
    tpu.vector_store %arg8[%c0_50, %c0_51], %66 {strides = array<i32>} : memref<256x128xf32, #tpu.memory_space<vmem>>, vector<256x128xf32>,
    %c15_i32 = arith.constant 15 : i32
    %68 = arith.addi %1, %c15_i32 : i32
    %c0_52 = arith.constant 0 : index
    %69 = arith.index_cast %68 : i32 to index
    %c0_53 = arith.constant 0 : index
    %70 = vector.load %arg3[%c0_52, %69, %c0_53] : memref<1x768x128xf32, #tpu.memory_space<vmem>>, vector<1x256x128xf32>
    %71 = vector.shape_cast %70 : vector<1x256x128xf32> to vector<256x128xf32>
    %72 = arith.truncf %71 : vector<256x128xf32> to vector<256x128xbf16>
    %c6 = arith.constant 6 : index
    %c0_54 = arith.constant 0 : index
    %c0_55 = arith.constant 0 : index
    %73 = vector.load %arg4[%c6, %c0_54, %c0_55] : memref<9x128x128xbf16, #tpu.memory_space<vmem>>, vector<1x128x128xbf16>
    %74 = vector.shape_cast %73 : vector<1x128x128xbf16> to vector<128x128xbf16>
    %cst_56 = arith.constant dense<0.000000e+00> : vector<256x128xf32>
    %75 = tpu.matmul %72, %74, %cst_56 {dimension_numbers = #tpu.dot_dimension_numbers<[1], [0], [0], [1], [0, 0, 1, 1], [], []>} : vector<256x128xbf16>, vector<128x128xbf16>, vector<256x128xf32> -> vector<256x128xf32>
    %c0_57 = arith.constant 0 : index
    %c0_58 = arith.constant 0 : index
    %76 = vector.load %arg8[%c0_57, %c0_58] : memref<256x128xf32, #tpu.memory_space<vmem>>, vector<256x128xf32>
    %77 = arith.addf %76, %75 : vector<256x128xf32>
    %c0_59 = arith.constant 0 : index
    %c0_60 = arith.constant 0 : index
    %78 = vector.load %arg8[%c0_59, %c0_60] : memref<256x128xf32, #tpu.memory_space<vmem>>, vector<256x128xf32>
    tpu.vector_store %arg8[%c0_59, %c0_60], %77 {strides = array<i32>} : memref<256x128xf32, #tpu.memory_space<vmem>>, vector<256x128xf32>,
    %c16_i32 = arith.constant 16 : i32
    %79 = arith.addi %1, %c16_i32 : i32
    %80 = tpu.assume_multiple %79, 8 : i32
    %c0_61 = arith.constant 0 : index
    %81 = arith.index_cast %80 : i32 to index
    %c0_62 = arith.constant 0 : index
    %82 = vector.load %arg3[%c0_61, %81, %c0_62] : memref<1x768x128xf32, #tpu.memory_space<vmem>>, vector<1x256x128xf32>
    %83 = vector.shape_cast %82 : vector<1x256x128xf32> to vector<256x128xf32>
    %84 = arith.truncf %83 : vector<256x128xf32> to vector<256x128xbf16>
    %c7 = arith.constant 7 : index
    %c0_63 = arith.constant 0 : index
    %c0_64 = arith.constant 0 : index
    %85 = vector.load %arg4[%c7, %c0_63, %c0_64] : memref<9x128x128xbf16, #tpu.memory_space<vmem>>, vector<1x128x128xbf16>
    %86 = vector.shape_cast %85 : vector<1x128x128xbf16> to vector<128x128xbf16>
    %cst_65 = arith.constant dense<0.000000e+00> : vector<256x128xf32>
    %87 = tpu.matmul %84, %86, %cst_65 {dimension_numbers = #tpu.dot_dimension_numbers<[1], [0], [0], [1], [0, 0, 1, 1], [], []>} : vector<256x128xbf16>, vector<128x128xbf16>, vector<256x128xf32> -> vector<256x128xf32>
    %c0_66 = arith.constant 0 : index
    %c0_67 = arith.constant 0 : index
    %88 = vector.load %arg8[%c0_66, %c0_67] : memref<256x128xf32, #tpu.memory_space<vmem>>, vector<256x128xf32>
    %89 = arith.addf %88, %87 : vector<256x128xf32>
    %c0_68 = arith.constant 0 : index
    %c0_69 = arith.constant 0 : index
    %90 = vector.load %arg8[%c0_68, %c0_69] : memref<256x128xf32, #tpu.memory_space<vmem>>, vector<256x128xf32>
    tpu.vector_store %arg8[%c0_68, %c0_69], %89 {strides = array<i32>} : memref<256x128xf32, #tpu.memory_space<vmem>>, vector<256x128xf32>,
    %c17_i32 = arith.constant 17 : i32
    %91 = arith.addi %1, %c17_i32 : i32
    %c0_70 = arith.constant 0 : index
    %92 = arith.index_cast %91 : i32 to index
    %c0_71 = arith.constant 0 : index
    %93 = vector.load %arg3[%c0_70, %92, %c0_71] : memref<1x768x128xf32, #tpu.memory_space<vmem>>, vector<1x256x128xf32>
    %94 = vector.shape_cast %93 : vector<1x256x128xf32> to vector<256x128xf32>
    %95 = arith.truncf %94 : vector<256x128xf32> to vector<256x128xbf16>
    %c8 = arith.constant 8 : index
    %c0_72 = arith.constant 0 : index
    %c0_73 = arith.constant 0 : index
    %96 = vector.load %arg4[%c8, %c0_72, %c0_73] : memref<9x128x128xbf16, #tpu.memory_space<vmem>>, vector<1x128x128xbf16>
    %97 = vector.shape_cast %96 : vector<1x128x128xbf16> to vector<128x128xbf16>
    %cst_74 = arith.constant dense<0.000000e+00> : vector<256x128xf32>
    %98 = tpu.matmul %95, %97, %cst_74 {dimension_numbers = #tpu.dot_dimension_numbers<[1], [0], [0], [1], [0, 0, 1, 1], [], []>} : vector<256x128xbf16>, vector<128x128xbf16>, vector<256x128xf32> -> vector<256x128xf32>
    %c0_75 = arith.constant 0 : index
    %c0_76 = arith.constant 0 : index
    %99 = vector.load %arg8[%c0_75, %c0_76] : memref<256x128xf32, #tpu.memory_space<vmem>>, vector<256x128xf32>
    %100 = arith.addf %99, %98 : vector<256x128xf32>
    %c0_77 = arith.constant 0 : index
    %c0_78 = arith.constant 0 : index
    %101 = vector.load %arg8[%c0_77, %c0_78] : memref<256x128xf32, #tpu.memory_space<vmem>>, vector<256x128xf32>
    tpu.vector_store %arg8[%c0_77, %c0_78], %100 {strides = array<i32>} : memref<256x128xf32, #tpu.memory_space<vmem>>, vector<256x128xf32>,
    %c0_79 = arith.constant 0 : index
    %c0_80 = arith.constant 0 : index
    %102 = vector.load %arg8[%c0_79, %c0_80] : memref<256x128xf32, #tpu.memory_space<vmem>>, vector<256x128xf32>
    %c0_81 = arith.constant 0 : index
    %c0_82 = arith.constant 0 : index
    %103 = vector.load %arg5[%c0_81, %c0_82] : memref<256x1xf32, #tpu.memory_space<vmem>>, vector<256x1xf32>
    %104 = arith.truncf %102 : vector<256x128xf32> to vector<256x128xbf16>
    %c0_83 = arith.constant 0 : index
    %c0_84 = arith.constant 0 : index
    %c0_85 = arith.constant 0 : index
    %105 = vector.load %arg6[%c0_83, %c0_84, %c0_85] : memref<1x256x128xbf16, #tpu.memory_space<vmem>>, vector<1x256x128xbf16>
    %106 = vector.shape_cast %105 : vector<1x256x128xbf16> to vector<256x128xbf16>
    %107 = vector.shape_cast %104 : vector<256x128xbf16> to vector<1x256x128xbf16>
    tpu.vector_store %arg6[%c0_83, %c0_84, %c0_85], %107 {strides = array<i32>} : memref<1x256x128xbf16, #tpu.memory_space<vmem>>, vector<1x256x128xbf16>,
    %108 = vector.broadcast %103 : vector<256x1xf32> to vector<256x128xf32>
    %109 = arith.mulf %102, %108 : vector<256x128xf32>
    %cst_86 = arith.constant dense<0.000000e+00> : vector<128xf32>
    %110 = vector.multi_reduction <add>, %109, %cst_86 [0] : vector<256x128xf32> to vector<128xf32>
    %111 = vector.shape_cast %110 : vector<128xf32> to vector<1x128xf32>
    %112 = arith.mulf %102, %102 : vector<256x128xf32>
    %113 = vector.broadcast %103 : vector<256x1xf32> to vector<256x128xf32>
    %114 = arith.mulf %112, %113 : vector<256x128xf32>
    %cst_87 = arith.constant dense<0.000000e+00> : vector<128xf32>
    %115 = vector.multi_reduction <add>, %114, %cst_87 [0] : vector<256x128xf32> to vector<128xf32>
    %116 = vector.shape_cast %115 : vector<128xf32> to vector<1x128xf32>
    %117 = tpu.iota {dimensions = array<i32: 0>} : vector<8x128xi32>
    %118 = vector.shape_cast %111 : vector<1x128xf32> to vector<1x128xf32>
    %119 = vector.broadcast %118 : vector<1x128xf32> to vector<8x128xf32>
    %120 = vector.shape_cast %116 : vector<1x128xf32> to vector<1x128xf32>
    %121 = vector.broadcast %120 : vector<1x128xf32> to vector<8x128xf32>
    %c0_i32_88 = arith.constant 0 : i32
    %122 = vector.broadcast %c0_i32_88 : i32 to vector<8x128xi32>
    %123 = arith.cmpi eq, %117, %122 : vector<8x128xi32>
    %c1_i32_89 = arith.constant 1 : i32
    %124 = vector.broadcast %c1_i32_89 : i32 to vector<8x128xi32>
    %125 = arith.cmpi eq, %117, %124 : vector<8x128xi32>
    %cst_90 = arith.constant 0.000000e+00 : f32
    %126 = vector.broadcast %cst_90 : f32 to vector<8x128xf32>
    %127 = arith.select %125, %121, %126 : vector<8x128xi1>, vector<8x128xf32>
    %128 = arith.select %123, %119, %127 : vector<8x128xi1>, vector<8x128xf32>
    %c0_91 = arith.constant 0 : index
    %c0_92 = arith.constant 0 : index
    %c0_93 = arith.constant 0 : index
    %c0_94 = arith.constant 0 : index
    %129 = vector.load %arg7[%c0_91, %c0_92, %c0_93, %c0_94] : memref<1x1x8x128xf32, #tpu.memory_space<vmem>>, vector<1x1x8x128xf32>
    %130 = vector.shape_cast %129 : vector<1x1x8x128xf32> to vector<8x128xf32>
    %131 = vector.shape_cast %128 : vector<8x128xf32> to vector<1x1x8x128xf32>
    tpu.vector_store %arg7[%c0_91, %c0_92, %c0_93, %c0_94], %131 {strides = array<i32>} : memref<1x1x8x128xf32, #tpu.memory_space<vmem>>, vector<1x1x8x128xf32>,
    return
  }
  func.func @transform_0(%arg0: i32, %arg1: i32, %arg2: i32) -> (i32, i32, i32) {
    %c0_i32 = arith.constant 0 : i32
    %c0_i32_0 = arith.constant 0 : i32
    %c0_i32_1 = arith.constant 0 : i32
    return %arg0, %c0_i32, %c0_i32_0 : i32, i32, i32
  }
  func.func @transform_1(%arg0: i32, %arg1: i32, %arg2: i32) -> (i32, i32, i32) {
    %c0_i32 = arith.constant 0 : i32
    %c0_i32_0 = arith.constant 0 : i32
    %c0_i32_1 = arith.constant 0 : i32
    return %c0_i32, %c0_i32_0, %arg1 : i32, i32, i32
  }
  func.func @transform_2(%arg0: i32, %arg1: i32, %arg2: i32) -> (i32, i32) {
    %c0_i32 = arith.constant 0 : i32
    %c0_i32_0 = arith.constant 0 : i32
    return %arg2, %c0_i32 : i32, i32
  }
  func.func @transform_3(%arg0: i32, %arg1: i32, %arg2: i32) -> (i32, i32, i32) {
    %c0_i32 = arith.constant 0 : i32
    return %arg0, %arg2, %arg1 : i32, i32, i32
  }
  func.func @transform_4(%arg0: i32, %arg1: i32, %arg2: i32) -> (i32, i32, i32, i32) {
    %c0_i32 = arith.constant 0 : i32
    %c0_i32_0 = arith.constant 0 : i32
    return %arg0, %arg2, %c0_i32, %arg1 : i32, i32, i32, i32
  }
}

module attributes {stable_mosaic.version = 11 : i64} {
  func.func @_bn_add_bn_relu_kernel(%arg0: i32, %arg1: i32, %arg2: memref<1x256x128xbf16, #tpu.memory_space<vmem>>, %arg3: memref<1x128xf32, #tpu.memory_space<vmem>>, %arg4: memref<1x128xf32, #tpu.memory_space<vmem>>, %arg5: memref<1x256x128xbf16, #tpu.memory_space<vmem>>, %arg6: memref<1x128xf32, #tpu.memory_space<vmem>>, %arg7: memref<1x128xf32, #tpu.memory_space<vmem>>, %arg8: memref<1x256x128xf32, #tpu.memory_space<vmem>>) attributes {dimension_semantics = [#tpu.dimension_semantics<parallel>, #tpu.dimension_semantics<parallel>], iteration_bounds = array<i64: 2, 1>, scalar_prefetch = 0 : i64, scratch_operands = 0 : i64, tpu.core_type = #tpu.core_type<tc>, window_params = [{transform_indices = @transform_0, window_bounds = array<i64: 1, 256, 128>}, {pipeline_mode = #tpu.pipeline_mode<synchronous>, transform_indices = @transform_1, window_bounds = array<i64: 1, 128>}, {pipeline_mode = #tpu.pipeline_mode<synchronous>, transform_indices = @transform_2, window_bounds = array<i64: 1, 128>}, {transform_indices = @transform_3, window_bounds = array<i64: 1, 256, 128>}, {pipeline_mode = #tpu.pipeline_mode<synchronous>, transform_indices = @transform_4, window_bounds = array<i64: 1, 128>}, {pipeline_mode = #tpu.pipeline_mode<synchronous>, transform_indices = @transform_5, window_bounds = array<i64: 1, 128>}, {transform_indices = @transform_6, window_bounds = array<i64: 1, 256, 128>}]} {
    %c0 = arith.constant 0 : index
    %c0_0 = arith.constant 0 : index
    %c0_1 = arith.constant 0 : index
    %0 = vector.load %arg2[%c0, %c0_0, %c0_1] : memref<1x256x128xbf16, #tpu.memory_space<vmem>>, vector<1x256x128xbf16>
    %1 = vector.shape_cast %0 : vector<1x256x128xbf16> to vector<256x128xbf16>
    %2 = arith.extf %1 : vector<256x128xbf16> to vector<256x128xf32>
    %c0_2 = arith.constant 0 : index
    %c0_3 = arith.constant 0 : index
    %3 = vector.load %arg3[%c0_2, %c0_3] : memref<1x128xf32, #tpu.memory_space<vmem>>, vector<1x128xf32>
    %4 = vector.broadcast %3 : vector<1x128xf32> to vector<256x128xf32>
    %5 = arith.mulf %2, %4 : vector<256x128xf32>
    %c0_4 = arith.constant 0 : index
    %c0_5 = arith.constant 0 : index
    %6 = vector.load %arg4[%c0_4, %c0_5] : memref<1x128xf32, #tpu.memory_space<vmem>>, vector<1x128xf32>
    %7 = vector.broadcast %6 : vector<1x128xf32> to vector<256x128xf32>
    %8 = arith.addf %5, %7 : vector<256x128xf32>
    %c0_6 = arith.constant 0 : index
    %c0_7 = arith.constant 0 : index
    %c0_8 = arith.constant 0 : index
    %9 = vector.load %arg5[%c0_6, %c0_7, %c0_8] : memref<1x256x128xbf16, #tpu.memory_space<vmem>>, vector<1x256x128xbf16>
    %10 = vector.shape_cast %9 : vector<1x256x128xbf16> to vector<256x128xbf16>
    %11 = arith.extf %10 : vector<256x128xbf16> to vector<256x128xf32>
    %c0_9 = arith.constant 0 : index
    %c0_10 = arith.constant 0 : index
    %12 = vector.load %arg6[%c0_9, %c0_10] : memref<1x128xf32, #tpu.memory_space<vmem>>, vector<1x128xf32>
    %13 = vector.broadcast %12 : vector<1x128xf32> to vector<256x128xf32>
    %14 = arith.mulf %11, %13 : vector<256x128xf32>
    %15 = arith.addf %8, %14 : vector<256x128xf32>
    %c0_11 = arith.constant 0 : index
    %c0_12 = arith.constant 0 : index
    %16 = vector.load %arg7[%c0_11, %c0_12] : memref<1x128xf32, #tpu.memory_space<vmem>>, vector<1x128xf32>
    %17 = vector.broadcast %16 : vector<1x128xf32> to vector<256x128xf32>
    %18 = arith.addf %15, %17 : vector<256x128xf32>
    %cst = arith.constant 0.000000e+00 : f32
    %19 = vector.broadcast %cst : f32 to vector<256x128xf32>
    %20 = arith.maximumf %18, %19 : vector<256x128xf32>
    %c0_13 = arith.constant 0 : index
    %c0_14 = arith.constant 0 : index
    %c0_15 = arith.constant 0 : index
    %21 = vector.load %arg8[%c0_13, %c0_14, %c0_15] : memref<1x256x128xf32, #tpu.memory_space<vmem>>, vector<1x256x128xf32>
    %22 = vector.shape_cast %21 : vector<1x256x128xf32> to vector<256x128xf32>
    %23 = vector.shape_cast %20 : vector<256x128xf32> to vector<1x256x128xf32>
    tpu.vector_store %arg8[%c0_13, %c0_14, %c0_15], %23 {strides = array<i32>} : memref<1x256x128xf32, #tpu.memory_space<vmem>>, vector<1x256x128xf32>,
    return
  }
  func.func @transform_0(%arg0: i32, %arg1: i32) -> (i32, i32, i32) {
    %c0_i32 = arith.constant 0 : i32
    %c0_i32_0 = arith.constant 0 : i32
    return %arg0, %arg1, %c0_i32 : i32, i32, i32
  }
  func.func @transform_1(%arg0: i32, %arg1: i32) -> (i32, i32) {
    %c0_i32 = arith.constant 0 : i32
    %c0_i32_0 = arith.constant 0 : i32
    %c0_i32_1 = arith.constant 0 : i32
    return %c0_i32, %c0_i32_0 : i32, i32
  }
  func.func @transform_2(%arg0: i32, %arg1: i32) -> (i32, i32) {
    %c0_i32 = arith.constant 0 : i32
    %c0_i32_0 = arith.constant 0 : i32
    %c0_i32_1 = arith.constant 0 : i32
    return %c0_i32, %c0_i32_0 : i32, i32
  }
  func.func @transform_3(%arg0: i32, %arg1: i32) -> (i32, i32, i32) {
    %c0_i32 = arith.constant 0 : i32
    %0 = arith.addi %arg1, %c0_i32 : i32
    %c0_i32_0 = arith.constant 0 : i32
    %c0_i32_1 = arith.constant 0 : i32
    return %arg0, %0, %c0_i32_0 : i32, i32, i32
  }
  func.func @transform_4(%arg0: i32, %arg1: i32) -> (i32, i32) {
    %c0_i32 = arith.constant 0 : i32
    %c0_i32_0 = arith.constant 0 : i32
    %c0_i32_1 = arith.constant 0 : i32
    return %c0_i32, %c0_i32_0 : i32, i32
  }
  func.func @transform_5(%arg0: i32, %arg1: i32) -> (i32, i32) {
    %c0_i32 = arith.constant 0 : i32
    %c0_i32_0 = arith.constant 0 : i32
    %c0_i32_1 = arith.constant 0 : i32
    return %c0_i32, %c0_i32_0 : i32, i32
  }
  func.func @transform_6(%arg0: i32, %arg1: i32) -> (i32, i32, i32) {
    %c0_i32 = arith.constant 0 : i32
    %c0_i32_0 = arith.constant 0 : i32
    return %arg0, %arg1, %c0_i32 : i32, i32, i32
  }
}

</mosaic_0001>

<llo_original>
// kernel: basic_block_forward.5
$region0: #{basic_block_forward.5}
  #allocation0 [shape = 'u32[]', space=smem, size = 0x4, offset = 0x4, fixed_abs, tag = 'smem constant byte address 0x4 - core index']
  #allocation1 [shape = 'u32[144,128]{1,0:T(1,128)}', space=vmem, size = 0x12000, scoped, tag = 'internal scratch']
  %s0 = inlined_call_operand.vmem [shape: bf16[2,256,128], index: 0, kind: input, shape index: {}]
  %s1 = inlined_call_operand.vmem [shape: f32[1,128], index: 1, kind: input, shape index: {}]
  %s2 = inlined_call_operand.vmem [shape: f32[1,128], index: 2, kind: input, shape index: {}]
  %s3 = inlined_call_operand.vmem [shape: f32[768,1], index: 3, kind: input, shape index: {}]
  %s4 = inlined_call_operand.vmem [shape: f32[2,768,128], index: 4, kind: output, shape index: {}]
  %s5 = sld [smem:[#allocation0]]
  $region49: #{basic_block_forward.5} parent=0
    _
  %s7 = ssub.s32 1, %s5
  %s8 = scalar_select 0, %s7, %s5
  loop: start=0, step=1, limit=8
  $region2: #{basic_block_forward.5} parent=0 // loop_pre_header
    _
  $region3: #{basic_block_forward.5} parent=0 // loop_header
    %s10 = sphi 0, %s14
    %p11 = scmp.ge.s32.totalorder %s10, 8
    %s17 = sphi 0, %s29
    %s18 = sphi 0, %s25
    %s19 = sphi 0, %s17
    %s20 = sphi 0, %s18
    %s21 = sphi 0, %s19
    %s22 = sphi 0, %s20
    %s44 = sphi 0, %s46
    %s47 = sphi 0, %s44
    %s48 = sphi 0, %s47
    %s64 = sphi 0, %s48
    %s68 = sphi 0, %s68
    %s70 = sphi 0, %s68
    %s71 = sphi 0, %s70
    %s85 = sphi 0, %s71
    %s89 = sphi 0, %s89
    %s91 = sphi 0, %s89
    %s92 = sphi 0, %s91
    %s106 = sphi 0, %s92
    %s112 = sphi 0, %s114
    %s115 = sphi 0, %s112
    %s116 = sphi 0, %s115
    %s132 = sphi 0, %s116
    %s140 = sphi 0, %s142
    %s143 = sphi 0, %s140
    %s144 = sphi 0, %s143
    %s160 = sphi 0, %s144
  $region4: #{basic_block_forward.5} parent=0 // loop_header_branch
    %13 = sbr.rel (%p11) target = $region8
  $region5: #{basic_block_forward.5} parent=0 // loop_body
    %s15 = ssub.s32 %s10, 1
    %s16 = ssub.s32 %s10, 2
    %s23 = sadd.s32 1, %s18
    %p24 = scmp.ge.s32.totalorder %s23, 3
    %s25 = scalar_select %p24, 0, %s23
    %s26 = sadd.s32 1, %s17
    %s27 = scalar_select %p24, %s26, %s17
    %p28 = scmp.ge.s32.totalorder %s27, 2
    %s29 = scalar_select %p28, 0, %s27
    %s30 = ssub.s32 %s18, 1
    %p31 = scmp.gt.s32.totalorder %s30, 0
    %s32 = scalar_select %p31, %s30, 0
    %p33 = scmp.lt.s32.totalorder %s32, 0
    %s34 = scalar_select %p33, %s32, 0
    %s35 = ssub.s32 %s25, 1
    %p36 = scmp.gt.s32.totalorder %s35, 0
    %s37 = scalar_select %p36, %s35, 0
    %p38 = scmp.lt.s32.totalorder %s37, 0
    %s39 = scalar_select %p38, %s37, 0
    %s40 = ssub.s32 %s17, %s29
    %s41 = ssub.s32 %s34, %s39
    %s42 = sor.u32 %s40, %s41
    %p43 = scmp.eq.s32.totalorder %s42, 0
    %s45 = sadd.s32 %s44, 1
    %s46 = scalar_select %p43, %s44, %s45
    %p49 = pneg %p43
    %p50 = scmp.eq.s32.totalorder %s10, 5
    %p51 = por %p49, %p50
    %p52 = scmp.ne.s32.totalorder %s44, %s47
    %p53 = scmp.eq.s32.totalorder %s10, 0
    %p54 = por %p52, %p53
    %p55 = scmp.ne.s32.totalorder %s44, %s47
    %p56 = scmp.eq.s32.totalorder %s15, 5
    %p57 = por %p55, %p56
    %p58 = scmp.ne.s32.totalorder %s47, %s48
    %p59 = scmp.eq.s32.totalorder %s15, 0
    %p60 = por %p58, %p59
    %p61 = scmp.ne.s32.totalorder %s47, %s48
    %p62 = scmp.eq.s32.totalorder %s16, 5
    %p63 = por %p61, %p62
    %p65 = scmp.ne.s32.totalorder %s48, %s64
    %p66 = scmp.eq.s32.totalorder %s16, 0
    %p67 = por %p65, %p66
    %s69 = sadd.s32 %s68, 1
    %p72 = scmp.eq.s32.totalorder %s10, 5
    %p73 = scmp.ne.s32.totalorder %s68, %s70
    %p74 = scmp.eq.s32.totalorder %s10, 0
    %p75 = por %p73, %p74
    %p76 = scmp.ne.s32.totalorder %s68, %s70
    %p77 = scmp.eq.s32.totalorder %s15, 5
    %p78 = por %p76, %p77
    %p79 = scmp.ne.s32.totalorder %s70, %s71
    %p80 = scmp.eq.s32.totalorder %s15, 0
    %p81 = por %p79, %p80
    %p82 = scmp.ne.s32.totalorder %s70, %s71
    %p83 = scmp.eq.s32.totalorder %s16, 5
    %p84 = por %p82, %p83
    %p86 = scmp.ne.s32.totalorder %s71, %s85
    %p87 = scmp.eq.s32.totalorder %s16, 0
    %p88 = por %p86, %p87
    %s90 = sadd.s32 %s89, 1
    %p93 = scmp.eq.s32.totalorder %s10, 5
    %p94 = scmp.ne.s32.totalorder %s89, %s91
    %p95 = scmp.eq.s32.totalorder %s10, 0
    %p96 = por %p94, %p95
    %p97 = scmp.ne.s32.totalorder %s89, %s91
    %p98 = scmp.eq.s32.totalorder %s15, 5
    %p99 = por %p97, %p98
    %p100 = scmp.ne.s32.totalorder %s91, %s92
    %p101 = scmp.eq.s32.totalorder %s15, 0
    %p102 = por %p100, %p101
    %p103 = scmp.ne.s32.totalorder %s91, %s92
    %p104 = scmp.eq.s32.totalorder %s16, 5
    %p105 = por %p103, %p104
    %p107 = scmp.ne.s32.totalorder %s92, %s106
    %p108 = scmp.eq.s32.totalorder %s16, 0
    %p109 = por %p107, %p108
    %s110 = ssub.s32 %s18, %s25
    %p111 = scmp.eq.s32.totalorder %s110, 0
    %s113 = sadd.s32 %s112, 1
    %s114 = scalar_select %p111, %s112, %s113
    %p117 = pneg %p111
    %p118 = scmp.eq.s32.totalorder %s10, 5
    %p119 = por %p117, %p118
    %p120 = scmp.ne.s32.totalorder %s112, %s115
    %p121 = scmp.eq.s32.totalorder %s10, 0
    %p122 = por %p120, %p121
    %p123 = scmp.ne.s32.totalorder %s112, %s115
    %p124 = scmp.eq.s32.totalorder %s15, 5
    %p125 = por %p123, %p124
    %p126 = scmp.ne.s32.totalorder %s115, %s116
    %p127 = scmp.eq.s32.totalorder %s15, 0
    %p128 = por %p126, %p127
    %p129 = scmp.ne.s32.totalorder %s115, %s116
    %p130 = scmp.eq.s32.totalorder %s16, 5
    %p131 = por %p129, %p130
    %p133 = scmp.ne.s32.totalorder %s116, %s132
    %p134 = scmp.eq.s32.totalorder %s16, 0
    %p135 = por %p133, %p134
    %s136 = ssub.s32 %s17, %s29
    %s137 = ssub.s32 %s18, %s25
    %s138 = sor.u32 %s136, %s137
    %p139 = scmp.eq.s32.totalorder %s138, 0
    %s141 = sadd.s32 %s140, 1
    %s142 = scalar_select %p139, %s140, %s141
    %p145 = pneg %p139
    %p146 = scmp.eq.s32.totalorder %s10, 5
    %p147 = por %p145, %p146
    %p148 = scmp.ne.s32.totalorder %s140, %s143
    %p149 = scmp.eq.s32.totalorder %s10, 0
    %p150 = por %p148, %p149
    %p151 = scmp.ne.s32.totalorder %s140, %s143
    %p152 = scmp.eq.s32.totalorder %s15, 5
    %p153 = por %p151, %p152
    %p154 = scmp.ne.s32.totalorder %s143, %s144
    %p155 = scmp.eq.s32.totalorder %s15, 0
    %p156 = por %p154, %p155
    %p157 = scmp.ne.s32.totalorder %s143, %s144
    %p158 = scmp.eq.s32.totalorder %s16, 5
    %p159 = por %p157, %p158
    %p161 = scmp.ne.s32.totalorder %s144, %s160
    %p162 = scmp.eq.s32.totalorder %s16, 0
    %p163 = por %p161, %p162
    %p164 = scmp.le.s32.totalorder 1, %s10
    %p165 = scmp.lt.s32.totalorder %s10, 7
    %p166 = pnand %p164, %p165
    %p167 = pneg %p166
    // Predicated region
    $region9: #{basic_block_forward.5} parent=5 // pred_check
      _
    $region10: #{basic_block_forward.5} parent=5 // pred_check_branch
      %169 = sbr.rel (%p166) target = $region12
    $region11: #{basic_block_forward.5} parent=5 // pred_region
      %s170 = ssub.s32 %s10, 1
      // Predicated region
      $region13: #{basic_block_forward.5} parent=11 // pred_check
        %p171 = pneg %p81
      $region14: #{basic_block_forward.5} parent=11 // pred_check_branch
        %173 = sbr.rel (%p171) target = $region16
      $region15: #{basic_block_forward.5} parent=11 // pred_region
        _
      $region16: #{basic_block_forward.5} parent=11 // pred_fallthru
        _
      // Predicated region
      $region17: #{basic_block_forward.5} parent=11 // pred_check
        %p174 = pneg %p102
      $region18: #{basic_block_forward.5} parent=11 // pred_check_branch
        %176 = sbr.rel (%p174) target = $region20
      $region19: #{basic_block_forward.5} parent=11 // pred_region
        _
      $region20: #{basic_block_forward.5} parent=11 // pred_fallthru
        _
    $region12: #{basic_block_forward.5} parent=5 // pred_fallthru
      _
    %p177 = scmp.lt.s32.totalorder %s10, 6
    // Predicated region
    $region21: #{basic_block_forward.5} parent=5 // pred_check
      %p178 = pneg %p177
    $region22: #{basic_block_forward.5} parent=5 // pred_check_branch
      %180 = sbr.rel (%p178) target = $region24
    $region23: #{basic_block_forward.5} parent=5 // pred_region
      // Predicated region
      $region25: #{basic_block_forward.5} parent=23 // pred_check
        %p181 = pneg %p54
      $region26: #{basic_block_forward.5} parent=23 // pred_check_branch
        %183 = sbr.rel (%p181) target = $region28
      $region27: #{basic_block_forward.5} parent=23 // pred_region
        %s184 = ssub.s32 %s18, 1
        %p185 = scmp.gt.s32.totalorder %s184, 0
        %s186 = scalar_select %p185, %s184, 0
        %p187 = scmp.lt.s32.totalorder %s186, 0
        %s188 = scalar_select %p187, %s186, 0
        %s189 = smul.u32 32, %s188
        %p190 = scmp.lt.s32.totalorder %s17, 1
        %s191 = scalar_select %p190, %s17, 1
        %p192 = scmp.lt.s32.totalorder %s189, 31
        %s193 = scalar_select %p192, %s189, 31
        %s194 = smul.addr %s191, 32
        %s195 = sadd.s32 %s193, %s194
        %s196 = smul.addr %s195, 4
        %s197 = scalar_lea.vmem %s0, %s196
        %s198 = ssub.s32 %s18, 1
        %p199 = scmp.gt.s32.totalorder %s198, 0
        %s200 = scalar_select %p199, %s198, 0
        %p201 = scmp.lt.s32.totalorder %s200, 0
        %s202 = scalar_select %p201, %s200, 0
        %s203 = smul.u32 32, %s202
      $region28: #{basic_block_forward.5} parent=23 // pred_fallthru
        _
      // Predicated region
      $region29: #{basic_block_forward.5} parent=23 // pred_check
        %p204 = pneg %p122
      $region30: #{basic_block_forward.5} parent=23 // pred_check_branch
        %206 = sbr.rel (%p204) target = $region32
      $region31: #{basic_block_forward.5} parent=23 // pred_region
        %s207 = smul.u32 32, %s18
        %p208 = scmp.lt.s32.totalorder %s207, 95
        %s209 = scalar_select %p208, %s207, 95
        %s210 = smul.addr %s209, 8
        %s211 = scalar_lea.vmem %s3, %s210
        %s212 = smul.u32 32, %s18
      $region32: #{basic_block_forward.5} parent=23 // pred_fallthru
        _
    $region24: #{basic_block_forward.5} parent=5 // pred_fallthru
      _
    %p213 = scmp.le.s32.totalorder 1, %s10
    %p214 = scmp.lt.s32.totalorder %s10, 7
    %p215 = pnand %p213, %p214
    %p216 = pneg %p215
    // Predicated region
    $region33: #{basic_block_forward.5} parent=5 // pred_check
      _
    $region34: #{basic_block_forward.5} parent=5 // pred_check_branch
      %218 = sbr.rel (%p215) target = $region36
    $region35: #{basic_block_forward.5} parent=5 // pred_region
      %s219 = ssub.s32 %s10, 1
      %s220 = ssub.s32 %s20, 1
      %p221 = scmp.gt.s32.totalorder %s220, 0
      %s222 = scalar_select %p221, %s220, 0
      %p223 = scmp.lt.s32.totalorder %s222, 0
      %s224 = scalar_select %p223, %s222, 0
      %s225 = smul.u32 32, %s224
      %p226 = scmp.lt.s32.totalorder %s19, 1
      %s227 = scalar_select %p226, %s19, 1
      %p228 = scmp.lt.s32.totalorder %s225, 31
      %s229 = scalar_select %p228, %s225, 31
      %s230 = smul.addr %s227, 32
      %s231 = sadd.s32 %s229, %s230
      %s232 = smul.addr %s231, 4
      %s233 = scalar_lea.vmem %s0, %s232
      %p234 = pneg %p60
      %p235 = pneg %p57
      %p236 = pneg %p81
      %p237 = pneg %p78
      %p238 = pneg %p102
      %p239 = pneg %p99
      %s240 = smul.u32 32, %s20
      %p241 = scmp.lt.s32.totalorder %s240, 95
      %s242 = scalar_select %p241, %s240, 95
      %s243 = smul.addr %s242, 8
      %s244 = scalar_lea.vmem %s3, %s243
      %p245 = pneg %p128
      %p246 = pneg %p125
      %p247 = pneg %p156
      %p248 = pneg %p153
      %s249 = smul.u32 32, %s20
      %p250 = scmp.lt.s32.totalorder %s19, 1
      %s251 = scalar_select %p250, %s19, 1
      %p252 = scmp.lt.s32.totalorder %s249, 95
      %s253 = scalar_select %p252, %s249, 95
      %s254 = smul.addr %s251, 96
      %s255 = sadd.s32 %s253, %s254
      %s256 = smul.addr %s255, 8
      %s257 = scalar_lea.vmem %s4, %s256
      %s258 = ssub.s32 %s20, 1
      %p259 = scmp.gt.s32.totalorder %s258, 0
      %s260 = scalar_select %p259, %s258, 0
      %p261 = scmp.lt.s32.totalorder %s260, 0
      %s262 = scalar_select %p261, %s260, 0
      %s263 = smul.u32 32, %s262
      %p264 = scmp.lt.s32.totalorder %s19, 1
      %s265 = scalar_select %p264, %s19, 1
      %p266 = scmp.lt.s32.totalorder %s263, 31
      %s267 = scalar_select %p266, %s263, 31
      %s268 = smul.addr %s265, 32
      %s269 = sadd.s32 %s267, %s268
      %s270 = smul.addr %s269, 4
      %s271 = scalar_lea.vmem %s0, %s270
      %s272 = ssub.s32 %s20, 1
      %p273 = scmp.gt.s32.totalorder %s272, 0
      %s274 = scalar_select %p273, %s272, 0
      %p275 = scmp.lt.s32.totalorder %s274, 0
      %s276 = scalar_select %p275, %s274, 0
      %s277 = smul.u32 32, %s276
      %s278 = smul.u32 32, %s20
      %p279 = scmp.lt.s32.totalorder %s278, 95
      %s280 = scalar_select %p279, %s278, 95
      %s281 = smul.addr %s280, 8
      %s282 = scalar_lea.vmem %s3, %s281
      %s283 = smul.u32 32, %s20
      %s284 = smul.u32 32, %s20
      %p285 = scmp.lt.s32.totalorder %s19, 1
      %s286 = scalar_select %p285, %s19, 1
      %p287 = scmp.lt.s32.totalorder %s284, 95
      %s288 = scalar_select %p287, %s284, 95
      %s289 = smul.addr %s286, 96
      %s290 = sadd.s32 %s288, %s289
      %s291 = smul.addr %s290, 8
      %s292 = scalar_lea.vmem %s4, %s291
      %s293 = smul.u32 32, %s20
      %v294 = vld [vmem:[%s271] sm:$0xf]
      %v295 = vld [vmem:[%s271 + $0x4] sm:$0xf]
      %v296 = vld [vmem:[%s271 + $0x8] sm:$0xf]
      %v297 = vld [vmem:[%s271 + $0xc] sm:$0xf]
      %v298 = vld [vmem:[%s271 + $0x10] sm:$0xf]
      %v299 = vld [vmem:[%s271 + $0x14] sm:$0xf]
      %v300 = vld [vmem:[%s271 + $0x18] sm:$0xf]
      %v301 = vld [vmem:[%s271 + $0x1c] sm:$0xf]
      %v302 = vld [vmem:[%s271 + $0x20] sm:$0xf]
      %v303 = vld [vmem:[%s271 + $0x24] sm:$0xf]
      %v304 = vld [vmem:[%s271 + $0x28] sm:$0xf]
      %v305 = vld [vmem:[%s271 + $0x2c] sm:$0xf]
      %v306 = vld [vmem:[%s271 + $0x30] sm:$0xf]
      %v307 = vld [vmem:[%s271 + $0x34] sm:$0xf]
      %v308 = vld [vmem:[%s271 + $0x38] sm:$0xf]
      %v309 = vld [vmem:[%s271 + $0x3c] sm:$0xf]
      %v310 = vld [vmem:[%s271 + $0x40] sm:$0xf]
      %v311 = vld [vmem:[%s271 + $0x44] sm:$0xf]
      %v312 = vld [vmem:[%s271 + $0x48] sm:$0xf]
      %v313 = vld [vmem:[%s271 + $0x4c] sm:$0xf]
      %v314 = vld [vmem:[%s271 + $0x50] sm:$0xf]
      %v315 = vld [vmem:[%s271 + $0x54] sm:$0xf]
      %v316 = vld [vmem:[%s271 + $0x58] sm:$0xf]
      %v317 = vld [vmem:[%s271 + $0x5c] sm:$0xf]
      %v318 = vld [vmem:[%s271 + $0x60] sm:$0xf]
      %v319 = vld [vmem:[%s271 + $0x64] sm:$0xf]
      %v320 = vld [vmem:[%s271 + $0x68] sm:$0xf]
      %v321 = vld [vmem:[%s271 + $0x6c] sm:$0xf]
      %v322 = vld [vmem:[%s271 + $0x70] sm:$0xf]
      %v323 = vld [vmem:[%s271 + $0x74] sm:$0xf]
      %v324 = vld [vmem:[%s271 + $0x78] sm:$0xf]
      %v325 = vld [vmem:[%s271 + $0x7c] sm:$0xf]
      %v326 = vunpack.c.l.bf16 %v294
      %v327 = vunpack.c.l.bf16 %v295
      %v328 = vunpack.c.l.bf16 %v296
      %v329 = vunpack.c.l.bf16 %v297
      %v330 = vunpack.c.l.bf16 %v298
      %v331 = vunpack.c.l.bf16 %v299
      %v332 = vunpack.c.l.bf16 %v300
      %v333 = vunpack.c.l.bf16 %v301
      %v334 = vunpack.c.l.bf16 %v302
      %v335 = vunpack.c.l.bf16 %v303
      %v336 = vunpack.c.l.bf16 %v304
      %v337 = vunpack.c.l.bf16 %v305
      %v338 = vunpack.c.l.bf16 %v306
      %v339 = vunpack.c.l.bf16 %v307
      %v340 = vunpack.c.l.bf16 %v308
      %v341 = vunpack.c.l.bf16 %v309
      %v342 = vunpack.c.l.bf16 %v310
      %v343 = vunpack.c.l.bf16 %v311
      %v344 = vunpack.c.l.bf16 %v312
      %v345 = vunpack.c.l.bf16 %v313
      %v346 = vunpack.c.l.bf16 %v314
      %v347 = vunpack.c.l.bf16 %v315
      %v348 = vunpack.c.l.bf16 %v316
      %v349 = vunpack.c.l.bf16 %v317
      %v350 = vunpack.c.l.bf16 %v318
      %v351 = vunpack.c.l.bf16 %v319
      %v352 = vunpack.c.l.bf16 %v320
      %v353 = vunpack.c.l.bf16 %v321
      %v354 = vunpack.c.l.bf16 %v322
      %v355 = vunpack.c.l.bf16 %v323
      %v356 = vunpack.c.l.bf16 %v324
      %v357 = vunpack.c.l.bf16 %v325
      %v358 = vld [vmem:[%s1] sm:$0x1]
      %v360 = vlaneseq
      %v361 = vshrl.u32 %v360, 7
      %v362 = vsub.s32 0, %v361
      %v363 = vrot.slane %v358, %v362
      %v365 = vmul.f32 %v326, %v363
      %v366 = vmul.f32 %v327, %v363
      %v367 = vmul.f32 %v328, %v363
      %v368 = vmul.f32 %v329, %v363
      %v369 = vmul.f32 %v330, %v363
      %v370 = vmul.f32 %v331, %v363
      %v371 = vmul.f32 %v332, %v363
      %v372 = vmul.f32 %v333, %v363
      %v373 = vmul.f32 %v334, %v363
      %v374 = vmul.f32 %v335, %v363
      %v375 = vmul.f32 %v336, %v363
      %v376 = vmul.f32 %v337, %v363
      %v377 = vmul.f32 %v338, %v363
      %v378 = vmul.f32 %v339, %v363
      %v379 = vmul.f32 %v340, %v363
      %v380 = vmul.f32 %v341, %v363
      %v381 = vmul.f32 %v342, %v363
      %v382 = vmul.f32 %v343, %v363
      %v383 = vmul.f32 %v344, %v363
      %v384 = vmul.f32 %v345, %v363
      %v385 = vmul.f32 %v346, %v363
      %v386 = vmul.f32 %v347, %v363
      %v387 = vmul.f32 %v348, %v363
      %v388 = vmul.f32 %v349, %v363
      %v389 = vmul.f32 %v350, %v363
      %v390 = vmul.f32 %v351, %v363
      %v391 = vmul.f32 %v352, %v363
      %v392 = vmul.f32 %v353, %v363
      %v393 = vmul.f32 %v354, %v363
      %v394 = vmul.f32 %v355, %v363
      %v395 = vmul.f32 %v356, %v363
      %v396 = vmul.f32 %v357, %v363
      %v397 = vld [vmem:[%s2] sm:$0x1]
      %v399 = vlaneseq
      %v400 = vshrl.u32 %v399, 7
      %v401 = vsub.s32 0, %v400
      %v402 = vrot.slane %v397, %v401
      %v404 = vadd.f32 %v365, %v402
      %v405 = vadd.f32 %v366, %v402
      %v406 = vadd.f32 %v367, %v402
      %v407 = vadd.f32 %v368, %v402
      %v408 = vadd.f32 %v369, %v402
      %v409 = vadd.f32 %v370, %v402
      %v410 = vadd.f32 %v371, %v402
      %v411 = vadd.f32 %v372, %v402
      %v412 = vadd.f32 %v373, %v402
      %v413 = vadd.f32 %v374, %v402
      %v414 = vadd.f32 %v375, %v402
      %v415 = vadd.f32 %v376, %v402
      %v416 = vadd.f32 %v377, %v402
      %v417 = vadd.f32 %v378, %v402
      %v418 = vadd.f32 %v379, %v402
      %v419 = vadd.f32 %v380, %v402
      %v420 = vadd.f32 %v381, %v402
      %v421 = vadd.f32 %v382, %v402
      %v422 = vadd.f32 %v383, %v402
      %v423 = vadd.f32 %v384, %v402
      %v424 = vadd.f32 %v385, %v402
      %v425 = vadd.f32 %v386, %v402
      %v426 = vadd.f32 %v387, %v402
      %v427 = vadd.f32 %v388, %v402
      %v428 = vadd.f32 %v389, %v402
      %v429 = vadd.f32 %v390, %v402
      %v430 = vadd.f32 %v391, %v402
      %v431 = vadd.f32 %v392, %v402
      %v432 = vadd.f32 %v393, %v402
      %v433 = vadd.f32 %v394, %v402
      %v434 = vadd.f32 %v395, %v402
      %v435 = vadd.f32 %v396, %v402
      %v436 = vmax.f32 %v404, 0.0
      %v437 = vmax.f32 %v405, 0.0
      %v438 = vmax.f32 %v406, 0.0
      %v439 = vmax.f32 %v407, 0.0
      %v440 = vmax.f32 %v408, 0.0
      %v441 = vmax.f32 %v409, 0.0
      %v442 = vmax.f32 %v410, 0.0
      %v443 = vmax.f32 %v411, 0.0
      %v444 = vmax.f32 %v412, 0.0
      %v445 = vmax.f32 %v413, 0.0
      %v446 = vmax.f32 %v414, 0.0
      %v447 = vmax.f32 %v415, 0.0
      %v448 = vmax.f32 %v416, 0.0
      %v449 = vmax.f32 %v417, 0.0
      %v450 = vmax.f32 %v418, 0.0
      %v451 = vmax.f32 %v419, 0.0
      %v452 = vmax.f32 %v420, 0.0
      %v453 = vmax.f32 %v421, 0.0
      %v454 = vmax.f32 %v422, 0.0
      %v455 = vmax.f32 %v423, 0.0
      %v456 = vmax.f32 %v424, 0.0
      %v457 = vmax.f32 %v425, 0.0
      %v458 = vmax.f32 %v426, 0.0
      %v459 = vmax.f32 %v427, 0.0
      %v460 = vmax.f32 %v428, 0.0
      %v461 = vmax.f32 %v429, 0.0
      %v462 = vmax.f32 %v430, 0.0
      %v463 = vmax.f32 %v431, 0.0
      %v464 = vmax.f32 %v432, 0.0
      %v465 = vmax.f32 %v433, 0.0
      %v466 = vmax.f32 %v434, 0.0
      %v467 = vmax.f32 %v435, 0.0
      %v468 = vld [vmem:[%s282] sm:$0xff]
      %v469 = vld [vmem:[%s282 + $0x8] sm:$0xff]
      %v470 = vld [vmem:[%s282 + $0x10] sm:$0xff]
      %v471 = vld [vmem:[%s282 + $0x18] sm:$0xff]
      %v472 = vld [vmem:[%s282 + $0x20] sm:$0xff]
      %v473 = vld [vmem:[%s282 + $0x28] sm:$0xff]
      %v474 = vld [vmem:[%s282 + $0x30] sm:$0xff]
      %v475 = vld [vmem:[%s282 + $0x38] sm:$0xff]
      %v476 = vld [vmem:[%s282 + $0x40] sm:$0xff]
      %v477 = vld [vmem:[%s282 + $0x48] sm:$0xff]
      %v478 = vld [vmem:[%s282 + $0x50] sm:$0xff]
      %v479 = vld [vmem:[%s282 + $0x58] sm:$0xff]
      %v480 = vld [vmem:[%s282 + $0x60] sm:$0xff]
      %v481 = vld [vmem:[%s282 + $0x68] sm:$0xff]
      %v482 = vld [vmem:[%s282 + $0x70] sm:$0xff]
      %v483 = vld [vmem:[%s282 + $0x78] sm:$0xff]
      %v484 = vld [vmem:[%s282 + $0x80] sm:$0xff]
      %v485 = vld [vmem:[%s282 + $0x88] sm:$0xff]
      %v486 = vld [vmem:[%s282 + $0x90] sm:$0xff]
      %v487 = vld [vmem:[%s282 + $0x98] sm:$0xff]
      %v488 = vld [vmem:[%s282 + $0xa0] sm:$0xff]
      %v489 = vld [vmem:[%s282 + $0xa8] sm:$0xff]
      %v490 = vld [vmem:[%s282 + $0xb0] sm:$0xff]
      %v491 = vld [vmem:[%s282 + $0xb8] sm:$0xff]
      %v492 = vld [vmem:[%s282 + $0xc0] sm:$0xff]
      %v493 = vld [vmem:[%s282 + $0xc8] sm:$0xff]
      %v494 = vld [vmem:[%s282 + $0xd0] sm:$0xff]
      %v495 = vld [vmem:[%s282 + $0xd8] sm:$0xff]
      %v496 = vld [vmem:[%s282 + $0xe0] sm:$0xff]
      %v497 = vld [vmem:[%s282 + $0xe8] sm:$0xff]
      %v498 = vld [vmem:[%s282 + $0xf0] sm:$0xff]
      %v499 = vld [vmem:[%s282 + $0xf8] sm:$0xff]
      %vm500 = vcmp.gt.f32.partialorder %v468, 0.5
      %vm501 = vcmp.gt.f32.partialorder %v469, 0.5
      %vm502 = vcmp.gt.f32.partialorder %v470, 0.5
      %vm503 = vcmp.gt.f32.partialorder %v471, 0.5
      %vm504 = vcmp.gt.f32.partialorder %v472, 0.5
      %vm505 = vcmp.gt.f32.partialorder %v473, 0.5
      %vm506 = vcmp.gt.f32.partialorder %v474, 0.5
      %vm507 = vcmp.gt.f32.partialorder %v475, 0.5
      %vm508 = vcmp.gt.f32.partialorder %v476, 0.5
      %vm509 = vcmp.gt.f32.partialorder %v477, 0.5
      %vm510 = vcmp.gt.f32.partialorder %v478, 0.5
      %vm511 = vcmp.gt.f32.partialorder %v479, 0.5
      %vm512 = vcmp.gt.f32.partialorder %v480, 0.5
      %vm513 = vcmp.gt.f32.partialorder %v481, 0.5
      %vm514 = vcmp.gt.f32.partialorder %v482, 0.5
      %vm515 = vcmp.gt.f32.partialorder %v483, 0.5
      %vm516 = vcmp.gt.f32.partialorder %v484, 0.5
      %vm517 = vcmp.gt.f32.partialorder %v485, 0.5
      %vm518 = vcmp.gt.f32.partialorder %v486, 0.5
      %vm519 = vcmp.gt.f32.partialorder %v487, 0.5
      %vm520 = vcmp.gt.f32.partialorder %v488, 0.5
      %vm521 = vcmp.gt.f32.partialorder %v489, 0.5
      %vm522 = vcmp.gt.f32.partialorder %v490, 0.5
      %vm523 = vcmp.gt.f32.partialorder %v491, 0.5
      %vm524 = vcmp.gt.f32.partialorder %v492, 0.5
      %vm525 = vcmp.gt.f32.partialorder %v493, 0.5
      %vm526 = vcmp.gt.f32.partialorder %v494, 0.5
      %vm527 = vcmp.gt.f32.partialorder %v495, 0.5
      %vm528 = vcmp.gt.f32.partialorder %v496, 0.5
      %vm529 = vcmp.gt.f32.partialorder %v497, 0.5
      %vm530 = vcmp.gt.f32.partialorder %v498, 0.5
      %vm531 = vcmp.gt.f32.partialorder %v499, 0.5
      %v532 = vsel %vm500, 1, 0
      %v533 = vsel %vm501, 1, 0
      %v534 = vsel %vm502, 1, 0
      %v535 = vsel %vm503, 1, 0
      %v536 = vsel %vm504, 1, 0
      %v537 = vsel %vm505, 1, 0
      %v538 = vsel %vm506, 1, 0
      %v539 = vsel %vm507, 1, 0
      %v540 = vsel %vm508, 1, 0
      %v541 = vsel %vm509, 1, 0
      %v542 = vsel %vm510, 1, 0
      %v543 = vsel %vm511, 1, 0
      %v544 = vsel %vm512, 1, 0
      %v545 = vsel %vm513, 1, 0
      %v546 = vsel %vm514, 1, 0
      %v547 = vsel %vm515, 1, 0
      %v548 = vsel %vm516, 1, 0
      %v549 = vsel %vm517, 1, 0
      %v550 = vsel %vm518, 1, 0
      %v551 = vsel %vm519, 1, 0
      %v552 = vsel %vm520, 1, 0
      %v553 = vsel %vm521, 1, 0
      %v554 = vsel %vm522, 1, 0
      %v555 = vsel %vm523, 1, 0
      %v556 = vsel %vm524, 1, 0
      %v557 = vsel %vm525, 1, 0
      %v558 = vsel %vm526, 1, 0
      %v559 = vsel %vm527, 1, 0
      %v560 = vsel %vm528, 1, 0
      %v561 = vsel %vm529, 1, 0
      %v562 = vsel %vm530, 1, 0
      %v563 = vsel %vm531, 1, 0
      %564 = vset.pattern.permute.xlu0 0
      %565 = vperm.xlu0 %564, %v532
      %v566 = vpop.permute.xlu0 %565
      %567 = vset.pattern.permute.xlu0 0
      %568 = vperm.xlu0 %567, %v533
      %v569 = vpop.permute.xlu0 %568
      %570 = vset.pattern.permute.xlu0 0
      %571 = vperm.xlu0 %570, %v534
      %v572 = vpop.permute.xlu0 %571
      %573 = vset.pattern.permute.xlu0 0
      %574 = vperm.xlu0 %573, %v535
      %v575 = vpop.permute.xlu0 %574
      %576 = vset.pattern.permute.xlu0 0
      %577 = vperm.xlu0 %576, %v536
      %v578 = vpop.permute.xlu0 %577
      %579 = vset.pattern.permute.xlu0 0
      %580 = vperm.xlu0 %579, %v537
      %v581 = vpop.permute.xlu0 %580
      %582 = vset.pattern.permute.xlu0 0
      %583 = vperm.xlu0 %582, %v538
      %v584 = vpop.permute.xlu0 %583
      %585 = vset.pattern.permute.xlu0 0
      %586 = vperm.xlu0 %585, %v539
      %v587 = vpop.permute.xlu0 %586
      %588 = vset.pattern.permute.xlu0 0
      %589 = vperm.xlu0 %588, %v540
      %v590 = vpop.permute.xlu0 %589
      %591 = vset.pattern.permute.xlu0 0
      %592 = vperm.xlu0 %591, %v541
      %v593 = vpop.permute.xlu0 %592
      %594 = vset.pattern.permute.xlu0 0
      %595 = vperm.xlu0 %594, %v542
      %v596 = vpop.permute.xlu0 %595
      %597 = vset.pattern.permute.xlu0 0
      %598 = vperm.xlu0 %597, %v543
      %v599 = vpop.permute.xlu0 %598
      %600 = vset.pattern.permute.xlu0 0
      %601 = vperm.xlu0 %600, %v544
      %v602 = vpop.permute.xlu0 %601
      %603 = vset.pattern.permute.xlu0 0
      %604 = vperm.xlu0 %603, %v545
      %v605 = vpop.permute.xlu0 %604
      %606 = vset.pattern.permute.xlu0 0
      %607 = vperm.xlu0 %606, %v546
      %v608 = vpop.permute.xlu0 %607
      %609 = vset.pattern.permute.xlu0 0
      %610 = vperm.xlu0 %609, %v547
      %v611 = vpop.permute.xlu0 %610
      %612 = vset.pattern.permute.xlu0 0
      %613 = vperm.xlu0 %612, %v548
      %v614 = vpop.permute.xlu0 %613
      %615 = vset.pattern.permute.xlu0 0
      %616 = vperm.xlu0 %615, %v549
      %v617 = vpop.permute.xlu0 %616
      %618 = vset.pattern.permute.xlu0 0
      %619 = vperm.xlu0 %618, %v550
      %v620 = vpop.permute.xlu0 %619
      %621 = vset.pattern.permute.xlu0 0
      %622 = vperm.xlu0 %621, %v551
      %v623 = vpop.permute.xlu0 %622
      %624 = vset.pattern.permute.xlu0 0
      %625 = vperm.xlu0 %624, %v552
      %v626 = vpop.permute.xlu0 %625
      %627 = vset.pattern.permute.xlu0 0
      %628 = vperm.xlu0 %627, %v553
      %v629 = vpop.permute.xlu0 %628
      %630 = vset.pattern.permute.xlu0 0
      %631 = vperm.xlu0 %630, %v554
      %v632 = vpop.permute.xlu0 %631
      %633 = vset.pattern.permute.xlu0 0
      %634 = vperm.xlu0 %633, %v555
      %v635 = vpop.permute.xlu0 %634
      %636 = vset.pattern.permute.xlu0 0
      %637 = vperm.xlu0 %636, %v556
      %v638 = vpop.permute.xlu0 %637
      %639 = vset.pattern.permute.xlu0 0
      %640 = vperm.xlu0 %639, %v557
      %v641 = vpop.permute.xlu0 %640
      %642 = vset.pattern.permute.xlu0 0
      %643 = vperm.xlu0 %642, %v558
      %v644 = vpop.permute.xlu0 %643
      %645 = vset.pattern.permute.xlu0 0
      %646 = vperm.xlu0 %645, %v559
      %v647 = vpop.permute.xlu0 %646
      %648 = vset.pattern.permute.xlu0 0
      %649 = vperm.xlu0 %648, %v560
      %v650 = vpop.permute.xlu0 %649
      %651 = vset.pattern.permute.xlu0 0
      %652 = vperm.xlu0 %651, %v561
      %v653 = vpop.permute.xlu0 %652
      %654 = vset.pattern.permute.xlu0 0
      %655 = vperm.xlu0 %654, %v562
      %v656 = vpop.permute.xlu0 %655
      %657 = vset.pattern.permute.xlu0 0
      %658 = vperm.xlu0 %657, %v563
      %v659 = vpop.permute.xlu0 %658
      %vm660 = vcmp.eq.s32.totalorder %v566, 1
      %vm661 = vcmp.eq.s32.totalorder %v569, 1
      %vm662 = vcmp.eq.s32.totalorder %v572, 1
      %vm663 = vcmp.eq.s32.totalorder %v575, 1
      %vm664 = vcmp.eq.s32.totalorder %v578, 1
      %vm665 = vcmp.eq.s32.totalorder %v581, 1
      %vm666 = vcmp.eq.s32.totalorder %v584, 1
      %vm667 = vcmp.eq.s32.totalorder %v587, 1
      %vm668 = vcmp.eq.s32.totalorder %v590, 1
      %vm669 = vcmp.eq.s32.totalorder %v593, 1
      %vm670 = vcmp.eq.s32.totalorder %v596, 1
      %vm671 = vcmp.eq.s32.totalorder %v599, 1
      %vm672 = vcmp.eq.s32.totalorder %v602, 1
      %vm673 = vcmp.eq.s32.totalorder %v605, 1
      %vm674 = vcmp.eq.s32.totalorder %v608, 1
      %vm675 = vcmp.eq.s32.totalorder %v611, 1
      %vm676 = vcmp.eq.s32.totalorder %v614, 1
      %vm677 = vcmp.eq.s32.totalorder %v617, 1
      %vm678 = vcmp.eq.s32.totalorder %v620, 1
      %vm679 = vcmp.eq.s32.totalorder %v623, 1
      %vm680 = vcmp.eq.s32.totalorder %v626, 1
      %vm681 = vcmp.eq.s32.totalorder %v629, 1
      %vm682 = vcmp.eq.s32.totalorder %v632, 1
      %vm683 = vcmp.eq.s32.totalorder %v635, 1
      %vm684 = vcmp.eq.s32.totalorder %v638, 1
      %vm685 = vcmp.eq.s32.totalorder %v641, 1
      %vm686 = vcmp.eq.s32.totalorder %v644, 1
      %vm687 = vcmp.eq.s32.totalorder %v647, 1
      %vm688 = vcmp.eq.s32.totalorder %v650, 1
      %vm689 = vcmp.eq.s32.totalorder %v653, 1
      %vm690 = vcmp.eq.s32.totalorder %v656, 1
      %vm691 = vcmp.eq.s32.totalorder %v659, 1
      %v692 = vsel %vm660, %v436, 0.0
      %v693 = vsel %vm661, %v437, 0.0
      %v694 = vsel %vm662, %v438, 0.0
      %v695 = vsel %vm663, %v439, 0.0
      %v696 = vsel %vm664, %v440, 0.0
      %v697 = vsel %vm665, %v441, 0.0
      %v698 = vsel %vm666, %v442, 0.0
      %v699 = vsel %vm667, %v443, 0.0
      %v700 = vsel %vm668, %v444, 0.0
      %v701 = vsel %vm669, %v445, 0.0
      %v702 = vsel %vm670, %v446, 0.0
      %v703 = vsel %vm671, %v447, 0.0
      %v704 = vsel %vm672, %v448, 0.0
      %v705 = vsel %vm673, %v449, 0.0
      %v706 = vsel %vm674, %v450, 0.0
      %v707 = vsel %vm675, %v451, 0.0
      %v708 = vsel %vm676, %v452, 0.0
      %v709 = vsel %vm677, %v453, 0.0
      %v710 = vsel %vm678, %v454, 0.0
      %v711 = vsel %vm679, %v455, 0.0
      %v712 = vsel %vm680, %v456, 0.0
      %v713 = vsel %vm681, %v457, 0.0
      %v714 = vsel %vm682, %v458, 0.0
      %v715 = vsel %vm683, %v459, 0.0
      %v716 = vsel %vm684, %v460, 0.0
      %v717 = vsel %vm685, %v461, 0.0
      %v718 = vsel %vm686, %v462, 0.0
      %v719 = vsel %vm687, %v463, 0.0
      %v720 = vsel %vm688, %v464, 0.0
      %v721 = vsel %vm689, %v465, 0.0
      %v722 = vsel %vm690, %v466, 0.0
      %v723 = vsel %vm691, %v467, 0.0
      %724 = vst [vmem:[%s292] sm:$0xff] %v692
      %725 = vst [vmem:[%s292 + $0x8] sm:$0xff] %v693
      %726 = vst [vmem:[%s292 + $0x10] sm:$0xff] %v694
      %727 = vst [vmem:[%s292 + $0x18] sm:$0xff] %v695
      %728 = vst [vmem:[%s292 + $0x20] sm:$0xff] %v696
      %729 = vst [vmem:[%s292 + $0x28] sm:$0xff] %v697
      %730 = vst [vmem:[%s292 + $0x30] sm:$0xff] %v698
      %731 = vst [vmem:[%s292 + $0x38] sm:$0xff] %v699
      %732 = vst [vmem:[%s292 + $0x40] sm:$0xff] %v700
      %733 = vst [vmem:[%s292 + $0x48] sm:$0xff] %v701
      %734 = vst [vmem:[%s292 + $0x50] sm:$0xff] %v702
      %735 = vst [vmem:[%s292 + $0x58] sm:$0xff] %v703
      %736 = vst [vmem:[%s292 + $0x60] sm:$0xff] %v704
      %737 = vst [vmem:[%s292 + $0x68] sm:$0xff] %v705
      %738 = vst [vmem:[%s292 + $0x70] sm:$0xff] %v706
      %739 = vst [vmem:[%s292 + $0x78] sm:$0xff] %v707
      %740 = vst [vmem:[%s292 + $0x80] sm:$0xff] %v708
      %741 = vst [vmem:[%s292 + $0x88] sm:$0xff] %v709
      %742 = vst [vmem:[%s292 + $0x90] sm:$0xff] %v710
      %743 = vst [vmem:[%s292 + $0x98] sm:$0xff] %v711
      %744 = vst [vmem:[%s292 + $0xa0] sm:$0xff] %v712
      %745 = vst [vmem:[%s292 + $0xa8] sm:$0xff] %v713
      %746 = vst [vmem:[%s292 + $0xb0] sm:$0xff] %v714
      %747 = vst [vmem:[%s292 + $0xb8] sm:$0xff] %v715
      %748 = vst [vmem:[%s292 + $0xc0] sm:$0xff] %v716
      %749 = vst [vmem:[%s292 + $0xc8] sm:$0xff] %v717
      %750 = vst [vmem:[%s292 + $0xd0] sm:$0xff] %v718
      %751 = vst [vmem:[%s292 + $0xd8] sm:$0xff] %v719
      %752 = vst [vmem:[%s292 + $0xe0] sm:$0xff] %v720
      %753 = vst [vmem:[%s292 + $0xe8] sm:$0xff] %v721
      %754 = vst [vmem:[%s292 + $0xf0] sm:$0xff] %v722
      %755 = vst [vmem:[%s292 + $0xf8] sm:$0xff] %v723
      %s756 = smul.u32 32, %s20
      %p757 = scmp.lt.s32.totalorder %s19, 1
      %s758 = scalar_select %p757, %s19, 1
      %p759 = scmp.lt.s32.totalorder %s756, 95
      %s760 = scalar_select %p759, %s756, 95
      %s761 = smul.addr %s758, 96
      %s762 = sadd.s32 %s760, %s761
      %s763 = smul.addr %s762, 8
      %s764 = scalar_lea.vmem %s4, %s763
      // Predicated region
      $region37: #{basic_block_forward.5} parent=35 // pred_check
        %p765 = pneg %p153
      $region38: #{basic_block_forward.5} parent=35 // pred_check_branch
        %767 = sbr.rel (%p765) target = $region40
      $region39: #{basic_block_forward.5} parent=35 // pred_region
        %s768 = smul.u32 32, %s20
      $region40: #{basic_block_forward.5} parent=35 // pred_fallthru
        _
    $region36: #{basic_block_forward.5} parent=5 // pred_fallthru
      _
    %p769 = scmp.le.s32.totalorder 2, %s10
    // Predicated region
    $region41: #{basic_block_forward.5} parent=5 // pred_check
      %p770 = pneg %p769
    $region42: #{basic_block_forward.5} parent=5 // pred_check_branch
      %772 = sbr.rel (%p770) target = $region44
    $region43: #{basic_block_forward.5} parent=5 // pred_region
      %s773 = ssub.s32 %s10, 2
      // Predicated region
      $region45: #{basic_block_forward.5} parent=43 // pred_check
        %p774 = pneg %p159
      $region46: #{basic_block_forward.5} parent=43 // pred_check_branch
        %776 = sbr.rel (%p774) target = $region48
      $region47: #{basic_block_forward.5} parent=43 // pred_region
        %s777 = smul.u32 32, %s22
        %p778 = scmp.lt.s32.totalorder %s21, 1
        %s779 = scalar_select %p778, %s21, 1
        %p780 = scmp.lt.s32.totalorder %s777, 95
        %s781 = scalar_select %p780, %s777, 95
        %s782 = smul.addr %s779, 96
        %s783 = sadd.s32 %s781, %s782
        %s784 = smul.addr %s783, 8
        %s785 = scalar_lea.vmem %s4, %s784
      $region48: #{basic_block_forward.5} parent=43 // pred_fallthru
        _
    $region44: #{basic_block_forward.5} parent=5 // pred_fallthru
      _
  $region6: #{basic_block_forward.5} parent=0 // loop_footer
    %s14 = sadd.s32 1, %s10
  $region7: #{basic_block_forward.5} parent=0 // loop_footer_branch
    %9 = sbr.rel target = $region3
  $region8: #{basic_block_forward.5} parent=0 // loop_exit
    _

// kernel: basic_block_forward.7
$region0: #{basic_block_forward.7}
  #allocation0 [shape = 'u32[]', space=smem, size = 0x4, offset = 0x4, fixed_abs, tag = 'smem constant byte address 0x4 - core index']
  #allocation1 [shape = 'u32[144,128]{1,0:T(1,128)}', space=vmem, size = 0x12000, scoped, tag = 'internal scratch']
  %s0 = inlined_call_operand.vmem [shape: bf16[2,256,128], index: 0, kind: input, shape index: {}]
  %s1 = inlined_call_operand.vmem [shape: f32[1,128], index: 1, kind: input, shape index: {}]
  %s2 = inlined_call_operand.vmem [shape: f32[1,128], index: 2, kind: input, shape index: {}]
  %s3 = inlined_call_operand.vmem [shape: bf16[2,256,128], index: 3, kind: input, shape index: {}]
  %s4 = inlined_call_operand.vmem [shape: f32[1,128], index: 4, kind: input, shape index: {}]
  %s5 = inlined_call_operand.vmem [shape: f32[1,128], index: 5, kind: input, shape index: {}]
  %s6 = inlined_call_operand.vmem [shape: f32[2,256,128], index: 6, kind: output, shape index: {}]
  %s7 = sld [smem:[#allocation0]]
  $region57: #{basic_block_forward.7} parent=0
    _
  %s9 = ssub.s32 1, %s7
  %s10 = scalar_select 0, %s9, %s7
  loop: start=0, step=1, limit=4
  $region2: #{basic_block_forward.7} parent=0 // loop_pre_header
    _
  $region3: #{basic_block_forward.7} parent=0 // loop_header
    %s12 = sphi 0, %s16
    %p13 = scmp.ge.s32.totalorder %s12, 4
    %s19 = sphi 0, %s31
    %s20 = sphi 0, %s27
    %s21 = sphi 0, %s19
    %s22 = sphi 0, %s20
    %s23 = sphi 0, %s21
    %s24 = sphi 0, %s22
    %s36 = sphi 0, %s38
    %s39 = sphi 0, %s36
    %s40 = sphi 0, %s39
    %s56 = sphi 0, %s40
    %s60 = sphi 0, %s60
    %s62 = sphi 0, %s60
    %s63 = sphi 0, %s62
    %s77 = sphi 0, %s63
    %s81 = sphi 0, %s81
    %s83 = sphi 0, %s81
    %s84 = sphi 0, %s83
    %s98 = sphi 0, %s84
    %s106 = sphi 0, %s108
    %s109 = sphi 0, %s106
    %s110 = sphi 0, %s109
    %s126 = sphi 0, %s110
    %s130 = sphi 0, %s130
    %s132 = sphi 0, %s130
    %s133 = sphi 0, %s132
    %s147 = sphi 0, %s133
    %s151 = sphi 0, %s151
    %s153 = sphi 0, %s151
    %s154 = sphi 0, %s153
    %s168 = sphi 0, %s154
    %s176 = sphi 0, %s178
    %s179 = sphi 0, %s176
    %s180 = sphi 0, %s179
    %s196 = sphi 0, %s180
  $region4: #{basic_block_forward.7} parent=0 // loop_header_branch
    %15 = sbr.rel (%p13) target = $region8
  $region5: #{basic_block_forward.7} parent=0 // loop_body
    %s17 = ssub.s32 %s12, 1
    %s18 = ssub.s32 %s12, 2
    %s25 = sadd.s32 1, %s20
    %p26 = scmp.ge.s32.totalorder %s25, 1
    %s27 = scalar_select %p26, 0, %s25
    %s28 = sadd.s32 1, %s19
    %s29 = scalar_select %p26, %s28, %s19
    %p30 = scmp.ge.s32.totalorder %s29, 2
    %s31 = scalar_select %p30, 0, %s29
    %s32 = ssub.s32 %s19, %s31
    %s33 = ssub.s32 %s20, %s27
    %s34 = sor.u32 %s32, %s33
    %p35 = scmp.eq.s32.totalorder %s34, 0
    %s37 = sadd.s32 %s36, 1
    %s38 = scalar_select %p35, %s36, %s37
    %p41 = pneg %p35
    %p42 = scmp.eq.s32.totalorder %s12, 1
    %p43 = por %p41, %p42
    %p44 = scmp.ne.s32.totalorder %s36, %s39
    %p45 = scmp.eq.s32.totalorder %s12, 0
    %p46 = por %p44, %p45
    %p47 = scmp.ne.s32.totalorder %s36, %s39
    %p48 = scmp.eq.s32.totalorder %s17, 1
    %p49 = por %p47, %p48
    %p50 = scmp.ne.s32.totalorder %s39, %s40
    %p51 = scmp.eq.s32.totalorder %s17, 0
    %p52 = por %p50, %p51
    %p53 = scmp.ne.s32.totalorder %s39, %s40
    %p54 = scmp.eq.s32.totalorder %s18, 1
    %p55 = por %p53, %p54
    %p57 = scmp.ne.s32.totalorder %s40, %s56
    %p58 = scmp.eq.s32.totalorder %s18, 0
    %p59 = por %p57, %p58
    %s61 = sadd.s32 %s60, 1
    %p64 = scmp.eq.s32.totalorder %s12, 1
    %p65 = scmp.ne.s32.totalorder %s60, %s62
    %p66 = scmp.eq.s32.totalorder %s12, 0
    %p67 = por %p65, %p66
    %p68 = scmp.ne.s32.totalorder %s60, %s62
    %p69 = scmp.eq.s32.totalorder %s17, 1
    %p70 = por %p68, %p69
    %p71 = scmp.ne.s32.totalorder %s62, %s63
    %p72 = scmp.eq.s32.totalorder %s17, 0
    %p73 = por %p71, %p72
    %p74 = scmp.ne.s32.totalorder %s62, %s63
    %p75 = scmp.eq.s32.totalorder %s18, 1
    %p76 = por %p74, %p75
    %p78 = scmp.ne.s32.totalorder %s63, %s77
    %p79 = scmp.eq.s32.totalorder %s18, 0
    %p80 = por %p78, %p79
    %s82 = sadd.s32 %s81, 1
    %p85 = scmp.eq.s32.totalorder %s12, 1
    %p86 = scmp.ne.s32.totalorder %s81, %s83
    %p87 = scmp.eq.s32.totalorder %s12, 0
    %p88 = por %p86, %p87
    %p89 = scmp.ne.s32.totalorder %s81, %s83
    %p90 = scmp.eq.s32.totalorder %s17, 1
    %p91 = por %p89, %p90
    %p92 = scmp.ne.s32.totalorder %s83, %s84
    %p93 = scmp.eq.s32.totalorder %s17, 0
    %p94 = por %p92, %p93
    %p95 = scmp.ne.s32.totalorder %s83, %s84
    %p96 = scmp.eq.s32.totalorder %s18, 1
    %p97 = por %p95, %p96
    %p99 = scmp.ne.s32.totalorder %s84, %s98
    %p100 = scmp.eq.s32.totalorder %s18, 0
    %p101 = por %p99, %p100
    %s102 = ssub.s32 %s19, %s31
    %s103 = ssub.s32 %s20, %s27
    %s104 = sor.u32 %s102, %s103
    %p105 = scmp.eq.s32.totalorder %s104, 0
    %s107 = sadd.s32 %s106, 1
    %s108 = scalar_select %p105, %s106, %s107
    %p111 = pneg %p105
    %p112 = scmp.eq.s32.totalorder %s12, 1
    %p113 = por %p111, %p112
    %p114 = scmp.ne.s32.totalorder %s106, %s109
    %p115 = scmp.eq.s32.totalorder %s12, 0
    %p116 = por %p114, %p115
    %p117 = scmp.ne.s32.totalorder %s106, %s109
    %p118 = scmp.eq.s32.totalorder %s17, 1
    %p119 = por %p117, %p118
    %p120 = scmp.ne.s32.totalorder %s109, %s110
    %p121 = scmp.eq.s32.totalorder %s17, 0
    %p122 = por %p120, %p121
    %p123 = scmp.ne.s32.totalorder %s109, %s110
    %p124 = scmp.eq.s32.totalorder %s18, 1
    %p125 = por %p123, %p124
    %p127 = scmp.ne.s32.totalorder %s110, %s126
    %p128 = scmp.eq.s32.totalorder %s18, 0
    %p129 = por %p127, %p128
    %s131 = sadd.s32 %s130, 1
    %p134 = scmp.eq.s32.totalorder %s12, 1
    %p135 = scmp.ne.s32.totalorder %s130, %s132
    %p136 = scmp.eq.s32.totalorder %s12, 0
    %p137 = por %p135, %p136
    %p138 = scmp.ne.s32.totalorder %s130, %s132
    %p139 = scmp.eq.s32.totalorder %s17, 1
    %p140 = por %p138, %p139
    %p141 = scmp.ne.s32.totalorder %s132, %s133
    %p142 = scmp.eq.s32.totalorder %s17, 0
    %p143 = por %p141, %p142
    %p144 = scmp.ne.s32.totalorder %s132, %s133
    %p145 = scmp.eq.s32.totalorder %s18, 1
    %p146 = por %p144, %p145
    %p148 = scmp.ne.s32.totalorder %s133, %s147
    %p149 = scmp.eq.s32.totalorder %s18, 0
    %p150 = por %p148, %p149
    %s152 = sadd.s32 %s151, 1
    %p155 = scmp.eq.s32.totalorder %s12, 1
    %p156 = scmp.ne.s32.totalorder %s151, %s153
    %p157 = scmp.eq.s32.totalorder %s12, 0
    %p158 = por %p156, %p157
    %p159 = scmp.ne.s32.totalorder %s151, %s153
    %p160 = scmp.eq.s32.totalorder %s17, 1
    %p161 = por %p159, %p160
    %p162 = scmp.ne.s32.totalorder %s153, %s154
    %p163 = scmp.eq.s32.totalorder %s17, 0
    %p164 = por %p162, %p163
    %p165 = scmp.ne.s32.totalorder %s153, %s154
    %p166 = scmp.eq.s32.totalorder %s18, 1
    %p167 = por %p165, %p166
    %p169 = scmp.ne.s32.totalorder %s154, %s168
    %p170 = scmp.eq.s32.totalorder %s18, 0
    %p171 = por %p169, %p170
    %s172 = ssub.s32 %s19, %s31
    %s173 = ssub.s32 %s20, %s27
    %s174 = sor.u32 %s172, %s173
    %p175 = scmp.eq.s32.totalorder %s174, 0
    %s177 = sadd.s32 %s176, 1
    %s178 = scalar_select %p175, %s176, %s177
    %p181 = pneg %p175
    %p182 = scmp.eq.s32.totalorder %s12, 1
    %p183 = por %p181, %p182
    %p184 = scmp.ne.s32.totalorder %s176, %s179
    %p185 = scmp.eq.s32.totalorder %s12, 0
    %p186 = por %p184, %p185
    %p187 = scmp.ne.s32.totalorder %s176, %s179
    %p188 = scmp.eq.s32.totalorder %s17, 1
    %p189 = por %p187, %p188
    %p190 = scmp.ne.s32.totalorder %s179, %s180
    %p191 = scmp.eq.s32.totalorder %s17, 0
    %p192 = por %p190, %p191
    %p193 = scmp.ne.s32.totalorder %s179, %s180
    %p194 = scmp.eq.s32.totalorder %s18, 1
    %p195 = por %p193, %p194
    %p197 = scmp.ne.s32.totalorder %s180, %s196
    %p198 = scmp.eq.s32.totalorder %s18, 0
    %p199 = por %p197, %p198
    %p200 = scmp.le.s32.totalorder 1, %s12
    %p201 = scmp.lt.s32.totalorder %s12, 3
    %p202 = pnand %p200, %p201
    %p203 = pneg %p202
    // Predicated region
    $region9: #{basic_block_forward.7} parent=5 // pred_check
      _
    $region10: #{basic_block_forward.7} parent=5 // pred_check_branch
      %205 = sbr.rel (%p202) target = $region12
    $region11: #{basic_block_forward.7} parent=5 // pred_region
      %s206 = ssub.s32 %s12, 1
      // Predicated region
      $region13: #{basic_block_forward.7} parent=11 // pred_check
        %p207 = pneg %p73
      $region14: #{basic_block_forward.7} parent=11 // pred_check_branch
        %209 = sbr.rel (%p207) target = $region16
      $region15: #{basic_block_forward.7} parent=11 // pred_region
        _
      $region16: #{basic_block_forward.7} parent=11 // pred_fallthru
        _
      // Predicated region
      $region17: #{basic_block_forward.7} parent=11 // pred_check
        %p210 = pneg %p94
      $region18: #{basic_block_forward.7} parent=11 // pred_check_branch
        %212 = sbr.rel (%p210) target = $region20
      $region19: #{basic_block_forward.7} parent=11 // pred_region
        _
      $region20: #{basic_block_forward.7} parent=11 // pred_fallthru
        _
      // Predicated region
      $region21: #{basic_block_forward.7} parent=11 // pred_check
        %p213 = pneg %p143
      $region22: #{basic_block_forward.7} parent=11 // pred_check_branch
        %215 = sbr.rel (%p213) target = $region24
      $region23: #{basic_block_forward.7} parent=11 // pred_region
        _
      $region24: #{basic_block_forward.7} parent=11 // pred_fallthru
        _
      // Predicated region
      $region25: #{basic_block_forward.7} parent=11 // pred_check
        %p216 = pneg %p164
      $region26: #{basic_block_forward.7} parent=11 // pred_check_branch
        %218 = sbr.rel (%p216) target = $region28
      $region27: #{basic_block_forward.7} parent=11 // pred_region
        _
      $region28: #{basic_block_forward.7} parent=11 // pred_fallthru
        _
    $region12: #{basic_block_forward.7} parent=5 // pred_fallthru
      _
    %p219 = scmp.lt.s32.totalorder %s12, 2
    // Predicated region
    $region29: #{basic_block_forward.7} parent=5 // pred_check
      %p220 = pneg %p219
    $region30: #{basic_block_forward.7} parent=5 // pred_check_branch
      %222 = sbr.rel (%p220) target = $region32
    $region31: #{basic_block_forward.7} parent=5 // pred_region
      // Predicated region
      $region33: #{basic_block_forward.7} parent=31 // pred_check
        %p223 = pneg %p46
      $region34: #{basic_block_forward.7} parent=31 // pred_check_branch
        %225 = sbr.rel (%p223) target = $region36
      $region35: #{basic_block_forward.7} parent=31 // pred_region
        %s226 = smul.u32 32, %s20
        %p227 = scmp.lt.s32.totalorder %s19, 1
        %s228 = scalar_select %p227, %s19, 1
        %p229 = scmp.lt.s32.totalorder %s226, 31
        %s230 = scalar_select %p229, %s226, 31
        %s231 = smul.addr %s228, 32
        %s232 = sadd.s32 %s230, %s231
        %s233 = smul.addr %s232, 4
        %s234 = scalar_lea.vmem %s0, %s233
        %s235 = smul.u32 32, %s20
      $region36: #{basic_block_forward.7} parent=31 // pred_fallthru
        _
      // Predicated region
      $region37: #{basic_block_forward.7} parent=31 // pred_check
        %p236 = pneg %p116
      $region38: #{basic_block_forward.7} parent=31 // pred_check_branch
        %238 = sbr.rel (%p236) target = $region40
      $region39: #{basic_block_forward.7} parent=31 // pred_region
        %s239 = smul.u32 32, %s20
        %p240 = scmp.lt.s32.totalorder %s19, 1
        %s241 = scalar_select %p240, %s19, 1
        %p242 = scmp.lt.s32.totalorder %s239, 31
        %s243 = scalar_select %p242, %s239, 31
        %s244 = smul.addr %s241, 32
        %s245 = sadd.s32 %s243, %s244
        %s246 = smul.addr %s245, 4
        %s247 = scalar_lea.vmem %s3, %s246
        %s248 = smul.u32 32, %s20
      $region40: #{basic_block_forward.7} parent=31 // pred_fallthru
        _
    $region32: #{basic_block_forward.7} parent=5 // pred_fallthru
      _
    %p249 = scmp.le.s32.totalorder 1, %s12
    %p250 = scmp.lt.s32.totalorder %s12, 3
    %p251 = pnand %p249, %p250
    %p252 = pneg %p251
    // Predicated region
    $region41: #{basic_block_forward.7} parent=5 // pred_check
      _
    $region42: #{basic_block_forward.7} parent=5 // pred_check_branch
      %254 = sbr.rel (%p251) target = $region44
    $region43: #{basic_block_forward.7} parent=5 // pred_region
      %s255 = ssub.s32 %s12, 1
      %s256 = smul.u32 32, %s22
      %p257 = scmp.lt.s32.totalorder %s21, 1
      %s258 = scalar_select %p257, %s21, 1
      %p259 = scmp.lt.s32.totalorder %s256, 31
      %s260 = scalar_select %p259, %s256, 31
      %s261 = smul.addr %s258, 32
      %s262 = sadd.s32 %s260, %s261
      %s263 = smul.addr %s262, 4
      %s264 = scalar_lea.vmem %s0, %s263
      %p265 = pneg %p52
      %p266 = pneg %p49
      %p267 = pneg %p73
      %p268 = pneg %p70
      %p269 = pneg %p94
      %p270 = pneg %p91
      %s271 = smul.u32 32, %s22
      %p272 = scmp.lt.s32.totalorder %s21, 1
      %s273 = scalar_select %p272, %s21, 1
      %p274 = scmp.lt.s32.totalorder %s271, 31
      %s275 = scalar_select %p274, %s271, 31
      %s276 = smul.addr %s273, 32
      %s277 = sadd.s32 %s275, %s276
      %s278 = smul.addr %s277, 4
      %s279 = scalar_lea.vmem %s3, %s278
      %p280 = pneg %p122
      %p281 = pneg %p119
      %p282 = pneg %p143
      %p283 = pneg %p140
      %p284 = pneg %p164
      %p285 = pneg %p161
      %p286 = pneg %p192
      %p287 = pneg %p189
      %s288 = smul.u32 32, %s22
      %p289 = scmp.lt.s32.totalorder %s21, 1
      %s290 = scalar_select %p289, %s21, 1
      %p291 = scmp.lt.s32.totalorder %s288, 31
      %s292 = scalar_select %p291, %s288, 31
      %s293 = smul.addr %s290, 32
      %s294 = sadd.s32 %s292, %s293
      %s295 = smul.addr %s294, 8
      %s296 = scalar_lea.vmem %s6, %s295
      %s297 = smul.u32 32, %s22
      %p298 = scmp.lt.s32.totalorder %s21, 1
      %s299 = scalar_select %p298, %s21, 1
      %p300 = scmp.lt.s32.totalorder %s297, 31
      %s301 = scalar_select %p300, %s297, 31
      %s302 = smul.addr %s299, 32
      %s303 = sadd.s32 %s301, %s302
      %s304 = smul.addr %s303, 4
      %s305 = scalar_lea.vmem %s0, %s304
      %s306 = smul.u32 32, %s22
      %s307 = smul.u32 32, %s22
      %p308 = scmp.lt.s32.totalorder %s21, 1
      %s309 = scalar_select %p308, %s21, 1
      %p310 = scmp.lt.s32.totalorder %s307, 31
      %s311 = scalar_select %p310, %s307, 31
      %s312 = smul.addr %s309, 32
      %s313 = sadd.s32 %s311, %s312
      %s314 = smul.addr %s313, 4
      %s315 = scalar_lea.vmem %s3, %s314
      %s316 = smul.u32 32, %s22
      %s317 = smul.u32 32, %s22
      %p318 = scmp.lt.s32.totalorder %s21, 1
      %s319 = scalar_select %p318, %s21, 1
      %p320 = scmp.lt.s32.totalorder %s317, 31
      %s321 = scalar_select %p320, %s317, 31
      %s322 = smul.addr %s319, 32
      %s323 = sadd.s32 %s321, %s322
      %s324 = smul.addr %s323, 8
      %s325 = scalar_lea.vmem %s6, %s324
      %s326 = smul.u32 32, %s22
      %v327 = vld [vmem:[%s305] sm:$0xf]
      %v328 = vld [vmem:[%s305 + $0x4] sm:$0xf]
      %v329 = vld [vmem:[%s305 + $0x8] sm:$0xf]
      %v330 = vld [vmem:[%s305 + $0xc] sm:$0xf]
      %v331 = vld [vmem:[%s305 + $0x10] sm:$0xf]
      %v332 = vld [vmem:[%s305 + $0x14] sm:$0xf]
      %v333 = vld [vmem:[%s305 + $0x18] sm:$0xf]
      %v334 = vld [vmem:[%s305 + $0x1c] sm:$0xf]
      %v335 = vld [vmem:[%s305 + $0x20] sm:$0xf]
      %v336 = vld [vmem:[%s305 + $0x24] sm:$0xf]
      %v337 = vld [vmem:[%s305 + $0x28] sm:$0xf]
      %v338 = vld [vmem:[%s305 + $0x2c] sm:$0xf]
      %v339 = vld [vmem:[%s305 + $0x30] sm:$0xf]
      %v340 = vld [vmem:[%s305 + $0x34] sm:$0xf]
      %v341 = vld [vmem:[%s305 + $0x38] sm:$0xf]
      %v342 = vld [vmem:[%s305 + $0x3c] sm:$0xf]
      %v343 = vld [vmem:[%s305 + $0x40] sm:$0xf]
      %v344 = vld [vmem:[%s305 + $0x44] sm:$0xf]
      %v345 = vld [vmem:[%s305 + $0x48] sm:$0xf]
      %v346 = vld [vmem:[%s305 + $0x4c] sm:$0xf]
      %v347 = vld [vmem:[%s305 + $0x50] sm:$0xf]
      %v348 = vld [vmem:[%s305 + $0x54] sm:$0xf]
      %v349 = vld [vmem:[%s305 + $0x58] sm:$0xf]
      %v350 = vld [vmem:[%s305 + $0x5c] sm:$0xf]
      %v351 = vld [vmem:[%s305 + $0x60] sm:$0xf]
      %v352 = vld [vmem:[%s305 + $0x64] sm:$0xf]
      %v353 = vld [vmem:[%s305 + $0x68] sm:$0xf]
      %v354 = vld [vmem:[%s305 + $0x6c] sm:$0xf]
      %v355 = vld [vmem:[%s305 + $0x70] sm:$0xf]
      %v356 = vld [vmem:[%s305 + $0x74] sm:$0xf]
      %v357 = vld [vmem:[%s305 + $0x78] sm:$0xf]
      %v358 = vld [vmem:[%s305 + $0x7c] sm:$0xf]
      %v359 = vunpack.c.l.bf16 %v327
      %v360 = vunpack.c.l.bf16 %v328
      %v361 = vunpack.c.l.bf16 %v329
      %v362 = vunpack.c.l.bf16 %v330
      %v363 = vunpack.c.l.bf16 %v331
      %v364 = vunpack.c.l.bf16 %v332
      %v365 = vunpack.c.l.bf16 %v333
      %v366 = vunpack.c.l.bf16 %v334
      %v367 = vunpack.c.l.bf16 %v335
      %v368 = vunpack.c.l.bf16 %v336
      %v369 = vunpack.c.l.bf16 %v337
      %v370 = vunpack.c.l.bf16 %v338
      %v371 = vunpack.c.l.bf16 %v339
      %v372 = vunpack.c.l.bf16 %v340
      %v373 = vunpack.c.l.bf16 %v341
      %v374 = vunpack.c.l.bf16 %v342
      %v375 = vunpack.c.l.bf16 %v343
      %v376 = vunpack.c.l.bf16 %v344
      %v377 = vunpack.c.l.bf16 %v345
      %v378 = vunpack.c.l.bf16 %v346
      %v379 = vunpack.c.l.bf16 %v347
      %v380 = vunpack.c.l.bf16 %v348
      %v381 = vunpack.c.l.bf16 %v349
      %v382 = vunpack.c.l.bf16 %v350
      %v383 = vunpack.c.l.bf16 %v351
      %v384 = vunpack.c.l.bf16 %v352
      %v385 = vunpack.c.l.bf16 %v353
      %v386 = vunpack.c.l.bf16 %v354
      %v387 = vunpack.c.l.bf16 %v355
      %v388 = vunpack.c.l.bf16 %v356
      %v389 = vunpack.c.l.bf16 %v357
      %v390 = vunpack.c.l.bf16 %v358
      %v391 = vld [vmem:[%s1] sm:$0x1]
      %v393 = vlaneseq
      %v394 = vshrl.u32 %v393, 7
      %v395 = vsub.s32 0, %v394
      %v396 = vrot.slane %v391, %v395
      %v398 = vmul.f32 %v359, %v396
      %v399 = vmul.f32 %v360, %v396
      %v400 = vmul.f32 %v361, %v396
      %v401 = vmul.f32 %v362, %v396
      %v402 = vmul.f32 %v363, %v396
      %v403 = vmul.f32 %v364, %v396
      %v404 = vmul.f32 %v365, %v396
      %v405 = vmul.f32 %v366, %v396
      %v406 = vmul.f32 %v367, %v396
      %v407 = vmul.f32 %v368, %v396
      %v408 = vmul.f32 %v369, %v396
      %v409 = vmul.f32 %v370, %v396
      %v410 = vmul.f32 %v371, %v396
      %v411 = vmul.f32 %v372, %v396
      %v412 = vmul.f32 %v373, %v396
      %v413 = vmul.f32 %v374, %v396
      %v414 = vmul.f32 %v375, %v396
      %v415 = vmul.f32 %v376, %v396
      %v416 = vmul.f32 %v377, %v396
      %v417 = vmul.f32 %v378, %v396
      %v418 = vmul.f32 %v379, %v396
      %v419 = vmul.f32 %v380, %v396
      %v420 = vmul.f32 %v381, %v396
      %v421 = vmul.f32 %v382, %v396
      %v422 = vmul.f32 %v383, %v396
      %v423 = vmul.f32 %v384, %v396
      %v424 = vmul.f32 %v385, %v396
      %v425 = vmul.f32 %v386, %v396
      %v426 = vmul.f32 %v387, %v396
      %v427 = vmul.f32 %v388, %v396
      %v428 = vmul.f32 %v389, %v396
      %v429 = vmul.f32 %v390, %v396
      %v430 = vld [vmem:[%s2] sm:$0x1]
      %v432 = vlaneseq
      %v433 = vshrl.u32 %v432, 7
      %v434 = vsub.s32 0, %v433
      %v435 = vrot.slane %v430, %v434
      %v437 = vadd.f32 %v398, %v435
      %v438 = vadd.f32 %v399, %v435
      %v439 = vadd.f32 %v400, %v435
      %v440 = vadd.f32 %v401, %v435
      %v441 = vadd.f32 %v402, %v435
      %v442 = vadd.f32 %v403, %v435
      %v443 = vadd.f32 %v404, %v435
      %v444 = vadd.f32 %v405, %v435
      %v445 = vadd.f32 %v406, %v435
      %v446 = vadd.f32 %v407, %v435
      %v447 = vadd.f32 %v408, %v435
      %v448 = vadd.f32 %v409, %v435
      %v449 = vadd.f32 %v410, %v435
      %v450 = vadd.f32 %v411, %v435
      %v451 = vadd.f32 %v412, %v435
      %v452 = vadd.f32 %v413, %v435
      %v453 = vadd.f32 %v414, %v435
      %v454 = vadd.f32 %v415, %v435
      %v455 = vadd.f32 %v416, %v435
      %v456 = vadd.f32 %v417, %v435
      %v457 = vadd.f32 %v418, %v435
      %v458 = vadd.f32 %v419, %v435
      %v459 = vadd.f32 %v420, %v435
      %v460 = vadd.f32 %v421, %v435
      %v461 = vadd.f32 %v422, %v435
      %v462 = vadd.f32 %v423, %v435
      %v463 = vadd.f32 %v424, %v435
      %v464 = vadd.f32 %v425, %v435
      %v465 = vadd.f32 %v426, %v435
      %v466 = vadd.f32 %v427, %v435
      %v467 = vadd.f32 %v428, %v435
      %v468 = vadd.f32 %v429, %v435
      %v469 = vld [vmem:[%s315] sm:$0xf]
      %v470 = vld [vmem:[%s315 + $0x4] sm:$0xf]
      %v471 = vld [vmem:[%s315 + $0x8] sm:$0xf]
      %v472 = vld [vmem:[%s315 + $0xc] sm:$0xf]
      %v473 = vld [vmem:[%s315 + $0x10] sm:$0xf]
      %v474 = vld [vmem:[%s315 + $0x14] sm:$0xf]
      %v475 = vld [vmem:[%s315 + $0x18] sm:$0xf]
      %v476 = vld [vmem:[%s315 + $0x1c] sm:$0xf]
      %v477 = vld [vmem:[%s315 + $0x20] sm:$0xf]
      %v478 = vld [vmem:[%s315 + $0x24] sm:$0xf]
      %v479 = vld [vmem:[%s315 + $0x28] sm:$0xf]
      %v480 = vld [vmem:[%s315 + $0x2c] sm:$0xf]
      %v481 = vld [vmem:[%s315 + $0x30] sm:$0xf]
      %v482 = vld [vmem:[%s315 + $0x34] sm:$0xf]
      %v483 = vld [vmem:[%s315 + $0x38] sm:$0xf]
      %v484 = vld [vmem:[%s315 + $0x3c] sm:$0xf]
      %v485 = vld [vmem:[%s315 + $0x40] sm:$0xf]
      %v486 = vld [vmem:[%s315 + $0x44] sm:$0xf]
      %v487 = vld [vmem:[%s315 + $0x48] sm:$0xf]
      %v488 = vld [vmem:[%s315 + $0x4c] sm:$0xf]
      %v489 = vld [vmem:[%s315 + $0x50] sm:$0xf]
      %v490 = vld [vmem:[%s315 + $0x54] sm:$0xf]
      %v491 = vld [vmem:[%s315 + $0x58] sm:$0xf]
      %v492 = vld [vmem:[%s315 + $0x5c] sm:$0xf]
      %v493 = vld [vmem:[%s315 + $0x60] sm:$0xf]
      %v494 = vld [vmem:[%s315 + $0x64] sm:$0xf]
      %v495 = vld [vmem:[%s315 + $0x68] sm:$0xf]
      %v496 = vld [vmem:[%s315 + $0x6c] sm:$0xf]
      %v497 = vld [vmem:[%s315 + $0x70] sm:$0xf]
      %v498 = vld [vmem:[%s315 + $0x74] sm:$0xf]
      %v499 = vld [vmem:[%s315 + $0x78] sm:$0xf]
      %v500 = vld [vmem:[%s315 + $0x7c] sm:$0xf]
      %v501 = vunpack.c.l.bf16 %v469
      %v502 = vunpack.c.l.bf16 %v470
      %v503 = vunpack.c.l.bf16 %v471
      %v504 = vunpack.c.l.bf16 %v472
      %v505 = vunpack.c.l.bf16 %v473
      %v506 = vunpack.c.l.bf16 %v474
      %v507 = vunpack.c.l.bf16 %v475
      %v508 = vunpack.c.l.bf16 %v476
      %v509 = vunpack.c.l.bf16 %v477
      %v510 = vunpack.c.l.bf16 %v478
      %v511 = vunpack.c.l.bf16 %v479
      %v512 = vunpack.c.l.bf16 %v480
      %v513 = vunpack.c.l.bf16 %v481
      %v514 = vunpack.c.l.bf16 %v482
      %v515 = vunpack.c.l.bf16 %v483
      %v516 = vunpack.c.l.bf16 %v484
      %v517 = vunpack.c.l.bf16 %v485
      %v518 = vunpack.c.l.bf16 %v486
      %v519 = vunpack.c.l.bf16 %v487
      %v520 = vunpack.c.l.bf16 %v488
      %v521 = vunpack.c.l.bf16 %v489
      %v522 = vunpack.c.l.bf16 %v490
      %v523 = vunpack.c.l.bf16 %v491
      %v524 = vunpack.c.l.bf16 %v492
      %v525 = vunpack.c.l.bf16 %v493
      %v526 = vunpack.c.l.bf16 %v494
      %v527 = vunpack.c.l.bf16 %v495
      %v528 = vunpack.c.l.bf16 %v496
      %v529 = vunpack.c.l.bf16 %v497
      %v530 = vunpack.c.l.bf16 %v498
      %v531 = vunpack.c.l.bf16 %v499
      %v532 = vunpack.c.l.bf16 %v500
      %v533 = vld [vmem:[%s4] sm:$0x1]
      %v535 = vlaneseq
      %v536 = vshrl.u32 %v535, 7
      %v537 = vsub.s32 0, %v536
      %v538 = vrot.slane %v533, %v537
      %v540 = vmul.f32 %v501, %v538
      %v541 = vmul.f32 %v502, %v538
      %v542 = vmul.f32 %v503, %v538
      %v543 = vmul.f32 %v504, %v538
      %v544 = vmul.f32 %v505, %v538
      %v545 = vmul.f32 %v506, %v538
      %v546 = vmul.f32 %v507, %v538
      %v547 = vmul.f32 %v508, %v538
      %v548 = vmul.f32 %v509, %v538
      %v549 = vmul.f32 %v510, %v538
      %v550 = vmul.f32 %v511, %v538
      %v551 = vmul.f32 %v512, %v538
      %v552 = vmul.f32 %v513, %v538
      %v553 = vmul.f32 %v514, %v538
      %v554 = vmul.f32 %v515, %v538
      %v555 = vmul.f32 %v516, %v538
      %v556 = vmul.f32 %v517, %v538
      %v557 = vmul.f32 %v518, %v538
      %v558 = vmul.f32 %v519, %v538
      %v559 = vmul.f32 %v520, %v538
      %v560 = vmul.f32 %v521, %v538
      %v561 = vmul.f32 %v522, %v538
      %v562 = vmul.f32 %v523, %v538
      %v563 = vmul.f32 %v524, %v538
      %v564 = vmul.f32 %v525, %v538
      %v565 = vmul.f32 %v526, %v538
      %v566 = vmul.f32 %v527, %v538
      %v567 = vmul.f32 %v528, %v538
      %v568 = vmul.f32 %v529, %v538
      %v569 = vmul.f32 %v530, %v538
      %v570 = vmul.f32 %v531, %v538
      %v571 = vmul.f32 %v532, %v538
      %v572 = vadd.f32 %v437, %v540
      %v573 = vadd.f32 %v438, %v541
      %v574 = vadd.f32 %v439, %v542
      %v575 = vadd.f32 %v440, %v543
      %v576 = vadd.f32 %v441, %v544
      %v577 = vadd.f32 %v442, %v545
      %v578 = vadd.f32 %v443, %v546
      %v579 = vadd.f32 %v444, %v547
      %v580 = vadd.f32 %v445, %v548
      %v581 = vadd.f32 %v446, %v549
      %v582 = vadd.f32 %v447, %v550
      %v583 = vadd.f32 %v448, %v551
      %v584 = vadd.f32 %v449, %v552
      %v585 = vadd.f32 %v450, %v553
      %v586 = vadd.f32 %v451, %v554
      %v587 = vadd.f32 %v452, %v555
      %v588 = vadd.f32 %v453, %v556
      %v589 = vadd.f32 %v454, %v557
      %v590 = vadd.f32 %v455, %v558
      %v591 = vadd.f32 %v456, %v559
      %v592 = vadd.f32 %v457, %v560
      %v593 = vadd.f32 %v458, %v561
      %v594 = vadd.f32 %v459, %v562
      %v595 = vadd.f32 %v460, %v563
      %v596 = vadd.f32 %v461, %v564
      %v597 = vadd.f32 %v462, %v565
      %v598 = vadd.f32 %v463, %v566
      %v599 = vadd.f32 %v464, %v567
      %v600 = vadd.f32 %v465, %v568
      %v601 = vadd.f32 %v466, %v569
      %v602 = vadd.f32 %v467, %v570
      %v603 = vadd.f32 %v468, %v571
      %v604 = vld [vmem:[%s5] sm:$0x1]
      %v606 = vlaneseq
      %v607 = vshrl.u32 %v606, 7
      %v608 = vsub.s32 0, %v607
      %v609 = vrot.slane %v604, %v608
      %v611 = vadd.f32 %v572, %v609
      %v612 = vadd.f32 %v573, %v609
      %v613 = vadd.f32 %v574, %v609
      %v614 = vadd.f32 %v575, %v609
      %v615 = vadd.f32 %v576, %v609
      %v616 = vadd.f32 %v577, %v609
      %v617 = vadd.f32 %v578, %v609
      %v618 = vadd.f32 %v579, %v609
      %v619 = vadd.f32 %v580, %v609
      %v620 = vadd.f32 %v581, %v609
      %v621 = vadd.f32 %v582, %v609
      %v622 = vadd.f32 %v583, %v609
      %v623 = vadd.f32 %v584, %v609
      %v624 = vadd.f32 %v585, %v609
      %v625 = vadd.f32 %v586, %v609
      %v626 = vadd.f32 %v587, %v609
      %v627 = vadd.f32 %v588, %v609
      %v628 = vadd.f32 %v589, %v609
      %v629 = vadd.f32 %v590, %v609
      %v630 = vadd.f32 %v591, %v609
      %v631 = vadd.f32 %v592, %v609
      %v632 = vadd.f32 %v593, %v609
      %v633 = vadd.f32 %v594, %v609
      %v634 = vadd.f32 %v595, %v609
      %v635 = vadd.f32 %v596, %v609
      %v636 = vadd.f32 %v597, %v609
      %v637 = vadd.f32 %v598, %v609
      %v638 = vadd.f32 %v599, %v609
      %v639 = vadd.f32 %v600, %v609
      %v640 = vadd.f32 %v601, %v609
      %v641 = vadd.f32 %v602, %v609
      %v642 = vadd.f32 %v603, %v609
      %v643 = vmax.f32 %v611, 0.0
      %v644 = vmax.f32 %v612, 0.0
      %v645 = vmax.f32 %v613, 0.0
      %v646 = vmax.f32 %v614, 0.0
      %v647 = vmax.f32 %v615, 0.0
      %v648 = vmax.f32 %v616, 0.0
      %v649 = vmax.f32 %v617, 0.0
      %v650 = vmax.f32 %v618, 0.0
      %v651 = vmax.f32 %v619, 0.0
      %v652 = vmax.f32 %v620, 0.0
      %v653 = vmax.f32 %v621, 0.0
      %v654 = vmax.f32 %v622, 0.0
      %v655 = vmax.f32 %v623, 0.0
      %v656 = vmax.f32 %v624, 0.0
      %v657 = vmax.f32 %v625, 0.0
      %v658 = vmax.f32 %v626, 0.0
      %v659 = vmax.f32 %v627, 0.0
      %v660 = vmax.f32 %v628, 0.0
      %v661 = vmax.f32 %v629, 0.0
      %v662 = vmax.f32 %v630, 0.0
      %v663 = vmax.f32 %v631, 0.0
      %v664 = vmax.f32 %v632, 0.0
      %v665 = vmax.f32 %v633, 0.0
      %v666 = vmax.f32 %v634, 0.0
      %v667 = vmax.f32 %v635, 0.0
      %v668 = vmax.f32 %v636, 0.0
      %v669 = vmax.f32 %v637, 0.0
      %v670 = vmax.f32 %v638, 0.0
      %v671 = vmax.f32 %v639, 0.0
      %v672 = vmax.f32 %v640, 0.0
      %v673 = vmax.f32 %v641, 0.0
      %v674 = vmax.f32 %v642, 0.0
      %675 = vst [vmem:[%s325] sm:$0xff] %v643
      %676 = vst [vmem:[%s325 + $0x8] sm:$0xff] %v644
      %677 = vst [vmem:[%s325 + $0x10] sm:$0xff] %v645
      %678 = vst [vmem:[%s325 + $0x18] sm:$0xff] %v646
      %679 = vst [vmem:[%s325 + $0x20] sm:$0xff] %v647
      %680 = vst [vmem:[%s325 + $0x28] sm:$0xff] %v648
      %681 = vst [vmem:[%s325 + $0x30] sm:$0xff] %v649
      %682 = vst [vmem:[%s325 + $0x38] sm:$0xff] %v650
      %683 = vst [vmem:[%s325 + $0x40] sm:$0xff] %v651
      %684 = vst [vmem:[%s325 + $0x48] sm:$0xff] %v652
      %685 = vst [vmem:[%s325 + $0x50] sm:$0xff] %v653
      %686 = vst [vmem:[%s325 + $0x58] sm:$0xff] %v654
      %687 = vst [vmem:[%s325 + $0x60] sm:$0xff] %v655
      %688 = vst [vmem:[%s325 + $0x68] sm:$0xff] %v656
      %689 = vst [vmem:[%s325 + $0x70] sm:$0xff] %v657
      %690 = vst [vmem:[%s325 + $0x78] sm:$0xff] %v658
      %691 = vst [vmem:[%s325 + $0x80] sm:$0xff] %v659
      %692 = vst [vmem:[%s325 + $0x88] sm:$0xff] %v660
      %693 = vst [vmem:[%s325 + $0x90] sm:$0xff] %v661
      %694 = vst [vmem:[%s325 + $0x98] sm:$0xff] %v662
      %695 = vst [vmem:[%s325 + $0xa0] sm:$0xff] %v663
      %696 = vst [vmem:[%s325 + $0xa8] sm:$0xff] %v664
      %697 = vst [vmem:[%s325 + $0xb0] sm:$0xff] %v665
      %698 = vst [vmem:[%s325 + $0xb8] sm:$0xff] %v666
      %699 = vst [vmem:[%s325 + $0xc0] sm:$0xff] %v667
      %700 = vst [vmem:[%s325 + $0xc8] sm:$0xff] %v668
      %701 = vst [vmem:[%s325 + $0xd0] sm:$0xff] %v669
      %702 = vst [vmem:[%s325 + $0xd8] sm:$0xff] %v670
      %703 = vst [vmem:[%s325 + $0xe0] sm:$0xff] %v671
      %704 = vst [vmem:[%s325 + $0xe8] sm:$0xff] %v672
      %705 = vst [vmem:[%s325 + $0xf0] sm:$0xff] %v673
      %706 = vst [vmem:[%s325 + $0xf8] sm:$0xff] %v674
      %s707 = smul.u32 32, %s22
      %p708 = scmp.lt.s32.totalorder %s21, 1
      %s709 = scalar_select %p708, %s21, 1
      %p710 = scmp.lt.s32.totalorder %s707, 31
      %s711 = scalar_select %p710, %s707, 31
      %s712 = smul.addr %s709, 32
      %s713 = sadd.s32 %s711, %s712
      %s714 = smul.addr %s713, 8
      %s715 = scalar_lea.vmem %s6, %s714
      // Predicated region
      $region45: #{basic_block_forward.7} parent=43 // pred_check
        %p716 = pneg %p189
      $region46: #{basic_block_forward.7} parent=43 // pred_check_branch
        %718 = sbr.rel (%p716) target = $region48
      $region47: #{basic_block_forward.7} parent=43 // pred_region
        %s719 = smul.u32 32, %s22
      $region48: #{basic_block_forward.7} parent=43 // pred_fallthru
        _
    $region44: #{basic_block_forward.7} parent=5 // pred_fallthru
      _
    %p720 = scmp.le.s32.totalorder 2, %s12
    // Predicated region
    $region49: #{basic_block_forward.7} parent=5 // pred_check
      %p721 = pneg %p720
    $region50: #{basic_block_forward.7} parent=5 // pred_check_branch
      %723 = sbr.rel (%p721) target = $region52
    $region51: #{basic_block_forward.7} parent=5 // pred_region
      %s724 = ssub.s32 %s12, 2
      // Predicated region
      $region53: #{basic_block_forward.7} parent=51 // pred_check
        %p725 = pneg %p195
      $region54: #{basic_block_forward.7} parent=51 // pred_check_branch
        %727 = sbr.rel (%p725) target = $region56
      $region55: #{basic_block_forward.7} parent=51 // pred_region
        %s728 = smul.u32 32, %s24
        %p729 = scmp.lt.s32.totalorder %s23, 1
        %s730 = scalar_select %p729, %s23, 1
        %p731 = scmp.lt.s32.totalorder %s728, 31
        %s732 = scalar_select %p731, %s728, 31
        %s733 = smul.addr %s730, 32
        %s734 = sadd.s32 %s732, %s733
        %s735 = smul.addr %s734, 8
        %s736 = scalar_lea.vmem %s6, %s735
      $region56: #{basic_block_forward.7} parent=51 // pred_fallthru
        _
    $region52: #{basic_block_forward.7} parent=5 // pred_fallthru
      _
  $region6: #{basic_block_forward.7} parent=0 // loop_footer
    %s16 = sadd.s32 1, %s12
  $region7: #{basic_block_forward.7} parent=0 // loop_footer_branch
    %11 = sbr.rel target = $region3
  $region8: #{basic_block_forward.7} parent=0 // loop_exit
    _

// kernel: basic_block_forward.4
$region0: #{basic_block_forward.4}
  #allocation0 [shape = 'u32[]', space=smem, size = 0x4, offset = 0x4, fixed_abs, tag = 'smem constant byte address 0x4 - core index']
  #allocation1 [shape = 'u32[144,128]{1,0:T(1,128)}', space=vmem, size = 0x12000, scoped, tag = 'internal scratch']
  #allocation2 [shape = 'f32[256,128]{1,0:T(8,128)}', space=vmem, size = 0x20000, scoped, tag = 'scratch operand']
  %s0 = inlined_call_operand.vmem [shape: f32[2,768,128], index: 0, kind: input, shape index: {}]
  %s1 = inlined_call_operand.vmem [shape: bf16[4,128,128], index: 1, kind: input, shape index: {}]
  %s2 = inlined_call_operand.vmem [shape: f32[256,1], index: 2, kind: input, shape index: {}]
  %s3 = inlined_call_operand.vmem [shape: bf16[1,128,128], index: 3, kind: input, shape index: {}]
  %s4 = inlined_call_operand.vmem [shape: bf16[2,256,128], index: 4, kind: output, shape index: {0}]
  %s5 = inlined_call_operand.vmem [shape: f32[2,1,8,128], index: 5, kind: output, shape index: {1}]
  %s6 = inlined_call_operand.vmem [shape: bf16[2,256,128], index: 6, kind: output, shape index: {2}]
  %s7 = inlined_call_operand.vmem [shape: f32[2,1,8,128], index: 7, kind: output, shape index: {3}]
  %8 = xla_tuple %s4, %s5, %s6, %s7
  %s9 = sld [smem:[#allocation0]]
  $region73: #{basic_block_forward.4} parent=0
    _
  %s11 = ssub.s32 1, %s9
  %s12 = scalar_select 0, %s11, %s9
  loop: start=0, step=1, limit=4
  $region2: #{basic_block_forward.4} parent=0 // loop_pre_header
    _
  $region3: #{basic_block_forward.4} parent=0 // loop_header
    %s14 = sphi 0, %s18
    %p15 = scmp.ge.s32.totalorder %s14, 4
    %s21 = sphi 0, %s40
    %s22 = sphi 0, %s36
    %s23 = sphi 0, %s32
    %s24 = sphi 0, %s21
    %s25 = sphi 0, %s22
    %s26 = sphi 0, %s23
    %s27 = sphi 0, %s24
    %s28 = sphi 0, %s25
    %s29 = sphi 0, %s26
    %s43 = sphi 0, %s45
    %s46 = sphi 0, %s43
    %s47 = sphi 0, %s46
    %s63 = sphi 0, %s47
    %s69 = sphi 0, %s71
    %s72 = sphi 0, %s69
    %s73 = sphi 0, %s72
    %s89 = sphi 0, %s73
    %s95 = sphi 0, %s97
    %s98 = sphi 0, %s95
    %s99 = sphi 0, %s98
    %s115 = sphi 0, %s99
    %s121 = sphi 0, %s123
    %s124 = sphi 0, %s121
    %s125 = sphi 0, %s124
    %s141 = sphi 0, %s125
    %s151 = sphi 0, %s153
    %s154 = sphi 0, %s151
    %s155 = sphi 0, %s154
    %s171 = sphi 0, %s155
    %s181 = sphi 0, %s183
    %s184 = sphi 0, %s181
    %s185 = sphi 0, %s184
    %s201 = sphi 0, %s185
    %s211 = sphi 0, %s213
    %s214 = sphi 0, %s211
    %s215 = sphi 0, %s214
    %s231 = sphi 0, %s215
    %s241 = sphi 0, %s243
    %s244 = sphi 0, %s241
    %s245 = sphi 0, %s244
    %s261 = sphi 0, %s245
  $region4: #{basic_block_forward.4} parent=0 // loop_header_branch
    %17 = sbr.rel (%p15) target = $region8
  $region5: #{basic_block_forward.4} parent=0 // loop_body
    %s19 = ssub.s32 %s14, 1
    %s20 = ssub.s32 %s14, 2
    %s30 = sadd.s32 1, %s23
    %p31 = scmp.ge.s32.totalorder %s30, 1
    %s32 = scalar_select %p31, 0, %s30
    %s33 = sadd.s32 1, %s22
    %s34 = scalar_select %p31, %s33, %s22
    %p35 = scmp.ge.s32.totalorder %s34, 1
    %s36 = scalar_select %p35, 0, %s34
    %s37 = sadd.s32 1, %s21
    %s38 = scalar_select %p35, %s37, %s21
    %p39 = scmp.ge.s32.totalorder %s38, 2
    %s40 = scalar_select %p39, 0, %s38
    %s41 = ssub.s32 %s21, %s40
    %p42 = scmp.eq.s32.totalorder %s41, 0
    %s44 = sadd.s32 %s43, 1
    %s45 = scalar_select %p42, %s43, %s44
    %p48 = pneg %p42
    %p49 = scmp.eq.s32.totalorder %s14, 1
    %p50 = por %p48, %p49
    %p51 = scmp.ne.s32.totalorder %s43, %s46
    %p52 = scmp.eq.s32.totalorder %s14, 0
    %p53 = por %p51, %p52
    %p54 = scmp.ne.s32.totalorder %s43, %s46
    %p55 = scmp.eq.s32.totalorder %s19, 1
    %p56 = por %p54, %p55
    %p57 = scmp.ne.s32.totalorder %s46, %s47
    %p58 = scmp.eq.s32.totalorder %s19, 0
    %p59 = por %p57, %p58
    %p60 = scmp.ne.s32.totalorder %s46, %s47
    %p61 = scmp.eq.s32.totalorder %s20, 1
    %p62 = por %p60, %p61
    %p64 = scmp.ne.s32.totalorder %s47, %s63
    %p65 = scmp.eq.s32.totalorder %s20, 0
    %p66 = por %p64, %p65
    %s67 = ssub.s32 %s22, %s36
    %p68 = scmp.eq.s32.totalorder %s67, 0
    %s70 = sadd.s32 %s69, 1
    %s71 = scalar_select %p68, %s69, %s70
    %p74 = pneg %p68
    %p75 = scmp.eq.s32.totalorder %s14, 1
    %p76 = por %p74, %p75
    %p77 = scmp.ne.s32.totalorder %s69, %s72
    %p78 = scmp.eq.s32.totalorder %s14, 0
    %p79 = por %p77, %p78
    %p80 = scmp.ne.s32.totalorder %s69, %s72
    %p81 = scmp.eq.s32.totalorder %s19, 1
    %p82 = por %p80, %p81
    %p83 = scmp.ne.s32.totalorder %s72, %s73
    %p84 = scmp.eq.s32.totalorder %s19, 0
    %p85 = por %p83, %p84
    %p86 = scmp.ne.s32.totalorder %s72, %s73
    %p87 = scmp.eq.s32.totalorder %s20, 1
    %p88 = por %p86, %p87
    %p90 = scmp.ne.s32.totalorder %s73, %s89
    %p91 = scmp.eq.s32.totalorder %s20, 0
    %p92 = por %p90, %p91
    %s93 = ssub.s32 %s23, %s32
    %p94 = scmp.eq.s32.totalorder %s93, 0
    %s96 = sadd.s32 %s95, 1
    %s97 = scalar_select %p94, %s95, %s96
    %p100 = pneg %p94
    %p101 = scmp.eq.s32.totalorder %s14, 1
    %p102 = por %p100, %p101
    %p103 = scmp.ne.s32.totalorder %s95, %s98
    %p104 = scmp.eq.s32.totalorder %s14, 0
    %p105 = por %p103, %p104
    %p106 = scmp.ne.s32.totalorder %s95, %s98
    %p107 = scmp.eq.s32.totalorder %s19, 1
    %p108 = por %p106, %p107
    %p109 = scmp.ne.s32.totalorder %s98, %s99
    %p110 = scmp.eq.s32.totalorder %s19, 0
    %p111 = por %p109, %p110
    %p112 = scmp.ne.s32.totalorder %s98, %s99
    %p113 = scmp.eq.s32.totalorder %s20, 1
    %p114 = por %p112, %p113
    %p116 = scmp.ne.s32.totalorder %s99, %s115
    %p117 = scmp.eq.s32.totalorder %s20, 0
    %p118 = por %p116, %p117
    %s119 = ssub.s32 %s22, %s36
    %p120 = scmp.eq.s32.totalorder %s119, 0
    %s122 = sadd.s32 %s121, 1
    %s123 = scalar_select %p120, %s121, %s122
    %p126 = pneg %p120
    %p127 = scmp.eq.s32.totalorder %s14, 1
    %p128 = por %p126, %p127
    %p129 = scmp.ne.s32.totalorder %s121, %s124
    %p130 = scmp.eq.s32.totalorder %s14, 0
    %p131 = por %p129, %p130
    %p132 = scmp.ne.s32.totalorder %s121, %s124
    %p133 = scmp.eq.s32.totalorder %s19, 1
    %p134 = por %p132, %p133
    %p135 = scmp.ne.s32.totalorder %s124, %s125
    %p136 = scmp.eq.s32.totalorder %s19, 0
    %p137 = por %p135, %p136
    %p138 = scmp.ne.s32.totalorder %s124, %s125
    %p139 = scmp.eq.s32.totalorder %s20, 1
    %p140 = por %p138, %p139
    %p142 = scmp.ne.s32.totalorder %s125, %s141
    %p143 = scmp.eq.s32.totalorder %s20, 0
    %p144 = por %p142, %p143
    %s145 = ssub.s32 %s21, %s40
    %s146 = ssub.s32 %s23, %s32
    %s147 = sor.u32 %s145, %s146
    %s148 = ssub.s32 %s22, %s36
    %s149 = sor.u32 %s147, %s148
    %p150 = scmp.eq.s32.totalorder %s149, 0
    %s152 = sadd.s32 %s151, 1
    %s153 = scalar_select %p150, %s151, %s152
    %p156 = pneg %p150
    %p157 = scmp.eq.s32.totalorder %s14, 1
    %p158 = por %p156, %p157
    %p159 = scmp.ne.s32.totalorder %s151, %s154
    %p160 = scmp.eq.s32.totalorder %s14, 0
    %p161 = por %p159, %p160
    %p162 = scmp.ne.s32.totalorder %s151, %s154
    %p163 = scmp.eq.s32.totalorder %s19, 1
    %p164 = por %p162, %p163
    %p165 = scmp.ne.s32.totalorder %s154, %s155
    %p166 = scmp.eq.s32.totalorder %s19, 0
    %p167 = por %p165, %p166
    %p168 = scmp.ne.s32.totalorder %s154, %s155
    %p169 = scmp.eq.s32.totalorder %s20, 1
    %p170 = por %p168, %p169
    %p172 = scmp.ne.s32.totalorder %s155, %s171
    %p173 = scmp.eq.s32.totalorder %s20, 0
    %p174 = por %p172, %p173
    %s175 = ssub.s32 %s21, %s40
    %s176 = ssub.s32 %s23, %s32
    %s177 = sor.u32 %s175, %s176
    %s178 = ssub.s32 %s22, %s36
    %s179 = sor.u32 %s177, %s178
    %p180 = scmp.eq.s32.totalorder %s179, 0
    %s182 = sadd.s32 %s181, 1
    %s183 = scalar_select %p180, %s181, %s182
    %p186 = pneg %p180
    %p187 = scmp.eq.s32.totalorder %s14, 1
    %p188 = por %p186, %p187
    %p189 = scmp.ne.s32.totalorder %s181, %s184
    %p190 = scmp.eq.s32.totalorder %s14, 0
    %p191 = por %p189, %p190
    %p192 = scmp.ne.s32.totalorder %s181, %s184
    %p193 = scmp.eq.s32.totalorder %s19, 1
    %p194 = por %p192, %p193
    %p195 = scmp.ne.s32.totalorder %s184, %s185
    %p196 = scmp.eq.s32.totalorder %s19, 0
    %p197 = por %p195, %p196
    %p198 = scmp.ne.s32.totalorder %s184, %s185
    %p199 = scmp.eq.s32.totalorder %s20, 1
    %p200 = por %p198, %p199
    %p202 = scmp.ne.s32.totalorder %s185, %s201
    %p203 = scmp.eq.s32.totalorder %s20, 0
    %p204 = por %p202, %p203
    %s205 = ssub.s32 %s21, %s40
    %s206 = ssub.s32 %s23, %s32
    %s207 = sor.u32 %s205, %s206
    %s208 = ssub.s32 %s22, %s36
    %s209 = sor.u32 %s207, %s208
    %p210 = scmp.eq.s32.totalorder %s209, 0
    %s212 = sadd.s32 %s211, 1
    %s213 = scalar_select %p210, %s211, %s212
    %p216 = pneg %p210
    %p217 = scmp.eq.s32.totalorder %s14, 1
    %p218 = por %p216, %p217
    %p219 = scmp.ne.s32.totalorder %s211, %s214
    %p220 = scmp.eq.s32.totalorder %s14, 0
    %p221 = por %p219, %p220
    %p222 = scmp.ne.s32.totalorder %s211, %s214
    %p223 = scmp.eq.s32.totalorder %s19, 1
    %p224 = por %p222, %p223
    %p225 = scmp.ne.s32.totalorder %s214, %s215
    %p226 = scmp.eq.s32.totalorder %s19, 0
    %p227 = por %p225, %p226
    %p228 = scmp.ne.s32.totalorder %s214, %s215
    %p229 = scmp.eq.s32.totalorder %s20, 1
    %p230 = por %p228, %p229
    %p232 = scmp.ne.s32.totalorder %s215, %s231
    %p233 = scmp.eq.s32.totalorder %s20, 0
    %p234 = por %p232, %p233
    %s235 = ssub.s32 %s21, %s40
    %s236 = ssub.s32 %s23, %s32
    %s237 = sor.u32 %s235, %s236
    %s238 = ssub.s32 %s22, %s36
    %s239 = sor.u32 %s237, %s238
    %p240 = scmp.eq.s32.totalorder %s239, 0
    %s242 = sadd.s32 %s241, 1
    %s243 = scalar_select %p240, %s241, %s242
    %p246 = pneg %p240
    %p247 = scmp.eq.s32.totalorder %s14, 1
    %p248 = por %p246, %p247
    %p249 = scmp.ne.s32.totalorder %s241, %s244
    %p250 = scmp.eq.s32.totalorder %s14, 0
    %p251 = por %p249, %p250
    %p252 = scmp.ne.s32.totalorder %s241, %s244
    %p253 = scmp.eq.s32.totalorder %s19, 1
    %p254 = por %p252, %p253
    %p255 = scmp.ne.s32.totalorder %s244, %s245
    %p256 = scmp.eq.s32.totalorder %s19, 0
    %p257 = por %p255, %p256
    %p258 = scmp.ne.s32.totalorder %s244, %s245
    %p259 = scmp.eq.s32.totalorder %s20, 1
    %p260 = por %p258, %p259
    %p262 = scmp.ne.s32.totalorder %s245, %s261
    %p263 = scmp.eq.s32.totalorder %s20, 0
    %p264 = por %p262, %p263
    %p265 = scmp.le.s32.totalorder 1, %s14
    %p266 = scmp.lt.s32.totalorder %s14, 3
    %p267 = pnand %p265, %p266
    %p268 = pneg %p267
    // Predicated region
    $region9: #{basic_block_forward.4} parent=5 // pred_check
      _
    $region10: #{basic_block_forward.4} parent=5 // pred_check_branch
      %270 = sbr.rel (%p267) target = $region12
    $region11: #{basic_block_forward.4} parent=5 // pred_region
      %s271 = ssub.s32 %s14, 1
      // Predicated region
      $region13: #{basic_block_forward.4} parent=11 // pred_check
        %p272 = pneg %p85
      $region14: #{basic_block_forward.4} parent=11 // pred_check_branch
        %274 = sbr.rel (%p272) target = $region16
      $region15: #{basic_block_forward.4} parent=11 // pred_region
        %p275 = scmp.lt.s32.totalorder %s25, 0
        %s276 = scalar_select %p275, %s25, 0
        %s277 = smul.addr %s276, 4
        %s278 = scalar_lea.vmem %s1, %s277
      $region16: #{basic_block_forward.4} parent=11 // pred_fallthru
        _
      // Predicated region
      $region17: #{basic_block_forward.4} parent=11 // pred_check
        %p279 = pneg %p111
      $region18: #{basic_block_forward.4} parent=11 // pred_check_branch
        %281 = sbr.rel (%p279) target = $region20
      $region19: #{basic_block_forward.4} parent=11 // pred_region
        %s282 = smul.u32 32, %s26
        %p283 = scmp.lt.s32.totalorder %s282, 31
        %s284 = scalar_select %p283, %s282, 31
        %s285 = smul.addr %s284, 8
        %s286 = scalar_lea.vmem %s2, %s285
        %s287 = smul.u32 32, %s26
      $region20: #{basic_block_forward.4} parent=11 // pred_fallthru
        _
      // Predicated region
      $region21: #{basic_block_forward.4} parent=11 // pred_check
        %p288 = pneg %p137
      $region22: #{basic_block_forward.4} parent=11 // pred_check_branch
        %290 = sbr.rel (%p288) target = $region24
      $region23: #{basic_block_forward.4} parent=11 // pred_region
        %p291 = scmp.lt.s32.totalorder %s25, 0
        %s292 = scalar_select %p291, %s25, 0
        %s293 = smul.addr %s292, 4
        %s294 = scalar_lea.vmem %s3, %s293
      $region24: #{basic_block_forward.4} parent=11 // pred_fallthru
        _
    $region12: #{basic_block_forward.4} parent=5 // pred_fallthru
      _
    %p295 = scmp.lt.s32.totalorder %s14, 2
    // Predicated region
    $region25: #{basic_block_forward.4} parent=5 // pred_check
      %p296 = pneg %p295
    $region26: #{basic_block_forward.4} parent=5 // pred_check_branch
      %298 = sbr.rel (%p296) target = $region28
    $region27: #{basic_block_forward.4} parent=5 // pred_region
      // Predicated region
      $region29: #{basic_block_forward.4} parent=27 // pred_check
        %p299 = pneg %p53
      $region30: #{basic_block_forward.4} parent=27 // pred_check_branch
        %301 = sbr.rel (%p299) target = $region32
      $region31: #{basic_block_forward.4} parent=27 // pred_region
        %p302 = scmp.lt.s32.totalorder %s21, 1
        %s303 = scalar_select %p302, %s21, 1
        %s304 = smul.addr %s303, 96
        %s305 = smul.addr %s304, 8
        %s306 = scalar_lea.vmem %s0, %s305
      $region32: #{basic_block_forward.4} parent=27 // pred_fallthru
        _
    $region28: #{basic_block_forward.4} parent=5 // pred_fallthru
      _
    %p307 = scmp.le.s32.totalorder 1, %s14
    %p308 = scmp.lt.s32.totalorder %s14, 3
    %p309 = pnand %p307, %p308
    %p310 = pneg %p309
    // Predicated region
    $region33: #{basic_block_forward.4} parent=5 // pred_check
      _
    $region34: #{basic_block_forward.4} parent=5 // pred_check_branch
      %312 = sbr.rel (%p309) target = $region36
    $region35: #{basic_block_forward.4} parent=5 // pred_region
      %s313 = ssub.s32 %s14, 1
      %p314 = scmp.lt.s32.totalorder %s24, 1
      %s315 = scalar_select %p314, %s24, 1
      %s316 = smul.addr %s315, 96
      %s317 = smul.addr %s316, 8
      %s318 = scalar_lea.vmem %s0, %s317
      %p319 = pneg %p59
      %p320 = pneg %p56
      %p321 = scmp.lt.s32.totalorder %s25, 0
      %s322 = scalar_select %p321, %s25, 0
      %s323 = smul.addr %s322, 4
      %s324 = scalar_lea.vmem %s1, %s323
      %p325 = pneg %p85
      %p326 = pneg %p82
      %s327 = smul.u32 32, %s26
      %p328 = scmp.lt.s32.totalorder %s327, 31
      %s329 = scalar_select %p328, %s327, 31
      %s330 = smul.addr %s329, 8
      %s331 = scalar_lea.vmem %s2, %s330
      %p332 = pneg %p111
      %p333 = pneg %p108
      %p334 = scmp.lt.s32.totalorder %s25, 0
      %s335 = scalar_select %p334, %s25, 0
      %s336 = smul.addr %s335, 4
      %s337 = scalar_lea.vmem %s3, %s336
      %p338 = pneg %p137
      %p339 = pneg %p134
      %p340 = pneg %p167
      %p341 = pneg %p164
      %s342 = smul.u32 32, %s26
      %p343 = scmp.lt.s32.totalorder %s24, 1
      %s344 = scalar_select %p343, %s24, 1
      %p345 = scmp.lt.s32.totalorder %s342, 31
      %s346 = scalar_select %p345, %s342, 31
      %p347 = scmp.lt.s32.totalorder %s25, 0
      %s348 = scalar_select %p347, %s25, 0
      %s349 = sadd.s32 %s348, %s346
      %s350 = smul.addr %s344, 32
      %s351 = sadd.s32 %s349, %s350
      %s352 = smul.addr %s351, 4
      %s353 = scalar_lea.vmem %s4, %s352
      %p354 = pneg %p197
      %p355 = pneg %p194
      %p356 = scmp.lt.s32.totalorder %s24, 1
      %s357 = scalar_select %p356, %s24, 1
      %p358 = scmp.lt.s32.totalorder %s26, 0
      %s359 = scalar_select %p358, %s26, 0
      %p360 = scmp.lt.s32.totalorder %s25, 0
      %s361 = scalar_select %p360, %s25, 0
      %s362 = sadd.s32 %s361, %s359
      %s363 = sadd.s32 %s362, %s357
      %s364 = smul.addr %s363, 8
      %s365 = scalar_lea.vmem %s5, %s364
      %p366 = pneg %p227
      %p367 = pneg %p224
      %s368 = smul.u32 32, %s26
      %p369 = scmp.lt.s32.totalorder %s24, 1
      %s370 = scalar_select %p369, %s24, 1
      %p371 = scmp.lt.s32.totalorder %s368, 31
      %s372 = scalar_select %p371, %s368, 31
      %p373 = scmp.lt.s32.totalorder %s25, 0
      %s374 = scalar_select %p373, %s25, 0
      %s375 = sadd.s32 %s374, %s372
      %s376 = smul.addr %s370, 32
      %s377 = sadd.s32 %s375, %s376
      %s378 = smul.addr %s377, 4
      %s379 = scalar_lea.vmem %s6, %s378
      %p380 = pneg %p257
      %p381 = pneg %p254
      %p382 = scmp.lt.s32.totalorder %s24, 1
      %s383 = scalar_select %p382, %s24, 1
      %p384 = scmp.lt.s32.totalorder %s26, 0
      %s385 = scalar_select %p384, %s26, 0
      %p386 = scmp.lt.s32.totalorder %s25, 0
      %s387 = scalar_select %p386, %s25, 0
      %s388 = sadd.s32 %s387, %s385
      %s389 = sadd.s32 %s388, %s383
      %s390 = smul.addr %s389, 8
      %s391 = scalar_lea.vmem %s7, %s390
      %p392 = scmp.lt.s32.totalorder %s24, 1
      %s393 = scalar_select %p392, %s24, 1
      %s394 = smul.addr %s393, 96
      %s395 = smul.addr %s394, 8
      %s396 = scalar_lea.vmem %s0, %s395
      %p397 = scmp.lt.s32.totalorder %s25, 0
      %s398 = scalar_select %p397, %s25, 0
      %s399 = smul.addr %s398, 4
      %s400 = scalar_lea.vmem %s1, %s399
      %s401 = smul.u32 32, %s26
      %p402 = scmp.lt.s32.totalorder %s401, 31
      %s403 = scalar_select %p402, %s401, 31
      %s404 = smul.addr %s403, 8
      %s405 = scalar_lea.vmem %s2, %s404
      %s406 = smul.u32 32, %s26
      %p407 = scmp.lt.s32.totalorder %s25, 0
      %s408 = scalar_select %p407, %s25, 0
      %s409 = smul.addr %s408, 4
      %s410 = scalar_lea.vmem %s3, %s409
      %s411 = smul.u32 32, %s26
      %p412 = scmp.lt.s32.totalorder %s24, 1
      %s413 = scalar_select %p412, %s24, 1
      %p414 = scmp.lt.s32.totalorder %s411, 31
      %s415 = scalar_select %p414, %s411, 31
      %p416 = scmp.lt.s32.totalorder %s25, 0
      %s417 = scalar_select %p416, %s25, 0
      %s418 = sadd.s32 %s417, %s415
      %s419 = smul.addr %s413, 32
      %s420 = sadd.s32 %s418, %s419
      %s421 = smul.addr %s420, 4
      %s422 = scalar_lea.vmem %s4, %s421
      %s423 = smul.u32 32, %s26
      %p424 = scmp.lt.s32.totalorder %s24, 1
      %s425 = scalar_select %p424, %s24, 1
      %p426 = scmp.lt.s32.totalorder %s26, 0
      %s427 = scalar_select %p426, %s26, 0
      %p428 = scmp.lt.s32.totalorder %s25, 0
      %s429 = scalar_select %p428, %s25, 0
      %s430 = sadd.s32 %s429, %s427
      %s431 = sadd.s32 %s430, %s425
      %s432 = smul.addr %s431, 8
      %s433 = scalar_lea.vmem %s5, %s432
      %s434 = smul.u32 32, %s26
      %p435 = scmp.lt.s32.totalorder %s24, 1
      %s436 = scalar_select %p435, %s24, 1
      %p437 = scmp.lt.s32.totalorder %s434, 31
      %s438 = scalar_select %p437, %s434, 31
      %p439 = scmp.lt.s32.totalorder %s25, 0
      %s440 = scalar_select %p439, %s25, 0
      %s441 = sadd.s32 %s440, %s438
      %s442 = smul.addr %s436, 32
      %s443 = sadd.s32 %s441, %s442
      %s444 = smul.addr %s443, 4
      %s445 = scalar_lea.vmem %s6, %s444
      %s446 = smul.u32 32, %s26
      %p447 = scmp.lt.s32.totalorder %s24, 1
      %s448 = scalar_select %p447, %s24, 1
      %p449 = scmp.lt.s32.totalorder %s26, 0
      %s450 = scalar_select %p449, %s26, 0
      %p451 = scmp.lt.s32.totalorder %s25, 0
      %s452 = scalar_select %p451, %s25, 0
      %s453 = sadd.s32 %s452, %s450
      %s454 = sadd.s32 %s453, %s448
      %s455 = smul.addr %s454, 8
      %s456 = scalar_lea.vmem %s7, %s455
      %s458 = sadd.s32 %s26, 1
      %s459 = smul.u32 %s458, 256
      %s460 = sadd.s32 %s459, 4294967279
      %s461 = scalar_lea.vmem %s396, %s460
      %v462 = vld [vmem:[%s461] sm:$0xff]
      %v463 = vld [vmem:[%s461 + $0x8] sm:$0xff]
      %v464 = vld [vmem:[%s461 + $0x10] sm:$0xff]
      %v465 = vld [vmem:[%s461 + $0x18] sm:$0xff]
      %v466 = vld [vmem:[%s461 + $0x20] sm:$0xff]
      %v467 = vld [vmem:[%s461 + $0x28] sm:$0xff]
      %v468 = vld [vmem:[%s461 + $0x30] sm:$0xff]
      %v469 = vld [vmem:[%s461 + $0x38] sm:$0xff]
      %v470 = vld [vmem:[%s461 + $0x40] sm:$0xff]
      %v471 = vld [vmem:[%s461 + $0x48] sm:$0xff]
      %v472 = vld [vmem:[%s461 + $0x50] sm:$0xff]
      %v473 = vld [vmem:[%s461 + $0x58] sm:$0xff]
      %v474 = vld [vmem:[%s461 + $0x60] sm:$0xff]
      %v475 = vld [vmem:[%s461 + $0x68] sm:$0xff]
      %v476 = vld [vmem:[%s461 + $0x70] sm:$0xff]
      %v477 = vld [vmem:[%s461 + $0x78] sm:$0xff]
      %v478 = vld [vmem:[%s461 + $0x80] sm:$0xff]
      %v479 = vld [vmem:[%s461 + $0x88] sm:$0xff]
      %v480 = vld [vmem:[%s461 + $0x90] sm:$0xff]
      %v481 = vld [vmem:[%s461 + $0x98] sm:$0xff]
      %v482 = vld [vmem:[%s461 + $0xa0] sm:$0xff]
      %v483 = vld [vmem:[%s461 + $0xa8] sm:$0xff]
      %v484 = vld [vmem:[%s461 + $0xb0] sm:$0xff]
      %v485 = vld [vmem:[%s461 + $0xb8] sm:$0xff]
      %v486 = vld [vmem:[%s461 + $0xc0] sm:$0xff]
      %v487 = vld [vmem:[%s461 + $0xc8] sm:$0xff]
      %v488 = vld [vmem:[%s461 + $0xd0] sm:$0xff]
      %v489 = vld [vmem:[%s461 + $0xd8] sm:$0xff]
      %v490 = vld [vmem:[%s461 + $0xe0] sm:$0xff]
      %v491 = vld [vmem:[%s461 + $0xe8] sm:$0xff]
      %v492 = vld [vmem:[%s461 + $0xf0] sm:$0xff]
      %v493 = vld [vmem:[%s461 + $0xf8] sm:$0xff]
      %v494 = vpack.c.bf16 %v463, %v462
      %v495 = vpack.c.bf16 %v465, %v464
      %v496 = vpack.c.bf16 %v467, %v466
      %v497 = vpack.c.bf16 %v469, %v468
      %v498 = vpack.c.bf16 %v471, %v470
      %v499 = vpack.c.bf16 %v473, %v472
      %v500 = vpack.c.bf16 %v475, %v474
      %v501 = vpack.c.bf16 %v477, %v476
      %v502 = vpack.c.bf16 %v479, %v478
      %v503 = vpack.c.bf16 %v481, %v480
      %v504 = vpack.c.bf16 %v483, %v482
      %v505 = vpack.c.bf16 %v485, %v484
      %v506 = vpack.c.bf16 %v487, %v486
      %v507 = vpack.c.bf16 %v489, %v488
      %v508 = vpack.c.bf16 %v491, %v490
      %v509 = vpack.c.bf16 %v493, %v492
      %v510 = vld [vmem:[%s400] sm:$0xf]
      %v511 = vld [vmem:[%s400 + $0x4] sm:$0xf]
      %v512 = vld [vmem:[%s400 + $0x8] sm:$0xf]
      %v513 = vld [vmem:[%s400 + $0xc] sm:$0xf]
      %v514 = vld [vmem:[%s400 + $0x10] sm:$0xf]
      %v515 = vld [vmem:[%s400 + $0x14] sm:$0xf]
      %v516 = vld [vmem:[%s400 + $0x18] sm:$0xf]
      %v517 = vld [vmem:[%s400 + $0x1c] sm:$0xf]
      %v518 = vld [vmem:[%s400 + $0x20] sm:$0xf]
      %v519 = vld [vmem:[%s400 + $0x24] sm:$0xf]
      %v520 = vld [vmem:[%s400 + $0x28] sm:$0xf]
      %v521 = vld [vmem:[%s400 + $0x2c] sm:$0xf]
      %v522 = vld [vmem:[%s400 + $0x30] sm:$0xf]
      %v523 = vld [vmem:[%s400 + $0x34] sm:$0xf]
      %v524 = vld [vmem:[%s400 + $0x38] sm:$0xf]
      %v525 = vld [vmem:[%s400 + $0x3c] sm:$0xf]
      %v542 = vunpack.c.l.b16 %v510
      %v543 = vunpack.c.l.b16 %v511
      %v544 = vunpack.c.l.b16 %v512
      %v545 = vunpack.c.l.b16 %v513
      %v546 = vunpack.c.l.b16 %v514
      %v547 = vunpack.c.l.b16 %v515
      %v548 = vunpack.c.l.b16 %v516
      %v549 = vunpack.c.l.b16 %v517
      %v550 = vunpack.c.l.b16 %v518
      %v551 = vunpack.c.l.b16 %v519
      %v552 = vunpack.c.l.b16 %v520
      %v553 = vunpack.c.l.b16 %v521
      %v554 = vunpack.c.l.b16 %v522
      %v555 = vunpack.c.l.b16 %v523
      %v556 = vunpack.c.l.b16 %v524
      %v557 = vunpack.c.l.b16 %v525
      %v558 = vpack.c.b16 %v543, %v542
      %v559 = vpack.c.b16 %v545, %v544
      %v560 = vpack.c.b16 %v547, %v546
      %v561 = vpack.c.b16 %v549, %v548
      %v562 = vpack.c.b16 %v551, %v550
      %v563 = vpack.c.b16 %v553, %v552
      %v564 = vpack.c.b16 %v555, %v554
      %v565 = vpack.c.b16 %v557, %v556
      %574 = vmatprep.subr.bf16.mxu0 0
      %575 = vmatpush1.bf16.msra.mxu0 %v558
      %576 = vmatprep.subr.bf16.mxu0 0
      %577 = vmatpush1.bf16.msra.mxu0 %v559
      %578 = vmatprep.subr.bf16.mxu0 0
      %579 = vmatpush1.bf16.msra.mxu0 %v560
      %580 = vmatprep.subr.bf16.mxu0 0
      %581 = vmatpush1.bf16.msra.mxu0 %v561
      %582 = vmatprep.subr.bf16.mxu0 0
      %583 = vmatpush1.bf16.msra.mxu0 %v562
      %584 = vmatprep.subr.bf16.mxu0 0
      %585 = vmatpush1.bf16.msra.mxu0 %v563
      %586 = vmatprep.subr.bf16.mxu0 0
      %587 = vmatpush1.bf16.msra.mxu0 %v564
      %588 = vmatprep.subr.bf16.mxu0 0
      %589 = vmatpush1.bf16.msra.mxu0 %v565
      %590 = vmatprep.subr.bf16.mxu0 0
      %591 = vmatpush1.bf16.msra.mxu0 0
      %592 = vmatprep.subr.bf16.mxu0 0
      %593 = vmatpush1.bf16.msra.mxu0 0
      %594 = vmatprep.subr.bf16.mxu0 0
      %595 = vmatpush1.bf16.msra.mxu0 0
      %596 = vmatprep.subr.bf16.mxu0 0
      %597 = vmatpush1.bf16.msra.mxu0 0
      %598 = vmatprep.subr.bf16.mxu0 0
      %599 = vmatpush1.bf16.msra.mxu0 0
      %600 = vmatprep.subr.bf16.mxu0 0
      %601 = vmatpush1.bf16.msra.mxu0 0
      %602 = vmatprep.subr.bf16.mxu0 0
      %603 = vmatpush1.bf16.msra.mxu0 0
      %604 = vmatprep.subr.bf16.mxu0 0
      %605 = vmatpush1.bf16.msra.mxu0 0
      %606 = vmatprep.mubr.bf16.mxu0 0
      %607 = vmatmul.mubr.bf16.gmra.mrb[0].mxu0 %v494
      %v608 = vpop.f32.mrb[0].mxu0
      %v609 = vadd.f32 0.0, %v608
      %v610 = vpop.f32.mrb[0].mxu0
      %v611 = vpop.f32.mrb[0].mxu0
      %v612 = vadd.f32 0.0, %v611
      %v613 = vpop.f32.mrb[0].mxu0
      %614 = vmatprep.mubr.bf16.mxu0 0
      %615 = vmatmul.mubr.bf16.gmra.mrb[0].mxu0 %v495
      %v616 = vpop.f32.mrb[0].mxu0
      %v617 = vadd.f32 0.0, %v616
      %v618 = vpop.f32.mrb[0].mxu0
      %v619 = vpop.f32.mrb[0].mxu0
      %v620 = vadd.f32 0.0, %v619
      %v621 = vpop.f32.mrb[0].mxu0
      %622 = vmatprep.mubr.bf16.mxu0 0
      %623 = vmatmul.mubr.bf16.gmra.mrb[0].mxu0 %v496
      %v624 = vpop.f32.mrb[0].mxu0
      %v625 = vadd.f32 0.0, %v624
      %v626 = vpop.f32.mrb[0].mxu0
      %v627 = vpop.f32.mrb[0].mxu0
      %v628 = vadd.f32 0.0, %v627
      %v629 = vpop.f32.mrb[0].mxu0
      %630 = vmatprep.mubr.bf16.mxu0 0
      %631 = vmatmul.mubr.bf16.gmra.mrb[0].mxu0 %v497
      %v632 = vpop.f32.mrb[0].mxu0
      %v633 = vadd.f32 0.0, %v632
      %v634 = vpop.f32.mrb[0].mxu0
      %v635 = vpop.f32.mrb[0].mxu0
      %v636 = vadd.f32 0.0, %v635
      %v637 = vpop.f32.mrb[0].mxu0
      %638 = vmatprep.mubr.bf16.mxu0 0
      %639 = vmatmul.mubr.bf16.gmra.mrb[0].mxu0 %v498
      %v640 = vpop.f32.mrb[0].mxu0
      %v641 = vadd.f32 0.0, %v640
      %v642 = vpop.f32.mrb[0].mxu0
      %v643 = vpop.f32.mrb[0].mxu0
      %v644 = vadd.f32 0.0, %v643
      %v645 = vpop.f32.mrb[0].mxu0
      %646 = vmatprep.mubr.bf16.mxu0 0
      %647 = vmatmul.mubr.bf16.gmra.mrb[0].mxu0 %v499
      %v648 = vpop.f32.mrb[0].mxu0
      %v649 = vadd.f32 0.0, %v648
      %v650 = vpop.f32.mrb[0].mxu0
      %v651 = vpop.f32.mrb[0].mxu0
      %v652 = vadd.f32 0.0, %v651
      %v653 = vpop.f32.mrb[0].mxu0
      %654 = vmatprep.mubr.bf16.mxu0 0
      %655 = vmatmul.mubr.bf16.gmra.mrb[0].mxu0 %v500
      %v656 = vpop.f32.mrb[0].mxu0
      %v657 = vadd.f32 0.0, %v656
      %v658 = vpop.f32.mrb[0].mxu0
      %v659 = vpop.f32.mrb[0].mxu0
      %v660 = vadd.f32 0.0, %v659
      %v661 = vpop.f32.mrb[0].mxu0
      %662 = vmatprep.mubr.bf16.mxu0 0
      %663 = vmatmul.mubr.bf16.gmra.mrb[0].mxu0 %v501
      %v664 = vpop.f32.mrb[0].mxu0
      %v665 = vadd.f32 0.0, %v664
      %v666 = vpop.f32.mrb[0].mxu0
      %v667 = vpop.f32.mrb[0].mxu0
      %v668 = vadd.f32 0.0, %v667
      %v669 = vpop.f32.mrb[0].mxu0
      %670 = vmatprep.mubr.bf16.mxu0 0
      %671 = vmatmul.mubr.bf16.gmra.mrb[0].mxu0 %v502
      %v672 = vpop.f32.mrb[0].mxu0
      %v673 = vadd.f32 0.0, %v672
      %v674 = vpop.f32.mrb[0].mxu0
      %v675 = vpop.f32.mrb[0].mxu0
      %v676 = vadd.f32 0.0, %v675
      %v677 = vpop.f32.mrb[0].mxu0
      %678 = vmatprep.mubr.bf16.mxu0 0
      %679 = vmatmul.mubr.bf16.gmra.mrb[0].mxu0 %v503
      %v680 = vpop.f32.mrb[0].mxu0
      %v681 = vadd.f32 0.0, %v680
      %v682 = vpop.f32.mrb[0].mxu0
      %v683 = vpop.f32.mrb[0].mxu0
      %v684 = vadd.f32 0.0, %v683
      %v685 = vpop.f32.mrb[0].mxu0
      %686 = vmatprep.mubr.bf16.mxu0 0
      %687 = vmatmul.mubr.bf16.gmra.mrb[0].mxu0 %v504
      %v688 = vpop.f32.mrb[0].mxu0
      %v689 = vadd.f32 0.0, %v688
      %v690 = vpop.f32.mrb[0].mxu0
      %v691 = vpop.f32.mrb[0].mxu0
      %v692 = vadd.f32 0.0, %v691
      %v693 = vpop.f32.mrb[0].mxu0
      %694 = vmatprep.mubr.bf16.mxu0 0
      %695 = vmatmul.mubr.bf16.gmra.mrb[0].mxu0 %v505
      %v696 = vpop.f32.mrb[0].mxu0
      %v697 = vadd.f32 0.0, %v696
      %v698 = vpop.f32.mrb[0].mxu0
      %v699 = vpop.f32.mrb[0].mxu0
      %v700 = vadd.f32 0.0, %v699
      %v701 = vpop.f32.mrb[0].mxu0
      %702 = vmatprep.mubr.bf16.mxu0 0
      %703 = vmatmul.mubr.bf16.gmra.mrb[0].mxu0 %v506
      %v704 = vpop.f32.mrb[0].mxu0
      %v705 = vadd.f32 0.0, %v704
      %v706 = vpop.f32.mrb[0].mxu0
      %v707 = vpop.f32.mrb[0].mxu0
      %v708 = vadd.f32 0.0, %v707
      %v709 = vpop.f32.mrb[0].mxu0
      %710 = vmatprep.mubr.bf16.mxu0 0
      %711 = vmatmul.mubr.bf16.gmra.mrb[0].mxu0 %v507
      %v712 = vpop.f32.mrb[0].mxu0
      %v713 = vadd.f32 0.0, %v712
      %v714 = vpop.f32.mrb[0].mxu0
      %v715 = vpop.f32.mrb[0].mxu0
      %v716 = vadd.f32 0.0, %v715
      %v717 = vpop.f32.mrb[0].mxu0
      %718 = vmatprep.mubr.bf16.mxu0 0
      %719 = vmatmul.mubr.bf16.gmra.mrb[0].mxu0 %v508
      %v720 = vpop.f32.mrb[0].mxu0
      %v721 = vadd.f32 0.0, %v720
      %v722 = vpop.f32.mrb[0].mxu0
      %v723 = vpop.f32.mrb[0].mxu0
      %v724 = vadd.f32 0.0, %v723
      %v725 = vpop.f32.mrb[0].mxu0
      %726 = vmatprep.mubr.bf16.mxu0 0
      %727 = vmatmul.mubr.bf16.gmra.mrb[0].mxu0 %v509
      %v728 = vpop.f32.mrb[0].mxu0
      %v729 = vadd.f32 0.0, %v728
      %v730 = vpop.f32.mrb[0].mxu0
      %v731 = vpop.f32.mrb[0].mxu0
      %v732 = vadd.f32 0.0, %v731
      %v733 = vpop.f32.mrb[0].mxu0
      %734 = vdwg.mxu0
      %735 = vst [vmem:[#allocation2] sm:$0xff] %v609
      %736 = vst [vmem:[#allocation2 + $0x8] sm:$0xff] %v612
      %737 = vst [vmem:[#allocation2 + $0x10] sm:$0xff] %v617
      %738 = vst [vmem:[#allocation2 + $0x18] sm:$0xff] %v620
      %739 = vst [vmem:[#allocation2 + $0x20] sm:$0xff] %v625
      %740 = vst [vmem:[#allocation2 + $0x28] sm:$0xff] %v628
      %741 = vst [vmem:[#allocation2 + $0x30] sm:$0xff] %v633
      %742 = vst [vmem:[#allocation2 + $0x38] sm:$0xff] %v636
      %743 = vst [vmem:[#allocation2 + $0x40] sm:$0xff] %v641
      %744 = vst [vmem:[#allocation2 + $0x48] sm:$0xff] %v644
      %745 = vst [vmem:[#allocation2 + $0x50] sm:$0xff] %v649
      %746 = vst [vmem:[#allocation2 + $0x58] sm:$0xff] %v652
      %747 = vst [vmem:[#allocation2 + $0x60] sm:$0xff] %v657
      %748 = vst [vmem:[#allocation2 + $0x68] sm:$0xff] %v660
      %749 = vst [vmem:[#allocation2 + $0x70] sm:$0xff] %v665
      %750 = vst [vmem:[#allocation2 + $0x78] sm:$0xff] %v668
      %751 = vst [vmem:[#allocation2 + $0x80] sm:$0xff] %v673
      %752 = vst [vmem:[#allocation2 + $0x88] sm:$0xff] %v676
      %753 = vst [vmem:[#allocation2 + $0x90] sm:$0xff] %v681
      %754 = vst [vmem:[#allocation2 + $0x98] sm:$0xff] %v684
      %755 = vst [vmem:[#allocation2 + $0xa0] sm:$0xff] %v689
      %756 = vst [vmem:[#allocation2 + $0xa8] sm:$0xff] %v692
      %757 = vst [vmem:[#allocation2 + $0xb0] sm:$0xff] %v697
      %758 = vst [vmem:[#allocation2 + $0xb8] sm:$0xff] %v700
      %759 = vst [vmem:[#allocation2 + $0xc0] sm:$0xff] %v705
      %760 = vst [vmem:[#allocation2 + $0xc8] sm:$0xff] %v708
      %761 = vst [vmem:[#allocation2 + $0xd0] sm:$0xff] %v713
      %762 = vst [vmem:[#allocation2 + $0xd8] sm:$0xff] %v716
      %763 = vst [vmem:[#allocation2 + $0xe0] sm:$0xff] %v721
      %764 = vst [vmem:[#allocation2 + $0xe8] sm:$0xff] %v724
      %765 = vst [vmem:[#allocation2 + $0xf0] sm:$0xff] %v729
      %766 = vst [vmem:[#allocation2 + $0xf8] sm:$0xff] %v732
      %s767 = sadd.s32 %s459, 4294967280
      %s768 = scalar_lea.vmem %s396, %s767
      %v769 = vld [vmem:[%s768] sm:$0xff]
      %v770 = vld [vmem:[%s768 + $0x8] sm:$0xff]
      %v771 = vld [vmem:[%s768 + $0x10] sm:$0xff]
      %v772 = vld [vmem:[%s768 + $0x18] sm:$0xff]
      %v773 = vld [vmem:[%s768 + $0x20] sm:$0xff]
      %v774 = vld [vmem:[%s768 + $0x28] sm:$0xff]
      %v775 = vld [vmem:[%s768 + $0x30] sm:$0xff]
      %v776 = vld [vmem:[%s768 + $0x38] sm:$0xff]
      %v777 = vld [vmem:[%s768 + $0x40] sm:$0xff]
      %v778 = vld [vmem:[%s768 + $0x48] sm:$0xff]
      %v779 = vld [vmem:[%s768 + $0x50] sm:$0xff]
      %v780 = vld [vmem:[%s768 + $0x58] sm:$0xff]
      %v781 = vld [vmem:[%s768 + $0x60] sm:$0xff]
      %v782 = vld [vmem:[%s768 + $0x68] sm:$0xff]
      %v783 = vld [vmem:[%s768 + $0x70] sm:$0xff]
      %v784 = vld [vmem:[%s768 + $0x78] sm:$0xff]
      %v785 = vld [vmem:[%s768 + $0x80] sm:$0xff]
      %v786 = vld [vmem:[%s768 + $0x88] sm:$0xff]
      %v787 = vld [vmem:[%s768 + $0x90] sm:$0xff]
      %v788 = vld [vmem:[%s768 + $0x98] sm:$0xff]
      %v789 = vld [vmem:[%s768 + $0xa0] sm:$0xff]
      %v790 = vld [vmem:[%s768 + $0xa8] sm:$0xff]
      %v791 = vld [vmem:[%s768 + $0xb0] sm:$0xff]
      %v792 = vld [vmem:[%s768 + $0xb8] sm:$0xff]
      %v793 = vld [vmem:[%s768 + $0xc0] sm:$0xff]
      %v794 = vld [vmem:[%s768 + $0xc8] sm:$0xff]
      %v795 = vld [vmem:[%s768 + $0xd0] sm:$0xff]
      %v796 = vld [vmem:[%s768 + $0xd8] sm:$0xff]
      %v797 = vld [vmem:[%s768 + $0xe0] sm:$0xff]
      %v798 = vld [vmem:[%s768 + $0xe8] sm:$0xff]
      %v799 = vld [vmem:[%s768 + $0xf0] sm:$0xff]
      %v800 = vld [vmem:[%s768 + $0xf8] sm:$0xff]
      %v801 = vpack.c.bf16 %v770, %v769
      %v802 = vpack.c.bf16 %v772, %v771
      %v803 = vpack.c.bf16 %v774, %v773
      %v804 = vpack.c.bf16 %v776, %v775
      %v805 = vpack.c.bf16 %v778, %v777
      %v806 = vpack.c.bf16 %v780, %v779
      %v807 = vpack.c.bf16 %v782, %v781
      %v808 = vpack.c.bf16 %v784, %v783
      %v809 = vpack.c.bf16 %v786, %v785
      %v810 = vpack.c.bf16 %v788, %v787
      %v811 = vpack.c.bf16 %v790, %v789
      %v812 = vpack.c.bf16 %v792, %v791
      %v813 = vpack.c.bf16 %v794, %v793
      %v814 = vpack.c.bf16 %v796, %v795
      %v815 = vpack.c.bf16 %v798, %v797
      %v816 = vpack.c.bf16 %v800, %v799
      %s817 = scalar_lea.vmem %s400, 64
      %v818 = vld [vmem:[%s817] sm:$0xf]
      %v819 = vld [vmem:[%s817 + $0x4] sm:$0xf]
      %v820 = vld [vmem:[%s817 + $0x8] sm:$0xf]
      %v821 = vld [vmem:[%s817 + $0xc] sm:$0xf]
      %v822 = vld [vmem:[%s817 + $0x10] sm:$0xf]
      %v823 = vld [vmem:[%s817 + $0x14] sm:$0xf]
      %v824 = vld [vmem:[%s817 + $0x18] sm:$0xf]
      %v825 = vld [vmem:[%s817 + $0x1c] sm:$0xf]
      %v826 = vld [vmem:[%s817 + $0x20] sm:$0xf]
      %v827 = vld [vmem:[%s817 + $0x24] sm:$0xf]
      %v828 = vld [vmem:[%s817 + $0x28] sm:$0xf]
      %v829 = vld [vmem:[%s817 + $0x2c] sm:$0xf]
      %v830 = vld [vmem:[%s817 + $0x30] sm:$0xf]
      %v831 = vld [vmem:[%s817 + $0x34] sm:$0xf]
      %v832 = vld [vmem:[%s817 + $0x38] sm:$0xf]
      %v833 = vld [vmem:[%s817 + $0x3c] sm:$0xf]
      %v850 = vunpack.c.l.b16 %v818
      %v851 = vunpack.c.l.b16 %v819
      %v852 = vunpack.c.l.b16 %v820
      %v853 = vunpack.c.l.b16 %v821
      %v854 = vunpack.c.l.b16 %v822
      %v855 = vunpack.c.l.b16 %v823
      %v856 = vunpack.c.l.b16 %v824
      %v857 = vunpack.c.l.b16 %v825
      %v858 = vunpack.c.l.b16 %v826
      %v859 = vunpack.c.l.b16 %v827
      %v860 = vunpack.c.l.b16 %v828
      %v861 = vunpack.c.l.b16 %v829
      %v862 = vunpack.c.l.b16 %v830
      %v863 = vunpack.c.l.b16 %v831
      %v864 = vunpack.c.l.b16 %v832
      %v865 = vunpack.c.l.b16 %v833
      %v866 = vpack.c.b16 %v851, %v850
      %v867 = vpack.c.b16 %v853, %v852
      %v868 = vpack.c.b16 %v855, %v854
      %v869 = vpack.c.b16 %v857, %v856
      %v870 = vpack.c.b16 %v859, %v858
      %v871 = vpack.c.b16 %v861, %v860
      %v872 = vpack.c.b16 %v863, %v862
      %v873 = vpack.c.b16 %v865, %v864
      %882 = vmatprep.subr.bf16.mxu0 0
      %883 = vmatpush1.bf16.msra.mxu0 %v866
      %884 = vmatprep.subr.bf16.mxu0 0
      %885 = vmatpush1.bf16.msra.mxu0 %v867
      %886 = vmatprep.subr.bf16.mxu0 0
      %887 = vmatpush1.bf16.msra.mxu0 %v868
      %888 = vmatprep.subr.bf16.mxu0 0
      %889 = vmatpush1.bf16.msra.mxu0 %v869
      %890 = vmatprep.subr.bf16.mxu0 0
      %891 = vmatpush1.bf16.msra.mxu0 %v870
      %892 = vmatprep.subr.bf16.mxu0 0
      %893 = vmatpush1.bf16.msra.mxu0 %v871
      %894 = vmatprep.subr.bf16.mxu0 0
      %895 = vmatpush1.bf16.msra.mxu0 %v872
      %896 = vmatprep.subr.bf16.mxu0 0
      %897 = vmatpush1.bf16.msra.mxu0 %v873
      %898 = vmatprep.subr.bf16.mxu0 0
      %899 = vmatpush1.bf16.msra.mxu0 0
      %900 = vmatprep.subr.bf16.mxu0 0
      %901 = vmatpush1.bf16.msra.mxu0 0
      %902 = vmatprep.subr.bf16.mxu0 0
      %903 = vmatpush1.bf16.msra.mxu0 0
      %904 = vmatprep.subr.bf16.mxu0 0
      %905 = vmatpush1.bf16.msra.mxu0 0
      %906 = vmatprep.subr.bf16.mxu0 0
      %907 = vmatpush1.bf16.msra.mxu0 0
      %908 = vmatprep.subr.bf16.mxu0 0
      %909 = vmatpush1.bf16.msra.mxu0 0
      %910 = vmatprep.subr.bf16.mxu0 0
      %911 = vmatpush1.bf16.msra.mxu0 0
      %912 = vmatprep.subr.bf16.mxu0 0
      %913 = vmatpush1.bf16.msra.mxu0 0
      %914 = vmatprep.mubr.bf16.mxu0 0
      %915 = vmatmul.mubr.bf16.gmra.mrb[0].mxu0 %v801
      %v916 = vpop.f32.mrb[0].mxu0
      %v917 = vadd.f32 0.0, %v916
      %v918 = vpop.f32.mrb[0].mxu0
      %v919 = vpop.f32.mrb[0].mxu0
      %v920 = vadd.f32 0.0, %v919
      %v921 = vpop.f32.mrb[0].mxu0
      %922 = vmatprep.mubr.bf16.mxu0 0
      %923 = vmatmul.mubr.bf16.gmra.mrb[0].mxu0 %v802
      %v924 = vpop.f32.mrb[0].mxu0
      %v925 = vadd.f32 0.0, %v924
      %v926 = vpop.f32.mrb[0].mxu0
      %v927 = vpop.f32.mrb[0].mxu0
      %v928 = vadd.f32 0.0, %v927
      %v929 = vpop.f32.mrb[0].mxu0
      %930 = vmatprep.mubr.bf16.mxu0 0
      %931 = vmatmul.mubr.bf16.gmra.mrb[0].mxu0 %v803
      %v932 = vpop.f32.mrb[0].mxu0
      %v933 = vadd.f32 0.0, %v932
      %v934 = vpop.f32.mrb[0].mxu0
      %v935 = vpop.f32.mrb[0].mxu0
      %v936 = vadd.f32 0.0, %v935
      %v937 = vpop.f32.mrb[0].mxu0
      %938 = vmatprep.mubr.bf16.mxu0 0
      %939 = vmatmul.mubr.bf16.gmra.mrb[0].mxu0 %v804
      %v940 = vpop.f32.mrb[0].mxu0
      %v941 = vadd.f32 0.0, %v940
      %v942 = vpop.f32.mrb[0].mxu0
      %v943 = vpop.f32.mrb[0].mxu0
      %v944 = vadd.f32 0.0, %v943
      %v945 = vpop.f32.mrb[0].mxu0
      %946 = vmatprep.mubr.bf16.mxu0 0
      %947 = vmatmul.mubr.bf16.gmra.mrb[0].mxu0 %v805
      %v948 = vpop.f32.mrb[0].mxu0
      %v949 = vadd.f32 0.0, %v948
      %v950 = vpop.f32.mrb[0].mxu0
      %v951 = vpop.f32.mrb[0].mxu0
      %v952 = vadd.f32 0.0, %v951
      %v953 = vpop.f32.mrb[0].mxu0
      %954 = vmatprep.mubr.bf16.mxu0 0
      %955 = vmatmul.mubr.bf16.gmra.mrb[0].mxu0 %v806
      %v956 = vpop.f32.mrb[0].mxu0
      %v957 = vadd.f32 0.0, %v956
      %v958 = vpop.f32.mrb[0].mxu0
      %v959 = vpop.f32.mrb[0].mxu0
      %v960 = vadd.f32 0.0, %v959
      %v961 = vpop.f32.mrb[0].mxu0
      %962 = vmatprep.mubr.bf16.mxu0 0
      %963 = vmatmul.mubr.bf16.gmra.mrb[0].mxu0 %v807
      %v964 = vpop.f32.mrb[0].mxu0
      %v965 = vadd.f32 0.0, %v964
      %v966 = vpop.f32.mrb[0].mxu0
      %v967 = vpop.f32.mrb[0].mxu0
      %v968 = vadd.f32 0.0, %v967
      %v969 = vpop.f32.mrb[0].mxu0
      %970 = vmatprep.mubr.bf16.mxu0 0
      %971 = vmatmul.mubr.bf16.gmra.mrb[0].mxu0 %v808
      %v972 = vpop.f32.mrb[0].mxu0
      %v973 = vadd.f32 0.0, %v972
      %v974 = vpop.f32.mrb[0].mxu0
      %v975 = vpop.f32.mrb[0].mxu0
      %v976 = vadd.f32 0.0, %v975
      %v977 = vpop.f32.mrb[0].mxu0
      %978 = vmatprep.mubr.bf16.mxu0 0
      %979 = vmatmul.mubr.bf16.gmra.mrb[0].mxu0 %v809
      %v980 = vpop.f32.mrb[0].mxu0
      %v981 = vadd.f32 0.0, %v980
      %v982 = vpop.f32.mrb[0].mxu0
      %v983 = vpop.f32.mrb[0].mxu0
      %v984 = vadd.f32 0.0, %v983
      %v985 = vpop.f32.mrb[0].mxu0
      %986 = vmatprep.mubr.bf16.mxu0 0
      %987 = vmatmul.mubr.bf16.gmra.mrb[0].mxu0 %v810
      %v988 = vpop.f32.mrb[0].mxu0
      %v989 = vadd.f32 0.0, %v988
      %v990 = vpop.f32.mrb[0].mxu0
      %v991 = vpop.f32.mrb[0].mxu0
      %v992 = vadd.f32 0.0, %v991
      %v993 = vpop.f32.mrb[0].mxu0
      %994 = vmatprep.mubr.bf16.mxu0 0
      %995 = vmatmul.mubr.bf16.gmra.mrb[0].mxu0 %v811
      %v996 = vpop.f32.mrb[0].mxu0
      %v997 = vadd.f32 0.0, %v996
      %v998 = vpop.f32.mrb[0].mxu0
      %v999 = vpop.f32.mrb[0].mxu0
      %v1000 = vadd.f32 0.0, %v999
      %v1001 = vpop.f32.mrb[0].mxu0
      %1002 = vmatprep.mubr.bf16.mxu0 0
      %1003 = vmatmul.mubr.bf16.gmra.mrb[0].mxu0 %v812
      %v1004 = vpop.f32.mrb[0].mxu0
      %v1005 = vadd.f32 0.0, %v1004
      %v1006 = vpop.f32.mrb[0].mxu0
      %v1007 = vpop.f32.mrb[0].mxu0
      %v1008 = vadd.f32 0.0, %v1007
      %v1009 = vpop.f32.mrb[0].mxu0
      %1010 = vmatprep.mubr.bf16.mxu0 0
      %1011 = vmatmul.mubr.bf16.gmra.mrb[0].mxu0 %v813
      %v1012 = vpop.f32.mrb[0].mxu0
      %v1013 = vadd.f32 0.0, %v1012
      %v1014 = vpop.f32.mrb[0].mxu0
      %v1015 = vpop.f32.mrb[0].mxu0
      %v1016 = vadd.f32 0.0, %v1015
      %v1017 = vpop.f32.mrb[0].mxu0
      %1018 = vmatprep.mubr.bf16.mxu0 0
      %1019 = vmatmul.mubr.bf16.gmra.mrb[0].mxu0 %v814
      %v1020 = vpop.f32.mrb[0].mxu0
      %v1021 = vadd.f32 0.0, %v1020
      %v1022 = vpop.f32.mrb[0].mxu0
      %v1023 = vpop.f32.mrb[0].mxu0
      %v1024 = vadd.f32 0.0, %v1023
      %v1025 = vpop.f32.mrb[0].mxu0
      %1026 = vmatprep.mubr.bf16.mxu0 0
      %1027 = vmatmul.mubr.bf16.gmra.mrb[0].mxu0 %v815
      %v1028 = vpop.f32.mrb[0].mxu0
      %v1029 = vadd.f32 0.0, %v1028
      %v1030 = vpop.f32.mrb[0].mxu0
      %v1031 = vpop.f32.mrb[0].mxu0
      %v1032 = vadd.f32 0.0, %v1031
      %v1033 = vpop.f32.mrb[0].mxu0
      %1034 = vmatprep.mubr.bf16.mxu0 0
      %1035 = vmatmul.mubr.bf16.gmra.mrb[0].mxu0 %v816
      %v1036 = vpop.f32.mrb[0].mxu0
      %v1037 = vadd.f32 0.0, %v1036
      %v1038 = vpop.f32.mrb[0].mxu0
      %v1039 = vpop.f32.mrb[0].mxu0
      %v1040 = vadd.f32 0.0, %v1039
      %v1041 = vpop.f32.mrb[0].mxu0
      %1042 = vdwg.mxu0
      %v1043 = vld [vmem:[#allocation2] sm:$0xff]
      %v1044 = vld [vmem:[#allocation2 + $0x8] sm:$0xff]
      %v1045 = vld [vmem:[#allocation2 + $0x10] sm:$0xff]
      %v1046 = vld [vmem:[#allocation2 + $0x18] sm:$0xff]
      %v1047 = vld [vmem:[#allocation2 + $0x20] sm:$0xff]
      %v1048 = vld [vmem:[#allocation2 + $0x28] sm:$0xff]
      %v1049 = vld [vmem:[#allocation2 + $0x30] sm:$0xff]
      %v1050 = vld [vmem:[#allocation2 + $0x38] sm:$0xff]
      %v1051 = vld [vmem:[#allocation2 + $0x40] sm:$0xff]
      %v1052 = vld [vmem:[#allocation2 + $0x48] sm:$0xff]
      %v1053 = vld [vmem:[#allocation2 + $0x50] sm:$0xff]
      %v1054 = vld [vmem:[#allocation2 + $0x58] sm:$0xff]
      %v1055 = vld [vmem:[#allocation2 + $0x60] sm:$0xff]
      %v1056 = vld [vmem:[#allocation2 + $0x68] sm:$0xff]
      %v1057 = vld [vmem:[#allocation2 + $0x70] sm:$0xff]
      %v1058 = vld [vmem:[#allocation2 + $0x78] sm:$0xff]
      %v1059 = vld [vmem:[#allocation2 + $0x80] sm:$0xff]
      %v1060 = vld [vmem:[#allocation2 + $0x88] sm:$0xff]
      %v1061 = vld [vmem:[#allocation2 + $0x90] sm:$0xff]
      %v1062 = vld [vmem:[#allocation2 + $0x98] sm:$0xff]
      %v1063 = vld [vmem:[#allocation2 + $0xa0] sm:$0xff]
      %v1064 = vld [vmem:[#allocation2 + $0xa8] sm:$0xff]
      %v1065 = vld [vmem:[#allocation2 + $0xb0] sm:$0xff]
      %v1066 = vld [vmem:[#allocation2 + $0xb8] sm:$0xff]
      %v1067 = vld [vmem:[#allocation2 + $0xc0] sm:$0xff]
      %v1068 = vld [vmem:[#allocation2 + $0xc8] sm:$0xff]
      %v1069 = vld [vmem:[#allocation2 + $0xd0] sm:$0xff]
      %v1070 = vld [vmem:[#allocation2 + $0xd8] sm:$0xff]
      %v1071 = vld [vmem:[#allocation2 + $0xe0] sm:$0xff]
      %v1072 = vld [vmem:[#allocation2 + $0xe8] sm:$0xff]
      %v1073 = vld [vmem:[#allocation2 + $0xf0] sm:$0xff]
      %v1074 = vld [vmem:[#allocation2 + $0xf8] sm:$0xff]
      %v1075 = vadd.f32 %v1043, %v917
      %v1076 = vadd.f32 %v1044, %v920
      %v1077 = vadd.f32 %v1045, %v925
      %v1078 = vadd.f32 %v1046, %v928
      %v1079 = vadd.f32 %v1047, %v933
      %v1080 = vadd.f32 %v1048, %v936
      %v1081 = vadd.f32 %v1049, %v941
      %v1082 = vadd.f32 %v1050, %v944
      %v1083 = vadd.f32 %v1051, %v949
      %v1084 = vadd.f32 %v1052, %v952
      %v1085 = vadd.f32 %v1053, %v957
      %v1086 = vadd.f32 %v1054, %v960
      %v1087 = vadd.f32 %v1055, %v965
      %v1088 = vadd.f32 %v1056, %v968
      %v1089 = vadd.f32 %v1057, %v973
      %v1090 = vadd.f32 %v1058, %v976
      %v1091 = vadd.f32 %v1059, %v981
      %v1092 = vadd.f32 %v1060, %v984
      %v1093 = vadd.f32 %v1061, %v989
      %v1094 = vadd.f32 %v1062, %v992
      %v1095 = vadd.f32 %v1063, %v997
      %v1096 = vadd.f32 %v1064, %v1000
      %v1097 = vadd.f32 %v1065, %v1005
      %v1098 = vadd.f32 %v1066, %v1008
      %v1099 = vadd.f32 %v1067, %v1013
      %v1100 = vadd.f32 %v1068, %v1016
      %v1101 = vadd.f32 %v1069, %v1021
      %v1102 = vadd.f32 %v1070, %v1024
      %v1103 = vadd.f32 %v1071, %v1029
      %v1104 = vadd.f32 %v1072, %v1032
      %v1105 = vadd.f32 %v1073, %v1037
      %v1106 = vadd.f32 %v1074, %v1040
      %1107 = vst [vmem:[#allocation2] sm:$0xff] %v1075
      %1108 = vst [vmem:[#allocation2 + $0x8] sm:$0xff] %v1076
      %1109 = vst [vmem:[#allocation2 + $0x10] sm:$0xff] %v1077
      %1110 = vst [vmem:[#allocation2 + $0x18] sm:$0xff] %v1078
      %1111 = vst [vmem:[#allocation2 + $0x20] sm:$0xff] %v1079
      %1112 = vst [vmem:[#allocation2 + $0x28] sm:$0xff] %v1080
      %1113 = vst [vmem:[#allocation2 + $0x30] sm:$0xff] %v1081
      %1114 = vst [vmem:[#allocation2 + $0x38] sm:$0xff] %v1082
      %1115 = vst [vmem:[#allocation2 + $0x40] sm:$0xff] %v1083
      %1116 = vst [vmem:[#allocation2 + $0x48] sm:$0xff] %v1084
      %1117 = vst [vmem:[#allocation2 + $0x50] sm:$0xff] %v1085
      %1118 = vst [vmem:[#allocation2 + $0x58] sm:$0xff] %v1086
      %1119 = vst [vmem:[#allocation2 + $0x60] sm:$0xff] %v1087
      %1120 = vst [vmem:[#allocation2 + $0x68] sm:$0xff] %v1088
      %1121 = vst [vmem:[#allocation2 + $0x70] sm:$0xff] %v1089
      %1122 = vst [vmem:[#allocation2 + $0x78] sm:$0xff] %v1090
      %1123 = vst [vmem:[#allocation2 + $0x80] sm:$0xff] %v1091
      %1124 = vst [vmem:[#allocation2 + $0x88] sm:$0xff] %v1092
      %1125 = vst [vmem:[#allocation2 + $0x90] sm:$0xff] %v1093
      %1126 = vst [vmem:[#allocation2 + $0x98] sm:$0xff] %v1094
      %1127 = vst [vmem:[#allocation2 + $0xa0] sm:$0xff] %v1095
      %1128 = vst [vmem:[#allocation2 + $0xa8] sm:$0xff] %v1096
      %1129 = vst [vmem:[#allocation2 + $0xb0] sm:$0xff] %v1097
      %1130 = vst [vmem:[#allocation2 + $0xb8] sm:$0xff] %v1098
      %1131 = vst [vmem:[#allocation2 + $0xc0] sm:$0xff] %v1099
      %1132 = vst [vmem:[#allocation2 + $0xc8] sm:$0xff] %v1100
      %1133 = vst [vmem:[#allocation2 + $0xd0] sm:$0xff] %v1101
      %1134 = vst [vmem:[#allocation2 + $0xd8] sm:$0xff] %v1102
      %1135 = vst [vmem:[#allocation2 + $0xe0] sm:$0xff] %v1103
      %1136 = vst [vmem:[#allocation2 + $0xe8] sm:$0xff] %v1104
      %1137 = vst [vmem:[#allocation2 + $0xf0] sm:$0xff] %v1105
      %1138 = vst [vmem:[#allocation2 + $0xf8] sm:$0xff] %v1106
      %s1139 = sadd.s32 %s459, 4294967295
      %s1140 = scalar_lea.vmem %s396, %s1139
      %v1141 = vld [vmem:[%s1140] sm:$0xff]
      %v1142 = vld [vmem:[%s1140 + $0x8] sm:$0xff]
      %v1143 = vld [vmem:[%s1140 + $0x10] sm:$0xff]
      %v1144 = vld [vmem:[%s1140 + $0x18] sm:$0xff]
      %v1145 = vld [vmem:[%s1140 + $0x20] sm:$0xff]
      %v1146 = vld [vmem:[%s1140 + $0x28] sm:$0xff]
      %v1147 = vld [vmem:[%s1140 + $0x30] sm:$0xff]
      %v1148 = vld [vmem:[%s1140 + $0x38] sm:$0xff]
      %v1149 = vld [vmem:[%s1140 + $0x40] sm:$0xff]
      %v1150 = vld [vmem:[%s1140 + $0x48] sm:$0xff]
      %v1151 = vld [vmem:[%s1140 + $0x50] sm:$0xff]
      %v1152 = vld [vmem:[%s1140 + $0x58] sm:$0xff]
      %v1153 = vld [vmem:[%s1140 + $0x60] sm:$0xff]
      %v1154 = vld [vmem:[%s1140 + $0x68] sm:$0xff]
      %v1155 = vld [vmem:[%s1140 + $0x70] sm:$0xff]
      %v1156 = vld [vmem:[%s1140 + $0x78] sm:$0xff]
      %v1157 = vld [vmem:[%s1140 + $0x80] sm:$0xff]
      %v1158 = vld [vmem:[%s1140 + $0x88] sm:$0xff]
      %v1159 = vld [vmem:[%s1140 + $0x90] sm:$0xff]
      %v1160 = vld [vmem:[%s1140 + $0x98] sm:$0xff]
      %v1161 = vld [vmem:[%s1140 + $0xa0] sm:$0xff]
      %v1162 = vld [vmem:[%s1140 + $0xa8] sm:$0xff]
      %v1163 = vld [vmem:[%s1140 + $0xb0] sm:$0xff]
      %v1164 = vld [vmem:[%s1140 + $0xb8] sm:$0xff]
      %v1165 = vld [vmem:[%s1140 + $0xc0] sm:$0xff]
      %v1166 = vld [vmem:[%s1140 + $0xc8] sm:$0xff]
      %v1167 = vld [vmem:[%s1140 + $0xd0] sm:$0xff]
      %v1168 = vld [vmem:[%s1140 + $0xd8] sm:$0xff]
      %v1169 = vld [vmem:[%s1140 + $0xe0] sm:$0xff]
      %v1170 = vld [vmem:[%s1140 + $0xe8] sm:$0xff]
      %v1171 = vld [vmem:[%s1140 + $0xf0] sm:$0xff]
      %v1172 = vld [vmem:[%s1140 + $0xf8] sm:$0xff]
      %v1173 = vpack.c.bf16 %v1142, %v1141
      %v1174 = vpack.c.bf16 %v1144, %v1143
      %v1175 = vpack.c.bf16 %v1146, %v1145
      %v1176 = vpack.c.bf16 %v1148, %v1147
      %v1177 = vpack.c.bf16 %v1150, %v1149
      %v1178 = vpack.c.bf16 %v1152, %v1151
      %v1179 = vpack.c.bf16 %v1154, %v1153
      %v1180 = vpack.c.bf16 %v1156, %v1155
      %v1181 = vpack.c.bf16 %v1158, %v1157
      %v1182 = vpack.c.bf16 %v1160, %v1159
      %v1183 = vpack.c.bf16 %v1162, %v1161
      %v1184 = vpack.c.bf16 %v1164, %v1163
      %v1185 = vpack.c.bf16 %v1166, %v1165
      %v1186 = vpack.c.bf16 %v1168, %v1167
      %v1187 = vpack.c.bf16 %v1170, %v1169
      %v1188 = vpack.c.bf16 %v1172, %v1171
      %s1189 = scalar_lea.vmem %s400, 128
      %v1190 = vld [vmem:[%s1189] sm:$0xf]
      %v1191 = vld [vmem:[%s1189 + $0x4] sm:$0xf]
      %v1192 = vld [vmem:[%s1189 + $0x8] sm:$0xf]
      %v1193 = vld [vmem:[%s1189 + $0xc] sm:$0xf]
      %v1194 = vld [vmem:[%s1189 + $0x10] sm:$0xf]
      %v1195 = vld [vmem:[%s1189 + $0x14] sm:$0xf]
      %v1196 = vld [vmem:[%s1189 + $0x18] sm:$0xf]
      %v1197 = vld [vmem:[%s1189 + $0x1c] sm:$0xf]
      %v1198 = vld [vmem:[%s1189 + $0x20] sm:$0xf]
      %v1199 = vld [vmem:[%s1189 + $0x24] sm:$0xf]
      %v1200 = vld [vmem:[%s1189 + $0x28] sm:$0xf]
      %v1201 = vld [vmem:[%s1189 + $0x2c] sm:$0xf]
      %v1202 = vld [vmem:[%s1189 + $0x30] sm:$0xf]
      %v1203 = vld [vmem:[%s1189 + $0x34] sm:$0xf]
      %v1204 = vld [vmem:[%s1189 + $0x38] sm:$0xf]
      %v1205 = vld [vmem:[%s1189 + $0x3c] sm:$0xf]
      %v1222 = vunpack.c.l.b16 %v1190
      %v1223 = vunpack.c.l.b16 %v1191
      %v1224 = vunpack.c.l.b16 %v1192
      %v1225 = vunpack.c.l.b16 %v1193
      %v1226 = vunpack.c.l.b16 %v1194
      %v1227 = vunpack.c.l.b16 %v1195
      %v1228 = vunpack.c.l.b16 %v1196
      %v1229 = vunpack.c.l.b16 %v1197
      %v1230 = vunpack.c.l.b16 %v1198
      %v1231 = vunpack.c.l.b16 %v1199
      %v1232 = vunpack.c.l.b16 %v1200
      %v1233 = vunpack.c.l.b16 %v1201
      %v1234 = vunpack.c.l.b16 %v1202
      %v1235 = vunpack.c.l.b16 %v1203
      %v1236 = vunpack.c.l.b16 %v1204
      %v1237 = vunpack.c.l.b16 %v1205
      %v1238 = vpack.c.b16 %v1223, %v1222
      %v1239 = vpack.c.b16 %v1225, %v1224
      %v1240 = vpack.c.b16 %v1227, %v1226
      %v1241 = vpack.c.b16 %v1229, %v1228
      %v1242 = vpack.c.b16 %v1231, %v1230
      %v1243 = vpack.c.b16 %v1233, %v1232
      %v1244 = vpack.c.b16 %v1235, %v1234
      %v1245 = vpack.c.b16 %v1237, %v1236
      %1254 = vmatprep.subr.bf16.mxu0 0
      %1255 = vmatpush1.bf16.msra.mxu0 %v1238
      %1256 = vmatprep.subr.bf16.mxu0 0
      %1257 = vmatpush1.bf16.msra.mxu0 %v1239
      %1258 = vmatprep.subr.bf16.mxu0 0
      %1259 = vmatpush1.bf16.msra.mxu0 %v1240
      %1260 = vmatprep.subr.bf16.mxu0 0
      %1261 = vmatpush1.bf16.msra.mxu0 %v1241
      %1262 = vmatprep.subr.bf16.mxu0 0
      %1263 = vmatpush1.bf16.msra.mxu0 %v1242
      %1264 = vmatprep.subr.bf16.mxu0 0
      %1265 = vmatpush1.bf16.msra.mxu0 %v1243
      %1266 = vmatprep.subr.bf16.mxu0 0
      %1267 = vmatpush1.bf16.msra.mxu0 %v1244
      %1268 = vmatprep.subr.bf16.mxu0 0
      %1269 = vmatpush1.bf16.msra.mxu0 %v1245
      %1270 = vmatprep.subr.bf16.mxu0 0
      %1271 = vmatpush1.bf16.msra.mxu0 0
      %1272 = vmatprep.subr.bf16.mxu0 0
      %1273 = vmatpush1.bf16.msra.mxu0 0
      %1274 = vmatprep.subr.bf16.mxu0 0
      %1275 = vmatpush1.bf16.msra.mxu0 0
      %1276 = vmatprep.subr.bf16.mxu0 0
      %1277 = vmatpush1.bf16.msra.mxu0 0
      %1278 = vmatprep.subr.bf16.mxu0 0
      %1279 = vmatpush1.bf16.msra.mxu0 0
      %1280 = vmatprep.subr.bf16.mxu0 0
      %1281 = vmatpush1.bf16.msra.mxu0 0
      %1282 = vmatprep.subr.bf16.mxu0 0
      %1283 = vmatpush1.bf16.msra.mxu0 0
      %1284 = vmatprep.subr.bf16.mxu0 0
      %1285 = vmatpush1.bf16.msra.mxu0 0
      %1286 = vmatprep.mubr.bf16.mxu0 0
      %1287 = vmatmul.mubr.bf16.gmra.mrb[0].mxu0 %v1173
      %v1288 = vpop.f32.mrb[0].mxu0
      %v1289 = vadd.f32 0.0, %v1288
      %v1290 = vpop.f32.mrb[0].mxu0
      %v1291 = vpop.f32.mrb[0].mxu0
      %v1292 = vadd.f32 0.0, %v1291
      %v1293 = vpop.f32.mrb[0].mxu0
      %1294 = vmatprep.mubr.bf16.mxu0 0
      %1295 = vmatmul.mubr.bf16.gmra.mrb[0].mxu0 %v1174
      %v1296 = vpop.f32.mrb[0].mxu0
      %v1297 = vadd.f32 0.0, %v1296
      %v1298 = vpop.f32.mrb[0].mxu0
      %v1299 = vpop.f32.mrb[0].mxu0
      %v1300 = vadd.f32 0.0, %v1299
      %v1301 = vpop.f32.mrb[0].mxu0
      %1302 = vmatprep.mubr.bf16.mxu0 0
      %1303 = vmatmul.mubr.bf16.gmra.mrb[0].mxu0 %v1175
      %v1304 = vpop.f32.mrb[0].mxu0
      %v1305 = vadd.f32 0.0, %v1304
      %v1306 = vpop.f32.mrb[0].mxu0
      %v1307 = vpop.f32.mrb[0].mxu0
      %v1308 = vadd.f32 0.0, %v1307
      %v1309 = vpop.f32.mrb[0].mxu0
      %1310 = vmatprep.mubr.bf16.mxu0 0
      %1311 = vmatmul.mubr.bf16.gmra.mrb[0].mxu0 %v1176
      %v1312 = vpop.f32.mrb[0].mxu0
      %v1313 = vadd.f32 0.0, %v1312
      %v1314 = vpop.f32.mrb[0].mxu0
      %v1315 = vpop.f32.mrb[0].mxu0
      %v1316 = vadd.f32 0.0, %v1315
      %v1317 = vpop.f32.mrb[0].mxu0
      %1318 = vmatprep.mubr.bf16.mxu0 0
      %1319 = vmatmul.mubr.bf16.gmra.mrb[0].mxu0 %v1177
      %v1320 = vpop.f32.mrb[0].mxu0
      %v1321 = vadd.f32 0.0, %v1320
      %v1322 = vpop.f32.mrb[0].mxu0
      %v1323 = vpop.f32.mrb[0].mxu0
      %v1324 = vadd.f32 0.0, %v1323
      %v1325 = vpop.f32.mrb[0].mxu0
      %1326 = vmatprep.mubr.bf16.mxu0 0
      %1327 = vmatmul.mubr.bf16.gmra.mrb[0].mxu0 %v1178
      %v1328 = vpop.f32.mrb[0].mxu0
      %v1329 = vadd.f32 0.0, %v1328
      %v1330 = vpop.f32.mrb[0].mxu0
      %v1331 = vpop.f32.mrb[0].mxu0
      %v1332 = vadd.f32 0.0, %v1331
      %v1333 = vpop.f32.mrb[0].mxu0
      %1334 = vmatprep.mubr.bf16.mxu0 0
      %1335 = vmatmul.mubr.bf16.gmra.mrb[0].mxu0 %v1179
      %v1336 = vpop.f32.mrb[0].mxu0
      %v1337 = vadd.f32 0.0, %v1336
      %v1338 = vpop.f32.mrb[0].mxu0
      %v1339 = vpop.f32.mrb[0].mxu0
      %v1340 = vadd.f32 0.0, %v1339
      %v1341 = vpop.f32.mrb[0].mxu0
      %1342 = vmatprep.mubr.bf16.mxu0 0
      %1343 = vmatmul.mubr.bf16.gmra.mrb[0].mxu0 %v1180
      %v1344 = vpop.f32.mrb[0].mxu0
      %v1345 = vadd.f32 0.0, %v1344
      %v1346 = vpop.f32.mrb[0].mxu0
      %v1347 = vpop.f32.mrb[0].mxu0
      %v1348 = vadd.f32 0.0, %v1347
      %v1349 = vpop.f32.mrb[0].mxu0
      %1350 = vmatprep.mubr.bf16.mxu0 0
      %1351 = vmatmul.mubr.bf16.gmra.mrb[0].mxu0 %v1181
      %v1352 = vpop.f32.mrb[0].mxu0
      %v1353 = vadd.f32 0.0, %v1352
      %v1354 = vpop.f32.mrb[0].mxu0
      %v1355 = vpop.f32.mrb[0].mxu0
      %v1356 = vadd.f32 0.0, %v1355
      %v1357 = vpop.f32.mrb[0].mxu0
      %1358 = vmatprep.mubr.bf16.mxu0 0
      %1359 = vmatmul.mubr.bf16.gmra.mrb[0].mxu0 %v1182
      %v1360 = vpop.f32.mrb[0].mxu0
      %v1361 = vadd.f32 0.0, %v1360
      %v1362 = vpop.f32.mrb[0].mxu0
      %v1363 = vpop.f32.mrb[0].mxu0
      %v1364 = vadd.f32 0.0, %v1363
      %v1365 = vpop.f32.mrb[0].mxu0
      %1366 = vmatprep.mubr.bf16.mxu0 0
      %1367 = vmatmul.mubr.bf16.gmra.mrb[0].mxu0 %v1183
      %v1368 = vpop.f32.mrb[0].mxu0
      %v1369 = vadd.f32 0.0, %v1368
      %v1370 = vpop.f32.mrb[0].mxu0
      %v1371 = vpop.f32.mrb[0].mxu0
      %v1372 = vadd.f32 0.0, %v1371
      %v1373 = vpop.f32.mrb[0].mxu0
      %1374 = vmatprep.mubr.bf16.mxu0 0
      %1375 = vmatmul.mubr.bf16.gmra.mrb[0].mxu0 %v1184
      %v1376 = vpop.f32.mrb[0].mxu0
      %v1377 = vadd.f32 0.0, %v1376
      %v1378 = vpop.f32.mrb[0].mxu0
      %v1379 = vpop.f32.mrb[0].mxu0
      %v1380 = vadd.f32 0.0, %v1379
      %v1381 = vpop.f32.mrb[0].mxu0
      %1382 = vmatprep.mubr.bf16.mxu0 0
      %1383 = vmatmul.mubr.bf16.gmra.mrb[0].mxu0 %v1185
      %v1384 = vpop.f32.mrb[0].mxu0
      %v1385 = vadd.f32 0.0, %v1384
      %v1386 = vpop.f32.mrb[0].mxu0
      %v1387 = vpop.f32.mrb[0].mxu0
      %v1388 = vadd.f32 0.0, %v1387
      %v1389 = vpop.f32.mrb[0].mxu0
      %1390 = vmatprep.mubr.bf16.mxu0 0
      %1391 = vmatmul.mubr.bf16.gmra.mrb[0].mxu0 %v1186
      %v1392 = vpop.f32.mrb[0].mxu0
      %v1393 = vadd.f32 0.0, %v1392
      %v1394 = vpop.f32.mrb[0].mxu0
      %v1395 = vpop.f32.mrb[0].mxu0
      %v1396 = vadd.f32 0.0, %v1395
      %v1397 = vpop.f32.mrb[0].mxu0
      %1398 = vmatprep.mubr.bf16.mxu0 0
      %1399 = vmatmul.mubr.bf16.gmra.mrb[0].mxu0 %v1187
      %v1400 = vpop.f32.mrb[0].mxu0
      %v1401 = vadd.f32 0.0, %v1400
      %v1402 = vpop.f32.mrb[0].mxu0
      %v1403 = vpop.f32.mrb[0].mxu0
      %v1404 = vadd.f32 0.0, %v1403
      %v1405 = vpop.f32.mrb[0].mxu0
      %1406 = vmatprep.mubr.bf16.mxu0 0
      %1407 = vmatmul.mubr.bf16.gmra.mrb[0].mxu0 %v1188
      %v1408 = vpop.f32.mrb[0].mxu0
      %v1409 = vadd.f32 0.0, %v1408
      %v1410 = vpop.f32.mrb[0].mxu0
      %v1411 = vpop.f32.mrb[0].mxu0
      %v1412 = vadd.f32 0.0, %v1411
      %v1413 = vpop.f32.mrb[0].mxu0
      %1414 = vdwg.mxu0
      %v1415 = vld [vmem:[#allocation2] sm:$0xff]
      %v1416 = vld [vmem:[#allocation2 + $0x8] sm:$0xff]
      %v1417 = vld [vmem:[#allocation2 + $0x10] sm:$0xff]
      %v1418 = vld [vmem:[#allocation2 + $0x18] sm:$0xff]
      %v1419 = vld [vmem:[#allocation2 + $0x20] sm:$0xff]
      %v1420 = vld [vmem:[#allocation2 + $0x28] sm:$0xff]
      %v1421 = vld [vmem:[#allocation2 + $0x30] sm:$0xff]
      %v1422 = vld [vmem:[#allocation2 + $0x38] sm:$0xff]
      %v1423 = vld [vmem:[#allocation2 + $0x40] sm:$0xff]
      %v1424 = vld [vmem:[#allocation2 + $0x48] sm:$0xff]
      %v1425 = vld [vmem:[#allocation2 + $0x50] sm:$0xff]
      %v1426 = vld [vmem:[#allocation2 + $0x58] sm:$0xff]
      %v1427 = vld [vmem:[#allocation2 + $0x60] sm:$0xff]
      %v1428 = vld [vmem:[#allocation2 + $0x68] sm:$0xff]
      %v1429 = vld [vmem:[#allocation2 + $0x70] sm:$0xff]
      %v1430 = vld [vmem:[#allocation2 + $0x78] sm:$0xff]
      %v1431 = vld [vmem:[#allocation2 + $0x80] sm:$0xff]
      %v1432 = vld [vmem:[#allocation2 + $0x88] sm:$0xff]
      %v1433 = vld [vmem:[#allocation2 + $0x90] sm:$0xff]
      %v1434 = vld [vmem:[#allocation2 + $0x98] sm:$0xff]
      %v1435 = vld [vmem:[#allocation2 + $0xa0] sm:$0xff]
      %v1436 = vld [vmem:[#allocation2 + $0xa8] sm:$0xff]
      %v1437 = vld [vmem:[#allocation2 + $0xb0] sm:$0xff]
      %v1438 = vld [vmem:[#allocation2 + $0xb8] sm:$0xff]
      %v1439 = vld [vmem:[#allocation2 + $0xc0] sm:$0xff]
      %v1440 = vld [vmem:[#allocation2 + $0xc8] sm:$0xff]
      %v1441 = vld [vmem:[#allocation2 + $0xd0] sm:$0xff]
      %v1442 = vld [vmem:[#allocation2 + $0xd8] sm:$0xff]
      %v1443 = vld [vmem:[#allocation2 + $0xe0] sm:$0xff]
      %v1444 = vld [vmem:[#allocation2 + $0xe8] sm:$0xff]
      %v1445 = vld [vmem:[#allocation2 + $0xf0] sm:$0xff]
      %v1446 = vld [vmem:[#allocation2 + $0xf8] sm:$0xff]
      %v1447 = vadd.f32 %v1415, %v1289
      %v1448 = vadd.f32 %v1416, %v1292
      %v1449 = vadd.f32 %v1417, %v1297
      %v1450 = vadd.f32 %v1418, %v1300
      %v1451 = vadd.f32 %v1419, %v1305
      %v1452 = vadd.f32 %v1420, %v1308
      %v1453 = vadd.f32 %v1421, %v1313
      %v1454 = vadd.f32 %v1422, %v1316
      %v1455 = vadd.f32 %v1423, %v1321
      %v1456 = vadd.f32 %v1424, %v1324
      %v1457 = vadd.f32 %v1425, %v1329
      %v1458 = vadd.f32 %v1426, %v1332
      %v1459 = vadd.f32 %v1427, %v1337
      %v1460 = vadd.f32 %v1428, %v1340
      %v1461 = vadd.f32 %v1429, %v1345
      %v1462 = vadd.f32 %v1430, %v1348
      %v1463 = vadd.f32 %v1431, %v1353
      %v1464 = vadd.f32 %v1432, %v1356
      %v1465 = vadd.f32 %v1433, %v1361
      %v1466 = vadd.f32 %v1434, %v1364
      %v1467 = vadd.f32 %v1435, %v1369
      %v1468 = vadd.f32 %v1436, %v1372
      %v1469 = vadd.f32 %v1437, %v1377
      %v1470 = vadd.f32 %v1438, %v1380
      %v1471 = vadd.f32 %v1439, %v1385
      %v1472 = vadd.f32 %v1440, %v1388
      %v1473 = vadd.f32 %v1441, %v1393
      %v1474 = vadd.f32 %v1442, %v1396
      %v1475 = vadd.f32 %v1443, %v1401
      %v1476 = vadd.f32 %v1444, %v1404
      %v1477 = vadd.f32 %v1445, %v1409
      %v1478 = vadd.f32 %v1446, %v1412
      %1479 = vst [vmem:[#allocation2] sm:$0xff] %v1447
      %1480 = vst [vmem:[#allocation2 + $0x8] sm:$0xff] %v1448
      %1481 = vst [vmem:[#allocation2 + $0x10] sm:$0xff] %v1449
      %1482 = vst [vmem:[#allocation2 + $0x18] sm:$0xff] %v1450
      %1483 = vst [vmem:[#allocation2 + $0x20] sm:$0xff] %v1451
      %1484 = vst [vmem:[#allocation2 + $0x28] sm:$0xff] %v1452
      %1485 = vst [vmem:[#allocation2 + $0x30] sm:$0xff] %v1453
      %1486 = vst [vmem:[#allocation2 + $0x38] sm:$0xff] %v1454
      %1487 = vst [vmem:[#allocation2 + $0x40] sm:$0xff] %v1455
      %1488 = vst [vmem:[#allocation2 + $0x48] sm:$0xff] %v1456
      %1489 = vst [vmem:[#allocation2 + $0x50] sm:$0xff] %v1457
      %1490 = vst [vmem:[#allocation2 + $0x58] sm:$0xff] %v1458
      %1491 = vst [vmem:[#allocation2 + $0x60] sm:$0xff] %v1459
      %1492 = vst [vmem:[#allocation2 + $0x68] sm:$0xff] %v1460
      %1493 = vst [vmem:[#allocation2 + $0x70] sm:$0xff] %v1461
      %1494 = vst [vmem:[#allocation2 + $0x78] sm:$0xff] %v1462
      %1495 = vst [vmem:[#allocation2 + $0x80] sm:$0xff] %v1463
      %1496 = vst [vmem:[#allocation2 + $0x88] sm:$0xff] %v1464
      %1497 = vst [vmem:[#allocation2 + $0x90] sm:$0xff] %v1465
      %1498 = vst [vmem:[#allocation2 + $0x98] sm:$0xff] %v1466
      %1499 = vst [vmem:[#allocation2 + $0xa0] sm:$0xff] %v1467
      %1500 = vst [vmem:[#allocation2 + $0xa8] sm:$0xff] %v1468
      %1501 = vst [vmem:[#allocation2 + $0xb0] sm:$0xff] %v1469
      %1502 = vst [vmem:[#allocation2 + $0xb8] sm:$0xff] %v1470
      %1503 = vst [vmem:[#allocation2 + $0xc0] sm:$0xff] %v1471
      %1504 = vst [vmem:[#allocation2 + $0xc8] sm:$0xff] %v1472
      %1505 = vst [vmem:[#allocation2 + $0xd0] sm:$0xff] %v1473
      %1506 = vst [vmem:[#allocation2 + $0xd8] sm:$0xff] %v1474
      %1507 = vst [vmem:[#allocation2 + $0xe0] sm:$0xff] %v1475
      %1508 = vst [vmem:[#allocation2 + $0xe8] sm:$0xff] %v1476
      %1509 = vst [vmem:[#allocation2 + $0xf0] sm:$0xff] %v1477
      %1510 = vst [vmem:[#allocation2 + $0xf8] sm:$0xff] %v1478
      %s1511 = scalar_lea.vmem %s396, %s459
      %v1512 = vld [vmem:[%s1511] sm:$0xff]
      %v1513 = vld [vmem:[%s1511 + $0x8] sm:$0xff]
      %v1514 = vld [vmem:[%s1511 + $0x10] sm:$0xff]
      %v1515 = vld [vmem:[%s1511 + $0x18] sm:$0xff]
      %v1516 = vld [vmem:[%s1511 + $0x20] sm:$0xff]
      %v1517 = vld [vmem:[%s1511 + $0x28] sm:$0xff]
      %v1518 = vld [vmem:[%s1511 + $0x30] sm:$0xff]
      %v1519 = vld [vmem:[%s1511 + $0x38] sm:$0xff]
      %v1520 = vld [vmem:[%s1511 + $0x40] sm:$0xff]
      %v1521 = vld [vmem:[%s1511 + $0x48] sm:$0xff]
      %v1522 = vld [vmem:[%s1511 + $0x50] sm:$0xff]
      %v1523 = vld [vmem:[%s1511 + $0x58] sm:$0xff]
      %v1524 = vld [vmem:[%s1511 + $0x60] sm:$0xff]
      %v1525 = vld [vmem:[%s1511 + $0x68] sm:$0xff]
      %v1526 = vld [vmem:[%s1511 + $0x70] sm:$0xff]
      %v1527 = vld [vmem:[%s1511 + $0x78] sm:$0xff]
      %v1528 = vld [vmem:[%s1511 + $0x80] sm:$0xff]
      %v1529 = vld [vmem:[%s1511 + $0x88] sm:$0xff]
      %v1530 = vld [vmem:[%s1511 + $0x90] sm:$0xff]
      %v1531 = vld [vmem:[%s1511 + $0x98] sm:$0xff]
      %v1532 = vld [vmem:[%s1511 + $0xa0] sm:$0xff]
      %v1533 = vld [vmem:[%s1511 + $0xa8] sm:$0xff]
      %v1534 = vld [vmem:[%s1511 + $0xb0] sm:$0xff]
      %v1535 = vld [vmem:[%s1511 + $0xb8] sm:$0xff]
      %v1536 = vld [vmem:[%s1511 + $0xc0] sm:$0xff]
      %v1537 = vld [vmem:[%s1511 + $0xc8] sm:$0xff]
      %v1538 = vld [vmem:[%s1511 + $0xd0] sm:$0xff]
      %v1539 = vld [vmem:[%s1511 + $0xd8] sm:$0xff]
      %v1540 = vld [vmem:[%s1511 + $0xe0] sm:$0xff]
      %v1541 = vld [vmem:[%s1511 + $0xe8] sm:$0xff]
      %v1542 = vld [vmem:[%s1511 + $0xf0] sm:$0xff]
      %v1543 = vld [vmem:[%s1511 + $0xf8] sm:$0xff]
      %v1544 = vpack.c.bf16 %v1513, %v1512
      %v1545 = vpack.c.bf16 %v1515, %v1514
      %v1546 = vpack.c.bf16 %v1517, %v1516
      %v1547 = vpack.c.bf16 %v1519, %v1518
      %v1548 = vpack.c.bf16 %v1521, %v1520
      %v1549 = vpack.c.bf16 %v1523, %v1522
      %v1550 = vpack.c.bf16 %v1525, %v1524
      %v1551 = vpack.c.bf16 %v1527, %v1526
      %v1552 = vpack.c.bf16 %v1529, %v1528
      %v1553 = vpack.c.bf16 %v1531, %v1530
      %v1554 = vpack.c.bf16 %v1533, %v1532
      %v1555 = vpack.c.bf16 %v1535, %v1534
      %v1556 = vpack.c.bf16 %v1537, %v1536
      %v1557 = vpack.c.bf16 %v1539, %v1538
      %v1558 = vpack.c.bf16 %v1541, %v1540
      %v1559 = vpack.c.bf16 %v1543, %v1542
      %s1560 = scalar_lea.vmem %s400, 192
      %v1561 = vld [vmem:[%s1560] sm:$0xf]
      %v1562 = vld [vmem:[%s1560 + $0x4] sm:$0xf]
      %v1563 = vld [vmem:[%s1560 + $0x8] sm:$0xf]
      %v1564 = vld [vmem:[%s1560 + $0xc] sm:$0xf]
      %v1565 = vld [vmem:[%s1560 + $0x10] sm:$0xf]
      %v1566 = vld [vmem:[%s1560 + $0x14] sm:$0xf]
      %v1567 = vld [vmem:[%s1560 + $0x18] sm:$0xf]
      %v1568 = vld [vmem:[%s1560 + $0x1c] sm:$0xf]
      %v1569 = vld [vmem:[%s1560 + $0x20] sm:$0xf]
      %v1570 = vld [vmem:[%s1560 + $0x24] sm:$0xf]
      %v1571 = vld [vmem:[%s1560 + $0x28] sm:$0xf]
      %v1572 = vld [vmem:[%s1560 + $0x2c] sm:$0xf]
      %v1573 = vld [vmem:[%s1560 + $0x30] sm:$0xf]
      %v1574 = vld [vmem:[%s1560 + $0x34] sm:$0xf]
      %v1575 = vld [vmem:[%s1560 + $0x38] sm:$0xf]
      %v1576 = vld [vmem:[%s1560 + $0x3c] sm:$0xf]
      %v1593 = vunpack.c.l.b16 %v1561
      %v1594 = vunpack.c.l.b16 %v1562
      %v1595 = vunpack.c.l.b16 %v1563
      %v1596 = vunpack.c.l.b16 %v1564
      %v1597 = vunpack.c.l.b16 %v1565
      %v1598 = vunpack.c.l.b16 %v1566
      %v1599 = vunpack.c.l.b16 %v1567
      %v1600 = vunpack.c.l.b16 %v1568
      %v1601 = vunpack.c.l.b16 %v1569
      %v1602 = vunpack.c.l.b16 %v1570
      %v1603 = vunpack.c.l.b16 %v1571
      %v1604 = vunpack.c.l.b16 %v1572
      %v1605 = vunpack.c.l.b16 %v1573
      %v1606 = vunpack.c.l.b16 %v1574
      %v1607 = vunpack.c.l.b16 %v1575
      %v1608 = vunpack.c.l.b16 %v1576
      %v1609 = vpack.c.b16 %v1594, %v1593
      %v1610 = vpack.c.b16 %v1596, %v1595
      %v1611 = vpack.c.b16 %v1598, %v1597
      %v1612 = vpack.c.b16 %v1600, %v1599
      %v1613 = vpack.c.b16 %v1602, %v1601
      %v1614 = vpack.c.b16 %v1604, %v1603
      %v1615 = vpack.c.b16 %v1606, %v1605
      %v1616 = vpack.c.b16 %v1608, %v1607
      %1625 = vmatprep.subr.bf16.mxu0 0
      %1626 = vmatpush1.bf16.msra.mxu0 %v1609
      %1627 = vmatprep.subr.bf16.mxu0 0
      %1628 = vmatpush1.bf16.msra.mxu0 %v1610
      %1629 = vmatprep.subr.bf16.mxu0 0
      %1630 = vmatpush1.bf16.msra.mxu0 %v1611
      %1631 = vmatprep.subr.bf16.mxu0 0
      %1632 = vmatpush1.bf16.msra.mxu0 %v1612
      %1633 = vmatprep.subr.bf16.mxu0 0
      %1634 = vmatpush1.bf16.msra.mxu0 %v1613
      %1635 = vmatprep.subr.bf16.mxu0 0
      %1636 = vmatpush1.bf16.msra.mxu0 %v1614
      %1637 = vmatprep.subr.bf16.mxu0 0
      %1638 = vmatpush1.bf16.msra.mxu0 %v1615
      %1639 = vmatprep.subr.bf16.mxu0 0
      %1640 = vmatpush1.bf16.msra.mxu0 %v1616
      %1641 = vmatprep.subr.bf16.mxu0 0
      %1642 = vmatpush1.bf16.msra.mxu0 0
      %1643 = vmatprep.subr.bf16.mxu0 0
      %1644 = vmatpush1.bf16.msra.mxu0 0
      %1645 = vmatprep.subr.bf16.mxu0 0
      %1646 = vmatpush1.bf16.msra.mxu0 0
      %1647 = vmatprep.subr.bf16.mxu0 0
      %1648 = vmatpush1.bf16.msra.mxu0 0
      %1649 = vmatprep.subr.bf16.mxu0 0
      %1650 = vmatpush1.bf16.msra.mxu0 0
      %1651 = vmatprep.subr.bf16.mxu0 0
      %1652 = vmatpush1.bf16.msra.mxu0 0
      %1653 = vmatprep.subr.bf16.mxu0 0
      %1654 = vmatpush1.bf16.msra.mxu0 0
      %1655 = vmatprep.subr.bf16.mxu0 0
      %1656 = vmatpush1.bf16.msra.mxu0 0
      %1657 = vmatprep.mubr.bf16.mxu0 0
      %1658 = vmatmul.mubr.bf16.gmra.mrb[0].mxu0 %v1544
      %v1659 = vpop.f32.mrb[0].mxu0
      %v1660 = vadd.f32 0.0, %v1659
      %v1661 = vpop.f32.mrb[0].mxu0
      %v1662 = vpop.f32.mrb[0].mxu0
      %v1663 = vadd.f32 0.0, %v1662
      %v1664 = vpop.f32.mrb[0].mxu0
      %1665 = vmatprep.mubr.bf16.mxu0 0
      %1666 = vmatmul.mubr.bf16.gmra.mrb[0].mxu0 %v1545
      %v1667 = vpop.f32.mrb[0].mxu0
      %v1668 = vadd.f32 0.0, %v1667
      %v1669 = vpop.f32.mrb[0].mxu0
      %v1670 = vpop.f32.mrb[0].mxu0
      %v1671 = vadd.f32 0.0, %v1670
      %v1672 = vpop.f32.mrb[0].mxu0
      %1673 = vmatprep.mubr.bf16.mxu0 0
      %1674 = vmatmul.mubr.bf16.gmra.mrb[0].mxu0 %v1546
      %v1675 = vpop.f32.mrb[0].mxu0
      %v1676 = vadd.f32 0.0, %v1675
      %v1677 = vpop.f32.mrb[0].mxu0
      %v1678 = vpop.f32.mrb[0].mxu0
      %v1679 = vadd.f32 0.0, %v1678
      %v1680 = vpop.f32.mrb[0].mxu0
      %1681 = vmatprep.mubr.bf16.mxu0 0
      %1682 = vmatmul.mubr.bf16.gmra.mrb[0].mxu0 %v1547
      %v1683 = vpop.f32.mrb[0].mxu0
      %v1684 = vadd.f32 0.0, %v1683
      %v1685 = vpop.f32.mrb[0].mxu0
      %v1686 = vpop.f32.mrb[0].mxu0
      %v1687 = vadd.f32 0.0, %v1686
      %v1688 = vpop.f32.mrb[0].mxu0
      %1689 = vmatprep.mubr.bf16.mxu0 0
      %1690 = vmatmul.mubr.bf16.gmra.mrb[0].mxu0 %v1548
      %v1691 = vpop.f32.mrb[0].mxu0
      %v1692 = vadd.f32 0.0, %v1691
      %v1693 = vpop.f32.mrb[0].mxu0
      %v1694 = vpop.f32.mrb[0].mxu0
      %v1695 = vadd.f32 0.0, %v1694
      %v1696 = vpop.f32.mrb[0].mxu0
      %1697 = vmatprep.mubr.bf16.mxu0 0
      %1698 = vmatmul.mubr.bf16.gmra.mrb[0].mxu0 %v1549
      %v1699 = vpop.f32.mrb[0].mxu0
      %v1700 = vadd.f32 0.0, %v1699
      %v1701 = vpop.f32.mrb[0].mxu0
      %v1702 = vpop.f32.mrb[0].mxu0
      %v1703 = vadd.f32 0.0, %v1702
      %v1704 = vpop.f32.mrb[0].mxu0
      %1705 = vmatprep.mubr.bf16.mxu0 0
      %1706 = vmatmul.mubr.bf16.gmra.mrb[0].mxu0 %v1550
      %v1707 = vpop.f32.mrb[0].mxu0
      %v1708 = vadd.f32 0.0, %v1707
      %v1709 = vpop.f32.mrb[0].mxu0
      %v1710 = vpop.f32.mrb[0].mxu0
      %v1711 = vadd.f32 0.0, %v1710
      %v1712 = vpop.f32.mrb[0].mxu0
      %1713 = vmatprep.mubr.bf16.mxu0 0
      %1714 = vmatmul.mubr.bf16.gmra.mrb[0].mxu0 %v1551
      %v1715 = vpop.f32.mrb[0].mxu0
      %v1716 = vadd.f32 0.0, %v1715
      %v1717 = vpop.f32.mrb[0].mxu0
      %v1718 = vpop.f32.mrb[0].mxu0
      %v1719 = vadd.f32 0.0, %v1718
      %v1720 = vpop.f32.mrb[0].mxu0
      %1721 = vmatprep.mubr.bf16.mxu0 0
      %1722 = vmatmul.mubr.bf16.gmra.mrb[0].mxu0 %v1552
      %v1723 = vpop.f32.mrb[0].mxu0
      %v1724 = vadd.f32 0.0, %v1723
      %v1725 = vpop.f32.mrb[0].mxu0
      %v1726 = vpop.f32.mrb[0].mxu0
      %v1727 = vadd.f32 0.0, %v1726
      %v1728 = vpop.f32.mrb[0].mxu0
      %1729 = vmatprep.mubr.bf16.mxu0 0
      %1730 = vmatmul.mubr.bf16.gmra.mrb[0].mxu0 %v1553
      %v1731 = vpop.f32.mrb[0].mxu0
      %v1732 = vadd.f32 0.0, %v1731
      %v1733 = vpop.f32.mrb[0].mxu0
      %v1734 = vpop.f32.mrb[0].mxu0
      %v1735 = vadd.f32 0.0, %v1734
      %v1736 = vpop.f32.mrb[0].mxu0
      %1737 = vmatprep.mubr.bf16.mxu0 0
      %1738 = vmatmul.mubr.bf16.gmra.mrb[0].mxu0 %v1554
      %v1739 = vpop.f32.mrb[0].mxu0
      %v1740 = vadd.f32 0.0, %v1739
      %v1741 = vpop.f32.mrb[0].mxu0
      %v1742 = vpop.f32.mrb[0].mxu0
      %v1743 = vadd.f32 0.0, %v1742
      %v1744 = vpop.f32.mrb[0].mxu0
      %1745 = vmatprep.mubr.bf16.mxu0 0
      %1746 = vmatmul.mubr.bf16.gmra.mrb[0].mxu0 %v1555
      %v1747 = vpop.f32.mrb[0].mxu0
      %v1748 = vadd.f32 0.0, %v1747
      %v1749 = vpop.f32.mrb[0].mxu0
      %v1750 = vpop.f32.mrb[0].mxu0
      %v1751 = vadd.f32 0.0, %v1750
      %v1752 = vpop.f32.mrb[0].mxu0
      %1753 = vmatprep.mubr.bf16.mxu0 0
      %1754 = vmatmul.mubr.bf16.gmra.mrb[0].mxu0 %v1556
      %v1755 = vpop.f32.mrb[0].mxu0
      %v1756 = vadd.f32 0.0, %v1755
      %v1757 = vpop.f32.mrb[0].mxu0
      %v1758 = vpop.f32.mrb[0].mxu0
      %v1759 = vadd.f32 0.0, %v1758
      %v1760 = vpop.f32.mrb[0].mxu0
      %1761 = vmatprep.mubr.bf16.mxu0 0
      %1762 = vmatmul.mubr.bf16.gmra.mrb[0].mxu0 %v1557
      %v1763 = vpop.f32.mrb[0].mxu0
      %v1764 = vadd.f32 0.0, %v1763
      %v1765 = vpop.f32.mrb[0].mxu0
      %v1766 = vpop.f32.mrb[0].mxu0
      %v1767 = vadd.f32 0.0, %v1766
      %v1768 = vpop.f32.mrb[0].mxu0
      %1769 = vmatprep.mubr.bf16.mxu0 0
      %1770 = vmatmul.mubr.bf16.gmra.mrb[0].mxu0 %v1558
      %v1771 = vpop.f32.mrb[0].mxu0
      %v1772 = vadd.f32 0.0, %v1771
      %v1773 = vpop.f32.mrb[0].mxu0
      %v1774 = vpop.f32.mrb[0].mxu0
      %v1775 = vadd.f32 0.0, %v1774
      %v1776 = vpop.f32.mrb[0].mxu0
      %1777 = vmatprep.mubr.bf16.mxu0 0
      %1778 = vmatmul.mubr.bf16.gmra.mrb[0].mxu0 %v1559
      %v1779 = vpop.f32.mrb[0].mxu0
      %v1780 = vadd.f32 0.0, %v1779
      %v1781 = vpop.f32.mrb[0].mxu0
      %v1782 = vpop.f32.mrb[0].mxu0
      %v1783 = vadd.f32 0.0, %v1782
      %v1784 = vpop.f32.mrb[0].mxu0
      %1785 = vdwg.mxu0
      %v1786 = vld [vmem:[#allocation2] sm:$0xff]
      %v1787 = vld [vmem:[#allocation2 + $0x8] sm:$0xff]
      %v1788 = vld [vmem:[#allocation2 + $0x10] sm:$0xff]
      %v1789 = vld [vmem:[#allocation2 + $0x18] sm:$0xff]
      %v1790 = vld [vmem:[#allocation2 + $0x20] sm:$0xff]
      %v1791 = vld [vmem:[#allocation2 + $0x28] sm:$0xff]
      %v1792 = vld [vmem:[#allocation2 + $0x30] sm:$0xff]
      %v1793 = vld [vmem:[#allocation2 + $0x38] sm:$0xff]
      %v1794 = vld [vmem:[#allocation2 + $0x40] sm:$0xff]
      %v1795 = vld [vmem:[#allocation2 + $0x48] sm:$0xff]
      %v1796 = vld [vmem:[#allocation2 + $0x50] sm:$0xff]
      %v1797 = vld [vmem:[#allocation2 + $0x58] sm:$0xff]
      %v1798 = vld [vmem:[#allocation2 + $0x60] sm:$0xff]
      %v1799 = vld [vmem:[#allocation2 + $0x68] sm:$0xff]
      %v1800 = vld [vmem:[#allocation2 + $0x70] sm:$0xff]
      %v1801 = vld [vmem:[#allocation2 + $0x78] sm:$0xff]
      %v1802 = vld [vmem:[#allocation2 + $0x80] sm:$0xff]
      %v1803 = vld [vmem:[#allocation2 + $0x88] sm:$0xff]
      %v1804 = vld [vmem:[#allocation2 + $0x90] sm:$0xff]
      %v1805 = vld [vmem:[#allocation2 + $0x98] sm:$0xff]
      %v1806 = vld [vmem:[#allocation2 + $0xa0] sm:$0xff]
      %v1807 = vld [vmem:[#allocation2 + $0xa8] sm:$0xff]
      %v1808 = vld [vmem:[#allocation2 + $0xb0] sm:$0xff]
      %v1809 = vld [vmem:[#allocation2 + $0xb8] sm:$0xff]
      %v1810 = vld [vmem:[#allocation2 + $0xc0] sm:$0xff]
      %v1811 = vld [vmem:[#allocation2 + $0xc8] sm:$0xff]
      %v1812 = vld [vmem:[#allocation2 + $0xd0] sm:$0xff]
      %v1813 = vld [vmem:[#allocation2 + $0xd8] sm:$0xff]
      %v1814 = vld [vmem:[#allocation2 + $0xe0] sm:$0xff]
      %v1815 = vld [vmem:[#allocation2 + $0xe8] sm:$0xff]
      %v1816 = vld [vmem:[#allocation2 + $0xf0] sm:$0xff]
      %v1817 = vld [vmem:[#allocation2 + $0xf8] sm:$0xff]
      %v1818 = vadd.f32 %v1786, %v1660
      %v1819 = vadd.f32 %v1787, %v1663
      %v1820 = vadd.f32 %v1788, %v1668
      %v1821 = vadd.f32 %v1789, %v1671
      %v1822 = vadd.f32 %v1790, %v1676
      %v1823 = vadd.f32 %v1791, %v1679
      %v1824 = vadd.f32 %v1792, %v1684
      %v1825 = vadd.f32 %v1793, %v1687
      %v1826 = vadd.f32 %v1794, %v1692
      %v1827 = vadd.f32 %v1795, %v1695
      %v1828 = vadd.f32 %v1796, %v1700
      %v1829 = vadd.f32 %v1797, %v1703
      %v1830 = vadd.f32 %v1798, %v1708
      %v1831 = vadd.f32 %v1799, %v1711
      %v1832 = vadd.f32 %v1800, %v1716
      %v1833 = vadd.f32 %v1801, %v1719
      %v1834 = vadd.f32 %v1802, %v1724
      %v1835 = vadd.f32 %v1803, %v1727
      %v1836 = vadd.f32 %v1804, %v1732
      %v1837 = vadd.f32 %v1805, %v1735
      %v1838 = vadd.f32 %v1806, %v1740
      %v1839 = vadd.f32 %v1807, %v1743
      %v1840 = vadd.f32 %v1808, %v1748
      %v1841 = vadd.f32 %v1809, %v1751
      %v1842 = vadd.f32 %v1810, %v1756
      %v1843 = vadd.f32 %v1811, %v1759
      %v1844 = vadd.f32 %v1812, %v1764
      %v1845 = vadd.f32 %v1813, %v1767
      %v1846 = vadd.f32 %v1814, %v1772
      %v1847 = vadd.f32 %v1815, %v1775
      %v1848 = vadd.f32 %v1816, %v1780
      %v1849 = vadd.f32 %v1817, %v1783
      %1850 = vst [vmem:[#allocation2] sm:$0xff] %v1818
      %1851 = vst [vmem:[#allocation2 + $0x8] sm:$0xff] %v1819
      %1852 = vst [vmem:[#allocation2 + $0x10] sm:$0xff] %v1820
      %1853 = vst [vmem:[#allocation2 + $0x18] sm:$0xff] %v1821
      %1854 = vst [vmem:[#allocation2 + $0x20] sm:$0xff] %v1822
      %1855 = vst [vmem:[#allocation2 + $0x28] sm:$0xff] %v1823
      %1856 = vst [vmem:[#allocation2 + $0x30] sm:$0xff] %v1824
      %1857 = vst [vmem:[#allocation2 + $0x38] sm:$0xff] %v1825
      %1858 = vst [vmem:[#allocation2 + $0x40] sm:$0xff] %v1826
      %1859 = vst [vmem:[#allocation2 + $0x48] sm:$0xff] %v1827
      %1860 = vst [vmem:[#allocation2 + $0x50] sm:$0xff] %v1828
      %1861 = vst [vmem:[#allocation2 + $0x58] sm:$0xff] %v1829
      %1862 = vst [vmem:[#allocation2 + $0x60] sm:$0xff] %v1830
      %1863 = vst [vmem:[#allocation2 + $0x68] sm:$0xff] %v1831
      %1864 = vst [vmem:[#allocation2 + $0x70] sm:$0xff] %v1832
      %1865 = vst [vmem:[#allocation2 + $0x78] sm:$0xff] %v1833
      %1866 = vst [vmem:[#allocation2 + $0x80] sm:$0xff] %v1834
      %1867 = vst [vmem:[#allocation2 + $0x88] sm:$0xff] %v1835
      %1868 = vst [vmem:[#allocation2 + $0x90] sm:$0xff] %v1836
      %1869 = vst [vmem:[#allocation2 + $0x98] sm:$0xff] %v1837
      %1870 = vst [vmem:[#allocation2 + $0xa0] sm:$0xff] %v1838
      %1871 = vst [vmem:[#allocation2 + $0xa8] sm:$0xff] %v1839
      %1872 = vst [vmem:[#allocation2 + $0xb0] sm:$0xff] %v1840
      %1873 = vst [vmem:[#allocation2 + $0xb8] sm:$0xff] %v1841
      %1874 = vst [vmem:[#allocation2 + $0xc0] sm:$0xff] %v1842
      %1875 = vst [vmem:[#allocation2 + $0xc8] sm:$0xff] %v1843
      %1876 = vst [vmem:[#allocation2 + $0xd0] sm:$0xff] %v1844
      %1877 = vst [vmem:[#allocation2 + $0xd8] sm:$0xff] %v1845
      %1878 = vst [vmem:[#allocation2 + $0xe0] sm:$0xff] %v1846
      %1879 = vst [vmem:[#allocation2 + $0xe8] sm:$0xff] %v1847
      %1880 = vst [vmem:[#allocation2 + $0xf0] sm:$0xff] %v1848
      %1881 = vst [vmem:[#allocation2 + $0xf8] sm:$0xff] %v1849
      %v1882 = vld [vmem:[%s410] sm:$0xf]
      %v1883 = vld [vmem:[%s410 + $0x4] sm:$0xf]
      %v1884 = vld [vmem:[%s410 + $0x8] sm:$0xf]
      %v1885 = vld [vmem:[%s410 + $0xc] sm:$0xf]
      %v1886 = vld [vmem:[%s410 + $0x10] sm:$0xf]
      %v1887 = vld [vmem:[%s410 + $0x14] sm:$0xf]
      %v1888 = vld [vmem:[%s410 + $0x18] sm:$0xf]
      %v1889 = vld [vmem:[%s410 + $0x1c] sm:$0xf]
      %v1890 = vld [vmem:[%s410 + $0x20] sm:$0xf]
      %v1891 = vld [vmem:[%s410 + $0x24] sm:$0xf]
      %v1892 = vld [vmem:[%s410 + $0x28] sm:$0xf]
      %v1893 = vld [vmem:[%s410 + $0x2c] sm:$0xf]
      %v1894 = vld [vmem:[%s410 + $0x30] sm:$0xf]
      %v1895 = vld [vmem:[%s410 + $0x34] sm:$0xf]
      %v1896 = vld [vmem:[%s410 + $0x38] sm:$0xf]
      %v1897 = vld [vmem:[%s410 + $0x3c] sm:$0xf]
      %v1914 = vunpack.c.l.b16 %v1882
      %v1915 = vunpack.c.l.b16 %v1883
      %v1916 = vunpack.c.l.b16 %v1884
      %v1917 = vunpack.c.l.b16 %v1885
      %v1918 = vunpack.c.l.b16 %v1886
      %v1919 = vunpack.c.l.b16 %v1887
      %v1920 = vunpack.c.l.b16 %v1888
      %v1921 = vunpack.c.l.b16 %v1889
      %v1922 = vunpack.c.l.b16 %v1890
      %v1923 = vunpack.c.l.b16 %v1891
      %v1924 = vunpack.c.l.b16 %v1892
      %v1925 = vunpack.c.l.b16 %v1893
      %v1926 = vunpack.c.l.b16 %v1894
      %v1927 = vunpack.c.l.b16 %v1895
      %v1928 = vunpack.c.l.b16 %v1896
      %v1929 = vunpack.c.l.b16 %v1897
      %v1930 = vpack.c.b16 %v1915, %v1914
      %v1931 = vpack.c.b16 %v1917, %v1916
      %v1932 = vpack.c.b16 %v1919, %v1918
      %v1933 = vpack.c.b16 %v1921, %v1920
      %v1934 = vpack.c.b16 %v1923, %v1922
      %v1935 = vpack.c.b16 %v1925, %v1924
      %v1936 = vpack.c.b16 %v1927, %v1926
      %v1937 = vpack.c.b16 %v1929, %v1928
      %1946 = vmatprep.subr.bf16.mxu0 0
      %1947 = vmatpush1.bf16.msra.mxu0 %v1930
      %1948 = vmatprep.subr.bf16.mxu0 0
      %1949 = vmatpush1.bf16.msra.mxu0 %v1931
      %1950 = vmatprep.subr.bf16.mxu0 0
      %1951 = vmatpush1.bf16.msra.mxu0 %v1932
      %1952 = vmatprep.subr.bf16.mxu0 0
      %1953 = vmatpush1.bf16.msra.mxu0 %v1933
      %1954 = vmatprep.subr.bf16.mxu0 0
      %1955 = vmatpush1.bf16.msra.mxu0 %v1934
      %1956 = vmatprep.subr.bf16.mxu0 0
      %1957 = vmatpush1.bf16.msra.mxu0 %v1935
      %1958 = vmatprep.subr.bf16.mxu0 0
      %1959 = vmatpush1.bf16.msra.mxu0 %v1936
      %1960 = vmatprep.subr.bf16.mxu0 0
      %1961 = vmatpush1.bf16.msra.mxu0 %v1937
      %1962 = vmatprep.subr.bf16.mxu0 0
      %1963 = vmatpush1.bf16.msra.mxu0 0
      %1964 = vmatprep.subr.bf16.mxu0 0
      %1965 = vmatpush1.bf16.msra.mxu0 0
      %1966 = vmatprep.subr.bf16.mxu0 0
      %1967 = vmatpush1.bf16.msra.mxu0 0
      %1968 = vmatprep.subr.bf16.mxu0 0
      %1969 = vmatpush1.bf16.msra.mxu0 0
      %1970 = vmatprep.subr.bf16.mxu0 0
      %1971 = vmatpush1.bf16.msra.mxu0 0
      %1972 = vmatprep.subr.bf16.mxu0 0
      %1973 = vmatpush1.bf16.msra.mxu0 0
      %1974 = vmatprep.subr.bf16.mxu0 0
      %1975 = vmatpush1.bf16.msra.mxu0 0
      %1976 = vmatprep.subr.bf16.mxu0 0
      %1977 = vmatpush1.bf16.msra.mxu0 0
      %1978 = vmatprep.mubr.bf16.mxu0 0
      %1979 = vmatmul.mubr.bf16.gmra.mrb[0].mxu0 %v1544
      %v1980 = vpop.f32.mrb[0].mxu0
      %v1981 = vadd.f32 0.0, %v1980
      %v1982 = vpop.f32.mrb[0].mxu0
      %v1983 = vpop.f32.mrb[0].mxu0
      %v1984 = vadd.f32 0.0, %v1983
      %v1985 = vpop.f32.mrb[0].mxu0
      %1986 = vmatprep.mubr.bf16.mxu0 0
      %1987 = vmatmul.mubr.bf16.gmra.mrb[0].mxu0 %v1545
      %v1988 = vpop.f32.mrb[0].mxu0
      %v1989 = vadd.f32 0.0, %v1988
      %v1990 = vpop.f32.mrb[0].mxu0
      %v1991 = vpop.f32.mrb[0].mxu0
      %v1992 = vadd.f32 0.0, %v1991
      %v1993 = vpop.f32.mrb[0].mxu0
      %1994 = vmatprep.mubr.bf16.mxu0 0
      %1995 = vmatmul.mubr.bf16.gmra.mrb[0].mxu0 %v1546
      %v1996 = vpop.f32.mrb[0].mxu0
      %v1997 = vadd.f32 0.0, %v1996
      %v1998 = vpop.f32.mrb[0].mxu0
      %v1999 = vpop.f32.mrb[0].mxu0
      %v2000 = vadd.f32 0.0, %v1999
      %v2001 = vpop.f32.mrb[0].mxu0
      %2002 = vmatprep.mubr.bf16.mxu0 0
      %2003 = vmatmul.mubr.bf16.gmra.mrb[0].mxu0 %v1547
      %v2004 = vpop.f32.mrb[0].mxu0
      %v2005 = vadd.f32 0.0, %v2004
      %v2006 = vpop.f32.mrb[0].mxu0
      %v2007 = vpop.f32.mrb[0].mxu0
      %v2008 = vadd.f32 0.0, %v2007
      %v2009 = vpop.f32.mrb[0].mxu0
      %2010 = vmatprep.mubr.bf16.mxu0 0
      %2011 = vmatmul.mubr.bf16.gmra.mrb[0].mxu0 %v1548
      %v2012 = vpop.f32.mrb[0].mxu0
      %v2013 = vadd.f32 0.0, %v2012
      %v2014 = vpop.f32.mrb[0].mxu0
      %v2015 = vpop.f32.mrb[0].mxu0
      %v2016 = vadd.f32 0.0, %v2015
      %v2017 = vpop.f32.mrb[0].mxu0
      %2018 = vmatprep.mubr.bf16.mxu0 0
      %2019 = vmatmul.mubr.bf16.gmra.mrb[0].mxu0 %v1549
      %v2020 = vpop.f32.mrb[0].mxu0
      %v2021 = vadd.f32 0.0, %v2020
      %v2022 = vpop.f32.mrb[0].mxu0
      %v2023 = vpop.f32.mrb[0].mxu0
      %v2024 = vadd.f32 0.0, %v2023
      %v2025 = vpop.f32.mrb[0].mxu0
      %2026 = vmatprep.mubr.bf16.mxu0 0
      %2027 = vmatmul.mubr.bf16.gmra.mrb[0].mxu0 %v1550
      %v2028 = vpop.f32.mrb[0].mxu0
      %v2029 = vadd.f32 0.0, %v2028
      %v2030 = vpop.f32.mrb[0].mxu0
      %v2031 = vpop.f32.mrb[0].mxu0
      %v2032 = vadd.f32 0.0, %v2031
      %v2033 = vpop.f32.mrb[0].mxu0
      %2034 = vmatprep.mubr.bf16.mxu0 0
      %2035 = vmatmul.mubr.bf16.gmra.mrb[0].mxu0 %v1551
      %v2036 = vpop.f32.mrb[0].mxu0
      %v2037 = vadd.f32 0.0, %v2036
      %v2038 = vpop.f32.mrb[0].mxu0
      %v2039 = vpop.f32.mrb[0].mxu0
      %v2040 = vadd.f32 0.0, %v2039
      %v2041 = vpop.f32.mrb[0].mxu0
      %2042 = vmatprep.mubr.bf16.mxu0 0
      %2043 = vmatmul.mubr.bf16.gmra.mrb[0].mxu0 %v1552
      %v2044 = vpop.f32.mrb[0].mxu0
      %v2045 = vadd.f32 0.0, %v2044
      %v2046 = vpop.f32.mrb[0].mxu0
      %v2047 = vpop.f32.mrb[0].mxu0
      %v2048 = vadd.f32 0.0, %v2047
      %v2049 = vpop.f32.mrb[0].mxu0
      %2050 = vmatprep.mubr.bf16.mxu0 0
      %2051 = vmatmul.mubr.bf16.gmra.mrb[0].mxu0 %v1553
      %v2052 = vpop.f32.mrb[0].mxu0
      %v2053 = vadd.f32 0.0, %v2052
      %v2054 = vpop.f32.mrb[0].mxu0
      %v2055 = vpop.f32.mrb[0].mxu0
      %v2056 = vadd.f32 0.0, %v2055
      %v2057 = vpop.f32.mrb[0].mxu0
      %2058 = vmatprep.mubr.bf16.mxu0 0
      %2059 = vmatmul.mubr.bf16.gmra.mrb[0].mxu0 %v1554
      %v2060 = vpop.f32.mrb[0].mxu0
      %v2061 = vadd.f32 0.0, %v2060
      %v2062 = vpop.f32.mrb[0].mxu0
      %v2063 = vpop.f32.mrb[0].mxu0
      %v2064 = vadd.f32 0.0, %v2063
      %v2065 = vpop.f32.mrb[0].mxu0
      %2066 = vmatprep.mubr.bf16.mxu0 0
      %2067 = vmatmul.mubr.bf16.gmra.mrb[0].mxu0 %v1555
      %v2068 = vpop.f32.mrb[0].mxu0
      %v2069 = vadd.f32 0.0, %v2068
      %v2070 = vpop.f32.mrb[0].mxu0
      %v2071 = vpop.f32.mrb[0].mxu0
      %v2072 = vadd.f32 0.0, %v2071
      %v2073 = vpop.f32.mrb[0].mxu0
      %2074 = vmatprep.mubr.bf16.mxu0 0
      %2075 = vmatmul.mubr.bf16.gmra.mrb[0].mxu0 %v1556
      %v2076 = vpop.f32.mrb[0].mxu0
      %v2077 = vadd.f32 0.0, %v2076
      %v2078 = vpop.f32.mrb[0].mxu0
      %v2079 = vpop.f32.mrb[0].mxu0
      %v2080 = vadd.f32 0.0, %v2079
      %v2081 = vpop.f32.mrb[0].mxu0
      %2082 = vmatprep.mubr.bf16.mxu0 0
      %2083 = vmatmul.mubr.bf16.gmra.mrb[0].mxu0 %v1557
      %v2084 = vpop.f32.mrb[0].mxu0
      %v2085 = vadd.f32 0.0, %v2084
      %v2086 = vpop.f32.mrb[0].mxu0
      %v2087 = vpop.f32.mrb[0].mxu0
      %v2088 = vadd.f32 0.0, %v2087
      %v2089 = vpop.f32.mrb[0].mxu0
      %2090 = vmatprep.mubr.bf16.mxu0 0
      %2091 = vmatmul.mubr.bf16.gmra.mrb[0].mxu0 %v1558
      %v2092 = vpop.f32.mrb[0].mxu0
      %v2093 = vadd.f32 0.0, %v2092
      %v2094 = vpop.f32.mrb[0].mxu0
      %v2095 = vpop.f32.mrb[0].mxu0
      %v2096 = vadd.f32 0.0, %v2095
      %v2097 = vpop.f32.mrb[0].mxu0
      %2098 = vmatprep.mubr.bf16.mxu0 0
      %2099 = vmatmul.mubr.bf16.gmra.mrb[0].mxu0 %v1559
      %v2100 = vpop.f32.mrb[0].mxu0
      %v2101 = vadd.f32 0.0, %v2100
      %v2102 = vpop.f32.mrb[0].mxu0
      %v2103 = vpop.f32.mrb[0].mxu0
      %v2104 = vadd.f32 0.0, %v2103
      %v2105 = vpop.f32.mrb[0].mxu0
      %2106 = vdwg.mxu0
      %v2107 = vld [vmem:[#allocation2] sm:$0xff]
      %v2108 = vld [vmem:[#allocation2 + $0x8] sm:$0xff]
      %v2109 = vld [vmem:[#allocation2 + $0x10] sm:$0xff]
      %v2110 = vld [vmem:[#allocation2 + $0x18] sm:$0xff]
      %v2111 = vld [vmem:[#allocation2 + $0x20] sm:$0xff]
      %v2112 = vld [vmem:[#allocation2 + $0x28] sm:$0xff]
      %v2113 = vld [vmem:[#allocation2 + $0x30] sm:$0xff]
      %v2114 = vld [vmem:[#allocation2 + $0x38] sm:$0xff]
      %v2115 = vld [vmem:[#allocation2 + $0x40] sm:$0xff]
      %v2116 = vld [vmem:[#allocation2 + $0x48] sm:$0xff]
      %v2117 = vld [vmem:[#allocation2 + $0x50] sm:$0xff]
      %v2118 = vld [vmem:[#allocation2 + $0x58] sm:$0xff]
      %v2119 = vld [vmem:[#allocation2 + $0x60] sm:$0xff]
      %v2120 = vld [vmem:[#allocation2 + $0x68] sm:$0xff]
      %v2121 = vld [vmem:[#allocation2 + $0x70] sm:$0xff]
      %v2122 = vld [vmem:[#allocation2 + $0x78] sm:$0xff]
      %v2123 = vld [vmem:[#allocation2 + $0x80] sm:$0xff]
      %v2124 = vld [vmem:[#allocation2 + $0x88] sm:$0xff]
      %v2125 = vld [vmem:[#allocation2 + $0x90] sm:$0xff]
      %v2126 = vld [vmem:[#allocation2 + $0x98] sm:$0xff]
      %v2127 = vld [vmem:[#allocation2 + $0xa0] sm:$0xff]
      %v2128 = vld [vmem:[#allocation2 + $0xa8] sm:$0xff]
      %v2129 = vld [vmem:[#allocation2 + $0xb0] sm:$0xff]
      %v2130 = vld [vmem:[#allocation2 + $0xb8] sm:$0xff]
      %v2131 = vld [vmem:[#allocation2 + $0xc0] sm:$0xff]
      %v2132 = vld [vmem:[#allocation2 + $0xc8] sm:$0xff]
      %v2133 = vld [vmem:[#allocation2 + $0xd0] sm:$0xff]
      %v2134 = vld [vmem:[#allocation2 + $0xd8] sm:$0xff]
      %v2135 = vld [vmem:[#allocation2 + $0xe0] sm:$0xff]
      %v2136 = vld [vmem:[#allocation2 + $0xe8] sm:$0xff]
      %v2137 = vld [vmem:[#allocation2 + $0xf0] sm:$0xff]
      %v2138 = vld [vmem:[#allocation2 + $0xf8] sm:$0xff]
      %v2139 = vld [vmem:[%s405] sm:$0xff]
      %v2140 = vld [vmem:[%s405 + $0x8] sm:$0xff]
      %v2141 = vld [vmem:[%s405 + $0x10] sm:$0xff]
      %v2142 = vld [vmem:[%s405 + $0x18] sm:$0xff]
      %v2143 = vld [vmem:[%s405 + $0x20] sm:$0xff]
      %v2144 = vld [vmem:[%s405 + $0x28] sm:$0xff]
      %v2145 = vld [vmem:[%s405 + $0x30] sm:$0xff]
      %v2146 = vld [vmem:[%s405 + $0x38] sm:$0xff]
      %v2147 = vld [vmem:[%s405 + $0x40] sm:$0xff]
      %v2148 = vld [vmem:[%s405 + $0x48] sm:$0xff]
      %v2149 = vld [vmem:[%s405 + $0x50] sm:$0xff]
      %v2150 = vld [vmem:[%s405 + $0x58] sm:$0xff]
      %v2151 = vld [vmem:[%s405 + $0x60] sm:$0xff]
      %v2152 = vld [vmem:[%s405 + $0x68] sm:$0xff]
      %v2153 = vld [vmem:[%s405 + $0x70] sm:$0xff]
      %v2154 = vld [vmem:[%s405 + $0x78] sm:$0xff]
      %v2155 = vld [vmem:[%s405 + $0x80] sm:$0xff]
      %v2156 = vld [vmem:[%s405 + $0x88] sm:$0xff]
      %v2157 = vld [vmem:[%s405 + $0x90] sm:$0xff]
      %v2158 = vld [vmem:[%s405 + $0x98] sm:$0xff]
      %v2159 = vld [vmem:[%s405 + $0xa0] sm:$0xff]
      %v2160 = vld [vmem:[%s405 + $0xa8] sm:$0xff]
      %v2161 = vld [vmem:[%s405 + $0xb0] sm:$0xff]
      %v2162 = vld [vmem:[%s405 + $0xb8] sm:$0xff]
      %v2163 = vld [vmem:[%s405 + $0xc0] sm:$0xff]
      %v2164 = vld [vmem:[%s405 + $0xc8] sm:$0xff]
      %v2165 = vld [vmem:[%s405 + $0xd0] sm:$0xff]
      %v2166 = vld [vmem:[%s405 + $0xd8] sm:$0xff]
      %v2167 = vld [vmem:[%s405 + $0xe0] sm:$0xff]
      %v2168 = vld [vmem:[%s405 + $0xe8] sm:$0xff]
      %v2169 = vld [vmem:[%s405 + $0xf0] sm:$0xff]
      %v2170 = vld [vmem:[%s405 + $0xf8] sm:$0xff]
      %v2171 = vpack.c.bf16 %v2108, %v2107
      %v2172 = vpack.c.bf16 %v2110, %v2109
      %v2173 = vpack.c.bf16 %v2112, %v2111
      %v2174 = vpack.c.bf16 %v2114, %v2113
      %v2175 = vpack.c.bf16 %v2116, %v2115
      %v2176 = vpack.c.bf16 %v2118, %v2117
      %v2177 = vpack.c.bf16 %v2120, %v2119
      %v2178 = vpack.c.bf16 %v2122, %v2121
      %v2179 = vpack.c.bf16 %v2124, %v2123
      %v2180 = vpack.c.bf16 %v2126, %v2125
      %v2181 = vpack.c.bf16 %v2128, %v2127
      %v2182 = vpack.c.bf16 %v2130, %v2129
      %v2183 = vpack.c.bf16 %v2132, %v2131
      %v2184 = vpack.c.bf16 %v2134, %v2133
      %v2185 = vpack.c.bf16 %v2136, %v2135
      %v2186 = vpack.c.bf16 %v2138, %v2137
      %v2203 = vunpack.c.l.b16 %v2171
      %v2204 = vunpack.c.h.b16 %v2171
      %v2205 = vunpack.c.l.b16 %v2172
      %v2206 = vunpack.c.h.b16 %v2172
      %v2207 = vunpack.c.l.b16 %v2173
      %v2208 = vunpack.c.h.b16 %v2173
      %v2209 = vunpack.c.l.b16 %v2174
      %v2210 = vunpack.c.h.b16 %v2174
      %v2211 = vunpack.c.l.b16 %v2175
      %v2212 = vunpack.c.h.b16 %v2175
      %v2213 = vunpack.c.l.b16 %v2176
      %v2214 = vunpack.c.h.b16 %v2176
      %v2215 = vunpack.c.l.b16 %v2177
      %v2216 = vunpack.c.h.b16 %v2177
      %v2217 = vunpack.c.l.b16 %v2178
      %v2218 = vunpack.c.h.b16 %v2178
      %v2219 = vunpack.c.l.b16 %v2179
      %v2220 = vunpack.c.h.b16 %v2179
      %v2221 = vunpack.c.l.b16 %v2180
      %v2222 = vunpack.c.h.b16 %v2180
      %v2223 = vunpack.c.l.b16 %v2181
      %v2224 = vunpack.c.h.b16 %v2181
      %v2225 = vunpack.c.l.b16 %v2182
      %v2226 = vunpack.c.h.b16 %v2182
      %v2227 = vunpack.c.l.b16 %v2183
      %v2228 = vunpack.c.h.b16 %v2183
      %v2229 = vunpack.c.l.b16 %v2184
      %v2230 = vunpack.c.h.b16 %v2184
      %v2231 = vunpack.c.l.b16 %v2185
      %v2232 = vunpack.c.h.b16 %v2185
      %v2233 = vunpack.c.l.b16 %v2186
      %v2234 = vunpack.c.h.b16 %v2186
      %v2235 = vpack.c.b16 %v2203, %v2203
      %v2236 = vpack.c.b16 %v2204, %v2204
      %v2237 = vpack.c.b16 %v2205, %v2205
      %v2238 = vpack.c.b16 %v2206, %v2206
      %v2239 = vpack.c.b16 %v2207, %v2207
      %v2240 = vpack.c.b16 %v2208, %v2208
      %v2241 = vpack.c.b16 %v2209, %v2209
      %v2242 = vpack.c.b16 %v2210, %v2210
      %v2243 = vpack.c.b16 %v2211, %v2211
      %v2244 = vpack.c.b16 %v2212, %v2212
      %v2245 = vpack.c.b16 %v2213, %v2213
      %v2246 = vpack.c.b16 %v2214, %v2214
      %v2247 = vpack.c.b16 %v2215, %v2215
      %v2248 = vpack.c.b16 %v2216, %v2216
      %v2249 = vpack.c.b16 %v2217, %v2217
      %v2250 = vpack.c.b16 %v2218, %v2218
      %v2251 = vpack.c.b16 %v2219, %v2219
      %v2252 = vpack.c.b16 %v2220, %v2220
      %v2253 = vpack.c.b16 %v2221, %v2221
      %v2254 = vpack.c.b16 %v2222, %v2222
      %v2255 = vpack.c.b16 %v2223, %v2223
      %v2256 = vpack.c.b16 %v2224, %v2224
      %v2257 = vpack.c.b16 %v2225, %v2225
      %v2258 = vpack.c.b16 %v2226, %v2226
      %v2259 = vpack.c.b16 %v2227, %v2227
      %v2260 = vpack.c.b16 %v2228, %v2228
      %v2261 = vpack.c.b16 %v2229, %v2229
      %v2262 = vpack.c.b16 %v2230, %v2230
      %v2263 = vpack.c.b16 %v2231, %v2231
      %v2264 = vpack.c.b16 %v2232, %v2232
      %v2265 = vpack.c.b16 %v2233, %v2233
      %v2266 = vpack.c.b16 %v2234, %v2234
      %2299 = vst [vmem:[%s422] sm:$0xf] %v2235
      %2300 = vst [vmem:[%s422 + $0x4] sm:$0xf] %v2236
      %2301 = vst [vmem:[%s422 + $0x8] sm:$0xf] %v2237
      %2302 = vst [vmem:[%s422 + $0xc] sm:$0xf] %v2238
      %2303 = vst [vmem:[%s422 + $0x10] sm:$0xf] %v2239
      %2304 = vst [vmem:[%s422 + $0x14] sm:$0xf] %v2240
      %2305 = vst [vmem:[%s422 + $0x18] sm:$0xf] %v2241
      %2306 = vst [vmem:[%s422 + $0x1c] sm:$0xf] %v2242
      %2307 = vst [vmem:[%s422 + $0x20] sm:$0xf] %v2243
      %2308 = vst [vmem:[%s422 + $0x24] sm:$0xf] %v2244
      %2309 = vst [vmem:[%s422 + $0x28] sm:$0xf] %v2245
      %2310 = vst [vmem:[%s422 + $0x2c] sm:$0xf] %v2246
      %2311 = vst [vmem:[%s422 + $0x30] sm:$0xf] %v2247
      %2312 = vst [vmem:[%s422 + $0x34] sm:$0xf] %v2248
      %2313 = vst [vmem:[%s422 + $0x38] sm:$0xf] %v2249
      %2314 = vst [vmem:[%s422 + $0x3c] sm:$0xf] %v2250
      %2315 = vst [vmem:[%s422 + $0x40] sm:$0xf] %v2251
      %2316 = vst [vmem:[%s422 + $0x44] sm:$0xf] %v2252
      %2317 = vst [vmem:[%s422 + $0x48] sm:$0xf] %v2253
      %2318 = vst [vmem:[%s422 + $0x4c] sm:$0xf] %v2254
      %2319 = vst [vmem:[%s422 + $0x50] sm:$0xf] %v2255
      %2320 = vst [vmem:[%s422 + $0x54] sm:$0xf] %v2256
      %2321 = vst [vmem:[%s422 + $0x58] sm:$0xf] %v2257
      %2322 = vst [vmem:[%s422 + $0x5c] sm:$0xf] %v2258
      %2323 = vst [vmem:[%s422 + $0x60] sm:$0xf] %v2259
      %2324 = vst [vmem:[%s422 + $0x64] sm:$0xf] %v2260
      %2325 = vst [vmem:[%s422 + $0x68] sm:$0xf] %v2261
      %2326 = vst [vmem:[%s422 + $0x6c] sm:$0xf] %v2262
      %2327 = vst [vmem:[%s422 + $0x70] sm:$0xf] %v2263
      %2328 = vst [vmem:[%s422 + $0x74] sm:$0xf] %v2264
      %2329 = vst [vmem:[%s422 + $0x78] sm:$0xf] %v2265
      %2330 = vst [vmem:[%s422 + $0x7c] sm:$0xf] %v2266
      %2332 = vset.pattern.permute.xlu0 0
      %2333 = vperm.xlu0 %2332, %v2139
      %v2334 = vpop.permute.xlu0 %2333
      %2337 = vset.pattern.permute.xlu0 0
      %2338 = vperm.xlu0 %2337, %v2140
      %v2339 = vpop.permute.xlu0 %2338
      %2342 = vset.pattern.permute.xlu0 0
      %2343 = vperm.xlu0 %2342, %v2141
      %v2344 = vpop.permute.xlu0 %2343
      %2347 = vset.pattern.permute.xlu0 0
      %2348 = vperm.xlu0 %2347, %v2142
      %v2349 = vpop.permute.xlu0 %2348
      %2352 = vset.pattern.permute.xlu0 0
      %2353 = vperm.xlu0 %2352, %v2143
      %v2354 = vpop.permute.xlu0 %2353
      %2357 = vset.pattern.permute.xlu0 0
      %2358 = vperm.xlu0 %2357, %v2144
      %v2359 = vpop.permute.xlu0 %2358
      %2362 = vset.pattern.permute.xlu0 0
      %2363 = vperm.xlu0 %2362, %v2145
      %v2364 = vpop.permute.xlu0 %2363
      %2367 = vset.pattern.permute.xlu0 0
      %2368 = vperm.xlu0 %2367, %v2146
      %v2369 = vpop.permute.xlu0 %2368
      %2372 = vset.pattern.permute.xlu0 0
      %2373 = vperm.xlu0 %2372, %v2147
      %v2374 = vpop.permute.xlu0 %2373
      %2377 = vset.pattern.permute.xlu0 0
      %2378 = vperm.xlu0 %2377, %v2148
      %v2379 = vpop.permute.xlu0 %2378
      %2382 = vset.pattern.permute.xlu0 0
      %2383 = vperm.xlu0 %2382, %v2149
      %v2384 = vpop.permute.xlu0 %2383
      %2387 = vset.pattern.permute.xlu0 0
      %2388 = vperm.xlu0 %2387, %v2150
      %v2389 = vpop.permute.xlu0 %2388
      %2392 = vset.pattern.permute.xlu0 0
      %2393 = vperm.xlu0 %2392, %v2151
      %v2394 = vpop.permute.xlu0 %2393
      %2397 = vset.pattern.permute.xlu0 0
      %2398 = vperm.xlu0 %2397, %v2152
      %v2399 = vpop.permute.xlu0 %2398
      %2402 = vset.pattern.permute.xlu0 0
      %2403 = vperm.xlu0 %2402, %v2153
      %v2404 = vpop.permute.xlu0 %2403
      %2407 = vset.pattern.permute.xlu0 0
      %2408 = vperm.xlu0 %2407, %v2154
      %v2409 = vpop.permute.xlu0 %2408
      %2412 = vset.pattern.permute.xlu0 0
      %2413 = vperm.xlu0 %2412, %v2155
      %v2414 = vpop.permute.xlu0 %2413
      %2417 = vset.pattern.permute.xlu0 0
      %2418 = vperm.xlu0 %2417, %v2156
      %v2419 = vpop.permute.xlu0 %2418
      %2422 = vset.pattern.permute.xlu0 0
      %2423 = vperm.xlu0 %2422, %v2157
      %v2424 = vpop.permute.xlu0 %2423
      %2427 = vset.pattern.permute.xlu0 0
      %2428 = vperm.xlu0 %2427, %v2158
      %v2429 = vpop.permute.xlu0 %2428
      %2432 = vset.pattern.permute.xlu0 0
      %2433 = vperm.xlu0 %2432, %v2159
      %v2434 = vpop.permute.xlu0 %2433
      %2437 = vset.pattern.permute.xlu0 0
      %2438 = vperm.xlu0 %2437, %v2160
      %v2439 = vpop.permute.xlu0 %2438
      %2442 = vset.pattern.permute.xlu0 0
      %2443 = vperm.xlu0 %2442, %v2161
      %v2444 = vpop.permute.xlu0 %2443
      %2447 = vset.pattern.permute.xlu0 0
      %2448 = vperm.xlu0 %2447, %v2162
      %v2449 = vpop.permute.xlu0 %2448
      %2452 = vset.pattern.permute.xlu0 0
      %2453 = vperm.xlu0 %2452, %v2163
      %v2454 = vpop.permute.xlu0 %2453
      %2457 = vset.pattern.permute.xlu0 0
      %2458 = vperm.xlu0 %2457, %v2164
      %v2459 = vpop.permute.xlu0 %2458
      %2462 = vset.pattern.permute.xlu0 0
      %2463 = vperm.xlu0 %2462, %v2165
      %v2464 = vpop.permute.xlu0 %2463
      %2467 = vset.pattern.permute.xlu0 0
      %2468 = vperm.xlu0 %2467, %v2166
      %v2469 = vpop.permute.xlu0 %2468
      %2472 = vset.pattern.permute.xlu0 0
      %2473 = vperm.xlu0 %2472, %v2167
      %v2474 = vpop.permute.xlu0 %2473
      %2477 = vset.pattern.permute.xlu0 0
      %2478 = vperm.xlu0 %2477, %v2168
      %v2479 = vpop.permute.xlu0 %2478
      %2482 = vset.pattern.permute.xlu0 0
      %2483 = vperm.xlu0 %2482, %v2169
      %v2484 = vpop.permute.xlu0 %2483
      %2487 = vset.pattern.permute.xlu0 0
      %2488 = vperm.xlu0 %2487, %v2170
      %v2489 = vpop.permute.xlu0 %2488
      %v2491 = vmul.f32 %v2107, %v2334
      %v2492 = vmul.f32 %v2108, %v2339
      %v2493 = vmul.f32 %v2109, %v2344
      %v2494 = vmul.f32 %v2110, %v2349
      %v2495 = vmul.f32 %v2111, %v2354
      %v2496 = vmul.f32 %v2112, %v2359
      %v2497 = vmul.f32 %v2113, %v2364
      %v2498 = vmul.f32 %v2114, %v2369
      %v2499 = vmul.f32 %v2115, %v2374
      %v2500 = vmul.f32 %v2116, %v2379
      %v2501 = vmul.f32 %v2117, %v2384
      %v2502 = vmul.f32 %v2118, %v2389
      %v2503 = vmul.f32 %v2119, %v2394
      %v2504 = vmul.f32 %v2120, %v2399
      %v2505 = vmul.f32 %v2121, %v2404
      %v2506 = vmul.f32 %v2122, %v2409
      %v2507 = vmul.f32 %v2123, %v2414
      %v2508 = vmul.f32 %v2124, %v2419
      %v2509 = vmul.f32 %v2125, %v2424
      %v2510 = vmul.f32 %v2126, %v2429
      %v2511 = vmul.f32 %v2127, %v2434
      %v2512 = vmul.f32 %v2128, %v2439
      %v2513 = vmul.f32 %v2129, %v2444
      %v2514 = vmul.f32 %v2130, %v2449
      %v2515 = vmul.f32 %v2131, %v2454
      %v2516 = vmul.f32 %v2132, %v2459
      %v2517 = vmul.f32 %v2133, %v2464
      %v2518 = vmul.f32 %v2134, %v2469
      %v2519 = vmul.f32 %v2135, %v2474
      %v2520 = vmul.f32 %v2136, %v2479
      %v2521 = vmul.f32 %v2137, %v2484
      %v2522 = vmul.f32 %v2138, %v2489
      %v2523 = vadd.f32 %v2491, %v2492
      %v2524 = vadd.f32 %v2523, %v2493
      %v2525 = vadd.f32 %v2524, %v2494
      %v2526 = vadd.f32 %v2525, %v2495
      %v2527 = vadd.f32 %v2526, %v2496
      %v2528 = vadd.f32 %v2527, %v2497
      %v2529 = vadd.f32 %v2528, %v2498
      %v2530 = vadd.f32 %v2529, %v2499
      %v2531 = vadd.f32 %v2530, %v2500
      %v2532 = vadd.f32 %v2531, %v2501
      %v2533 = vadd.f32 %v2532, %v2502
      %v2534 = vadd.f32 %v2533, %v2503
      %v2535 = vadd.f32 %v2534, %v2504
      %v2536 = vadd.f32 %v2535, %v2505
      %v2537 = vadd.f32 %v2536, %v2506
      %v2538 = vadd.f32 %v2537, %v2507
      %v2539 = vadd.f32 %v2538, %v2508
      %v2540 = vadd.f32 %v2539, %v2509
      %v2541 = vadd.f32 %v2540, %v2510
      %v2542 = vadd.f32 %v2541, %v2511
      %v2543 = vadd.f32 %v2542, %v2512
      %v2544 = vadd.f32 %v2543, %v2513
      %v2545 = vadd.f32 %v2544, %v2514
      %v2546 = vadd.f32 %v2545, %v2515
      %v2547 = vadd.f32 %v2546, %v2516
      %v2548 = vadd.f32 %v2547, %v2517
      %v2549 = vadd.f32 %v2548, %v2518
      %v2550 = vadd.f32 %v2549, %v2519
      %v2551 = vadd.f32 %v2550, %v2520
      %v2552 = vadd.f32 %v2551, %v2521
      %v2553 = vadd.f32 %v2552, %v2522
      %v2554 = vrot.slane %v2553, 4
      %v2555 = vadd.f32 %v2553, %v2554
      %v2556 = vrot.slane %v2555, 2
      %v2557 = vadd.f32 %v2555, %v2556
      %v2558 = vrot.slane %v2557, 1
      %v2559 = vadd.f32 %v2557, %v2558
      %v2560 = vmul.f32 %v2107, %v2107
      %v2561 = vmul.f32 %v2108, %v2108
      %v2562 = vmul.f32 %v2109, %v2109
      %v2563 = vmul.f32 %v2110, %v2110
      %v2564 = vmul.f32 %v2111, %v2111
      %v2565 = vmul.f32 %v2112, %v2112
      %v2566 = vmul.f32 %v2113, %v2113
      %v2567 = vmul.f32 %v2114, %v2114
      %v2568 = vmul.f32 %v2115, %v2115
      %v2569 = vmul.f32 %v2116, %v2116
      %v2570 = vmul.f32 %v2117, %v2117
      %v2571 = vmul.f32 %v2118, %v2118
      %v2572 = vmul.f32 %v2119, %v2119
      %v2573 = vmul.f32 %v2120, %v2120
      %v2574 = vmul.f32 %v2121, %v2121
      %v2575 = vmul.f32 %v2122, %v2122
      %v2576 = vmul.f32 %v2123, %v2123
      %v2577 = vmul.f32 %v2124, %v2124
      %v2578 = vmul.f32 %v2125, %v2125
      %v2579 = vmul.f32 %v2126, %v2126
      %v2580 = vmul.f32 %v2127, %v2127
      %v2581 = vmul.f32 %v2128, %v2128
      %v2582 = vmul.f32 %v2129, %v2129
      %v2583 = vmul.f32 %v2130, %v2130
      %v2584 = vmul.f32 %v2131, %v2131
      %v2585 = vmul.f32 %v2132, %v2132
      %v2586 = vmul.f32 %v2133, %v2133
      %v2587 = vmul.f32 %v2134, %v2134
      %v2588 = vmul.f32 %v2135, %v2135
      %v2589 = vmul.f32 %v2136, %v2136
      %v2590 = vmul.f32 %v2137, %v2137
      %v2591 = vmul.f32 %v2138, %v2138
      %v2592 = vmul.f32 %v2560, %v2334
      %v2593 = vmul.f32 %v2561, %v2339
      %v2594 = vmul.f32 %v2562, %v2344
      %v2595 = vmul.f32 %v2563, %v2349
      %v2596 = vmul.f32 %v2564, %v2354
      %v2597 = vmul.f32 %v2565, %v2359
      %v2598 = vmul.f32 %v2566, %v2364
      %v2599 = vmul.f32 %v2567, %v2369
      %v2600 = vmul.f32 %v2568, %v2374
      %v2601 = vmul.f32 %v2569, %v2379
      %v2602 = vmul.f32 %v2570, %v2384
      %v2603 = vmul.f32 %v2571, %v2389
      %v2604 = vmul.f32 %v2572, %v2394
      %v2605 = vmul.f32 %v2573, %v2399
      %v2606 = vmul.f32 %v2574, %v2404
      %v2607 = vmul.f32 %v2575, %v2409
      %v2608 = vmul.f32 %v2576, %v2414
      %v2609 = vmul.f32 %v2577, %v2419
      %v2610 = vmul.f32 %v2578, %v2424
      %v2611 = vmul.f32 %v2579, %v2429
      %v2612 = vmul.f32 %v2580, %v2434
      %v2613 = vmul.f32 %v2581, %v2439
      %v2614 = vmul.f32 %v2582, %v2444
      %v2615 = vmul.f32 %v2583, %v2449
      %v2616 = vmul.f32 %v2584, %v2454
      %v2617 = vmul.f32 %v2585, %v2459
      %v2618 = vmul.f32 %v2586, %v2464
      %v2619 = vmul.f32 %v2587, %v2469
      %v2620 = vmul.f32 %v2588, %v2474
      %v2621 = vmul.f32 %v2589, %v2479
      %v2622 = vmul.f32 %v2590, %v2484
      %v2623 = vmul.f32 %v2591, %v2489
      %v2624 = vadd.f32 %v2592, %v2593
      %v2625 = vadd.f32 %v2624, %v2594
      %v2626 = vadd.f32 %v2625, %v2595
      %v2627 = vadd.f32 %v2626, %v2596
      %v2628 = vadd.f32 %v2627, %v2597
      %v2629 = vadd.f32 %v2628, %v2598
      %v2630 = vadd.f32 %v2629, %v2599
      %v2631 = vadd.f32 %v2630, %v2600
      %v2632 = vadd.f32 %v2631, %v2601
      %v2633 = vadd.f32 %v2632, %v2602
      %v2634 = vadd.f32 %v2633, %v2603
      %v2635 = vadd.f32 %v2634, %v2604
      %v2636 = vadd.f32 %v2635, %v2605
      %v2637 = vadd.f32 %v2636, %v2606
      %v2638 = vadd.f32 %v2637, %v2607
      %v2639 = vadd.f32 %v2638, %v2608
      %v2640 = vadd.f32 %v2639, %v2609
      %v2641 = vadd.f32 %v2640, %v2610
      %v2642 = vadd.f32 %v2641, %v2611
      %v2643 = vadd.f32 %v2642, %v2612
      %v2644 = vadd.f32 %v2643, %v2613
      %v2645 = vadd.f32 %v2644, %v2614
      %v2646 = vadd.f32 %v2645, %v2615
      %v2647 = vadd.f32 %v2646, %v2616
      %v2648 = vadd.f32 %v2647, %v2617
      %v2649 = vadd.f32 %v2648, %v2618
      %v2650 = vadd.f32 %v2649, %v2619
      %v2651 = vadd.f32 %v2650, %v2620
      %v2652 = vadd.f32 %v2651, %v2621
      %v2653 = vadd.f32 %v2652, %v2622
      %v2654 = vadd.f32 %v2653, %v2623
      %v2655 = vrot.slane %v2654, 4
      %v2656 = vadd.f32 %v2654, %v2655
      %v2657 = vrot.slane %v2656, 2
      %v2658 = vadd.f32 %v2656, %v2657
      %v2659 = vrot.slane %v2658, 1
      %v2660 = vadd.f32 %v2658, %v2659
      %v2661 = vlaneseq
      %v2662 = vshrl.u32 %v2661, 7
      %vm2663 = vcmp.eq.s32.totalorder %v2662, 0
      %vm2664 = vcmp.eq.s32.totalorder %v2662, 1
      %v2665 = vsel %vm2664, %v2660, 0.0
      %v2666 = vsel %vm2663, %v2559, %v2665
      %2667 = vst [vmem:[%s433] sm:$0xff] %v2666
      %v2668 = vpack.c.bf16 %v1984, %v1981
      %v2669 = vpack.c.bf16 %v1992, %v1989
      %v2670 = vpack.c.bf16 %v2000, %v1997
      %v2671 = vpack.c.bf16 %v2008, %v2005
      %v2672 = vpack.c.bf16 %v2016, %v2013
      %v2673 = vpack.c.bf16 %v2024, %v2021
      %v2674 = vpack.c.bf16 %v2032, %v2029
      %v2675 = vpack.c.bf16 %v2040, %v2037
      %v2676 = vpack.c.bf16 %v2048, %v2045
      %v2677 = vpack.c.bf16 %v2056, %v2053
      %v2678 = vpack.c.bf16 %v2064, %v2061
      %v2679 = vpack.c.bf16 %v2072, %v2069
      %v2680 = vpack.c.bf16 %v2080, %v2077
      %v2681 = vpack.c.bf16 %v2088, %v2085
      %v2682 = vpack.c.bf16 %v2096, %v2093
      %v2683 = vpack.c.bf16 %v2104, %v2101
      %v2700 = vunpack.c.l.b16 %v2668
      %v2701 = vunpack.c.h.b16 %v2668
      %v2702 = vunpack.c.l.b16 %v2669
      %v2703 = vunpack.c.h.b16 %v2669
      %v2704 = vunpack.c.l.b16 %v2670
      %v2705 = vunpack.c.h.b16 %v2670
      %v2706 = vunpack.c.l.b16 %v2671
      %v2707 = vunpack.c.h.b16 %v2671
      %v2708 = vunpack.c.l.b16 %v2672
      %v2709 = vunpack.c.h.b16 %v2672
      %v2710 = vunpack.c.l.b16 %v2673
      %v2711 = vunpack.c.h.b16 %v2673
      %v2712 = vunpack.c.l.b16 %v2674
      %v2713 = vunpack.c.h.b16 %v2674
      %v2714 = vunpack.c.l.b16 %v2675
      %v2715 = vunpack.c.h.b16 %v2675
      %v2716 = vunpack.c.l.b16 %v2676
      %v2717 = vunpack.c.h.b16 %v2676
      %v2718 = vunpack.c.l.b16 %v2677
      %v2719 = vunpack.c.h.b16 %v2677
      %v2720 = vunpack.c.l.b16 %v2678
      %v2721 = vunpack.c.h.b16 %v2678
      %v2722 = vunpack.c.l.b16 %v2679
      %v2723 = vunpack.c.h.b16 %v2679
      %v2724 = vunpack.c.l.b16 %v2680
      %v2725 = vunpack.c.h.b16 %v2680
      %v2726 = vunpack.c.l.b16 %v2681
      %v2727 = vunpack.c.h.b16 %v2681
      %v2728 = vunpack.c.l.b16 %v2682
      %v2729 = vunpack.c.h.b16 %v2682
      %v2730 = vunpack.c.l.b16 %v2683
      %v2731 = vunpack.c.h.b16 %v2683
      %v2732 = vpack.c.b16 %v2700, %v2700
      %v2733 = vpack.c.b16 %v2701, %v2701
      %v2734 = vpack.c.b16 %v2702, %v2702
      %v2735 = vpack.c.b16 %v2703, %v2703
      %v2736 = vpack.c.b16 %v2704, %v2704
      %v2737 = vpack.c.b16 %v2705, %v2705
      %v2738 = vpack.c.b16 %v2706, %v2706
      %v2739 = vpack.c.b16 %v2707, %v2707
      %v2740 = vpack.c.b16 %v2708, %v2708
      %v2741 = vpack.c.b16 %v2709, %v2709
      %v2742 = vpack.c.b16 %v2710, %v2710
      %v2743 = vpack.c.b16 %v2711, %v2711
      %v2744 = vpack.c.b16 %v2712, %v2712
      %v2745 = vpack.c.b16 %v2713, %v2713
      %v2746 = vpack.c.b16 %v2714, %v2714
      %v2747 = vpack.c.b16 %v2715, %v2715
      %v2748 = vpack.c.b16 %v2716, %v2716
      %v2749 = vpack.c.b16 %v2717, %v2717
      %v2750 = vpack.c.b16 %v2718, %v2718
      %v2751 = vpack.c.b16 %v2719, %v2719
      %v2752 = vpack.c.b16 %v2720, %v2720
      %v2753 = vpack.c.b16 %v2721, %v2721
      %v2754 = vpack.c.b16 %v2722, %v2722
      %v2755 = vpack.c.b16 %v2723, %v2723
      %v2756 = vpack.c.b16 %v2724, %v2724
      %v2757 = vpack.c.b16 %v2725, %v2725
      %v2758 = vpack.c.b16 %v2726, %v2726
      %v2759 = vpack.c.b16 %v2727, %v2727
      %v2760 = vpack.c.b16 %v2728, %v2728
      %v2761 = vpack.c.b16 %v2729, %v2729
      %v2762 = vpack.c.b16 %v2730, %v2730
      %v2763 = vpack.c.b16 %v2731, %v2731
      %2796 = vst [vmem:[%s445] sm:$0xf] %v2732
      %2797 = vst [vmem:[%s445 + $0x4] sm:$0xf] %v2733
      %2798 = vst [vmem:[%s445 + $0x8] sm:$0xf] %v2734
      %2799 = vst [vmem:[%s445 + $0xc] sm:$0xf] %v2735
      %2800 = vst [vmem:[%s445 + $0x10] sm:$0xf] %v2736
      %2801 = vst [vmem:[%s445 + $0x14] sm:$0xf] %v2737
      %2802 = vst [vmem:[%s445 + $0x18] sm:$0xf] %v2738
      %2803 = vst [vmem:[%s445 + $0x1c] sm:$0xf] %v2739
      %2804 = vst [vmem:[%s445 + $0x20] sm:$0xf] %v2740
      %2805 = vst [vmem:[%s445 + $0x24] sm:$0xf] %v2741
      %2806 = vst [vmem:[%s445 + $0x28] sm:$0xf] %v2742
      %2807 = vst [vmem:[%s445 + $0x2c] sm:$0xf] %v2743
      %2808 = vst [vmem:[%s445 + $0x30] sm:$0xf] %v2744
      %2809 = vst [vmem:[%s445 + $0x34] sm:$0xf] %v2745
      %2810 = vst [vmem:[%s445 + $0x38] sm:$0xf] %v2746
      %2811 = vst [vmem:[%s445 + $0x3c] sm:$0xf] %v2747
      %2812 = vst [vmem:[%s445 + $0x40] sm:$0xf] %v2748
      %2813 = vst [vmem:[%s445 + $0x44] sm:$0xf] %v2749
      %2814 = vst [vmem:[%s445 + $0x48] sm:$0xf] %v2750
      %2815 = vst [vmem:[%s445 + $0x4c] sm:$0xf] %v2751
      %2816 = vst [vmem:[%s445 + $0x50] sm:$0xf] %v2752
      %2817 = vst [vmem:[%s445 + $0x54] sm:$0xf] %v2753
      %2818 = vst [vmem:[%s445 + $0x58] sm:$0xf] %v2754
      %2819 = vst [vmem:[%s445 + $0x5c] sm:$0xf] %v2755
      %2820 = vst [vmem:[%s445 + $0x60] sm:$0xf] %v2756
      %2821 = vst [vmem:[%s445 + $0x64] sm:$0xf] %v2757
      %2822 = vst [vmem:[%s445 + $0x68] sm:$0xf] %v2758
      %2823 = vst [vmem:[%s445 + $0x6c] sm:$0xf] %v2759
      %2824 = vst [vmem:[%s445 + $0x70] sm:$0xf] %v2760
      %2825 = vst [vmem:[%s445 + $0x74] sm:$0xf] %v2761
      %2826 = vst [vmem:[%s445 + $0x78] sm:$0xf] %v2762
      %2827 = vst [vmem:[%s445 + $0x7c] sm:$0xf] %v2763
      %v2828 = vmul.f32 %v1981, %v2334
      %v2829 = vmul.f32 %v1984, %v2339
      %v2830 = vmul.f32 %v1989, %v2344
      %v2831 = vmul.f32 %v1992, %v2349
      %v2832 = vmul.f32 %v1997, %v2354
      %v2833 = vmul.f32 %v2000, %v2359
      %v2834 = vmul.f32 %v2005, %v2364
      %v2835 = vmul.f32 %v2008, %v2369
      %v2836 = vmul.f32 %v2013, %v2374
      %v2837 = vmul.f32 %v2016, %v2379
      %v2838 = vmul.f32 %v2021, %v2384
      %v2839 = vmul.f32 %v2024, %v2389
      %v2840 = vmul.f32 %v2029, %v2394
      %v2841 = vmul.f32 %v2032, %v2399
      %v2842 = vmul.f32 %v2037, %v2404
      %v2843 = vmul.f32 %v2040, %v2409
      %v2844 = vmul.f32 %v2045, %v2414
      %v2845 = vmul.f32 %v2048, %v2419
      %v2846 = vmul.f32 %v2053, %v2424
      %v2847 = vmul.f32 %v2056, %v2429
      %v2848 = vmul.f32 %v2061, %v2434
      %v2849 = vmul.f32 %v2064, %v2439
      %v2850 = vmul.f32 %v2069, %v2444
      %v2851 = vmul.f32 %v2072, %v2449
      %v2852 = vmul.f32 %v2077, %v2454
      %v2853 = vmul.f32 %v2080, %v2459
      %v2854 = vmul.f32 %v2085, %v2464
      %v2855 = vmul.f32 %v2088, %v2469
      %v2856 = vmul.f32 %v2093, %v2474
      %v2857 = vmul.f32 %v2096, %v2479
      %v2858 = vmul.f32 %v2101, %v2484
      %v2859 = vmul.f32 %v2104, %v2489
      %v2860 = vadd.f32 %v2828, %v2829
      %v2861 = vadd.f32 %v2860, %v2830
      %v2862 = vadd.f32 %v2861, %v2831
      %v2863 = vadd.f32 %v2862, %v2832
      %v2864 = vadd.f32 %v2863, %v2833
      %v2865 = vadd.f32 %v2864, %v2834
      %v2866 = vadd.f32 %v2865, %v2835
      %v2867 = vadd.f32 %v2866, %v2836
      %v2868 = vadd.f32 %v2867, %v2837
      %v2869 = vadd.f32 %v2868, %v2838
      %v2870 = vadd.f32 %v2869, %v2839
      %v2871 = vadd.f32 %v2870, %v2840
      %v2872 = vadd.f32 %v2871, %v2841
      %v2873 = vadd.f32 %v2872, %v2842
      %v2874 = vadd.f32 %v2873, %v2843
      %v2875 = vadd.f32 %v2874, %v2844
      %v2876 = vadd.f32 %v2875, %v2845
      %v2877 = vadd.f32 %v2876, %v2846
      %v2878 = vadd.f32 %v2877, %v2847
      %v2879 = vadd.f32 %v2878, %v2848
      %v2880 = vadd.f32 %v2879, %v2849
      %v2881 = vadd.f32 %v2880, %v2850
      %v2882 = vadd.f32 %v2881, %v2851
      %v2883 = vadd.f32 %v2882, %v2852
      %v2884 = vadd.f32 %v2883, %v2853
      %v2885 = vadd.f32 %v2884, %v2854
      %v2886 = vadd.f32 %v2885, %v2855
      %v2887 = vadd.f32 %v2886, %v2856
      %v2888 = vadd.f32 %v2887, %v2857
      %v2889 = vadd.f32 %v2888, %v2858
      %v2890 = vadd.f32 %v2889, %v2859
      %v2891 = vrot.slane %v2890, 4
      %v2892 = vadd.f32 %v2890, %v2891
      %v2893 = vrot.slane %v2892, 2
      %v2894 = vadd.f32 %v2892, %v2893
      %v2895 = vrot.slane %v2894, 1
      %v2896 = vadd.f32 %v2894, %v2895
      %v2897 = vmul.f32 %v1981, %v1981
      %v2898 = vmul.f32 %v1984, %v1984
      %v2899 = vmul.f32 %v1989, %v1989
      %v2900 = vmul.f32 %v1992, %v1992
      %v2901 = vmul.f32 %v1997, %v1997
      %v2902 = vmul.f32 %v2000, %v2000
      %v2903 = vmul.f32 %v2005, %v2005
      %v2904 = vmul.f32 %v2008, %v2008
      %v2905 = vmul.f32 %v2013, %v2013
      %v2906 = vmul.f32 %v2016, %v2016
      %v2907 = vmul.f32 %v2021, %v2021
      %v2908 = vmul.f32 %v2024, %v2024
      %v2909 = vmul.f32 %v2029, %v2029
      %v2910 = vmul.f32 %v2032, %v2032
      %v2911 = vmul.f32 %v2037, %v2037
      %v2912 = vmul.f32 %v2040, %v2040
      %v2913 = vmul.f32 %v2045, %v2045
      %v2914 = vmul.f32 %v2048, %v2048
      %v2915 = vmul.f32 %v2053, %v2053
      %v2916 = vmul.f32 %v2056, %v2056
      %v2917 = vmul.f32 %v2061, %v2061
      %v2918 = vmul.f32 %v2064, %v2064
      %v2919 = vmul.f32 %v2069, %v2069
      %v2920 = vmul.f32 %v2072, %v2072
      %v2921 = vmul.f32 %v2077, %v2077
      %v2922 = vmul.f32 %v2080, %v2080
      %v2923 = vmul.f32 %v2085, %v2085
      %v2924 = vmul.f32 %v2088, %v2088
      %v2925 = vmul.f32 %v2093, %v2093
      %v2926 = vmul.f32 %v2096, %v2096
      %v2927 = vmul.f32 %v2101, %v2101
      %v2928 = vmul.f32 %v2104, %v2104
      %v2929 = vmul.f32 %v2897, %v2334
      %v2930 = vmul.f32 %v2898, %v2339
      %v2931 = vmul.f32 %v2899, %v2344
      %v2932 = vmul.f32 %v2900, %v2349
      %v2933 = vmul.f32 %v2901, %v2354
      %v2934 = vmul.f32 %v2902, %v2359
      %v2935 = vmul.f32 %v2903, %v2364
      %v2936 = vmul.f32 %v2904, %v2369
      %v2937 = vmul.f32 %v2905, %v2374
      %v2938 = vmul.f32 %v2906, %v2379
      %v2939 = vmul.f32 %v2907, %v2384
      %v2940 = vmul.f32 %v2908, %v2389
      %v2941 = vmul.f32 %v2909, %v2394
      %v2942 = vmul.f32 %v2910, %v2399
      %v2943 = vmul.f32 %v2911, %v2404
      %v2944 = vmul.f32 %v2912, %v2409
      %v2945 = vmul.f32 %v2913, %v2414
      %v2946 = vmul.f32 %v2914, %v2419
      %v2947 = vmul.f32 %v2915, %v2424
      %v2948 = vmul.f32 %v2916, %v2429
      %v2949 = vmul.f32 %v2917, %v2434
      %v2950 = vmul.f32 %v2918, %v2439
      %v2951 = vmul.f32 %v2919, %v2444
      %v2952 = vmul.f32 %v2920, %v2449
      %v2953 = vmul.f32 %v2921, %v2454
      %v2954 = vmul.f32 %v2922, %v2459
      %v2955 = vmul.f32 %v2923, %v2464
      %v2956 = vmul.f32 %v2924, %v2469
      %v2957 = vmul.f32 %v2925, %v2474
      %v2958 = vmul.f32 %v2926, %v2479
      %v2959 = vmul.f32 %v2927, %v2484
      %v2960 = vmul.f32 %v2928, %v2489
      %v2961 = vadd.f32 %v2929, %v2930
      %v2962 = vadd.f32 %v2961, %v2931
      %v2963 = vadd.f32 %v2962, %v2932
      %v2964 = vadd.f32 %v2963, %v2933
      %v2965 = vadd.f32 %v2964, %v2934
      %v2966 = vadd.f32 %v2965, %v2935
      %v2967 = vadd.f32 %v2966, %v2936
      %v2968 = vadd.f32 %v2967, %v2937
      %v2969 = vadd.f32 %v2968, %v2938
      %v2970 = vadd.f32 %v2969, %v2939
      %v2971 = vadd.f32 %v2970, %v2940
      %v2972 = vadd.f32 %v2971, %v2941
      %v2973 = vadd.f32 %v2972, %v2942
      %v2974 = vadd.f32 %v2973, %v2943
      %v2975 = vadd.f32 %v2974, %v2944
      %v2976 = vadd.f32 %v2975, %v2945
      %v2977 = vadd.f32 %v2976, %v2946
      %v2978 = vadd.f32 %v2977, %v2947
      %v2979 = vadd.f32 %v2978, %v2948
      %v2980 = vadd.f32 %v2979, %v2949
      %v2981 = vadd.f32 %v2980, %v2950
      %v2982 = vadd.f32 %v2981, %v2951
      %v2983 = vadd.f32 %v2982, %v2952
      %v2984 = vadd.f32 %v2983, %v2953
      %v2985 = vadd.f32 %v2984, %v2954
      %v2986 = vadd.f32 %v2985, %v2955
      %v2987 = vadd.f32 %v2986, %v2956
      %v2988 = vadd.f32 %v2987, %v2957
      %v2989 = vadd.f32 %v2988, %v2958
      %v2990 = vadd.f32 %v2989, %v2959
      %v2991 = vadd.f32 %v2990, %v2960
      %v2992 = vrot.slane %v2991, 4
      %v2993 = vadd.f32 %v2991, %v2992
      %v2994 = vrot.slane %v2993, 2
      %v2995 = vadd.f32 %v2993, %v2994
      %v2996 = vrot.slane %v2995, 1
      %v2997 = vadd.f32 %v2995, %v2996
      %v2998 = vsel %vm2664, %v2997, 0.0
      %v2999 = vsel %vm2663, %v2896, %v2998
      %3000 = vst [vmem:[%s456] sm:$0xff] %v2999
      %s3001 = smul.u32 32, %s26
      %p3002 = scmp.lt.s32.totalorder %s24, 1
      %s3003 = scalar_select %p3002, %s24, 1
      %p3004 = scmp.lt.s32.totalorder %s3001, 31
      %s3005 = scalar_select %p3004, %s3001, 31
      %p3006 = scmp.lt.s32.totalorder %s25, 0
      %s3007 = scalar_select %p3006, %s25, 0
      %s3008 = sadd.s32 %s3007, %s3005
      %s3009 = smul.addr %s3003, 32
      %s3010 = sadd.s32 %s3008, %s3009
      %s3011 = smul.addr %s3010, 4
      %s3012 = scalar_lea.vmem %s4, %s3011
      %p3013 = scmp.lt.s32.totalorder %s24, 1
      %s3014 = scalar_select %p3013, %s24, 1
      %p3015 = scmp.lt.s32.totalorder %s26, 0
      %s3016 = scalar_select %p3015, %s26, 0
      %p3017 = scmp.lt.s32.totalorder %s25, 0
      %s3018 = scalar_select %p3017, %s25, 0
      %s3019 = sadd.s32 %s3018, %s3016
      %s3020 = sadd.s32 %s3019, %s3014
      %s3021 = smul.addr %s3020, 8
      %s3022 = scalar_lea.vmem %s5, %s3021
      %s3023 = smul.u32 32, %s26
      %p3024 = scmp.lt.s32.totalorder %s24, 1
      %s3025 = scalar_select %p3024, %s24, 1
      %p3026 = scmp.lt.s32.totalorder %s3023, 31
      %s3027 = scalar_select %p3026, %s3023, 31
      %p3028 = scmp.lt.s32.totalorder %s25, 0
      %s3029 = scalar_select %p3028, %s25, 0
      %s3030 = sadd.s32 %s3029, %s3027
      %s3031 = smul.addr %s3025, 32
      %s3032 = sadd.s32 %s3030, %s3031
      %s3033 = smul.addr %s3032, 4
      %s3034 = scalar_lea.vmem %s6, %s3033
      %p3035 = scmp.lt.s32.totalorder %s24, 1
      %s3036 = scalar_select %p3035, %s24, 1
      %p3037 = scmp.lt.s32.totalorder %s26, 0
      %s3038 = scalar_select %p3037, %s26, 0
      %p3039 = scmp.lt.s32.totalorder %s25, 0
      %s3040 = scalar_select %p3039, %s25, 0
      %s3041 = sadd.s32 %s3040, %s3038
      %s3042 = sadd.s32 %s3041, %s3036
      %s3043 = smul.addr %s3042, 8
      %s3044 = scalar_lea.vmem %s7, %s3043
      // Predicated region
      $region37: #{basic_block_forward.4} parent=35 // pred_check
        %p3045 = pneg %p164
      $region38: #{basic_block_forward.4} parent=35 // pred_check_branch
        %3047 = sbr.rel (%p3045) target = $region40
      $region39: #{basic_block_forward.4} parent=35 // pred_region
        %s3048 = smul.u32 32, %s26
      $region40: #{basic_block_forward.4} parent=35 // pred_fallthru
        _
      // Predicated region
      $region41: #{basic_block_forward.4} parent=35 // pred_check
        %p3049 = pneg %p194
      $region42: #{basic_block_forward.4} parent=35 // pred_check_branch
        %3051 = sbr.rel (%p3049) target = $region44
      $region43: #{basic_block_forward.4} parent=35 // pred_region
        _
      $region44: #{basic_block_forward.4} parent=35 // pred_fallthru
        _
      // Predicated region
      $region45: #{basic_block_forward.4} parent=35 // pred_check
        %p3052 = pneg %p224
      $region46: #{basic_block_forward.4} parent=35 // pred_check_branch
        %3054 = sbr.rel (%p3052) target = $region48
      $region47: #{basic_block_forward.4} parent=35 // pred_region
        %s3055 = smul.u32 32, %s26
      $region48: #{basic_block_forward.4} parent=35 // pred_fallthru
        _
      // Predicated region
      $region49: #{basic_block_forward.4} parent=35 // pred_check
        %p3056 = pneg %p254
      $region50: #{basic_block_forward.4} parent=35 // pred_check_branch
        %3058 = sbr.rel (%p3056) target = $region52
      $region51: #{basic_block_forward.4} parent=35 // pred_region
        _
      $region52: #{basic_block_forward.4} parent=35 // pred_fallthru
        _
    $region36: #{basic_block_forward.4} parent=5 // pred_fallthru
      _
    %p3059 = scmp.le.s32.totalorder 2, %s14
    // Predicated region
    $region53: #{basic_block_forward.4} parent=5 // pred_check
      %p3060 = pneg %p3059
    $region54: #{basic_block_forward.4} parent=5 // pred_check_branch
      %3062 = sbr.rel (%p3060) target = $region56
    $region55: #{basic_block_forward.4} parent=5 // pred_region
      %s3063 = ssub.s32 %s14, 2
      // Predicated region
      $region57: #{basic_block_forward.4} parent=55 // pred_check
        %p3064 = pneg %p170
      $region58: #{basic_block_forward.4} parent=55 // pred_check_branch
        %3066 = sbr.rel (%p3064) target = $region60
      $region59: #{basic_block_forward.4} parent=55 // pred_region
        %s3067 = smul.u32 32, %s29
        %p3068 = scmp.lt.s32.totalorder %s27, 1
        %s3069 = scalar_select %p3068, %s27, 1
        %p3070 = scmp.lt.s32.totalorder %s3067, 31
        %s3071 = scalar_select %p3070, %s3067, 31
        %p3072 = scmp.lt.s32.totalorder %s28, 0
        %s3073 = scalar_select %p3072, %s28, 0
        %s3074 = sadd.s32 %s3073, %s3071
        %s3075 = smul.addr %s3069, 32
        %s3076 = sadd.s32 %s3074, %s3075
        %s3077 = smul.addr %s3076, 4
        %s3078 = scalar_lea.vmem %s4, %s3077
      $region60: #{basic_block_forward.4} parent=55 // pred_fallthru
        _
      // Predicated region
      $region61: #{basic_block_forward.4} parent=55 // pred_check
        %p3079 = pneg %p200
      $region62: #{basic_block_forward.4} parent=55 // pred_check_branch
        %3081 = sbr.rel (%p3079) target = $region64
      $region63: #{basic_block_forward.4} parent=55 // pred_region
        %p3082 = scmp.lt.s32.totalorder %s27, 1
        %s3083 = scalar_select %p3082, %s27, 1
        %p3084 = scmp.lt.s32.totalorder %s29, 0
        %s3085 = scalar_select %p3084, %s29, 0
        %p3086 = scmp.lt.s32.totalorder %s28, 0
        %s3087 = scalar_select %p3086, %s28, 0
        %s3088 = sadd.s32 %s3087, %s3085
        %s3089 = sadd.s32 %s3088, %s3083
        %s3090 = smul.addr %s3089, 8
        %s3091 = scalar_lea.vmem %s5, %s3090
      $region64: #{basic_block_forward.4} parent=55 // pred_fallthru
        _
      // Predicated region
      $region65: #{basic_block_forward.4} parent=55 // pred_check
        %p3092 = pneg %p230
      $region66: #{basic_block_forward.4} parent=55 // pred_check_branch
        %3094 = sbr.rel (%p3092) target = $region68
      $region67: #{basic_block_forward.4} parent=55 // pred_region
        %s3095 = smul.u32 32, %s29
        %p3096 = scmp.lt.s32.totalorder %s27, 1
        %s3097 = scalar_select %p3096, %s27, 1
        %p3098 = scmp.lt.s32.totalorder %s3095, 31
        %s3099 = scalar_select %p3098, %s3095, 31
        %p3100 = scmp.lt.s32.totalorder %s28, 0
        %s3101 = scalar_select %p3100, %s28, 0
        %s3102 = sadd.s32 %s3101, %s3099
        %s3103 = smul.addr %s3097, 32
        %s3104 = sadd.s32 %s3102, %s3103
        %s3105 = smul.addr %s3104, 4
        %s3106 = scalar_lea.vmem %s6, %s3105
      $region68: #{basic_block_forward.4} parent=55 // pred_fallthru
        _
      // Predicated region
      $region69: #{basic_block_forward.4} parent=55 // pred_check
        %p3107 = pneg %p260
      $region70: #{basic_block_forward.4} parent=55 // pred_check_branch
        %3109 = sbr.rel (%p3107) target = $region72
      $region71: #{basic_block_forward.4} parent=55 // pred_region
        %p3110 = scmp.lt.s32.totalorder %s27, 1
        %s3111 = scalar_select %p3110, %s27, 1
        %p3112 = scmp.lt.s32.totalorder %s29, 0
        %s3113 = scalar_select %p3112, %s29, 0
        %p3114 = scmp.lt.s32.totalorder %s28, 0
        %s3115 = scalar_select %p3114, %s28, 0
        %s3116 = sadd.s32 %s3115, %s3113
        %s3117 = sadd.s32 %s3116, %s3111
        %s3118 = smul.addr %s3117, 8
        %s3119 = scalar_lea.vmem %s7, %s3118
      $region72: #{basic_block_forward.4} parent=55 // pred_fallthru
        _
    $region56: #{basic_block_forward.4} parent=5 // pred_fallthru
      _
  $region6: #{basic_block_forward.4} parent=0 // loop_footer
    %s18 = sadd.s32 1, %s14
  $region7: #{basic_block_forward.4} parent=0 // loop_footer_branch
    %13 = sbr.rel target = $region3
  $region8: #{basic_block_forward.4} parent=0 // loop_exit
    _

// kernel: basic_block_forward.6
$region0: #{basic_block_forward.6}
  #allocation0 [shape = 'u32[]', space=smem, size = 0x4, offset = 0x4, fixed_abs, tag = 'smem constant byte address 0x4 - core index']
  #allocation1 [shape = 'u32[144,128]{1,0:T(1,128)}', space=vmem, size = 0x12000, scoped, tag = 'internal scratch']
  #allocation2 [shape = 'f32[256,128]{1,0:T(8,128)}', space=vmem, size = 0x20000, scoped, tag = 'scratch operand']
  %s0 = inlined_call_operand.vmem [shape: f32[2,768,128], index: 0, kind: input, shape index: {}]
  %s1 = inlined_call_operand.vmem [shape: bf16[9,128,128], index: 1, kind: input, shape index: {}]
  %s2 = inlined_call_operand.vmem [shape: f32[256,1], index: 2, kind: input, shape index: {}]
  %s3 = inlined_call_operand.vmem [shape: bf16[2,256,128], index: 3, kind: output, shape index: {0}]
  %s4 = inlined_call_operand.vmem [shape: f32[2,1,8,128], index: 4, kind: output, shape index: {1}]
  %5 = xla_tuple %s3, %s4
  %s6 = sld [smem:[#allocation0]]
  $region53: #{basic_block_forward.6} parent=0
    _
  %s8 = ssub.s32 1, %s6
  %s9 = scalar_select 0, %s8, %s6
  loop: start=0, step=1, limit=4
  $region2: #{basic_block_forward.6} parent=0 // loop_pre_header
    _
  $region3: #{basic_block_forward.6} parent=0 // loop_header
    %s11 = sphi 0, %s15
    %p12 = scmp.ge.s32.totalorder %s11, 4
    %s18 = sphi 0, %s37
    %s19 = sphi 0, %s33
    %s20 = sphi 0, %s29
    %s21 = sphi 0, %s18
    %s22 = sphi 0, %s19
    %s23 = sphi 0, %s20
    %s24 = sphi 0, %s21
    %s25 = sphi 0, %s22
    %s26 = sphi 0, %s23
    %s40 = sphi 0, %s42
    %s43 = sphi 0, %s40
    %s44 = sphi 0, %s43
    %s60 = sphi 0, %s44
    %s66 = sphi 0, %s68
    %s69 = sphi 0, %s66
    %s70 = sphi 0, %s69
    %s86 = sphi 0, %s70
    %s92 = sphi 0, %s94
    %s95 = sphi 0, %s92
    %s96 = sphi 0, %s95
    %s112 = sphi 0, %s96
    %s122 = sphi 0, %s124
    %s125 = sphi 0, %s122
    %s126 = sphi 0, %s125
    %s142 = sphi 0, %s126
    %s152 = sphi 0, %s154
    %s155 = sphi 0, %s152
    %s156 = sphi 0, %s155
    %s172 = sphi 0, %s156
  $region4: #{basic_block_forward.6} parent=0 // loop_header_branch
    %14 = sbr.rel (%p12) target = $region8
  $region5: #{basic_block_forward.6} parent=0 // loop_body
    %s16 = ssub.s32 %s11, 1
    %s17 = ssub.s32 %s11, 2
    %s27 = sadd.s32 1, %s20
    %p28 = scmp.ge.s32.totalorder %s27, 1
    %s29 = scalar_select %p28, 0, %s27
    %s30 = sadd.s32 1, %s19
    %s31 = scalar_select %p28, %s30, %s19
    %p32 = scmp.ge.s32.totalorder %s31, 1
    %s33 = scalar_select %p32, 0, %s31
    %s34 = sadd.s32 1, %s18
    %s35 = scalar_select %p32, %s34, %s18
    %p36 = scmp.ge.s32.totalorder %s35, 2
    %s37 = scalar_select %p36, 0, %s35
    %s38 = ssub.s32 %s18, %s37
    %p39 = scmp.eq.s32.totalorder %s38, 0
    %s41 = sadd.s32 %s40, 1
    %s42 = scalar_select %p39, %s40, %s41
    %p45 = pneg %p39
    %p46 = scmp.eq.s32.totalorder %s11, 1
    %p47 = por %p45, %p46
    %p48 = scmp.ne.s32.totalorder %s40, %s43
    %p49 = scmp.eq.s32.totalorder %s11, 0
    %p50 = por %p48, %p49
    %p51 = scmp.ne.s32.totalorder %s40, %s43
    %p52 = scmp.eq.s32.totalorder %s16, 1
    %p53 = por %p51, %p52
    %p54 = scmp.ne.s32.totalorder %s43, %s44
    %p55 = scmp.eq.s32.totalorder %s16, 0
    %p56 = por %p54, %p55
    %p57 = scmp.ne.s32.totalorder %s43, %s44
    %p58 = scmp.eq.s32.totalorder %s17, 1
    %p59 = por %p57, %p58
    %p61 = scmp.ne.s32.totalorder %s44, %s60
    %p62 = scmp.eq.s32.totalorder %s17, 0
    %p63 = por %p61, %p62
    %s64 = ssub.s32 %s19, %s33
    %p65 = scmp.eq.s32.totalorder %s64, 0
    %s67 = sadd.s32 %s66, 1
    %s68 = scalar_select %p65, %s66, %s67
    %p71 = pneg %p65
    %p72 = scmp.eq.s32.totalorder %s11, 1
    %p73 = por %p71, %p72
    %p74 = scmp.ne.s32.totalorder %s66, %s69
    %p75 = scmp.eq.s32.totalorder %s11, 0
    %p76 = por %p74, %p75
    %p77 = scmp.ne.s32.totalorder %s66, %s69
    %p78 = scmp.eq.s32.totalorder %s16, 1
    %p79 = por %p77, %p78
    %p80 = scmp.ne.s32.totalorder %s69, %s70
    %p81 = scmp.eq.s32.totalorder %s16, 0
    %p82 = por %p80, %p81
    %p83 = scmp.ne.s32.totalorder %s69, %s70
    %p84 = scmp.eq.s32.totalorder %s17, 1
    %p85 = por %p83, %p84
    %p87 = scmp.ne.s32.totalorder %s70, %s86
    %p88 = scmp.eq.s32.totalorder %s17, 0
    %p89 = por %p87, %p88
    %s90 = ssub.s32 %s20, %s29
    %p91 = scmp.eq.s32.totalorder %s90, 0
    %s93 = sadd.s32 %s92, 1
    %s94 = scalar_select %p91, %s92, %s93
    %p97 = pneg %p91
    %p98 = scmp.eq.s32.totalorder %s11, 1
    %p99 = por %p97, %p98
    %p100 = scmp.ne.s32.totalorder %s92, %s95
    %p101 = scmp.eq.s32.totalorder %s11, 0
    %p102 = por %p100, %p101
    %p103 = scmp.ne.s32.totalorder %s92, %s95
    %p104 = scmp.eq.s32.totalorder %s16, 1
    %p105 = por %p103, %p104
    %p106 = scmp.ne.s32.totalorder %s95, %s96
    %p107 = scmp.eq.s32.totalorder %s16, 0
    %p108 = por %p106, %p107
    %p109 = scmp.ne.s32.totalorder %s95, %s96
    %p110 = scmp.eq.s32.totalorder %s17, 1
    %p111 = por %p109, %p110
    %p113 = scmp.ne.s32.totalorder %s96, %s112
    %p114 = scmp.eq.s32.totalorder %s17, 0
    %p115 = por %p113, %p114
    %s116 = ssub.s32 %s18, %s37
    %s117 = ssub.s32 %s20, %s29
    %s118 = sor.u32 %s116, %s117
    %s119 = ssub.s32 %s19, %s33
    %s120 = sor.u32 %s118, %s119
    %p121 = scmp.eq.s32.totalorder %s120, 0
    %s123 = sadd.s32 %s122, 1
    %s124 = scalar_select %p121, %s122, %s123
    %p127 = pneg %p121
    %p128 = scmp.eq.s32.totalorder %s11, 1
    %p129 = por %p127, %p128
    %p130 = scmp.ne.s32.totalorder %s122, %s125
    %p131 = scmp.eq.s32.totalorder %s11, 0
    %p132 = por %p130, %p131
    %p133 = scmp.ne.s32.totalorder %s122, %s125
    %p134 = scmp.eq.s32.totalorder %s16, 1
    %p135 = por %p133, %p134
    %p136 = scmp.ne.s32.totalorder %s125, %s126
    %p137 = scmp.eq.s32.totalorder %s16, 0
    %p138 = por %p136, %p137
    %p139 = scmp.ne.s32.totalorder %s125, %s126
    %p140 = scmp.eq.s32.totalorder %s17, 1
    %p141 = por %p139, %p140
    %p143 = scmp.ne.s32.totalorder %s126, %s142
    %p144 = scmp.eq.s32.totalorder %s17, 0
    %p145 = por %p143, %p144
    %s146 = ssub.s32 %s18, %s37
    %s147 = ssub.s32 %s20, %s29
    %s148 = sor.u32 %s146, %s147
    %s149 = ssub.s32 %s19, %s33
    %s150 = sor.u32 %s148, %s149
    %p151 = scmp.eq.s32.totalorder %s150, 0
    %s153 = sadd.s32 %s152, 1
    %s154 = scalar_select %p151, %s152, %s153
    %p157 = pneg %p151
    %p158 = scmp.eq.s32.totalorder %s11, 1
    %p159 = por %p157, %p158
    %p160 = scmp.ne.s32.totalorder %s152, %s155
    %p161 = scmp.eq.s32.totalorder %s11, 0
    %p162 = por %p160, %p161
    %p163 = scmp.ne.s32.totalorder %s152, %s155
    %p164 = scmp.eq.s32.totalorder %s16, 1
    %p165 = por %p163, %p164
    %p166 = scmp.ne.s32.totalorder %s155, %s156
    %p167 = scmp.eq.s32.totalorder %s16, 0
    %p168 = por %p166, %p167
    %p169 = scmp.ne.s32.totalorder %s155, %s156
    %p170 = scmp.eq.s32.totalorder %s17, 1
    %p171 = por %p169, %p170
    %p173 = scmp.ne.s32.totalorder %s156, %s172
    %p174 = scmp.eq.s32.totalorder %s17, 0
    %p175 = por %p173, %p174
    %p176 = scmp.le.s32.totalorder 1, %s11
    %p177 = scmp.lt.s32.totalorder %s11, 3
    %p178 = pnand %p176, %p177
    %p179 = pneg %p178
    // Predicated region
    $region9: #{basic_block_forward.6} parent=5 // pred_check
      _
    $region10: #{basic_block_forward.6} parent=5 // pred_check_branch
      %181 = sbr.rel (%p178) target = $region12
    $region11: #{basic_block_forward.6} parent=5 // pred_region
      %s182 = ssub.s32 %s11, 1
      // Predicated region
      $region13: #{basic_block_forward.6} parent=11 // pred_check
        %p183 = pneg %p82
      $region14: #{basic_block_forward.6} parent=11 // pred_check_branch
        %185 = sbr.rel (%p183) target = $region16
      $region15: #{basic_block_forward.6} parent=11 // pred_region
        %p186 = scmp.lt.s32.totalorder %s22, 0
        %s187 = scalar_select %p186, %s22, 0
        %s188 = smul.addr %s187, 4
        %s189 = scalar_lea.vmem %s1, %s188
      $region16: #{basic_block_forward.6} parent=11 // pred_fallthru
        _
      // Predicated region
      $region17: #{basic_block_forward.6} parent=11 // pred_check
        %p190 = pneg %p108
      $region18: #{basic_block_forward.6} parent=11 // pred_check_branch
        %192 = sbr.rel (%p190) target = $region20
      $region19: #{basic_block_forward.6} parent=11 // pred_region
        %s193 = smul.u32 32, %s23
        %p194 = scmp.lt.s32.totalorder %s193, 31
        %s195 = scalar_select %p194, %s193, 31
        %s196 = smul.addr %s195, 8
        %s197 = scalar_lea.vmem %s2, %s196
        %s198 = smul.u32 32, %s23
      $region20: #{basic_block_forward.6} parent=11 // pred_fallthru
        _
    $region12: #{basic_block_forward.6} parent=5 // pred_fallthru
      _
    %p199 = scmp.lt.s32.totalorder %s11, 2
    // Predicated region
    $region21: #{basic_block_forward.6} parent=5 // pred_check
      %p200 = pneg %p199
    $region22: #{basic_block_forward.6} parent=5 // pred_check_branch
      %202 = sbr.rel (%p200) target = $region24
    $region23: #{basic_block_forward.6} parent=5 // pred_region
      // Predicated region
      $region25: #{basic_block_forward.6} parent=23 // pred_check
        %p203 = pneg %p50
      $region26: #{basic_block_forward.6} parent=23 // pred_check_branch
        %205 = sbr.rel (%p203) target = $region28
      $region27: #{basic_block_forward.6} parent=23 // pred_region
        %p206 = scmp.lt.s32.totalorder %s18, 1
        %s207 = scalar_select %p206, %s18, 1
        %s208 = smul.addr %s207, 96
        %s209 = smul.addr %s208, 8
        %s210 = scalar_lea.vmem %s0, %s209
      $region28: #{basic_block_forward.6} parent=23 // pred_fallthru
        _
    $region24: #{basic_block_forward.6} parent=5 // pred_fallthru
      _
    %p211 = scmp.le.s32.totalorder 1, %s11
    %p212 = scmp.lt.s32.totalorder %s11, 3
    %p213 = pnand %p211, %p212
    %p214 = pneg %p213
    // Predicated region
    $region29: #{basic_block_forward.6} parent=5 // pred_check
      _
    $region30: #{basic_block_forward.6} parent=5 // pred_check_branch
      %216 = sbr.rel (%p213) target = $region32
    $region31: #{basic_block_forward.6} parent=5 // pred_region
      %s217 = ssub.s32 %s11, 1
      %p218 = scmp.lt.s32.totalorder %s21, 1
      %s219 = scalar_select %p218, %s21, 1
      %s220 = smul.addr %s219, 96
      %s221 = smul.addr %s220, 8
      %s222 = scalar_lea.vmem %s0, %s221
      %p223 = pneg %p56
      %p224 = pneg %p53
      %p225 = scmp.lt.s32.totalorder %s22, 0
      %s226 = scalar_select %p225, %s22, 0
      %s227 = smul.addr %s226, 4
      %s228 = scalar_lea.vmem %s1, %s227
      %p229 = pneg %p82
      %p230 = pneg %p79
      %s231 = smul.u32 32, %s23
      %p232 = scmp.lt.s32.totalorder %s231, 31
      %s233 = scalar_select %p232, %s231, 31
      %s234 = smul.addr %s233, 8
      %s235 = scalar_lea.vmem %s2, %s234
      %p236 = pneg %p108
      %p237 = pneg %p105
      %p238 = pneg %p138
      %p239 = pneg %p135
      %s240 = smul.u32 32, %s23
      %p241 = scmp.lt.s32.totalorder %s21, 1
      %s242 = scalar_select %p241, %s21, 1
      %p243 = scmp.lt.s32.totalorder %s240, 31
      %s244 = scalar_select %p243, %s240, 31
      %p245 = scmp.lt.s32.totalorder %s22, 0
      %s246 = scalar_select %p245, %s22, 0
      %s247 = sadd.s32 %s246, %s244
      %s248 = smul.addr %s242, 32
      %s249 = sadd.s32 %s247, %s248
      %s250 = smul.addr %s249, 4
      %s251 = scalar_lea.vmem %s3, %s250
      %p252 = pneg %p168
      %p253 = pneg %p165
      %p254 = scmp.lt.s32.totalorder %s21, 1
      %s255 = scalar_select %p254, %s21, 1
      %p256 = scmp.lt.s32.totalorder %s23, 0
      %s257 = scalar_select %p256, %s23, 0
      %p258 = scmp.lt.s32.totalorder %s22, 0
      %s259 = scalar_select %p258, %s22, 0
      %s260 = sadd.s32 %s259, %s257
      %s261 = sadd.s32 %s260, %s255
      %s262 = smul.addr %s261, 8
      %s263 = scalar_lea.vmem %s4, %s262
      %p264 = scmp.lt.s32.totalorder %s21, 1
      %s265 = scalar_select %p264, %s21, 1
      %s266 = smul.addr %s265, 96
      %s267 = smul.addr %s266, 8
      %s268 = scalar_lea.vmem %s0, %s267
      %p269 = scmp.lt.s32.totalorder %s22, 0
      %s270 = scalar_select %p269, %s22, 0
      %s271 = smul.addr %s270, 4
      %s272 = scalar_lea.vmem %s1, %s271
      %s273 = smul.u32 32, %s23
      %p274 = scmp.lt.s32.totalorder %s273, 31
      %s275 = scalar_select %p274, %s273, 31
      %s276 = smul.addr %s275, 8
      %s277 = scalar_lea.vmem %s2, %s276
      %s278 = smul.u32 32, %s23
      %s279 = smul.u32 32, %s23
      %p280 = scmp.lt.s32.totalorder %s21, 1
      %s281 = scalar_select %p280, %s21, 1
      %p282 = scmp.lt.s32.totalorder %s279, 31
      %s283 = scalar_select %p282, %s279, 31
      %p284 = scmp.lt.s32.totalorder %s22, 0
      %s285 = scalar_select %p284, %s22, 0
      %s286 = sadd.s32 %s285, %s283
      %s287 = smul.addr %s281, 32
      %s288 = sadd.s32 %s286, %s287
      %s289 = smul.addr %s288, 4
      %s290 = scalar_lea.vmem %s3, %s289
      %s291 = smul.u32 32, %s23
      %p292 = scmp.lt.s32.totalorder %s21, 1
      %s293 = scalar_select %p292, %s21, 1
      %p294 = scmp.lt.s32.totalorder %s23, 0
      %s295 = scalar_select %p294, %s23, 0
      %p296 = scmp.lt.s32.totalorder %s22, 0
      %s297 = scalar_select %p296, %s22, 0
      %s298 = sadd.s32 %s297, %s295
      %s299 = sadd.s32 %s298, %s293
      %s300 = smul.addr %s299, 8
      %s301 = scalar_lea.vmem %s4, %s300
      %s303 = sadd.s32 %s23, 1
      %s304 = smul.u32 %s303, 256
      %s305 = sadd.s32 %s304, 4294967279
      %s306 = scalar_lea.vmem %s268, %s305
      %v307 = vld [vmem:[%s306] sm:$0xff]
      %v308 = vld [vmem:[%s306 + $0x8] sm:$0xff]
      %v309 = vld [vmem:[%s306 + $0x10] sm:$0xff]
      %v310 = vld [vmem:[%s306 + $0x18] sm:$0xff]
      %v311 = vld [vmem:[%s306 + $0x20] sm:$0xff]
      %v312 = vld [vmem:[%s306 + $0x28] sm:$0xff]
      %v313 = vld [vmem:[%s306 + $0x30] sm:$0xff]
      %v314 = vld [vmem:[%s306 + $0x38] sm:$0xff]
      %v315 = vld [vmem:[%s306 + $0x40] sm:$0xff]
      %v316 = vld [vmem:[%s306 + $0x48] sm:$0xff]
      %v317 = vld [vmem:[%s306 + $0x50] sm:$0xff]
      %v318 = vld [vmem:[%s306 + $0x58] sm:$0xff]
      %v319 = vld [vmem:[%s306 + $0x60] sm:$0xff]
      %v320 = vld [vmem:[%s306 + $0x68] sm:$0xff]
      %v321 = vld [vmem:[%s306 + $0x70] sm:$0xff]
      %v322 = vld [vmem:[%s306 + $0x78] sm:$0xff]
      %v323 = vld [vmem:[%s306 + $0x80] sm:$0xff]
      %v324 = vld [vmem:[%s306 + $0x88] sm:$0xff]
      %v325 = vld [vmem:[%s306 + $0x90] sm:$0xff]
      %v326 = vld [vmem:[%s306 + $0x98] sm:$0xff]
      %v327 = vld [vmem:[%s306 + $0xa0] sm:$0xff]
      %v328 = vld [vmem:[%s306 + $0xa8] sm:$0xff]
      %v329 = vld [vmem:[%s306 + $0xb0] sm:$0xff]
      %v330 = vld [vmem:[%s306 + $0xb8] sm:$0xff]
      %v331 = vld [vmem:[%s306 + $0xc0] sm:$0xff]
      %v332 = vld [vmem:[%s306 + $0xc8] sm:$0xff]
      %v333 = vld [vmem:[%s306 + $0xd0] sm:$0xff]
      %v334 = vld [vmem:[%s306 + $0xd8] sm:$0xff]
      %v335 = vld [vmem:[%s306 + $0xe0] sm:$0xff]
      %v336 = vld [vmem:[%s306 + $0xe8] sm:$0xff]
      %v337 = vld [vmem:[%s306 + $0xf0] sm:$0xff]
      %v338 = vld [vmem:[%s306 + $0xf8] sm:$0xff]
      %v339 = vpack.c.bf16 %v308, %v307
      %v340 = vpack.c.bf16 %v310, %v309
      %v341 = vpack.c.bf16 %v312, %v311
      %v342 = vpack.c.bf16 %v314, %v313
      %v343 = vpack.c.bf16 %v316, %v315
      %v344 = vpack.c.bf16 %v318, %v317
      %v345 = vpack.c.bf16 %v320, %v319
      %v346 = vpack.c.bf16 %v322, %v321
      %v347 = vpack.c.bf16 %v324, %v323
      %v348 = vpack.c.bf16 %v326, %v325
      %v349 = vpack.c.bf16 %v328, %v327
      %v350 = vpack.c.bf16 %v330, %v329
      %v351 = vpack.c.bf16 %v332, %v331
      %v352 = vpack.c.bf16 %v334, %v333
      %v353 = vpack.c.bf16 %v336, %v335
      %v354 = vpack.c.bf16 %v338, %v337
      %v355 = vld [vmem:[%s272] sm:$0xf]
      %v356 = vld [vmem:[%s272 + $0x4] sm:$0xf]
      %v357 = vld [vmem:[%s272 + $0x8] sm:$0xf]
      %v358 = vld [vmem:[%s272 + $0xc] sm:$0xf]
      %v359 = vld [vmem:[%s272 + $0x10] sm:$0xf]
      %v360 = vld [vmem:[%s272 + $0x14] sm:$0xf]
      %v361 = vld [vmem:[%s272 + $0x18] sm:$0xf]
      %v362 = vld [vmem:[%s272 + $0x1c] sm:$0xf]
      %v363 = vld [vmem:[%s272 + $0x20] sm:$0xf]
      %v364 = vld [vmem:[%s272 + $0x24] sm:$0xf]
      %v365 = vld [vmem:[%s272 + $0x28] sm:$0xf]
      %v366 = vld [vmem:[%s272 + $0x2c] sm:$0xf]
      %v367 = vld [vmem:[%s272 + $0x30] sm:$0xf]
      %v368 = vld [vmem:[%s272 + $0x34] sm:$0xf]
      %v369 = vld [vmem:[%s272 + $0x38] sm:$0xf]
      %v370 = vld [vmem:[%s272 + $0x3c] sm:$0xf]
      %v387 = vunpack.c.l.b16 %v355
      %v388 = vunpack.c.l.b16 %v356
      %v389 = vunpack.c.l.b16 %v357
      %v390 = vunpack.c.l.b16 %v358
      %v391 = vunpack.c.l.b16 %v359
      %v392 = vunpack.c.l.b16 %v360
      %v393 = vunpack.c.l.b16 %v361
      %v394 = vunpack.c.l.b16 %v362
      %v395 = vunpack.c.l.b16 %v363
      %v396 = vunpack.c.l.b16 %v364
      %v397 = vunpack.c.l.b16 %v365
      %v398 = vunpack.c.l.b16 %v366
      %v399 = vunpack.c.l.b16 %v367
      %v400 = vunpack.c.l.b16 %v368
      %v401 = vunpack.c.l.b16 %v369
      %v402 = vunpack.c.l.b16 %v370
      %v403 = vpack.c.b16 %v388, %v387
      %v404 = vpack.c.b16 %v390, %v389
      %v405 = vpack.c.b16 %v392, %v391
      %v406 = vpack.c.b16 %v394, %v393
      %v407 = vpack.c.b16 %v396, %v395
      %v408 = vpack.c.b16 %v398, %v397
      %v409 = vpack.c.b16 %v400, %v399
      %v410 = vpack.c.b16 %v402, %v401
      %419 = vmatprep.subr.bf16.mxu0 0
      %420 = vmatpush1.bf16.msra.mxu0 %v403
      %421 = vmatprep.subr.bf16.mxu0 0
      %422 = vmatpush1.bf16.msra.mxu0 %v404
      %423 = vmatprep.subr.bf16.mxu0 0
      %424 = vmatpush1.bf16.msra.mxu0 %v405
      %425 = vmatprep.subr.bf16.mxu0 0
      %426 = vmatpush1.bf16.msra.mxu0 %v406
      %427 = vmatprep.subr.bf16.mxu0 0
      %428 = vmatpush1.bf16.msra.mxu0 %v407
      %429 = vmatprep.subr.bf16.mxu0 0
      %430 = vmatpush1.bf16.msra.mxu0 %v408
      %431 = vmatprep.subr.bf16.mxu0 0
      %432 = vmatpush1.bf16.msra.mxu0 %v409
      %433 = vmatprep.subr.bf16.mxu0 0
      %434 = vmatpush1.bf16.msra.mxu0 %v410
      %435 = vmatprep.subr.bf16.mxu0 0
      %436 = vmatpush1.bf16.msra.mxu0 0
      %437 = vmatprep.subr.bf16.mxu0 0
      %438 = vmatpush1.bf16.msra.mxu0 0
      %439 = vmatprep.subr.bf16.mxu0 0
      %440 = vmatpush1.bf16.msra.mxu0 0
      %441 = vmatprep.subr.bf16.mxu0 0
      %442 = vmatpush1.bf16.msra.mxu0 0
      %443 = vmatprep.subr.bf16.mxu0 0
      %444 = vmatpush1.bf16.msra.mxu0 0
      %445 = vmatprep.subr.bf16.mxu0 0
      %446 = vmatpush1.bf16.msra.mxu0 0
      %447 = vmatprep.subr.bf16.mxu0 0
      %448 = vmatpush1.bf16.msra.mxu0 0
      %449 = vmatprep.subr.bf16.mxu0 0
      %450 = vmatpush1.bf16.msra.mxu0 0
      %451 = vmatprep.mubr.bf16.mxu0 0
      %452 = vmatmul.mubr.bf16.gmra.mrb[0].mxu0 %v339
      %v453 = vpop.f32.mrb[0].mxu0
      %v454 = vadd.f32 0.0, %v453
      %v455 = vpop.f32.mrb[0].mxu0
      %v456 = vpop.f32.mrb[0].mxu0
      %v457 = vadd.f32 0.0, %v456
      %v458 = vpop.f32.mrb[0].mxu0
      %459 = vmatprep.mubr.bf16.mxu0 0
      %460 = vmatmul.mubr.bf16.gmra.mrb[0].mxu0 %v340
      %v461 = vpop.f32.mrb[0].mxu0
      %v462 = vadd.f32 0.0, %v461
      %v463 = vpop.f32.mrb[0].mxu0
      %v464 = vpop.f32.mrb[0].mxu0
      %v465 = vadd.f32 0.0, %v464
      %v466 = vpop.f32.mrb[0].mxu0
      %467 = vmatprep.mubr.bf16.mxu0 0
      %468 = vmatmul.mubr.bf16.gmra.mrb[0].mxu0 %v341
      %v469 = vpop.f32.mrb[0].mxu0
      %v470 = vadd.f32 0.0, %v469
      %v471 = vpop.f32.mrb[0].mxu0
      %v472 = vpop.f32.mrb[0].mxu0
      %v473 = vadd.f32 0.0, %v472
      %v474 = vpop.f32.mrb[0].mxu0
      %475 = vmatprep.mubr.bf16.mxu0 0
      %476 = vmatmul.mubr.bf16.gmra.mrb[0].mxu0 %v342
      %v477 = vpop.f32.mrb[0].mxu0
      %v478 = vadd.f32 0.0, %v477
      %v479 = vpop.f32.mrb[0].mxu0
      %v480 = vpop.f32.mrb[0].mxu0
      %v481 = vadd.f32 0.0, %v480
      %v482 = vpop.f32.mrb[0].mxu0
      %483 = vmatprep.mubr.bf16.mxu0 0
      %484 = vmatmul.mubr.bf16.gmra.mrb[0].mxu0 %v343
      %v485 = vpop.f32.mrb[0].mxu0
      %v486 = vadd.f32 0.0, %v485
      %v487 = vpop.f32.mrb[0].mxu0
      %v488 = vpop.f32.mrb[0].mxu0
      %v489 = vadd.f32 0.0, %v488
      %v490 = vpop.f32.mrb[0].mxu0
      %491 = vmatprep.mubr.bf16.mxu0 0
      %492 = vmatmul.mubr.bf16.gmra.mrb[0].mxu0 %v344
      %v493 = vpop.f32.mrb[0].mxu0
      %v494 = vadd.f32 0.0, %v493
      %v495 = vpop.f32.mrb[0].mxu0
      %v496 = vpop.f32.mrb[0].mxu0
      %v497 = vadd.f32 0.0, %v496
      %v498 = vpop.f32.mrb[0].mxu0
      %499 = vmatprep.mubr.bf16.mxu0 0
      %500 = vmatmul.mubr.bf16.gmra.mrb[0].mxu0 %v345
      %v501 = vpop.f32.mrb[0].mxu0
      %v502 = vadd.f32 0.0, %v501
      %v503 = vpop.f32.mrb[0].mxu0
      %v504 = vpop.f32.mrb[0].mxu0
      %v505 = vadd.f32 0.0, %v504
      %v506 = vpop.f32.mrb[0].mxu0
      %507 = vmatprep.mubr.bf16.mxu0 0
      %508 = vmatmul.mubr.bf16.gmra.mrb[0].mxu0 %v346
      %v509 = vpop.f32.mrb[0].mxu0
      %v510 = vadd.f32 0.0, %v509
      %v511 = vpop.f32.mrb[0].mxu0
      %v512 = vpop.f32.mrb[0].mxu0
      %v513 = vadd.f32 0.0, %v512
      %v514 = vpop.f32.mrb[0].mxu0
      %515 = vmatprep.mubr.bf16.mxu0 0
      %516 = vmatmul.mubr.bf16.gmra.mrb[0].mxu0 %v347
      %v517 = vpop.f32.mrb[0].mxu0
      %v518 = vadd.f32 0.0, %v517
      %v519 = vpop.f32.mrb[0].mxu0
      %v520 = vpop.f32.mrb[0].mxu0
      %v521 = vadd.f32 0.0, %v520
      %v522 = vpop.f32.mrb[0].mxu0
      %523 = vmatprep.mubr.bf16.mxu0 0
      %524 = vmatmul.mubr.bf16.gmra.mrb[0].mxu0 %v348
      %v525 = vpop.f32.mrb[0].mxu0
      %v526 = vadd.f32 0.0, %v525
      %v527 = vpop.f32.mrb[0].mxu0
      %v528 = vpop.f32.mrb[0].mxu0
      %v529 = vadd.f32 0.0, %v528
      %v530 = vpop.f32.mrb[0].mxu0
      %531 = vmatprep.mubr.bf16.mxu0 0
      %532 = vmatmul.mubr.bf16.gmra.mrb[0].mxu0 %v349
      %v533 = vpop.f32.mrb[0].mxu0
      %v534 = vadd.f32 0.0, %v533
      %v535 = vpop.f32.mrb[0].mxu0
      %v536 = vpop.f32.mrb[0].mxu0
      %v537 = vadd.f32 0.0, %v536
      %v538 = vpop.f32.mrb[0].mxu0
      %539 = vmatprep.mubr.bf16.mxu0 0
      %540 = vmatmul.mubr.bf16.gmra.mrb[0].mxu0 %v350
      %v541 = vpop.f32.mrb[0].mxu0
      %v542 = vadd.f32 0.0, %v541
      %v543 = vpop.f32.mrb[0].mxu0
      %v544 = vpop.f32.mrb[0].mxu0
      %v545 = vadd.f32 0.0, %v544
      %v546 = vpop.f32.mrb[0].mxu0
      %547 = vmatprep.mubr.bf16.mxu0 0
      %548 = vmatmul.mubr.bf16.gmra.mrb[0].mxu0 %v351
      %v549 = vpop.f32.mrb[0].mxu0
      %v550 = vadd.f32 0.0, %v549
      %v551 = vpop.f32.mrb[0].mxu0
      %v552 = vpop.f32.mrb[0].mxu0
      %v553 = vadd.f32 0.0, %v552
      %v554 = vpop.f32.mrb[0].mxu0
      %555 = vmatprep.mubr.bf16.mxu0 0
      %556 = vmatmul.mubr.bf16.gmra.mrb[0].mxu0 %v352
      %v557 = vpop.f32.mrb[0].mxu0
      %v558 = vadd.f32 0.0, %v557
      %v559 = vpop.f32.mrb[0].mxu0
      %v560 = vpop.f32.mrb[0].mxu0
      %v561 = vadd.f32 0.0, %v560
      %v562 = vpop.f32.mrb[0].mxu0
      %563 = vmatprep.mubr.bf16.mxu0 0
      %564 = vmatmul.mubr.bf16.gmra.mrb[0].mxu0 %v353
      %v565 = vpop.f32.mrb[0].mxu0
      %v566 = vadd.f32 0.0, %v565
      %v567 = vpop.f32.mrb[0].mxu0
      %v568 = vpop.f32.mrb[0].mxu0
      %v569 = vadd.f32 0.0, %v568
      %v570 = vpop.f32.mrb[0].mxu0
      %571 = vmatprep.mubr.bf16.mxu0 0
      %572 = vmatmul.mubr.bf16.gmra.mrb[0].mxu0 %v354
      %v573 = vpop.f32.mrb[0].mxu0
      %v574 = vadd.f32 0.0, %v573
      %v575 = vpop.f32.mrb[0].mxu0
      %v576 = vpop.f32.mrb[0].mxu0
      %v577 = vadd.f32 0.0, %v576
      %v578 = vpop.f32.mrb[0].mxu0
      %579 = vdwg.mxu0
      %580 = vst [vmem:[#allocation2] sm:$0xff] %v454
      %581 = vst [vmem:[#allocation2 + $0x8] sm:$0xff] %v457
      %582 = vst [vmem:[#allocation2 + $0x10] sm:$0xff] %v462
      %583 = vst [vmem:[#allocation2 + $0x18] sm:$0xff] %v465
      %584 = vst [vmem:[#allocation2 + $0x20] sm:$0xff] %v470
      %585 = vst [vmem:[#allocation2 + $0x28] sm:$0xff] %v473
      %586 = vst [vmem:[#allocation2 + $0x30] sm:$0xff] %v478
      %587 = vst [vmem:[#allocation2 + $0x38] sm:$0xff] %v481
      %588 = vst [vmem:[#allocation2 + $0x40] sm:$0xff] %v486
      %589 = vst [vmem:[#allocation2 + $0x48] sm:$0xff] %v489
      %590 = vst [vmem:[#allocation2 + $0x50] sm:$0xff] %v494
      %591 = vst [vmem:[#allocation2 + $0x58] sm:$0xff] %v497
      %592 = vst [vmem:[#allocation2 + $0x60] sm:$0xff] %v502
      %593 = vst [vmem:[#allocation2 + $0x68] sm:$0xff] %v505
      %594 = vst [vmem:[#allocation2 + $0x70] sm:$0xff] %v510
      %595 = vst [vmem:[#allocation2 + $0x78] sm:$0xff] %v513
      %596 = vst [vmem:[#allocation2 + $0x80] sm:$0xff] %v518
      %597 = vst [vmem:[#allocation2 + $0x88] sm:$0xff] %v521
      %598 = vst [vmem:[#allocation2 + $0x90] sm:$0xff] %v526
      %599 = vst [vmem:[#allocation2 + $0x98] sm:$0xff] %v529
      %600 = vst [vmem:[#allocation2 + $0xa0] sm:$0xff] %v534
      %601 = vst [vmem:[#allocation2 + $0xa8] sm:$0xff] %v537
      %602 = vst [vmem:[#allocation2 + $0xb0] sm:$0xff] %v542
      %603 = vst [vmem:[#allocation2 + $0xb8] sm:$0xff] %v545
      %604 = vst [vmem:[#allocation2 + $0xc0] sm:$0xff] %v550
      %605 = vst [vmem:[#allocation2 + $0xc8] sm:$0xff] %v553
      %606 = vst [vmem:[#allocation2 + $0xd0] sm:$0xff] %v558
      %607 = vst [vmem:[#allocation2 + $0xd8] sm:$0xff] %v561
      %608 = vst [vmem:[#allocation2 + $0xe0] sm:$0xff] %v566
      %609 = vst [vmem:[#allocation2 + $0xe8] sm:$0xff] %v569
      %610 = vst [vmem:[#allocation2 + $0xf0] sm:$0xff] %v574
      %611 = vst [vmem:[#allocation2 + $0xf8] sm:$0xff] %v577
      %s612 = sadd.s32 %s304, 4294967280
      %s613 = scalar_lea.vmem %s268, %s612
      %v614 = vld [vmem:[%s613] sm:$0xff]
      %v615 = vld [vmem:[%s613 + $0x8] sm:$0xff]
      %v616 = vld [vmem:[%s613 + $0x10] sm:$0xff]
      %v617 = vld [vmem:[%s613 + $0x18] sm:$0xff]
      %v618 = vld [vmem:[%s613 + $0x20] sm:$0xff]
      %v619 = vld [vmem:[%s613 + $0x28] sm:$0xff]
      %v620 = vld [vmem:[%s613 + $0x30] sm:$0xff]
      %v621 = vld [vmem:[%s613 + $0x38] sm:$0xff]
      %v622 = vld [vmem:[%s613 + $0x40] sm:$0xff]
      %v623 = vld [vmem:[%s613 + $0x48] sm:$0xff]
      %v624 = vld [vmem:[%s613 + $0x50] sm:$0xff]
      %v625 = vld [vmem:[%s613 + $0x58] sm:$0xff]
      %v626 = vld [vmem:[%s613 + $0x60] sm:$0xff]
      %v627 = vld [vmem:[%s613 + $0x68] sm:$0xff]
      %v628 = vld [vmem:[%s613 + $0x70] sm:$0xff]
      %v629 = vld [vmem:[%s613 + $0x78] sm:$0xff]
      %v630 = vld [vmem:[%s613 + $0x80] sm:$0xff]
      %v631 = vld [vmem:[%s613 + $0x88] sm:$0xff]
      %v632 = vld [vmem:[%s613 + $0x90] sm:$0xff]
      %v633 = vld [vmem:[%s613 + $0x98] sm:$0xff]
      %v634 = vld [vmem:[%s613 + $0xa0] sm:$0xff]
      %v635 = vld [vmem:[%s613 + $0xa8] sm:$0xff]
      %v636 = vld [vmem:[%s613 + $0xb0] sm:$0xff]
      %v637 = vld [vmem:[%s613 + $0xb8] sm:$0xff]
      %v638 = vld [vmem:[%s613 + $0xc0] sm:$0xff]
      %v639 = vld [vmem:[%s613 + $0xc8] sm:$0xff]
      %v640 = vld [vmem:[%s613 + $0xd0] sm:$0xff]
      %v641 = vld [vmem:[%s613 + $0xd8] sm:$0xff]
      %v642 = vld [vmem:[%s613 + $0xe0] sm:$0xff]
      %v643 = vld [vmem:[%s613 + $0xe8] sm:$0xff]
      %v644 = vld [vmem:[%s613 + $0xf0] sm:$0xff]
      %v645 = vld [vmem:[%s613 + $0xf8] sm:$0xff]
      %v646 = vpack.c.bf16 %v615, %v614
      %v647 = vpack.c.bf16 %v617, %v616
      %v648 = vpack.c.bf16 %v619, %v618
      %v649 = vpack.c.bf16 %v621, %v620
      %v650 = vpack.c.bf16 %v623, %v622
      %v651 = vpack.c.bf16 %v625, %v624
      %v652 = vpack.c.bf16 %v627, %v626
      %v653 = vpack.c.bf16 %v629, %v628
      %v654 = vpack.c.bf16 %v631, %v630
      %v655 = vpack.c.bf16 %v633, %v632
      %v656 = vpack.c.bf16 %v635, %v634
      %v657 = vpack.c.bf16 %v637, %v636
      %v658 = vpack.c.bf16 %v639, %v638
      %v659 = vpack.c.bf16 %v641, %v640
      %v660 = vpack.c.bf16 %v643, %v642
      %v661 = vpack.c.bf16 %v645, %v644
      %s662 = scalar_lea.vmem %s272, 64
      %v663 = vld [vmem:[%s662] sm:$0xf]
      %v664 = vld [vmem:[%s662 + $0x4] sm:$0xf]
      %v665 = vld [vmem:[%s662 + $0x8] sm:$0xf]
      %v666 = vld [vmem:[%s662 + $0xc] sm:$0xf]
      %v667 = vld [vmem:[%s662 + $0x10] sm:$0xf]
      %v668 = vld [vmem:[%s662 + $0x14] sm:$0xf]
      %v669 = vld [vmem:[%s662 + $0x18] sm:$0xf]
      %v670 = vld [vmem:[%s662 + $0x1c] sm:$0xf]
      %v671 = vld [vmem:[%s662 + $0x20] sm:$0xf]
      %v672 = vld [vmem:[%s662 + $0x24] sm:$0xf]
      %v673 = vld [vmem:[%s662 + $0x28] sm:$0xf]
      %v674 = vld [vmem:[%s662 + $0x2c] sm:$0xf]
      %v675 = vld [vmem:[%s662 + $0x30] sm:$0xf]
      %v676 = vld [vmem:[%s662 + $0x34] sm:$0xf]
      %v677 = vld [vmem:[%s662 + $0x38] sm:$0xf]
      %v678 = vld [vmem:[%s662 + $0x3c] sm:$0xf]
      %v695 = vunpack.c.l.b16 %v663
      %v696 = vunpack.c.l.b16 %v664
      %v697 = vunpack.c.l.b16 %v665
      %v698 = vunpack.c.l.b16 %v666
      %v699 = vunpack.c.l.b16 %v667
      %v700 = vunpack.c.l.b16 %v668
      %v701 = vunpack.c.l.b16 %v669
      %v702 = vunpack.c.l.b16 %v670
      %v703 = vunpack.c.l.b16 %v671
      %v704 = vunpack.c.l.b16 %v672
      %v705 = vunpack.c.l.b16 %v673
      %v706 = vunpack.c.l.b16 %v674
      %v707 = vunpack.c.l.b16 %v675
      %v708 = vunpack.c.l.b16 %v676
      %v709 = vunpack.c.l.b16 %v677
      %v710 = vunpack.c.l.b16 %v678
      %v711 = vpack.c.b16 %v696, %v695
      %v712 = vpack.c.b16 %v698, %v697
      %v713 = vpack.c.b16 %v700, %v699
      %v714 = vpack.c.b16 %v702, %v701
      %v715 = vpack.c.b16 %v704, %v703
      %v716 = vpack.c.b16 %v706, %v705
      %v717 = vpack.c.b16 %v708, %v707
      %v718 = vpack.c.b16 %v710, %v709
      %727 = vmatprep.subr.bf16.mxu0 0
      %728 = vmatpush1.bf16.msra.mxu0 %v711
      %729 = vmatprep.subr.bf16.mxu0 0
      %730 = vmatpush1.bf16.msra.mxu0 %v712
      %731 = vmatprep.subr.bf16.mxu0 0
      %732 = vmatpush1.bf16.msra.mxu0 %v713
      %733 = vmatprep.subr.bf16.mxu0 0
      %734 = vmatpush1.bf16.msra.mxu0 %v714
      %735 = vmatprep.subr.bf16.mxu0 0
      %736 = vmatpush1.bf16.msra.mxu0 %v715
      %737 = vmatprep.subr.bf16.mxu0 0
      %738 = vmatpush1.bf16.msra.mxu0 %v716
      %739 = vmatprep.subr.bf16.mxu0 0
      %740 = vmatpush1.bf16.msra.mxu0 %v717
      %741 = vmatprep.subr.bf16.mxu0 0
      %742 = vmatpush1.bf16.msra.mxu0 %v718
      %743 = vmatprep.subr.bf16.mxu0 0
      %744 = vmatpush1.bf16.msra.mxu0 0
      %745 = vmatprep.subr.bf16.mxu0 0
      %746 = vmatpush1.bf16.msra.mxu0 0
      %747 = vmatprep.subr.bf16.mxu0 0
      %748 = vmatpush1.bf16.msra.mxu0 0
      %749 = vmatprep.subr.bf16.mxu0 0
      %750 = vmatpush1.bf16.msra.mxu0 0
      %751 = vmatprep.subr.bf16.mxu0 0
      %752 = vmatpush1.bf16.msra.mxu0 0
      %753 = vmatprep.subr.bf16.mxu0 0
      %754 = vmatpush1.bf16.msra.mxu0 0
      %755 = vmatprep.subr.bf16.mxu0 0
      %756 = vmatpush1.bf16.msra.mxu0 0
      %757 = vmatprep.subr.bf16.mxu0 0
      %758 = vmatpush1.bf16.msra.mxu0 0
      %759 = vmatprep.mubr.bf16.mxu0 0
      %760 = vmatmul.mubr.bf16.gmra.mrb[0].mxu0 %v646
      %v761 = vpop.f32.mrb[0].mxu0
      %v762 = vadd.f32 0.0, %v761
      %v763 = vpop.f32.mrb[0].mxu0
      %v764 = vpop.f32.mrb[0].mxu0
      %v765 = vadd.f32 0.0, %v764
      %v766 = vpop.f32.mrb[0].mxu0
      %767 = vmatprep.mubr.bf16.mxu0 0
      %768 = vmatmul.mubr.bf16.gmra.mrb[0].mxu0 %v647
      %v769 = vpop.f32.mrb[0].mxu0
      %v770 = vadd.f32 0.0, %v769
      %v771 = vpop.f32.mrb[0].mxu0
      %v772 = vpop.f32.mrb[0].mxu0
      %v773 = vadd.f32 0.0, %v772
      %v774 = vpop.f32.mrb[0].mxu0
      %775 = vmatprep.mubr.bf16.mxu0 0
      %776 = vmatmul.mubr.bf16.gmra.mrb[0].mxu0 %v648
      %v777 = vpop.f32.mrb[0].mxu0
      %v778 = vadd.f32 0.0, %v777
      %v779 = vpop.f32.mrb[0].mxu0
      %v780 = vpop.f32.mrb[0].mxu0
      %v781 = vadd.f32 0.0, %v780
      %v782 = vpop.f32.mrb[0].mxu0
      %783 = vmatprep.mubr.bf16.mxu0 0
      %784 = vmatmul.mubr.bf16.gmra.mrb[0].mxu0 %v649
      %v785 = vpop.f32.mrb[0].mxu0
      %v786 = vadd.f32 0.0, %v785
      %v787 = vpop.f32.mrb[0].mxu0
      %v788 = vpop.f32.mrb[0].mxu0
      %v789 = vadd.f32 0.0, %v788
      %v790 = vpop.f32.mrb[0].mxu0
      %791 = vmatprep.mubr.bf16.mxu0 0
      %792 = vmatmul.mubr.bf16.gmra.mrb[0].mxu0 %v650
      %v793 = vpop.f32.mrb[0].mxu0
      %v794 = vadd.f32 0.0, %v793
      %v795 = vpop.f32.mrb[0].mxu0
      %v796 = vpop.f32.mrb[0].mxu0
      %v797 = vadd.f32 0.0, %v796
      %v798 = vpop.f32.mrb[0].mxu0
      %799 = vmatprep.mubr.bf16.mxu0 0
      %800 = vmatmul.mubr.bf16.gmra.mrb[0].mxu0 %v651
      %v801 = vpop.f32.mrb[0].mxu0
      %v802 = vadd.f32 0.0, %v801
      %v803 = vpop.f32.mrb[0].mxu0
      %v804 = vpop.f32.mrb[0].mxu0
      %v805 = vadd.f32 0.0, %v804
      %v806 = vpop.f32.mrb[0].mxu0
      %807 = vmatprep.mubr.bf16.mxu0 0
      %808 = vmatmul.mubr.bf16.gmra.mrb[0].mxu0 %v652
      %v809 = vpop.f32.mrb[0].mxu0
      %v810 = vadd.f32 0.0, %v809
      %v811 = vpop.f32.mrb[0].mxu0
      %v812 = vpop.f32.mrb[0].mxu0
      %v813 = vadd.f32 0.0, %v812
      %v814 = vpop.f32.mrb[0].mxu0
      %815 = vmatprep.mubr.bf16.mxu0 0
      %816 = vmatmul.mubr.bf16.gmra.mrb[0].mxu0 %v653
      %v817 = vpop.f32.mrb[0].mxu0
      %v818 = vadd.f32 0.0, %v817
      %v819 = vpop.f32.mrb[0].mxu0
      %v820 = vpop.f32.mrb[0].mxu0
      %v821 = vadd.f32 0.0, %v820
      %v822 = vpop.f32.mrb[0].mxu0
      %823 = vmatprep.mubr.bf16.mxu0 0
      %824 = vmatmul.mubr.bf16.gmra.mrb[0].mxu0 %v654
      %v825 = vpop.f32.mrb[0].mxu0
      %v826 = vadd.f32 0.0, %v825
      %v827 = vpop.f32.mrb[0].mxu0
      %v828 = vpop.f32.mrb[0].mxu0
      %v829 = vadd.f32 0.0, %v828
      %v830 = vpop.f32.mrb[0].mxu0
      %831 = vmatprep.mubr.bf16.mxu0 0
      %832 = vmatmul.mubr.bf16.gmra.mrb[0].mxu0 %v655
      %v833 = vpop.f32.mrb[0].mxu0
      %v834 = vadd.f32 0.0, %v833
      %v835 = vpop.f32.mrb[0].mxu0
      %v836 = vpop.f32.mrb[0].mxu0
      %v837 = vadd.f32 0.0, %v836
      %v838 = vpop.f32.mrb[0].mxu0
      %839 = vmatprep.mubr.bf16.mxu0 0
      %840 = vmatmul.mubr.bf16.gmra.mrb[0].mxu0 %v656
      %v841 = vpop.f32.mrb[0].mxu0
      %v842 = vadd.f32 0.0, %v841
      %v843 = vpop.f32.mrb[0].mxu0
      %v844 = vpop.f32.mrb[0].mxu0
      %v845 = vadd.f32 0.0, %v844
      %v846 = vpop.f32.mrb[0].mxu0
      %847 = vmatprep.mubr.bf16.mxu0 0
      %848 = vmatmul.mubr.bf16.gmra.mrb[0].mxu0 %v657
      %v849 = vpop.f32.mrb[0].mxu0
      %v850 = vadd.f32 0.0, %v849
      %v851 = vpop.f32.mrb[0].mxu0
      %v852 = vpop.f32.mrb[0].mxu0
      %v853 = vadd.f32 0.0, %v852
      %v854 = vpop.f32.mrb[0].mxu0
      %855 = vmatprep.mubr.bf16.mxu0 0
      %856 = vmatmul.mubr.bf16.gmra.mrb[0].mxu0 %v658
      %v857 = vpop.f32.mrb[0].mxu0
      %v858 = vadd.f32 0.0, %v857
      %v859 = vpop.f32.mrb[0].mxu0
      %v860 = vpop.f32.mrb[0].mxu0
      %v861 = vadd.f32 0.0, %v860
      %v862 = vpop.f32.mrb[0].mxu0
      %863 = vmatprep.mubr.bf16.mxu0 0
      %864 = vmatmul.mubr.bf16.gmra.mrb[0].mxu0 %v659
      %v865 = vpop.f32.mrb[0].mxu0
      %v866 = vadd.f32 0.0, %v865
      %v867 = vpop.f32.mrb[0].mxu0
      %v868 = vpop.f32.mrb[0].mxu0
      %v869 = vadd.f32 0.0, %v868
      %v870 = vpop.f32.mrb[0].mxu0
      %871 = vmatprep.mubr.bf16.mxu0 0
      %872 = vmatmul.mubr.bf16.gmra.mrb[0].mxu0 %v660
      %v873 = vpop.f32.mrb[0].mxu0
      %v874 = vadd.f32 0.0, %v873
      %v875 = vpop.f32.mrb[0].mxu0
      %v876 = vpop.f32.mrb[0].mxu0
      %v877 = vadd.f32 0.0, %v876
      %v878 = vpop.f32.mrb[0].mxu0
      %879 = vmatprep.mubr.bf16.mxu0 0
      %880 = vmatmul.mubr.bf16.gmra.mrb[0].mxu0 %v661
      %v881 = vpop.f32.mrb[0].mxu0
      %v882 = vadd.f32 0.0, %v881
      %v883 = vpop.f32.mrb[0].mxu0
      %v884 = vpop.f32.mrb[0].mxu0
      %v885 = vadd.f32 0.0, %v884
      %v886 = vpop.f32.mrb[0].mxu0
      %887 = vdwg.mxu0
      %v888 = vld [vmem:[#allocation2] sm:$0xff]
      %v889 = vld [vmem:[#allocation2 + $0x8] sm:$0xff]
      %v890 = vld [vmem:[#allocation2 + $0x10] sm:$0xff]
      %v891 = vld [vmem:[#allocation2 + $0x18] sm:$0xff]
      %v892 = vld [vmem:[#allocation2 + $0x20] sm:$0xff]
      %v893 = vld [vmem:[#allocation2 + $0x28] sm:$0xff]
      %v894 = vld [vmem:[#allocation2 + $0x30] sm:$0xff]
      %v895 = vld [vmem:[#allocation2 + $0x38] sm:$0xff]
      %v896 = vld [vmem:[#allocation2 + $0x40] sm:$0xff]
      %v897 = vld [vmem:[#allocation2 + $0x48] sm:$0xff]
      %v898 = vld [vmem:[#allocation2 + $0x50] sm:$0xff]
      %v899 = vld [vmem:[#allocation2 + $0x58] sm:$0xff]
      %v900 = vld [vmem:[#allocation2 + $0x60] sm:$0xff]
      %v901 = vld [vmem:[#allocation2 + $0x68] sm:$0xff]
      %v902 = vld [vmem:[#allocation2 + $0x70] sm:$0xff]
      %v903 = vld [vmem:[#allocation2 + $0x78] sm:$0xff]
      %v904 = vld [vmem:[#allocation2 + $0x80] sm:$0xff]
      %v905 = vld [vmem:[#allocation2 + $0x88] sm:$0xff]
      %v906 = vld [vmem:[#allocation2 + $0x90] sm:$0xff]
      %v907 = vld [vmem:[#allocation2 + $0x98] sm:$0xff]
      %v908 = vld [vmem:[#allocation2 + $0xa0] sm:$0xff]
      %v909 = vld [vmem:[#allocation2 + $0xa8] sm:$0xff]
      %v910 = vld [vmem:[#allocation2 + $0xb0] sm:$0xff]
      %v911 = vld [vmem:[#allocation2 + $0xb8] sm:$0xff]
      %v912 = vld [vmem:[#allocation2 + $0xc0] sm:$0xff]
      %v913 = vld [vmem:[#allocation2 + $0xc8] sm:$0xff]
      %v914 = vld [vmem:[#allocation2 + $0xd0] sm:$0xff]
      %v915 = vld [vmem:[#allocation2 + $0xd8] sm:$0xff]
      %v916 = vld [vmem:[#allocation2 + $0xe0] sm:$0xff]
      %v917 = vld [vmem:[#allocation2 + $0xe8] sm:$0xff]
      %v918 = vld [vmem:[#allocation2 + $0xf0] sm:$0xff]
      %v919 = vld [vmem:[#allocation2 + $0xf8] sm:$0xff]
      %v920 = vadd.f32 %v888, %v762
      %v921 = vadd.f32 %v889, %v765
      %v922 = vadd.f32 %v890, %v770
      %v923 = vadd.f32 %v891, %v773
      %v924 = vadd.f32 %v892, %v778
      %v925 = vadd.f32 %v893, %v781
      %v926 = vadd.f32 %v894, %v786
      %v927 = vadd.f32 %v895, %v789
      %v928 = vadd.f32 %v896, %v794
      %v929 = vadd.f32 %v897, %v797
      %v930 = vadd.f32 %v898, %v802
      %v931 = vadd.f32 %v899, %v805
      %v932 = vadd.f32 %v900, %v810
      %v933 = vadd.f32 %v901, %v813
      %v934 = vadd.f32 %v902, %v818
      %v935 = vadd.f32 %v903, %v821
      %v936 = vadd.f32 %v904, %v826
      %v937 = vadd.f32 %v905, %v829
      %v938 = vadd.f32 %v906, %v834
      %v939 = vadd.f32 %v907, %v837
      %v940 = vadd.f32 %v908, %v842
      %v941 = vadd.f32 %v909, %v845
      %v942 = vadd.f32 %v910, %v850
      %v943 = vadd.f32 %v911, %v853
      %v944 = vadd.f32 %v912, %v858
      %v945 = vadd.f32 %v913, %v861
      %v946 = vadd.f32 %v914, %v866
      %v947 = vadd.f32 %v915, %v869
      %v948 = vadd.f32 %v916, %v874
      %v949 = vadd.f32 %v917, %v877
      %v950 = vadd.f32 %v918, %v882
      %v951 = vadd.f32 %v919, %v885
      %952 = vst [vmem:[#allocation2] sm:$0xff] %v920
      %953 = vst [vmem:[#allocation2 + $0x8] sm:$0xff] %v921
      %954 = vst [vmem:[#allocation2 + $0x10] sm:$0xff] %v922
      %955 = vst [vmem:[#allocation2 + $0x18] sm:$0xff] %v923
      %956 = vst [vmem:[#allocation2 + $0x20] sm:$0xff] %v924
      %957 = vst [vmem:[#allocation2 + $0x28] sm:$0xff] %v925
      %958 = vst [vmem:[#allocation2 + $0x30] sm:$0xff] %v926
      %959 = vst [vmem:[#allocation2 + $0x38] sm:$0xff] %v927
      %960 = vst [vmem:[#allocation2 + $0x40] sm:$0xff] %v928
      %961 = vst [vmem:[#allocation2 + $0x48] sm:$0xff] %v929
      %962 = vst [vmem:[#allocation2 + $0x50] sm:$0xff] %v930
      %963 = vst [vmem:[#allocation2 + $0x58] sm:$0xff] %v931
      %964 = vst [vmem:[#allocation2 + $0x60] sm:$0xff] %v932
      %965 = vst [vmem:[#allocation2 + $0x68] sm:$0xff] %v933
      %966 = vst [vmem:[#allocation2 + $0x70] sm:$0xff] %v934
      %967 = vst [vmem:[#allocation2 + $0x78] sm:$0xff] %v935
      %968 = vst [vmem:[#allocation2 + $0x80] sm:$0xff] %v936
      %969 = vst [vmem:[#allocation2 + $0x88] sm:$0xff] %v937
      %970 = vst [vmem:[#allocation2 + $0x90] sm:$0xff] %v938
      %971 = vst [vmem:[#allocation2 + $0x98] sm:$0xff] %v939
      %972 = vst [vmem:[#allocation2 + $0xa0] sm:$0xff] %v940
      %973 = vst [vmem:[#allocation2 + $0xa8] sm:$0xff] %v941
      %974 = vst [vmem:[#allocation2 + $0xb0] sm:$0xff] %v942
      %975 = vst [vmem:[#allocation2 + $0xb8] sm:$0xff] %v943
      %976 = vst [vmem:[#allocation2 + $0xc0] sm:$0xff] %v944
      %977 = vst [vmem:[#allocation2 + $0xc8] sm:$0xff] %v945
      %978 = vst [vmem:[#allocation2 + $0xd0] sm:$0xff] %v946
      %979 = vst [vmem:[#allocation2 + $0xd8] sm:$0xff] %v947
      %980 = vst [vmem:[#allocation2 + $0xe0] sm:$0xff] %v948
      %981 = vst [vmem:[#allocation2 + $0xe8] sm:$0xff] %v949
      %982 = vst [vmem:[#allocation2 + $0xf0] sm:$0xff] %v950
      %983 = vst [vmem:[#allocation2 + $0xf8] sm:$0xff] %v951
      %s984 = sadd.s32 %s304, 4294967281
      %s985 = scalar_lea.vmem %s268, %s984
      %v986 = vld [vmem:[%s985] sm:$0xff]
      %v987 = vld [vmem:[%s985 + $0x8] sm:$0xff]
      %v988 = vld [vmem:[%s985 + $0x10] sm:$0xff]
      %v989 = vld [vmem:[%s985 + $0x18] sm:$0xff]
      %v990 = vld [vmem:[%s985 + $0x20] sm:$0xff]
      %v991 = vld [vmem:[%s985 + $0x28] sm:$0xff]
      %v992 = vld [vmem:[%s985 + $0x30] sm:$0xff]
      %v993 = vld [vmem:[%s985 + $0x38] sm:$0xff]
      %v994 = vld [vmem:[%s985 + $0x40] sm:$0xff]
      %v995 = vld [vmem:[%s985 + $0x48] sm:$0xff]
      %v996 = vld [vmem:[%s985 + $0x50] sm:$0xff]
      %v997 = vld [vmem:[%s985 + $0x58] sm:$0xff]
      %v998 = vld [vmem:[%s985 + $0x60] sm:$0xff]
      %v999 = vld [vmem:[%s985 + $0x68] sm:$0xff]
      %v1000 = vld [vmem:[%s985 + $0x70] sm:$0xff]
      %v1001 = vld [vmem:[%s985 + $0x78] sm:$0xff]
      %v1002 = vld [vmem:[%s985 + $0x80] sm:$0xff]
      %v1003 = vld [vmem:[%s985 + $0x88] sm:$0xff]
      %v1004 = vld [vmem:[%s985 + $0x90] sm:$0xff]
      %v1005 = vld [vmem:[%s985 + $0x98] sm:$0xff]
      %v1006 = vld [vmem:[%s985 + $0xa0] sm:$0xff]
      %v1007 = vld [vmem:[%s985 + $0xa8] sm:$0xff]
      %v1008 = vld [vmem:[%s985 + $0xb0] sm:$0xff]
      %v1009 = vld [vmem:[%s985 + $0xb8] sm:$0xff]
      %v1010 = vld [vmem:[%s985 + $0xc0] sm:$0xff]
      %v1011 = vld [vmem:[%s985 + $0xc8] sm:$0xff]
      %v1012 = vld [vmem:[%s985 + $0xd0] sm:$0xff]
      %v1013 = vld [vmem:[%s985 + $0xd8] sm:$0xff]
      %v1014 = vld [vmem:[%s985 + $0xe0] sm:$0xff]
      %v1015 = vld [vmem:[%s985 + $0xe8] sm:$0xff]
      %v1016 = vld [vmem:[%s985 + $0xf0] sm:$0xff]
      %v1017 = vld [vmem:[%s985 + $0xf8] sm:$0xff]
      %v1018 = vpack.c.bf16 %v987, %v986
      %v1019 = vpack.c.bf16 %v989, %v988
      %v1020 = vpack.c.bf16 %v991, %v990
      %v1021 = vpack.c.bf16 %v993, %v992
      %v1022 = vpack.c.bf16 %v995, %v994
      %v1023 = vpack.c.bf16 %v997, %v996
      %v1024 = vpack.c.bf16 %v999, %v998
      %v1025 = vpack.c.bf16 %v1001, %v1000
      %v1026 = vpack.c.bf16 %v1003, %v1002
      %v1027 = vpack.c.bf16 %v1005, %v1004
      %v1028 = vpack.c.bf16 %v1007, %v1006
      %v1029 = vpack.c.bf16 %v1009, %v1008
      %v1030 = vpack.c.bf16 %v1011, %v1010
      %v1031 = vpack.c.bf16 %v1013, %v1012
      %v1032 = vpack.c.bf16 %v1015, %v1014
      %v1033 = vpack.c.bf16 %v1017, %v1016
      %s1034 = scalar_lea.vmem %s272, 128
      %v1035 = vld [vmem:[%s1034] sm:$0xf]
      %v1036 = vld [vmem:[%s1034 + $0x4] sm:$0xf]
      %v1037 = vld [vmem:[%s1034 + $0x8] sm:$0xf]
      %v1038 = vld [vmem:[%s1034 + $0xc] sm:$0xf]
      %v1039 = vld [vmem:[%s1034 + $0x10] sm:$0xf]
      %v1040 = vld [vmem:[%s1034 + $0x14] sm:$0xf]
      %v1041 = vld [vmem:[%s1034 + $0x18] sm:$0xf]
      %v1042 = vld [vmem:[%s1034 + $0x1c] sm:$0xf]
      %v1043 = vld [vmem:[%s1034 + $0x20] sm:$0xf]
      %v1044 = vld [vmem:[%s1034 + $0x24] sm:$0xf]
      %v1045 = vld [vmem:[%s1034 + $0x28] sm:$0xf]
      %v1046 = vld [vmem:[%s1034 + $0x2c] sm:$0xf]
      %v1047 = vld [vmem:[%s1034 + $0x30] sm:$0xf]
      %v1048 = vld [vmem:[%s1034 + $0x34] sm:$0xf]
      %v1049 = vld [vmem:[%s1034 + $0x38] sm:$0xf]
      %v1050 = vld [vmem:[%s1034 + $0x3c] sm:$0xf]
      %v1067 = vunpack.c.l.b16 %v1035
      %v1068 = vunpack.c.l.b16 %v1036
      %v1069 = vunpack.c.l.b16 %v1037
      %v1070 = vunpack.c.l.b16 %v1038
      %v1071 = vunpack.c.l.b16 %v1039
      %v1072 = vunpack.c.l.b16 %v1040
      %v1073 = vunpack.c.l.b16 %v1041
      %v1074 = vunpack.c.l.b16 %v1042
      %v1075 = vunpack.c.l.b16 %v1043
      %v1076 = vunpack.c.l.b16 %v1044
      %v1077 = vunpack.c.l.b16 %v1045
      %v1078 = vunpack.c.l.b16 %v1046
      %v1079 = vunpack.c.l.b16 %v1047
      %v1080 = vunpack.c.l.b16 %v1048
      %v1081 = vunpack.c.l.b16 %v1049
      %v1082 = vunpack.c.l.b16 %v1050
      %v1083 = vpack.c.b16 %v1068, %v1067
      %v1084 = vpack.c.b16 %v1070, %v1069
      %v1085 = vpack.c.b16 %v1072, %v1071
      %v1086 = vpack.c.b16 %v1074, %v1073
      %v1087 = vpack.c.b16 %v1076, %v1075
      %v1088 = vpack.c.b16 %v1078, %v1077
      %v1089 = vpack.c.b16 %v1080, %v1079
      %v1090 = vpack.c.b16 %v1082, %v1081
      %1099 = vmatprep.subr.bf16.mxu0 0
      %1100 = vmatpush1.bf16.msra.mxu0 %v1083
      %1101 = vmatprep.subr.bf16.mxu0 0
      %1102 = vmatpush1.bf16.msra.mxu0 %v1084
      %1103 = vmatprep.subr.bf16.mxu0 0
      %1104 = vmatpush1.bf16.msra.mxu0 %v1085
      %1105 = vmatprep.subr.bf16.mxu0 0
      %1106 = vmatpush1.bf16.msra.mxu0 %v1086
      %1107 = vmatprep.subr.bf16.mxu0 0
      %1108 = vmatpush1.bf16.msra.mxu0 %v1087
      %1109 = vmatprep.subr.bf16.mxu0 0
      %1110 = vmatpush1.bf16.msra.mxu0 %v1088
      %1111 = vmatprep.subr.bf16.mxu0 0
      %1112 = vmatpush1.bf16.msra.mxu0 %v1089
      %1113 = vmatprep.subr.bf16.mxu0 0
      %1114 = vmatpush1.bf16.msra.mxu0 %v1090
      %1115 = vmatprep.subr.bf16.mxu0 0
      %1116 = vmatpush1.bf16.msra.mxu0 0
      %1117 = vmatprep.subr.bf16.mxu0 0
      %1118 = vmatpush1.bf16.msra.mxu0 0
      %1119 = vmatprep.subr.bf16.mxu0 0
      %1120 = vmatpush1.bf16.msra.mxu0 0
      %1121 = vmatprep.subr.bf16.mxu0 0
      %1122 = vmatpush1.bf16.msra.mxu0 0
      %1123 = vmatprep.subr.bf16.mxu0 0
      %1124 = vmatpush1.bf16.msra.mxu0 0
      %1125 = vmatprep.subr.bf16.mxu0 0
      %1126 = vmatpush1.bf16.msra.mxu0 0
      %1127 = vmatprep.subr.bf16.mxu0 0
      %1128 = vmatpush1.bf16.msra.mxu0 0
      %1129 = vmatprep.subr.bf16.mxu0 0
      %1130 = vmatpush1.bf16.msra.mxu0 0
      %1131 = vmatprep.mubr.bf16.mxu0 0
      %1132 = vmatmul.mubr.bf16.gmra.mrb[0].mxu0 %v1018
      %v1133 = vpop.f32.mrb[0].mxu0
      %v1134 = vadd.f32 0.0, %v1133
      %v1135 = vpop.f32.mrb[0].mxu0
      %v1136 = vpop.f32.mrb[0].mxu0
      %v1137 = vadd.f32 0.0, %v1136
      %v1138 = vpop.f32.mrb[0].mxu0
      %1139 = vmatprep.mubr.bf16.mxu0 0
      %1140 = vmatmul.mubr.bf16.gmra.mrb[0].mxu0 %v1019
      %v1141 = vpop.f32.mrb[0].mxu0
      %v1142 = vadd.f32 0.0, %v1141
      %v1143 = vpop.f32.mrb[0].mxu0
      %v1144 = vpop.f32.mrb[0].mxu0
      %v1145 = vadd.f32 0.0, %v1144
      %v1146 = vpop.f32.mrb[0].mxu0
      %1147 = vmatprep.mubr.bf16.mxu0 0
      %1148 = vmatmul.mubr.bf16.gmra.mrb[0].mxu0 %v1020
      %v1149 = vpop.f32.mrb[0].mxu0
      %v1150 = vadd.f32 0.0, %v1149
      %v1151 = vpop.f32.mrb[0].mxu0
      %v1152 = vpop.f32.mrb[0].mxu0
      %v1153 = vadd.f32 0.0, %v1152
      %v1154 = vpop.f32.mrb[0].mxu0
      %1155 = vmatprep.mubr.bf16.mxu0 0
      %1156 = vmatmul.mubr.bf16.gmra.mrb[0].mxu0 %v1021
      %v1157 = vpop.f32.mrb[0].mxu0
      %v1158 = vadd.f32 0.0, %v1157
      %v1159 = vpop.f32.mrb[0].mxu0
      %v1160 = vpop.f32.mrb[0].mxu0
      %v1161 = vadd.f32 0.0, %v1160
      %v1162 = vpop.f32.mrb[0].mxu0
      %1163 = vmatprep.mubr.bf16.mxu0 0
      %1164 = vmatmul.mubr.bf16.gmra.mrb[0].mxu0 %v1022
      %v1165 = vpop.f32.mrb[0].mxu0
      %v1166 = vadd.f32 0.0, %v1165
      %v1167 = vpop.f32.mrb[0].mxu0
      %v1168 = vpop.f32.mrb[0].mxu0
      %v1169 = vadd.f32 0.0, %v1168
      %v1170 = vpop.f32.mrb[0].mxu0
      %1171 = vmatprep.mubr.bf16.mxu0 0
      %1172 = vmatmul.mubr.bf16.gmra.mrb[0].mxu0 %v1023
      %v1173 = vpop.f32.mrb[0].mxu0
      %v1174 = vadd.f32 0.0, %v1173
      %v1175 = vpop.f32.mrb[0].mxu0
      %v1176 = vpop.f32.mrb[0].mxu0
      %v1177 = vadd.f32 0.0, %v1176
      %v1178 = vpop.f32.mrb[0].mxu0
      %1179 = vmatprep.mubr.bf16.mxu0 0
      %1180 = vmatmul.mubr.bf16.gmra.mrb[0].mxu0 %v1024
      %v1181 = vpop.f32.mrb[0].mxu0
      %v1182 = vadd.f32 0.0, %v1181
      %v1183 = vpop.f32.mrb[0].mxu0
      %v1184 = vpop.f32.mrb[0].mxu0
      %v1185 = vadd.f32 0.0, %v1184
      %v1186 = vpop.f32.mrb[0].mxu0
      %1187 = vmatprep.mubr.bf16.mxu0 0
      %1188 = vmatmul.mubr.bf16.gmra.mrb[0].mxu0 %v1025
      %v1189 = vpop.f32.mrb[0].mxu0
      %v1190 = vadd.f32 0.0, %v1189
      %v1191 = vpop.f32.mrb[0].mxu0
      %v1192 = vpop.f32.mrb[0].mxu0
      %v1193 = vadd.f32 0.0, %v1192
      %v1194 = vpop.f32.mrb[0].mxu0
      %1195 = vmatprep.mubr.bf16.mxu0 0
      %1196 = vmatmul.mubr.bf16.gmra.mrb[0].mxu0 %v1026
      %v1197 = vpop.f32.mrb[0].mxu0
      %v1198 = vadd.f32 0.0, %v1197
      %v1199 = vpop.f32.mrb[0].mxu0
      %v1200 = vpop.f32.mrb[0].mxu0
      %v1201 = vadd.f32 0.0, %v1200
      %v1202 = vpop.f32.mrb[0].mxu0
      %1203 = vmatprep.mubr.bf16.mxu0 0
      %1204 = vmatmul.mubr.bf16.gmra.mrb[0].mxu0 %v1027
      %v1205 = vpop.f32.mrb[0].mxu0
      %v1206 = vadd.f32 0.0, %v1205
      %v1207 = vpop.f32.mrb[0].mxu0
      %v1208 = vpop.f32.mrb[0].mxu0
      %v1209 = vadd.f32 0.0, %v1208
      %v1210 = vpop.f32.mrb[0].mxu0
      %1211 = vmatprep.mubr.bf16.mxu0 0
      %1212 = vmatmul.mubr.bf16.gmra.mrb[0].mxu0 %v1028
      %v1213 = vpop.f32.mrb[0].mxu0
      %v1214 = vadd.f32 0.0, %v1213
      %v1215 = vpop.f32.mrb[0].mxu0
      %v1216 = vpop.f32.mrb[0].mxu0
      %v1217 = vadd.f32 0.0, %v1216
      %v1218 = vpop.f32.mrb[0].mxu0
      %1219 = vmatprep.mubr.bf16.mxu0 0
      %1220 = vmatmul.mubr.bf16.gmra.mrb[0].mxu0 %v1029
      %v1221 = vpop.f32.mrb[0].mxu0
      %v1222 = vadd.f32 0.0, %v1221
      %v1223 = vpop.f32.mrb[0].mxu0
      %v1224 = vpop.f32.mrb[0].mxu0
      %v1225 = vadd.f32 0.0, %v1224
      %v1226 = vpop.f32.mrb[0].mxu0
      %1227 = vmatprep.mubr.bf16.mxu0 0
      %1228 = vmatmul.mubr.bf16.gmra.mrb[0].mxu0 %v1030
      %v1229 = vpop.f32.mrb[0].mxu0
      %v1230 = vadd.f32 0.0, %v1229
      %v1231 = vpop.f32.mrb[0].mxu0
      %v1232 = vpop.f32.mrb[0].mxu0
      %v1233 = vadd.f32 0.0, %v1232
      %v1234 = vpop.f32.mrb[0].mxu0
      %1235 = vmatprep.mubr.bf16.mxu0 0
      %1236 = vmatmul.mubr.bf16.gmra.mrb[0].mxu0 %v1031
      %v1237 = vpop.f32.mrb[0].mxu0
      %v1238 = vadd.f32 0.0, %v1237
      %v1239 = vpop.f32.mrb[0].mxu0
      %v1240 = vpop.f32.mrb[0].mxu0
      %v1241 = vadd.f32 0.0, %v1240
      %v1242 = vpop.f32.mrb[0].mxu0
      %1243 = vmatprep.mubr.bf16.mxu0 0
      %1244 = vmatmul.mubr.bf16.gmra.mrb[0].mxu0 %v1032
      %v1245 = vpop.f32.mrb[0].mxu0
      %v1246 = vadd.f32 0.0, %v1245
      %v1247 = vpop.f32.mrb[0].mxu0
      %v1248 = vpop.f32.mrb[0].mxu0
      %v1249 = vadd.f32 0.0, %v1248
      %v1250 = vpop.f32.mrb[0].mxu0
      %1251 = vmatprep.mubr.bf16.mxu0 0
      %1252 = vmatmul.mubr.bf16.gmra.mrb[0].mxu0 %v1033
      %v1253 = vpop.f32.mrb[0].mxu0
      %v1254 = vadd.f32 0.0, %v1253
      %v1255 = vpop.f32.mrb[0].mxu0
      %v1256 = vpop.f32.mrb[0].mxu0
      %v1257 = vadd.f32 0.0, %v1256
      %v1258 = vpop.f32.mrb[0].mxu0
      %1259 = vdwg.mxu0
      %v1260 = vld [vmem:[#allocation2] sm:$0xff]
      %v1261 = vld [vmem:[#allocation2 + $0x8] sm:$0xff]
      %v1262 = vld [vmem:[#allocation2 + $0x10] sm:$0xff]
      %v1263 = vld [vmem:[#allocation2 + $0x18] sm:$0xff]
      %v1264 = vld [vmem:[#allocation2 + $0x20] sm:$0xff]
      %v1265 = vld [vmem:[#allocation2 + $0x28] sm:$0xff]
      %v1266 = vld [vmem:[#allocation2 + $0x30] sm:$0xff]
      %v1267 = vld [vmem:[#allocation2 + $0x38] sm:$0xff]
      %v1268 = vld [vmem:[#allocation2 + $0x40] sm:$0xff]
      %v1269 = vld [vmem:[#allocation2 + $0x48] sm:$0xff]
      %v1270 = vld [vmem:[#allocation2 + $0x50] sm:$0xff]
      %v1271 = vld [vmem:[#allocation2 + $0x58] sm:$0xff]
      %v1272 = vld [vmem:[#allocation2 + $0x60] sm:$0xff]
      %v1273 = vld [vmem:[#allocation2 + $0x68] sm:$0xff]
      %v1274 = vld [vmem:[#allocation2 + $0x70] sm:$0xff]
      %v1275 = vld [vmem:[#allocation2 + $0x78] sm:$0xff]
      %v1276 = vld [vmem:[#allocation2 + $0x80] sm:$0xff]
      %v1277 = vld [vmem:[#allocation2 + $0x88] sm:$0xff]
      %v1278 = vld [vmem:[#allocation2 + $0x90] sm:$0xff]
      %v1279 = vld [vmem:[#allocation2 + $0x98] sm:$0xff]
      %v1280 = vld [vmem:[#allocation2 + $0xa0] sm:$0xff]
      %v1281 = vld [vmem:[#allocation2 + $0xa8] sm:$0xff]
      %v1282 = vld [vmem:[#allocation2 + $0xb0] sm:$0xff]
      %v1283 = vld [vmem:[#allocation2 + $0xb8] sm:$0xff]
      %v1284 = vld [vmem:[#allocation2 + $0xc0] sm:$0xff]
      %v1285 = vld [vmem:[#allocation2 + $0xc8] sm:$0xff]
      %v1286 = vld [vmem:[#allocation2 + $0xd0] sm:$0xff]
      %v1287 = vld [vmem:[#allocation2 + $0xd8] sm:$0xff]
      %v1288 = vld [vmem:[#allocation2 + $0xe0] sm:$0xff]
      %v1289 = vld [vmem:[#allocation2 + $0xe8] sm:$0xff]
      %v1290 = vld [vmem:[#allocation2 + $0xf0] sm:$0xff]
      %v1291 = vld [vmem:[#allocation2 + $0xf8] sm:$0xff]
      %v1292 = vadd.f32 %v1260, %v1134
      %v1293 = vadd.f32 %v1261, %v1137
      %v1294 = vadd.f32 %v1262, %v1142
      %v1295 = vadd.f32 %v1263, %v1145
      %v1296 = vadd.f32 %v1264, %v1150
      %v1297 = vadd.f32 %v1265, %v1153
      %v1298 = vadd.f32 %v1266, %v1158
      %v1299 = vadd.f32 %v1267, %v1161
      %v1300 = vadd.f32 %v1268, %v1166
      %v1301 = vadd.f32 %v1269, %v1169
      %v1302 = vadd.f32 %v1270, %v1174
      %v1303 = vadd.f32 %v1271, %v1177
      %v1304 = vadd.f32 %v1272, %v1182
      %v1305 = vadd.f32 %v1273, %v1185
      %v1306 = vadd.f32 %v1274, %v1190
      %v1307 = vadd.f32 %v1275, %v1193
      %v1308 = vadd.f32 %v1276, %v1198
      %v1309 = vadd.f32 %v1277, %v1201
      %v1310 = vadd.f32 %v1278, %v1206
      %v1311 = vadd.f32 %v1279, %v1209
      %v1312 = vadd.f32 %v1280, %v1214
      %v1313 = vadd.f32 %v1281, %v1217
      %v1314 = vadd.f32 %v1282, %v1222
      %v1315 = vadd.f32 %v1283, %v1225
      %v1316 = vadd.f32 %v1284, %v1230
      %v1317 = vadd.f32 %v1285, %v1233
      %v1318 = vadd.f32 %v1286, %v1238
      %v1319 = vadd.f32 %v1287, %v1241
      %v1320 = vadd.f32 %v1288, %v1246
      %v1321 = vadd.f32 %v1289, %v1249
      %v1322 = vadd.f32 %v1290, %v1254
      %v1323 = vadd.f32 %v1291, %v1257
      %1324 = vst [vmem:[#allocation2] sm:$0xff] %v1292
      %1325 = vst [vmem:[#allocation2 + $0x8] sm:$0xff] %v1293
      %1326 = vst [vmem:[#allocation2 + $0x10] sm:$0xff] %v1294
      %1327 = vst [vmem:[#allocation2 + $0x18] sm:$0xff] %v1295
      %1328 = vst [vmem:[#allocation2 + $0x20] sm:$0xff] %v1296
      %1329 = vst [vmem:[#allocation2 + $0x28] sm:$0xff] %v1297
      %1330 = vst [vmem:[#allocation2 + $0x30] sm:$0xff] %v1298
      %1331 = vst [vmem:[#allocation2 + $0x38] sm:$0xff] %v1299
      %1332 = vst [vmem:[#allocation2 + $0x40] sm:$0xff] %v1300
      %1333 = vst [vmem:[#allocation2 + $0x48] sm:$0xff] %v1301
      %1334 = vst [vmem:[#allocation2 + $0x50] sm:$0xff] %v1302
      %1335 = vst [vmem:[#allocation2 + $0x58] sm:$0xff] %v1303
      %1336 = vst [vmem:[#allocation2 + $0x60] sm:$0xff] %v1304
      %1337 = vst [vmem:[#allocation2 + $0x68] sm:$0xff] %v1305
      %1338 = vst [vmem:[#allocation2 + $0x70] sm:$0xff] %v1306
      %1339 = vst [vmem:[#allocation2 + $0x78] sm:$0xff] %v1307
      %1340 = vst [vmem:[#allocation2 + $0x80] sm:$0xff] %v1308
      %1341 = vst [vmem:[#allocation2 + $0x88] sm:$0xff] %v1309
      %1342 = vst [vmem:[#allocation2 + $0x90] sm:$0xff] %v1310
      %1343 = vst [vmem:[#allocation2 + $0x98] sm:$0xff] %v1311
      %1344 = vst [vmem:[#allocation2 + $0xa0] sm:$0xff] %v1312
      %1345 = vst [vmem:[#allocation2 + $0xa8] sm:$0xff] %v1313
      %1346 = vst [vmem:[#allocation2 + $0xb0] sm:$0xff] %v1314
      %1347 = vst [vmem:[#allocation2 + $0xb8] sm:$0xff] %v1315
      %1348 = vst [vmem:[#allocation2 + $0xc0] sm:$0xff] %v1316
      %1349 = vst [vmem:[#allocation2 + $0xc8] sm:$0xff] %v1317
      %1350 = vst [vmem:[#allocation2 + $0xd0] sm:$0xff] %v1318
      %1351 = vst [vmem:[#allocation2 + $0xd8] sm:$0xff] %v1319
      %1352 = vst [vmem:[#allocation2 + $0xe0] sm:$0xff] %v1320
      %1353 = vst [vmem:[#allocation2 + $0xe8] sm:$0xff] %v1321
      %1354 = vst [vmem:[#allocation2 + $0xf0] sm:$0xff] %v1322
      %1355 = vst [vmem:[#allocation2 + $0xf8] sm:$0xff] %v1323
      %s1356 = sadd.s32 %s304, 4294967295
      %s1357 = scalar_lea.vmem %s268, %s1356
      %v1358 = vld [vmem:[%s1357] sm:$0xff]
      %v1359 = vld [vmem:[%s1357 + $0x8] sm:$0xff]
      %v1360 = vld [vmem:[%s1357 + $0x10] sm:$0xff]
      %v1361 = vld [vmem:[%s1357 + $0x18] sm:$0xff]
      %v1362 = vld [vmem:[%s1357 + $0x20] sm:$0xff]
      %v1363 = vld [vmem:[%s1357 + $0x28] sm:$0xff]
      %v1364 = vld [vmem:[%s1357 + $0x30] sm:$0xff]
      %v1365 = vld [vmem:[%s1357 + $0x38] sm:$0xff]
      %v1366 = vld [vmem:[%s1357 + $0x40] sm:$0xff]
      %v1367 = vld [vmem:[%s1357 + $0x48] sm:$0xff]
      %v1368 = vld [vmem:[%s1357 + $0x50] sm:$0xff]
      %v1369 = vld [vmem:[%s1357 + $0x58] sm:$0xff]
      %v1370 = vld [vmem:[%s1357 + $0x60] sm:$0xff]
      %v1371 = vld [vmem:[%s1357 + $0x68] sm:$0xff]
      %v1372 = vld [vmem:[%s1357 + $0x70] sm:$0xff]
      %v1373 = vld [vmem:[%s1357 + $0x78] sm:$0xff]
      %v1374 = vld [vmem:[%s1357 + $0x80] sm:$0xff]
      %v1375 = vld [vmem:[%s1357 + $0x88] sm:$0xff]
      %v1376 = vld [vmem:[%s1357 + $0x90] sm:$0xff]
      %v1377 = vld [vmem:[%s1357 + $0x98] sm:$0xff]
      %v1378 = vld [vmem:[%s1357 + $0xa0] sm:$0xff]
      %v1379 = vld [vmem:[%s1357 + $0xa8] sm:$0xff]
      %v1380 = vld [vmem:[%s1357 + $0xb0] sm:$0xff]
      %v1381 = vld [vmem:[%s1357 + $0xb8] sm:$0xff]
      %v1382 = vld [vmem:[%s1357 + $0xc0] sm:$0xff]
      %v1383 = vld [vmem:[%s1357 + $0xc8] sm:$0xff]
      %v1384 = vld [vmem:[%s1357 + $0xd0] sm:$0xff]
      %v1385 = vld [vmem:[%s1357 + $0xd8] sm:$0xff]
      %v1386 = vld [vmem:[%s1357 + $0xe0] sm:$0xff]
      %v1387 = vld [vmem:[%s1357 + $0xe8] sm:$0xff]
      %v1388 = vld [vmem:[%s1357 + $0xf0] sm:$0xff]
      %v1389 = vld [vmem:[%s1357 + $0xf8] sm:$0xff]
      %v1390 = vpack.c.bf16 %v1359, %v1358
      %v1391 = vpack.c.bf16 %v1361, %v1360
      %v1392 = vpack.c.bf16 %v1363, %v1362
      %v1393 = vpack.c.bf16 %v1365, %v1364
      %v1394 = vpack.c.bf16 %v1367, %v1366
      %v1395 = vpack.c.bf16 %v1369, %v1368
      %v1396 = vpack.c.bf16 %v1371, %v1370
      %v1397 = vpack.c.bf16 %v1373, %v1372
      %v1398 = vpack.c.bf16 %v1375, %v1374
      %v1399 = vpack.c.bf16 %v1377, %v1376
      %v1400 = vpack.c.bf16 %v1379, %v1378
      %v1401 = vpack.c.bf16 %v1381, %v1380
      %v1402 = vpack.c.bf16 %v1383, %v1382
      %v1403 = vpack.c.bf16 %v1385, %v1384
      %v1404 = vpack.c.bf16 %v1387, %v1386
      %v1405 = vpack.c.bf16 %v1389, %v1388
      %s1406 = scalar_lea.vmem %s272, 192
      %v1407 = vld [vmem:[%s1406] sm:$0xf]
      %v1408 = vld [vmem:[%s1406 + $0x4] sm:$0xf]
      %v1409 = vld [vmem:[%s1406 + $0x8] sm:$0xf]
      %v1410 = vld [vmem:[%s1406 + $0xc] sm:$0xf]
      %v1411 = vld [vmem:[%s1406 + $0x10] sm:$0xf]
      %v1412 = vld [vmem:[%s1406 + $0x14] sm:$0xf]
      %v1413 = vld [vmem:[%s1406 + $0x18] sm:$0xf]
      %v1414 = vld [vmem:[%s1406 + $0x1c] sm:$0xf]
      %v1415 = vld [vmem:[%s1406 + $0x20] sm:$0xf]
      %v1416 = vld [vmem:[%s1406 + $0x24] sm:$0xf]
      %v1417 = vld [vmem:[%s1406 + $0x28] sm:$0xf]
      %v1418 = vld [vmem:[%s1406 + $0x2c] sm:$0xf]
      %v1419 = vld [vmem:[%s1406 + $0x30] sm:$0xf]
      %v1420 = vld [vmem:[%s1406 + $0x34] sm:$0xf]
      %v1421 = vld [vmem:[%s1406 + $0x38] sm:$0xf]
      %v1422 = vld [vmem:[%s1406 + $0x3c] sm:$0xf]
      %v1439 = vunpack.c.l.b16 %v1407
      %v1440 = vunpack.c.l.b16 %v1408
      %v1441 = vunpack.c.l.b16 %v1409
      %v1442 = vunpack.c.l.b16 %v1410
      %v1443 = vunpack.c.l.b16 %v1411
      %v1444 = vunpack.c.l.b16 %v1412
      %v1445 = vunpack.c.l.b16 %v1413
      %v1446 = vunpack.c.l.b16 %v1414
      %v1447 = vunpack.c.l.b16 %v1415
      %v1448 = vunpack.c.l.b16 %v1416
      %v1449 = vunpack.c.l.b16 %v1417
      %v1450 = vunpack.c.l.b16 %v1418
      %v1451 = vunpack.c.l.b16 %v1419
      %v1452 = vunpack.c.l.b16 %v1420
      %v1453 = vunpack.c.l.b16 %v1421
      %v1454 = vunpack.c.l.b16 %v1422
      %v1455 = vpack.c.b16 %v1440, %v1439
      %v1456 = vpack.c.b16 %v1442, %v1441
      %v1457 = vpack.c.b16 %v1444, %v1443
      %v1458 = vpack.c.b16 %v1446, %v1445
      %v1459 = vpack.c.b16 %v1448, %v1447
      %v1460 = vpack.c.b16 %v1450, %v1449
      %v1461 = vpack.c.b16 %v1452, %v1451
      %v1462 = vpack.c.b16 %v1454, %v1453
      %1471 = vmatprep.subr.bf16.mxu0 0
      %1472 = vmatpush1.bf16.msra.mxu0 %v1455
      %1473 = vmatprep.subr.bf16.mxu0 0
      %1474 = vmatpush1.bf16.msra.mxu0 %v1456
      %1475 = vmatprep.subr.bf16.mxu0 0
      %1476 = vmatpush1.bf16.msra.mxu0 %v1457
      %1477 = vmatprep.subr.bf16.mxu0 0
      %1478 = vmatpush1.bf16.msra.mxu0 %v1458
      %1479 = vmatprep.subr.bf16.mxu0 0
      %1480 = vmatpush1.bf16.msra.mxu0 %v1459
      %1481 = vmatprep.subr.bf16.mxu0 0
      %1482 = vmatpush1.bf16.msra.mxu0 %v1460
      %1483 = vmatprep.subr.bf16.mxu0 0
      %1484 = vmatpush1.bf16.msra.mxu0 %v1461
      %1485 = vmatprep.subr.bf16.mxu0 0
      %1486 = vmatpush1.bf16.msra.mxu0 %v1462
      %1487 = vmatprep.subr.bf16.mxu0 0
      %1488 = vmatpush1.bf16.msra.mxu0 0
      %1489 = vmatprep.subr.bf16.mxu0 0
      %1490 = vmatpush1.bf16.msra.mxu0 0
      %1491 = vmatprep.subr.bf16.mxu0 0
      %1492 = vmatpush1.bf16.msra.mxu0 0
      %1493 = vmatprep.subr.bf16.mxu0 0
      %1494 = vmatpush1.bf16.msra.mxu0 0
      %1495 = vmatprep.subr.bf16.mxu0 0
      %1496 = vmatpush1.bf16.msra.mxu0 0
      %1497 = vmatprep.subr.bf16.mxu0 0
      %1498 = vmatpush1.bf16.msra.mxu0 0
      %1499 = vmatprep.subr.bf16.mxu0 0
      %1500 = vmatpush1.bf16.msra.mxu0 0
      %1501 = vmatprep.subr.bf16.mxu0 0
      %1502 = vmatpush1.bf16.msra.mxu0 0
      %1503 = vmatprep.mubr.bf16.mxu0 0
      %1504 = vmatmul.mubr.bf16.gmra.mrb[0].mxu0 %v1390
      %v1505 = vpop.f32.mrb[0].mxu0
      %v1506 = vadd.f32 0.0, %v1505
      %v1507 = vpop.f32.mrb[0].mxu0
      %v1508 = vpop.f32.mrb[0].mxu0
      %v1509 = vadd.f32 0.0, %v1508
      %v1510 = vpop.f32.mrb[0].mxu0
      %1511 = vmatprep.mubr.bf16.mxu0 0
      %1512 = vmatmul.mubr.bf16.gmra.mrb[0].mxu0 %v1391
      %v1513 = vpop.f32.mrb[0].mxu0
      %v1514 = vadd.f32 0.0, %v1513
      %v1515 = vpop.f32.mrb[0].mxu0
      %v1516 = vpop.f32.mrb[0].mxu0
      %v1517 = vadd.f32 0.0, %v1516
      %v1518 = vpop.f32.mrb[0].mxu0
      %1519 = vmatprep.mubr.bf16.mxu0 0
      %1520 = vmatmul.mubr.bf16.gmra.mrb[0].mxu0 %v1392
      %v1521 = vpop.f32.mrb[0].mxu0
      %v1522 = vadd.f32 0.0, %v1521
      %v1523 = vpop.f32.mrb[0].mxu0
      %v1524 = vpop.f32.mrb[0].mxu0
      %v1525 = vadd.f32 0.0, %v1524
      %v1526 = vpop.f32.mrb[0].mxu0
      %1527 = vmatprep.mubr.bf16.mxu0 0
      %1528 = vmatmul.mubr.bf16.gmra.mrb[0].mxu0 %v1393
      %v1529 = vpop.f32.mrb[0].mxu0
      %v1530 = vadd.f32 0.0, %v1529
      %v1531 = vpop.f32.mrb[0].mxu0
      %v1532 = vpop.f32.mrb[0].mxu0
      %v1533 = vadd.f32 0.0, %v1532
      %v1534 = vpop.f32.mrb[0].mxu0
      %1535 = vmatprep.mubr.bf16.mxu0 0
      %1536 = vmatmul.mubr.bf16.gmra.mrb[0].mxu0 %v1394
      %v1537 = vpop.f32.mrb[0].mxu0
      %v1538 = vadd.f32 0.0, %v1537
      %v1539 = vpop.f32.mrb[0].mxu0
      %v1540 = vpop.f32.mrb[0].mxu0
      %v1541 = vadd.f32 0.0, %v1540
      %v1542 = vpop.f32.mrb[0].mxu0
      %1543 = vmatprep.mubr.bf16.mxu0 0
      %1544 = vmatmul.mubr.bf16.gmra.mrb[0].mxu0 %v1395
      %v1545 = vpop.f32.mrb[0].mxu0
      %v1546 = vadd.f32 0.0, %v1545
      %v1547 = vpop.f32.mrb[0].mxu0
      %v1548 = vpop.f32.mrb[0].mxu0
      %v1549 = vadd.f32 0.0, %v1548
      %v1550 = vpop.f32.mrb[0].mxu0
      %1551 = vmatprep.mubr.bf16.mxu0 0
      %1552 = vmatmul.mubr.bf16.gmra.mrb[0].mxu0 %v1396
      %v1553 = vpop.f32.mrb[0].mxu0
      %v1554 = vadd.f32 0.0, %v1553
      %v1555 = vpop.f32.mrb[0].mxu0
      %v1556 = vpop.f32.mrb[0].mxu0
      %v1557 = vadd.f32 0.0, %v1556
      %v1558 = vpop.f32.mrb[0].mxu0
      %1559 = vmatprep.mubr.bf16.mxu0 0
      %1560 = vmatmul.mubr.bf16.gmra.mrb[0].mxu0 %v1397
      %v1561 = vpop.f32.mrb[0].mxu0
      %v1562 = vadd.f32 0.0, %v1561
      %v1563 = vpop.f32.mrb[0].mxu0
      %v1564 = vpop.f32.mrb[0].mxu0
      %v1565 = vadd.f32 0.0, %v1564
      %v1566 = vpop.f32.mrb[0].mxu0
      %1567 = vmatprep.mubr.bf16.mxu0 0
      %1568 = vmatmul.mubr.bf16.gmra.mrb[0].mxu0 %v1398
      %v1569 = vpop.f32.mrb[0].mxu0
      %v1570 = vadd.f32 0.0, %v1569
      %v1571 = vpop.f32.mrb[0].mxu0
      %v1572 = vpop.f32.mrb[0].mxu0
      %v1573 = vadd.f32 0.0, %v1572
      %v1574 = vpop.f32.mrb[0].mxu0
      %1575 = vmatprep.mubr.bf16.mxu0 0
      %1576 = vmatmul.mubr.bf16.gmra.mrb[0].mxu0 %v1399
      %v1577 = vpop.f32.mrb[0].mxu0
      %v1578 = vadd.f32 0.0, %v1577
      %v1579 = vpop.f32.mrb[0].mxu0
      %v1580 = vpop.f32.mrb[0].mxu0
      %v1581 = vadd.f32 0.0, %v1580
      %v1582 = vpop.f32.mrb[0].mxu0
      %1583 = vmatprep.mubr.bf16.mxu0 0
      %1584 = vmatmul.mubr.bf16.gmra.mrb[0].mxu0 %v1400
      %v1585 = vpop.f32.mrb[0].mxu0
      %v1586 = vadd.f32 0.0, %v1585
      %v1587 = vpop.f32.mrb[0].mxu0
      %v1588 = vpop.f32.mrb[0].mxu0
      %v1589 = vadd.f32 0.0, %v1588
      %v1590 = vpop.f32.mrb[0].mxu0
      %1591 = vmatprep.mubr.bf16.mxu0 0
      %1592 = vmatmul.mubr.bf16.gmra.mrb[0].mxu0 %v1401
      %v1593 = vpop.f32.mrb[0].mxu0
      %v1594 = vadd.f32 0.0, %v1593
      %v1595 = vpop.f32.mrb[0].mxu0
      %v1596 = vpop.f32.mrb[0].mxu0
      %v1597 = vadd.f32 0.0, %v1596
      %v1598 = vpop.f32.mrb[0].mxu0
      %1599 = vmatprep.mubr.bf16.mxu0 0
      %1600 = vmatmul.mubr.bf16.gmra.mrb[0].mxu0 %v1402
      %v1601 = vpop.f32.mrb[0].mxu0
      %v1602 = vadd.f32 0.0, %v1601
      %v1603 = vpop.f32.mrb[0].mxu0
      %v1604 = vpop.f32.mrb[0].mxu0
      %v1605 = vadd.f32 0.0, %v1604
      %v1606 = vpop.f32.mrb[0].mxu0
      %1607 = vmatprep.mubr.bf16.mxu0 0
      %1608 = vmatmul.mubr.bf16.gmra.mrb[0].mxu0 %v1403
      %v1609 = vpop.f32.mrb[0].mxu0
      %v1610 = vadd.f32 0.0, %v1609
      %v1611 = vpop.f32.mrb[0].mxu0
      %v1612 = vpop.f32.mrb[0].mxu0
      %v1613 = vadd.f32 0.0, %v1612
      %v1614 = vpop.f32.mrb[0].mxu0
      %1615 = vmatprep.mubr.bf16.mxu0 0
      %1616 = vmatmul.mubr.bf16.gmra.mrb[0].mxu0 %v1404
      %v1617 = vpop.f32.mrb[0].mxu0
      %v1618 = vadd.f32 0.0, %v1617
      %v1619 = vpop.f32.mrb[0].mxu0
      %v1620 = vpop.f32.mrb[0].mxu0
      %v1621 = vadd.f32 0.0, %v1620
      %v1622 = vpop.f32.mrb[0].mxu0
      %1623 = vmatprep.mubr.bf16.mxu0 0
      %1624 = vmatmul.mubr.bf16.gmra.mrb[0].mxu0 %v1405
      %v1625 = vpop.f32.mrb[0].mxu0
      %v1626 = vadd.f32 0.0, %v1625
      %v1627 = vpop.f32.mrb[0].mxu0
      %v1628 = vpop.f32.mrb[0].mxu0
      %v1629 = vadd.f32 0.0, %v1628
      %v1630 = vpop.f32.mrb[0].mxu0
      %1631 = vdwg.mxu0
      %v1632 = vld [vmem:[#allocation2] sm:$0xff]
      %v1633 = vld [vmem:[#allocation2 + $0x8] sm:$0xff]
      %v1634 = vld [vmem:[#allocation2 + $0x10] sm:$0xff]
      %v1635 = vld [vmem:[#allocation2 + $0x18] sm:$0xff]
      %v1636 = vld [vmem:[#allocation2 + $0x20] sm:$0xff]
      %v1637 = vld [vmem:[#allocation2 + $0x28] sm:$0xff]
      %v1638 = vld [vmem:[#allocation2 + $0x30] sm:$0xff]
      %v1639 = vld [vmem:[#allocation2 + $0x38] sm:$0xff]
      %v1640 = vld [vmem:[#allocation2 + $0x40] sm:$0xff]
      %v1641 = vld [vmem:[#allocation2 + $0x48] sm:$0xff]
      %v1642 = vld [vmem:[#allocation2 + $0x50] sm:$0xff]
      %v1643 = vld [vmem:[#allocation2 + $0x58] sm:$0xff]
      %v1644 = vld [vmem:[#allocation2 + $0x60] sm:$0xff]
      %v1645 = vld [vmem:[#allocation2 + $0x68] sm:$0xff]
      %v1646 = vld [vmem:[#allocation2 + $0x70] sm:$0xff]
      %v1647 = vld [vmem:[#allocation2 + $0x78] sm:$0xff]
      %v1648 = vld [vmem:[#allocation2 + $0x80] sm:$0xff]
      %v1649 = vld [vmem:[#allocation2 + $0x88] sm:$0xff]
      %v1650 = vld [vmem:[#allocation2 + $0x90] sm:$0xff]
      %v1651 = vld [vmem:[#allocation2 + $0x98] sm:$0xff]
      %v1652 = vld [vmem:[#allocation2 + $0xa0] sm:$0xff]
      %v1653 = vld [vmem:[#allocation2 + $0xa8] sm:$0xff]
      %v1654 = vld [vmem:[#allocation2 + $0xb0] sm:$0xff]
      %v1655 = vld [vmem:[#allocation2 + $0xb8] sm:$0xff]
      %v1656 = vld [vmem:[#allocation2 + $0xc0] sm:$0xff]
      %v1657 = vld [vmem:[#allocation2 + $0xc8] sm:$0xff]
      %v1658 = vld [vmem:[#allocation2 + $0xd0] sm:$0xff]
      %v1659 = vld [vmem:[#allocation2 + $0xd8] sm:$0xff]
      %v1660 = vld [vmem:[#allocation2 + $0xe0] sm:$0xff]
      %v1661 = vld [vmem:[#allocation2 + $0xe8] sm:$0xff]
      %v1662 = vld [vmem:[#allocation2 + $0xf0] sm:$0xff]
      %v1663 = vld [vmem:[#allocation2 + $0xf8] sm:$0xff]
      %v1664 = vadd.f32 %v1632, %v1506
      %v1665 = vadd.f32 %v1633, %v1509
      %v1666 = vadd.f32 %v1634, %v1514
      %v1667 = vadd.f32 %v1635, %v1517
      %v1668 = vadd.f32 %v1636, %v1522
      %v1669 = vadd.f32 %v1637, %v1525
      %v1670 = vadd.f32 %v1638, %v1530
      %v1671 = vadd.f32 %v1639, %v1533
      %v1672 = vadd.f32 %v1640, %v1538
      %v1673 = vadd.f32 %v1641, %v1541
      %v1674 = vadd.f32 %v1642, %v1546
      %v1675 = vadd.f32 %v1643, %v1549
      %v1676 = vadd.f32 %v1644, %v1554
      %v1677 = vadd.f32 %v1645, %v1557
      %v1678 = vadd.f32 %v1646, %v1562
      %v1679 = vadd.f32 %v1647, %v1565
      %v1680 = vadd.f32 %v1648, %v1570
      %v1681 = vadd.f32 %v1649, %v1573
      %v1682 = vadd.f32 %v1650, %v1578
      %v1683 = vadd.f32 %v1651, %v1581
      %v1684 = vadd.f32 %v1652, %v1586
      %v1685 = vadd.f32 %v1653, %v1589
      %v1686 = vadd.f32 %v1654, %v1594
      %v1687 = vadd.f32 %v1655, %v1597
      %v1688 = vadd.f32 %v1656, %v1602
      %v1689 = vadd.f32 %v1657, %v1605
      %v1690 = vadd.f32 %v1658, %v1610
      %v1691 = vadd.f32 %v1659, %v1613
      %v1692 = vadd.f32 %v1660, %v1618
      %v1693 = vadd.f32 %v1661, %v1621
      %v1694 = vadd.f32 %v1662, %v1626
      %v1695 = vadd.f32 %v1663, %v1629
      %1696 = vst [vmem:[#allocation2] sm:$0xff] %v1664
      %1697 = vst [vmem:[#allocation2 + $0x8] sm:$0xff] %v1665
      %1698 = vst [vmem:[#allocation2 + $0x10] sm:$0xff] %v1666
      %1699 = vst [vmem:[#allocation2 + $0x18] sm:$0xff] %v1667
      %1700 = vst [vmem:[#allocation2 + $0x20] sm:$0xff] %v1668
      %1701 = vst [vmem:[#allocation2 + $0x28] sm:$0xff] %v1669
      %1702 = vst [vmem:[#allocation2 + $0x30] sm:$0xff] %v1670
      %1703 = vst [vmem:[#allocation2 + $0x38] sm:$0xff] %v1671
      %1704 = vst [vmem:[#allocation2 + $0x40] sm:$0xff] %v1672
      %1705 = vst [vmem:[#allocation2 + $0x48] sm:$0xff] %v1673
      %1706 = vst [vmem:[#allocation2 + $0x50] sm:$0xff] %v1674
      %1707 = vst [vmem:[#allocation2 + $0x58] sm:$0xff] %v1675
      %1708 = vst [vmem:[#allocation2 + $0x60] sm:$0xff] %v1676
      %1709 = vst [vmem:[#allocation2 + $0x68] sm:$0xff] %v1677
      %1710 = vst [vmem:[#allocation2 + $0x70] sm:$0xff] %v1678
      %1711 = vst [vmem:[#allocation2 + $0x78] sm:$0xff] %v1679
      %1712 = vst [vmem:[#allocation2 + $0x80] sm:$0xff] %v1680
      %1713 = vst [vmem:[#allocation2 + $0x88] sm:$0xff] %v1681
      %1714 = vst [vmem:[#allocation2 + $0x90] sm:$0xff] %v1682
      %1715 = vst [vmem:[#allocation2 + $0x98] sm:$0xff] %v1683
      %1716 = vst [vmem:[#allocation2 + $0xa0] sm:$0xff] %v1684
      %1717 = vst [vmem:[#allocation2 + $0xa8] sm:$0xff] %v1685
      %1718 = vst [vmem:[#allocation2 + $0xb0] sm:$0xff] %v1686
      %1719 = vst [vmem:[#allocation2 + $0xb8] sm:$0xff] %v1687
      %1720 = vst [vmem:[#allocation2 + $0xc0] sm:$0xff] %v1688
      %1721 = vst [vmem:[#allocation2 + $0xc8] sm:$0xff] %v1689
      %1722 = vst [vmem:[#allocation2 + $0xd0] sm:$0xff] %v1690
      %1723 = vst [vmem:[#allocation2 + $0xd8] sm:$0xff] %v1691
      %1724 = vst [vmem:[#allocation2 + $0xe0] sm:$0xff] %v1692
      %1725 = vst [vmem:[#allocation2 + $0xe8] sm:$0xff] %v1693
      %1726 = vst [vmem:[#allocation2 + $0xf0] sm:$0xff] %v1694
      %1727 = vst [vmem:[#allocation2 + $0xf8] sm:$0xff] %v1695
      %s1728 = scalar_lea.vmem %s268, %s304
      %v1729 = vld [vmem:[%s1728] sm:$0xff]
      %v1730 = vld [vmem:[%s1728 + $0x8] sm:$0xff]
      %v1731 = vld [vmem:[%s1728 + $0x10] sm:$0xff]
      %v1732 = vld [vmem:[%s1728 + $0x18] sm:$0xff]
      %v1733 = vld [vmem:[%s1728 + $0x20] sm:$0xff]
      %v1734 = vld [vmem:[%s1728 + $0x28] sm:$0xff]
      %v1735 = vld [vmem:[%s1728 + $0x30] sm:$0xff]
      %v1736 = vld [vmem:[%s1728 + $0x38] sm:$0xff]
      %v1737 = vld [vmem:[%s1728 + $0x40] sm:$0xff]
      %v1738 = vld [vmem:[%s1728 + $0x48] sm:$0xff]
      %v1739 = vld [vmem:[%s1728 + $0x50] sm:$0xff]
      %v1740 = vld [vmem:[%s1728 + $0x58] sm:$0xff]
      %v1741 = vld [vmem:[%s1728 + $0x60] sm:$0xff]
      %v1742 = vld [vmem:[%s1728 + $0x68] sm:$0xff]
      %v1743 = vld [vmem:[%s1728 + $0x70] sm:$0xff]
      %v1744 = vld [vmem:[%s1728 + $0x78] sm:$0xff]
      %v1745 = vld [vmem:[%s1728 + $0x80] sm:$0xff]
      %v1746 = vld [vmem:[%s1728 + $0x88] sm:$0xff]
      %v1747 = vld [vmem:[%s1728 + $0x90] sm:$0xff]
      %v1748 = vld [vmem:[%s1728 + $0x98] sm:$0xff]
      %v1749 = vld [vmem:[%s1728 + $0xa0] sm:$0xff]
      %v1750 = vld [vmem:[%s1728 + $0xa8] sm:$0xff]
      %v1751 = vld [vmem:[%s1728 + $0xb0] sm:$0xff]
      %v1752 = vld [vmem:[%s1728 + $0xb8] sm:$0xff]
      %v1753 = vld [vmem:[%s1728 + $0xc0] sm:$0xff]
      %v1754 = vld [vmem:[%s1728 + $0xc8] sm:$0xff]
      %v1755 = vld [vmem:[%s1728 + $0xd0] sm:$0xff]
      %v1756 = vld [vmem:[%s1728 + $0xd8] sm:$0xff]
      %v1757 = vld [vmem:[%s1728 + $0xe0] sm:$0xff]
      %v1758 = vld [vmem:[%s1728 + $0xe8] sm:$0xff]
      %v1759 = vld [vmem:[%s1728 + $0xf0] sm:$0xff]
      %v1760 = vld [vmem:[%s1728 + $0xf8] sm:$0xff]
      %v1761 = vpack.c.bf16 %v1730, %v1729
      %v1762 = vpack.c.bf16 %v1732, %v1731
      %v1763 = vpack.c.bf16 %v1734, %v1733
      %v1764 = vpack.c.bf16 %v1736, %v1735
      %v1765 = vpack.c.bf16 %v1738, %v1737
      %v1766 = vpack.c.bf16 %v1740, %v1739
      %v1767 = vpack.c.bf16 %v1742, %v1741
      %v1768 = vpack.c.bf16 %v1744, %v1743
      %v1769 = vpack.c.bf16 %v1746, %v1745
      %v1770 = vpack.c.bf16 %v1748, %v1747
      %v1771 = vpack.c.bf16 %v1750, %v1749
      %v1772 = vpack.c.bf16 %v1752, %v1751
      %v1773 = vpack.c.bf16 %v1754, %v1753
      %v1774 = vpack.c.bf16 %v1756, %v1755
      %v1775 = vpack.c.bf16 %v1758, %v1757
      %v1776 = vpack.c.bf16 %v1760, %v1759
      %s1777 = scalar_lea.vmem %s272, 256
      %v1778 = vld [vmem:[%s1777] sm:$0xf]
      %v1779 = vld [vmem:[%s1777 + $0x4] sm:$0xf]
      %v1780 = vld [vmem:[%s1777 + $0x8] sm:$0xf]
      %v1781 = vld [vmem:[%s1777 + $0xc] sm:$0xf]
      %v1782 = vld [vmem:[%s1777 + $0x10] sm:$0xf]
      %v1783 = vld [vmem:[%s1777 + $0x14] sm:$0xf]
      %v1784 = vld [vmem:[%s1777 + $0x18] sm:$0xf]
      %v1785 = vld [vmem:[%s1777 + $0x1c] sm:$0xf]
      %v1786 = vld [vmem:[%s1777 + $0x20] sm:$0xf]
      %v1787 = vld [vmem:[%s1777 + $0x24] sm:$0xf]
      %v1788 = vld [vmem:[%s1777 + $0x28] sm:$0xf]
      %v1789 = vld [vmem:[%s1777 + $0x2c] sm:$0xf]
      %v1790 = vld [vmem:[%s1777 + $0x30] sm:$0xf]
      %v1791 = vld [vmem:[%s1777 + $0x34] sm:$0xf]
      %v1792 = vld [vmem:[%s1777 + $0x38] sm:$0xf]
      %v1793 = vld [vmem:[%s1777 + $0x3c] sm:$0xf]
      %v1810 = vunpack.c.l.b16 %v1778
      %v1811 = vunpack.c.l.b16 %v1779
      %v1812 = vunpack.c.l.b16 %v1780
      %v1813 = vunpack.c.l.b16 %v1781
      %v1814 = vunpack.c.l.b16 %v1782
      %v1815 = vunpack.c.l.b16 %v1783
      %v1816 = vunpack.c.l.b16 %v1784
      %v1817 = vunpack.c.l.b16 %v1785
      %v1818 = vunpack.c.l.b16 %v1786
      %v1819 = vunpack.c.l.b16 %v1787
      %v1820 = vunpack.c.l.b16 %v1788
      %v1821 = vunpack.c.l.b16 %v1789
      %v1822 = vunpack.c.l.b16 %v1790
      %v1823 = vunpack.c.l.b16 %v1791
      %v1824 = vunpack.c.l.b16 %v1792
      %v1825 = vunpack.c.l.b16 %v1793
      %v1826 = vpack.c.b16 %v1811, %v1810
      %v1827 = vpack.c.b16 %v1813, %v1812
      %v1828 = vpack.c.b16 %v1815, %v1814
      %v1829 = vpack.c.b16 %v1817, %v1816
      %v1830 = vpack.c.b16 %v1819, %v1818
      %v1831 = vpack.c.b16 %v1821, %v1820
      %v1832 = vpack.c.b16 %v1823, %v1822
      %v1833 = vpack.c.b16 %v1825, %v1824
      %1842 = vmatprep.subr.bf16.mxu0 0
      %1843 = vmatpush1.bf16.msra.mxu0 %v1826
      %1844 = vmatprep.subr.bf16.mxu0 0
      %1845 = vmatpush1.bf16.msra.mxu0 %v1827
      %1846 = vmatprep.subr.bf16.mxu0 0
      %1847 = vmatpush1.bf16.msra.mxu0 %v1828
      %1848 = vmatprep.subr.bf16.mxu0 0
      %1849 = vmatpush1.bf16.msra.mxu0 %v1829
      %1850 = vmatprep.subr.bf16.mxu0 0
      %1851 = vmatpush1.bf16.msra.mxu0 %v1830
      %1852 = vmatprep.subr.bf16.mxu0 0
      %1853 = vmatpush1.bf16.msra.mxu0 %v1831
      %1854 = vmatprep.subr.bf16.mxu0 0
      %1855 = vmatpush1.bf16.msra.mxu0 %v1832
      %1856 = vmatprep.subr.bf16.mxu0 0
      %1857 = vmatpush1.bf16.msra.mxu0 %v1833
      %1858 = vmatprep.subr.bf16.mxu0 0
      %1859 = vmatpush1.bf16.msra.mxu0 0
      %1860 = vmatprep.subr.bf16.mxu0 0
      %1861 = vmatpush1.bf16.msra.mxu0 0
      %1862 = vmatprep.subr.bf16.mxu0 0
      %1863 = vmatpush1.bf16.msra.mxu0 0
      %1864 = vmatprep.subr.bf16.mxu0 0
      %1865 = vmatpush1.bf16.msra.mxu0 0
      %1866 = vmatprep.subr.bf16.mxu0 0
      %1867 = vmatpush1.bf16.msra.mxu0 0
      %1868 = vmatprep.subr.bf16.mxu0 0
      %1869 = vmatpush1.bf16.msra.mxu0 0
      %1870 = vmatprep.subr.bf16.mxu0 0
      %1871 = vmatpush1.bf16.msra.mxu0 0
      %1872 = vmatprep.subr.bf16.mxu0 0
      %1873 = vmatpush1.bf16.msra.mxu0 0
      %1874 = vmatprep.mubr.bf16.mxu0 0
      %1875 = vmatmul.mubr.bf16.gmra.mrb[0].mxu0 %v1761
      %v1876 = vpop.f32.mrb[0].mxu0
      %v1877 = vadd.f32 0.0, %v1876
      %v1878 = vpop.f32.mrb[0].mxu0
      %v1879 = vpop.f32.mrb[0].mxu0
      %v1880 = vadd.f32 0.0, %v1879
      %v1881 = vpop.f32.mrb[0].mxu0
      %1882 = vmatprep.mubr.bf16.mxu0 0
      %1883 = vmatmul.mubr.bf16.gmra.mrb[0].mxu0 %v1762
      %v1884 = vpop.f32.mrb[0].mxu0
      %v1885 = vadd.f32 0.0, %v1884
      %v1886 = vpop.f32.mrb[0].mxu0
      %v1887 = vpop.f32.mrb[0].mxu0
      %v1888 = vadd.f32 0.0, %v1887
      %v1889 = vpop.f32.mrb[0].mxu0
      %1890 = vmatprep.mubr.bf16.mxu0 0
      %1891 = vmatmul.mubr.bf16.gmra.mrb[0].mxu0 %v1763
      %v1892 = vpop.f32.mrb[0].mxu0
      %v1893 = vadd.f32 0.0, %v1892
      %v1894 = vpop.f32.mrb[0].mxu0
      %v1895 = vpop.f32.mrb[0].mxu0
      %v1896 = vadd.f32 0.0, %v1895
      %v1897 = vpop.f32.mrb[0].mxu0
      %1898 = vmatprep.mubr.bf16.mxu0 0
      %1899 = vmatmul.mubr.bf16.gmra.mrb[0].mxu0 %v1764
      %v1900 = vpop.f32.mrb[0].mxu0
      %v1901 = vadd.f32 0.0, %v1900
      %v1902 = vpop.f32.mrb[0].mxu0
      %v1903 = vpop.f32.mrb[0].mxu0
      %v1904 = vadd.f32 0.0, %v1903
      %v1905 = vpop.f32.mrb[0].mxu0
      %1906 = vmatprep.mubr.bf16.mxu0 0
      %1907 = vmatmul.mubr.bf16.gmra.mrb[0].mxu0 %v1765
      %v1908 = vpop.f32.mrb[0].mxu0
      %v1909 = vadd.f32 0.0, %v1908
      %v1910 = vpop.f32.mrb[0].mxu0
      %v1911 = vpop.f32.mrb[0].mxu0
      %v1912 = vadd.f32 0.0, %v1911
      %v1913 = vpop.f32.mrb[0].mxu0
      %1914 = vmatprep.mubr.bf16.mxu0 0
      %1915 = vmatmul.mubr.bf16.gmra.mrb[0].mxu0 %v1766
      %v1916 = vpop.f32.mrb[0].mxu0
      %v1917 = vadd.f32 0.0, %v1916
      %v1918 = vpop.f32.mrb[0].mxu0
      %v1919 = vpop.f32.mrb[0].mxu0
      %v1920 = vadd.f32 0.0, %v1919
      %v1921 = vpop.f32.mrb[0].mxu0
      %1922 = vmatprep.mubr.bf16.mxu0 0
      %1923 = vmatmul.mubr.bf16.gmra.mrb[0].mxu0 %v1767
      %v1924 = vpop.f32.mrb[0].mxu0
      %v1925 = vadd.f32 0.0, %v1924
      %v1926 = vpop.f32.mrb[0].mxu0
      %v1927 = vpop.f32.mrb[0].mxu0
      %v1928 = vadd.f32 0.0, %v1927
      %v1929 = vpop.f32.mrb[0].mxu0
      %1930 = vmatprep.mubr.bf16.mxu0 0
      %1931 = vmatmul.mubr.bf16.gmra.mrb[0].mxu0 %v1768
      %v1932 = vpop.f32.mrb[0].mxu0
      %v1933 = vadd.f32 0.0, %v1932
      %v1934 = vpop.f32.mrb[0].mxu0
      %v1935 = vpop.f32.mrb[0].mxu0
      %v1936 = vadd.f32 0.0, %v1935
      %v1937 = vpop.f32.mrb[0].mxu0
      %1938 = vmatprep.mubr.bf16.mxu0 0
      %1939 = vmatmul.mubr.bf16.gmra.mrb[0].mxu0 %v1769
      %v1940 = vpop.f32.mrb[0].mxu0
      %v1941 = vadd.f32 0.0, %v1940
      %v1942 = vpop.f32.mrb[0].mxu0
      %v1943 = vpop.f32.mrb[0].mxu0
      %v1944 = vadd.f32 0.0, %v1943
      %v1945 = vpop.f32.mrb[0].mxu0
      %1946 = vmatprep.mubr.bf16.mxu0 0
      %1947 = vmatmul.mubr.bf16.gmra.mrb[0].mxu0 %v1770
      %v1948 = vpop.f32.mrb[0].mxu0
      %v1949 = vadd.f32 0.0, %v1948
      %v1950 = vpop.f32.mrb[0].mxu0
      %v1951 = vpop.f32.mrb[0].mxu0
      %v1952 = vadd.f32 0.0, %v1951
      %v1953 = vpop.f32.mrb[0].mxu0
      %1954 = vmatprep.mubr.bf16.mxu0 0
      %1955 = vmatmul.mubr.bf16.gmra.mrb[0].mxu0 %v1771
      %v1956 = vpop.f32.mrb[0].mxu0
      %v1957 = vadd.f32 0.0, %v1956
      %v1958 = vpop.f32.mrb[0].mxu0
      %v1959 = vpop.f32.mrb[0].mxu0
      %v1960 = vadd.f32 0.0, %v1959
      %v1961 = vpop.f32.mrb[0].mxu0
      %1962 = vmatprep.mubr.bf16.mxu0 0
      %1963 = vmatmul.mubr.bf16.gmra.mrb[0].mxu0 %v1772
      %v1964 = vpop.f32.mrb[0].mxu0
      %v1965 = vadd.f32 0.0, %v1964
      %v1966 = vpop.f32.mrb[0].mxu0
      %v1967 = vpop.f32.mrb[0].mxu0
      %v1968 = vadd.f32 0.0, %v1967
      %v1969 = vpop.f32.mrb[0].mxu0
      %1970 = vmatprep.mubr.bf16.mxu0 0
      %1971 = vmatmul.mubr.bf16.gmra.mrb[0].mxu0 %v1773
      %v1972 = vpop.f32.mrb[0].mxu0
      %v1973 = vadd.f32 0.0, %v1972
      %v1974 = vpop.f32.mrb[0].mxu0
      %v1975 = vpop.f32.mrb[0].mxu0
      %v1976 = vadd.f32 0.0, %v1975
      %v1977 = vpop.f32.mrb[0].mxu0
      %1978 = vmatprep.mubr.bf16.mxu0 0
      %1979 = vmatmul.mubr.bf16.gmra.mrb[0].mxu0 %v1774
      %v1980 = vpop.f32.mrb[0].mxu0
      %v1981 = vadd.f32 0.0, %v1980
      %v1982 = vpop.f32.mrb[0].mxu0
      %v1983 = vpop.f32.mrb[0].mxu0
      %v1984 = vadd.f32 0.0, %v1983
      %v1985 = vpop.f32.mrb[0].mxu0
      %1986 = vmatprep.mubr.bf16.mxu0 0
      %1987 = vmatmul.mubr.bf16.gmra.mrb[0].mxu0 %v1775
      %v1988 = vpop.f32.mrb[0].mxu0
      %v1989 = vadd.f32 0.0, %v1988
      %v1990 = vpop.f32.mrb[0].mxu0
      %v1991 = vpop.f32.mrb[0].mxu0
      %v1992 = vadd.f32 0.0, %v1991
      %v1993 = vpop.f32.mrb[0].mxu0
      %1994 = vmatprep.mubr.bf16.mxu0 0
      %1995 = vmatmul.mubr.bf16.gmra.mrb[0].mxu0 %v1776
      %v1996 = vpop.f32.mrb[0].mxu0
      %v1997 = vadd.f32 0.0, %v1996
      %v1998 = vpop.f32.mrb[0].mxu0
      %v1999 = vpop.f32.mrb[0].mxu0
      %v2000 = vadd.f32 0.0, %v1999
      %v2001 = vpop.f32.mrb[0].mxu0
      %2002 = vdwg.mxu0
      %v2003 = vld [vmem:[#allocation2] sm:$0xff]
      %v2004 = vld [vmem:[#allocation2 + $0x8] sm:$0xff]
      %v2005 = vld [vmem:[#allocation2 + $0x10] sm:$0xff]
      %v2006 = vld [vmem:[#allocation2 + $0x18] sm:$0xff]
      %v2007 = vld [vmem:[#allocation2 + $0x20] sm:$0xff]
      %v2008 = vld [vmem:[#allocation2 + $0x28] sm:$0xff]
      %v2009 = vld [vmem:[#allocation2 + $0x30] sm:$0xff]
      %v2010 = vld [vmem:[#allocation2 + $0x38] sm:$0xff]
      %v2011 = vld [vmem:[#allocation2 + $0x40] sm:$0xff]
      %v2012 = vld [vmem:[#allocation2 + $0x48] sm:$0xff]
      %v2013 = vld [vmem:[#allocation2 + $0x50] sm:$0xff]
      %v2014 = vld [vmem:[#allocation2 + $0x58] sm:$0xff]
      %v2015 = vld [vmem:[#allocation2 + $0x60] sm:$0xff]
      %v2016 = vld [vmem:[#allocation2 + $0x68] sm:$0xff]
      %v2017 = vld [vmem:[#allocation2 + $0x70] sm:$0xff]
      %v2018 = vld [vmem:[#allocation2 + $0x78] sm:$0xff]
      %v2019 = vld [vmem:[#allocation2 + $0x80] sm:$0xff]
      %v2020 = vld [vmem:[#allocation2 + $0x88] sm:$0xff]
      %v2021 = vld [vmem:[#allocation2 + $0x90] sm:$0xff]
      %v2022 = vld [vmem:[#allocation2 + $0x98] sm:$0xff]
      %v2023 = vld [vmem:[#allocation2 + $0xa0] sm:$0xff]
      %v2024 = vld [vmem:[#allocation2 + $0xa8] sm:$0xff]
      %v2025 = vld [vmem:[#allocation2 + $0xb0] sm:$0xff]
      %v2026 = vld [vmem:[#allocation2 + $0xb8] sm:$0xff]
      %v2027 = vld [vmem:[#allocation2 + $0xc0] sm:$0xff]
      %v2028 = vld [vmem:[#allocation2 + $0xc8] sm:$0xff]
      %v2029 = vld [vmem:[#allocation2 + $0xd0] sm:$0xff]
      %v2030 = vld [vmem:[#allocation2 + $0xd8] sm:$0xff]
      %v2031 = vld [vmem:[#allocation2 + $0xe0] sm:$0xff]
      %v2032 = vld [vmem:[#allocation2 + $0xe8] sm:$0xff]
      %v2033 = vld [vmem:[#allocation2 + $0xf0] sm:$0xff]
      %v2034 = vld [vmem:[#allocation2 + $0xf8] sm:$0xff]
      %v2035 = vadd.f32 %v2003, %v1877
      %v2036 = vadd.f32 %v2004, %v1880
      %v2037 = vadd.f32 %v2005, %v1885
      %v2038 = vadd.f32 %v2006, %v1888
      %v2039 = vadd.f32 %v2007, %v1893
      %v2040 = vadd.f32 %v2008, %v1896
      %v2041 = vadd.f32 %v2009, %v1901
      %v2042 = vadd.f32 %v2010, %v1904
      %v2043 = vadd.f32 %v2011, %v1909
      %v2044 = vadd.f32 %v2012, %v1912
      %v2045 = vadd.f32 %v2013, %v1917
      %v2046 = vadd.f32 %v2014, %v1920
      %v2047 = vadd.f32 %v2015, %v1925
      %v2048 = vadd.f32 %v2016, %v1928
      %v2049 = vadd.f32 %v2017, %v1933
      %v2050 = vadd.f32 %v2018, %v1936
      %v2051 = vadd.f32 %v2019, %v1941
      %v2052 = vadd.f32 %v2020, %v1944
      %v2053 = vadd.f32 %v2021, %v1949
      %v2054 = vadd.f32 %v2022, %v1952
      %v2055 = vadd.f32 %v2023, %v1957
      %v2056 = vadd.f32 %v2024, %v1960
      %v2057 = vadd.f32 %v2025, %v1965
      %v2058 = vadd.f32 %v2026, %v1968
      %v2059 = vadd.f32 %v2027, %v1973
      %v2060 = vadd.f32 %v2028, %v1976
      %v2061 = vadd.f32 %v2029, %v1981
      %v2062 = vadd.f32 %v2030, %v1984
      %v2063 = vadd.f32 %v2031, %v1989
      %v2064 = vadd.f32 %v2032, %v1992
      %v2065 = vadd.f32 %v2033, %v1997
      %v2066 = vadd.f32 %v2034, %v2000
      %2067 = vst [vmem:[#allocation2] sm:$0xff] %v2035
      %2068 = vst [vmem:[#allocation2 + $0x8] sm:$0xff] %v2036
      %2069 = vst [vmem:[#allocation2 + $0x10] sm:$0xff] %v2037
      %2070 = vst [vmem:[#allocation2 + $0x18] sm:$0xff] %v2038
      %2071 = vst [vmem:[#allocation2 + $0x20] sm:$0xff] %v2039
      %2072 = vst [vmem:[#allocation2 + $0x28] sm:$0xff] %v2040
      %2073 = vst [vmem:[#allocation2 + $0x30] sm:$0xff] %v2041
      %2074 = vst [vmem:[#allocation2 + $0x38] sm:$0xff] %v2042
      %2075 = vst [vmem:[#allocation2 + $0x40] sm:$0xff] %v2043
      %2076 = vst [vmem:[#allocation2 + $0x48] sm:$0xff] %v2044
      %2077 = vst [vmem:[#allocation2 + $0x50] sm:$0xff] %v2045
      %2078 = vst [vmem:[#allocation2 + $0x58] sm:$0xff] %v2046
      %2079 = vst [vmem:[#allocation2 + $0x60] sm:$0xff] %v2047
      %2080 = vst [vmem:[#allocation2 + $0x68] sm:$0xff] %v2048
      %2081 = vst [vmem:[#allocation2 + $0x70] sm:$0xff] %v2049
      %2082 = vst [vmem:[#allocation2 + $0x78] sm:$0xff] %v2050
      %2083 = vst [vmem:[#allocation2 + $0x80] sm:$0xff] %v2051
      %2084 = vst [vmem:[#allocation2 + $0x88] sm:$0xff] %v2052
      %2085 = vst [vmem:[#allocation2 + $0x90] sm:$0xff] %v2053
      %2086 = vst [vmem:[#allocation2 + $0x98] sm:$0xff] %v2054
      %2087 = vst [vmem:[#allocation2 + $0xa0] sm:$0xff] %v2055
      %2088 = vst [vmem:[#allocation2 + $0xa8] sm:$0xff] %v2056
      %2089 = vst [vmem:[#allocation2 + $0xb0] sm:$0xff] %v2057
      %2090 = vst [vmem:[#allocation2 + $0xb8] sm:$0xff] %v2058
      %2091 = vst [vmem:[#allocation2 + $0xc0] sm:$0xff] %v2059
      %2092 = vst [vmem:[#allocation2 + $0xc8] sm:$0xff] %v2060
      %2093 = vst [vmem:[#allocation2 + $0xd0] sm:$0xff] %v2061
      %2094 = vst [vmem:[#allocation2 + $0xd8] sm:$0xff] %v2062
      %2095 = vst [vmem:[#allocation2 + $0xe0] sm:$0xff] %v2063
      %2096 = vst [vmem:[#allocation2 + $0xe8] sm:$0xff] %v2064
      %2097 = vst [vmem:[#allocation2 + $0xf0] sm:$0xff] %v2065
      %2098 = vst [vmem:[#allocation2 + $0xf8] sm:$0xff] %v2066
      %s2099 = sadd.s32 %s304, 1
      %s2100 = scalar_lea.vmem %s268, %s2099
      %v2101 = vld [vmem:[%s2100] sm:$0xff]
      %v2102 = vld [vmem:[%s2100 + $0x8] sm:$0xff]
      %v2103 = vld [vmem:[%s2100 + $0x10] sm:$0xff]
      %v2104 = vld [vmem:[%s2100 + $0x18] sm:$0xff]
      %v2105 = vld [vmem:[%s2100 + $0x20] sm:$0xff]
      %v2106 = vld [vmem:[%s2100 + $0x28] sm:$0xff]
      %v2107 = vld [vmem:[%s2100 + $0x30] sm:$0xff]
      %v2108 = vld [vmem:[%s2100 + $0x38] sm:$0xff]
      %v2109 = vld [vmem:[%s2100 + $0x40] sm:$0xff]
      %v2110 = vld [vmem:[%s2100 + $0x48] sm:$0xff]
      %v2111 = vld [vmem:[%s2100 + $0x50] sm:$0xff]
      %v2112 = vld [vmem:[%s2100 + $0x58] sm:$0xff]
      %v2113 = vld [vmem:[%s2100 + $0x60] sm:$0xff]
      %v2114 = vld [vmem:[%s2100 + $0x68] sm:$0xff]
      %v2115 = vld [vmem:[%s2100 + $0x70] sm:$0xff]
      %v2116 = vld [vmem:[%s2100 + $0x78] sm:$0xff]
      %v2117 = vld [vmem:[%s2100 + $0x80] sm:$0xff]
      %v2118 = vld [vmem:[%s2100 + $0x88] sm:$0xff]
      %v2119 = vld [vmem:[%s2100 + $0x90] sm:$0xff]
      %v2120 = vld [vmem:[%s2100 + $0x98] sm:$0xff]
      %v2121 = vld [vmem:[%s2100 + $0xa0] sm:$0xff]
      %v2122 = vld [vmem:[%s2100 + $0xa8] sm:$0xff]
      %v2123 = vld [vmem:[%s2100 + $0xb0] sm:$0xff]
      %v2124 = vld [vmem:[%s2100 + $0xb8] sm:$0xff]
      %v2125 = vld [vmem:[%s2100 + $0xc0] sm:$0xff]
      %v2126 = vld [vmem:[%s2100 + $0xc8] sm:$0xff]
      %v2127 = vld [vmem:[%s2100 + $0xd0] sm:$0xff]
      %v2128 = vld [vmem:[%s2100 + $0xd8] sm:$0xff]
      %v2129 = vld [vmem:[%s2100 + $0xe0] sm:$0xff]
      %v2130 = vld [vmem:[%s2100 + $0xe8] sm:$0xff]
      %v2131 = vld [vmem:[%s2100 + $0xf0] sm:$0xff]
      %v2132 = vld [vmem:[%s2100 + $0xf8] sm:$0xff]
      %v2133 = vpack.c.bf16 %v2102, %v2101
      %v2134 = vpack.c.bf16 %v2104, %v2103
      %v2135 = vpack.c.bf16 %v2106, %v2105
      %v2136 = vpack.c.bf16 %v2108, %v2107
      %v2137 = vpack.c.bf16 %v2110, %v2109
      %v2138 = vpack.c.bf16 %v2112, %v2111
      %v2139 = vpack.c.bf16 %v2114, %v2113
      %v2140 = vpack.c.bf16 %v2116, %v2115
      %v2141 = vpack.c.bf16 %v2118, %v2117
      %v2142 = vpack.c.bf16 %v2120, %v2119
      %v2143 = vpack.c.bf16 %v2122, %v2121
      %v2144 = vpack.c.bf16 %v2124, %v2123
      %v2145 = vpack.c.bf16 %v2126, %v2125
      %v2146 = vpack.c.bf16 %v2128, %v2127
      %v2147 = vpack.c.bf16 %v2130, %v2129
      %v2148 = vpack.c.bf16 %v2132, %v2131
      %s2149 = scalar_lea.vmem %s272, 320
      %v2150 = vld [vmem:[%s2149] sm:$0xf]
      %v2151 = vld [vmem:[%s2149 + $0x4] sm:$0xf]
      %v2152 = vld [vmem:[%s2149 + $0x8] sm:$0xf]
      %v2153 = vld [vmem:[%s2149 + $0xc] sm:$0xf]
      %v2154 = vld [vmem:[%s2149 + $0x10] sm:$0xf]
      %v2155 = vld [vmem:[%s2149 + $0x14] sm:$0xf]
      %v2156 = vld [vmem:[%s2149 + $0x18] sm:$0xf]
      %v2157 = vld [vmem:[%s2149 + $0x1c] sm:$0xf]
      %v2158 = vld [vmem:[%s2149 + $0x20] sm:$0xf]
      %v2159 = vld [vmem:[%s2149 + $0x24] sm:$0xf]
      %v2160 = vld [vmem:[%s2149 + $0x28] sm:$0xf]
      %v2161 = vld [vmem:[%s2149 + $0x2c] sm:$0xf]
      %v2162 = vld [vmem:[%s2149 + $0x30] sm:$0xf]
      %v2163 = vld [vmem:[%s2149 + $0x34] sm:$0xf]
      %v2164 = vld [vmem:[%s2149 + $0x38] sm:$0xf]
      %v2165 = vld [vmem:[%s2149 + $0x3c] sm:$0xf]
      %v2182 = vunpack.c.l.b16 %v2150
      %v2183 = vunpack.c.l.b16 %v2151
      %v2184 = vunpack.c.l.b16 %v2152
      %v2185 = vunpack.c.l.b16 %v2153
      %v2186 = vunpack.c.l.b16 %v2154
      %v2187 = vunpack.c.l.b16 %v2155
      %v2188 = vunpack.c.l.b16 %v2156
      %v2189 = vunpack.c.l.b16 %v2157
      %v2190 = vunpack.c.l.b16 %v2158
      %v2191 = vunpack.c.l.b16 %v2159
      %v2192 = vunpack.c.l.b16 %v2160
      %v2193 = vunpack.c.l.b16 %v2161
      %v2194 = vunpack.c.l.b16 %v2162
      %v2195 = vunpack.c.l.b16 %v2163
      %v2196 = vunpack.c.l.b16 %v2164
      %v2197 = vunpack.c.l.b16 %v2165
      %v2198 = vpack.c.b16 %v2183, %v2182
      %v2199 = vpack.c.b16 %v2185, %v2184
      %v2200 = vpack.c.b16 %v2187, %v2186
      %v2201 = vpack.c.b16 %v2189, %v2188
      %v2202 = vpack.c.b16 %v2191, %v2190
      %v2203 = vpack.c.b16 %v2193, %v2192
      %v2204 = vpack.c.b16 %v2195, %v2194
      %v2205 = vpack.c.b16 %v2197, %v2196
      %2214 = vmatprep.subr.bf16.mxu0 0
      %2215 = vmatpush1.bf16.msra.mxu0 %v2198
      %2216 = vmatprep.subr.bf16.mxu0 0
      %2217 = vmatpush1.bf16.msra.mxu0 %v2199
      %2218 = vmatprep.subr.bf16.mxu0 0
      %2219 = vmatpush1.bf16.msra.mxu0 %v2200
      %2220 = vmatprep.subr.bf16.mxu0 0
      %2221 = vmatpush1.bf16.msra.mxu0 %v2201
      %2222 = vmatprep.subr.bf16.mxu0 0
      %2223 = vmatpush1.bf16.msra.mxu0 %v2202
      %2224 = vmatprep.subr.bf16.mxu0 0
      %2225 = vmatpush1.bf16.msra.mxu0 %v2203
      %2226 = vmatprep.subr.bf16.mxu0 0
      %2227 = vmatpush1.bf16.msra.mxu0 %v2204
      %2228 = vmatprep.subr.bf16.mxu0 0
      %2229 = vmatpush1.bf16.msra.mxu0 %v2205
      %2230 = vmatprep.subr.bf16.mxu0 0
      %2231 = vmatpush1.bf16.msra.mxu0 0
      %2232 = vmatprep.subr.bf16.mxu0 0
      %2233 = vmatpush1.bf16.msra.mxu0 0
      %2234 = vmatprep.subr.bf16.mxu0 0
      %2235 = vmatpush1.bf16.msra.mxu0 0
      %2236 = vmatprep.subr.bf16.mxu0 0
      %2237 = vmatpush1.bf16.msra.mxu0 0
      %2238 = vmatprep.subr.bf16.mxu0 0
      %2239 = vmatpush1.bf16.msra.mxu0 0
      %2240 = vmatprep.subr.bf16.mxu0 0
      %2241 = vmatpush1.bf16.msra.mxu0 0
      %2242 = vmatprep.subr.bf16.mxu0 0
      %2243 = vmatpush1.bf16.msra.mxu0 0
      %2244 = vmatprep.subr.bf16.mxu0 0
      %2245 = vmatpush1.bf16.msra.mxu0 0
      %2246 = vmatprep.mubr.bf16.mxu0 0
      %2247 = vmatmul.mubr.bf16.gmra.mrb[0].mxu0 %v2133
      %v2248 = vpop.f32.mrb[0].mxu0
      %v2249 = vadd.f32 0.0, %v2248
      %v2250 = vpop.f32.mrb[0].mxu0
      %v2251 = vpop.f32.mrb[0].mxu0
      %v2252 = vadd.f32 0.0, %v2251
      %v2253 = vpop.f32.mrb[0].mxu0
      %2254 = vmatprep.mubr.bf16.mxu0 0
      %2255 = vmatmul.mubr.bf16.gmra.mrb[0].mxu0 %v2134
      %v2256 = vpop.f32.mrb[0].mxu0
      %v2257 = vadd.f32 0.0, %v2256
      %v2258 = vpop.f32.mrb[0].mxu0
      %v2259 = vpop.f32.mrb[0].mxu0
      %v2260 = vadd.f32 0.0, %v2259
      %v2261 = vpop.f32.mrb[0].mxu0
      %2262 = vmatprep.mubr.bf16.mxu0 0
      %2263 = vmatmul.mubr.bf16.gmra.mrb[0].mxu0 %v2135
      %v2264 = vpop.f32.mrb[0].mxu0
      %v2265 = vadd.f32 0.0, %v2264
      %v2266 = vpop.f32.mrb[0].mxu0
      %v2267 = vpop.f32.mrb[0].mxu0
      %v2268 = vadd.f32 0.0, %v2267
      %v2269 = vpop.f32.mrb[0].mxu0
      %2270 = vmatprep.mubr.bf16.mxu0 0
      %2271 = vmatmul.mubr.bf16.gmra.mrb[0].mxu0 %v2136
      %v2272 = vpop.f32.mrb[0].mxu0
      %v2273 = vadd.f32 0.0, %v2272
      %v2274 = vpop.f32.mrb[0].mxu0
      %v2275 = vpop.f32.mrb[0].mxu0
      %v2276 = vadd.f32 0.0, %v2275
      %v2277 = vpop.f32.mrb[0].mxu0
      %2278 = vmatprep.mubr.bf16.mxu0 0
      %2279 = vmatmul.mubr.bf16.gmra.mrb[0].mxu0 %v2137
      %v2280 = vpop.f32.mrb[0].mxu0
      %v2281 = vadd.f32 0.0, %v2280
      %v2282 = vpop.f32.mrb[0].mxu0
      %v2283 = vpop.f32.mrb[0].mxu0
      %v2284 = vadd.f32 0.0, %v2283
      %v2285 = vpop.f32.mrb[0].mxu0
      %2286 = vmatprep.mubr.bf16.mxu0 0
      %2287 = vmatmul.mubr.bf16.gmra.mrb[0].mxu0 %v2138
      %v2288 = vpop.f32.mrb[0].mxu0
      %v2289 = vadd.f32 0.0, %v2288
      %v2290 = vpop.f32.mrb[0].mxu0
      %v2291 = vpop.f32.mrb[0].mxu0
      %v2292 = vadd.f32 0.0, %v2291
      %v2293 = vpop.f32.mrb[0].mxu0
      %2294 = vmatprep.mubr.bf16.mxu0 0
      %2295 = vmatmul.mubr.bf16.gmra.mrb[0].mxu0 %v2139
      %v2296 = vpop.f32.mrb[0].mxu0
      %v2297 = vadd.f32 0.0, %v2296
      %v2298 = vpop.f32.mrb[0].mxu0
      %v2299 = vpop.f32.mrb[0].mxu0
      %v2300 = vadd.f32 0.0, %v2299
      %v2301 = vpop.f32.mrb[0].mxu0
      %2302 = vmatprep.mubr.bf16.mxu0 0
      %2303 = vmatmul.mubr.bf16.gmra.mrb[0].mxu0 %v2140
      %v2304 = vpop.f32.mrb[0].mxu0
      %v2305 = vadd.f32 0.0, %v2304
      %v2306 = vpop.f32.mrb[0].mxu0
      %v2307 = vpop.f32.mrb[0].mxu0
      %v2308 = vadd.f32 0.0, %v2307
      %v2309 = vpop.f32.mrb[0].mxu0
      %2310 = vmatprep.mubr.bf16.mxu0 0
      %2311 = vmatmul.mubr.bf16.gmra.mrb[0].mxu0 %v2141
      %v2312 = vpop.f32.mrb[0].mxu0
      %v2313 = vadd.f32 0.0, %v2312
      %v2314 = vpop.f32.mrb[0].mxu0
      %v2315 = vpop.f32.mrb[0].mxu0
      %v2316 = vadd.f32 0.0, %v2315
      %v2317 = vpop.f32.mrb[0].mxu0
      %2318 = vmatprep.mubr.bf16.mxu0 0
      %2319 = vmatmul.mubr.bf16.gmra.mrb[0].mxu0 %v2142
      %v2320 = vpop.f32.mrb[0].mxu0
      %v2321 = vadd.f32 0.0, %v2320
      %v2322 = vpop.f32.mrb[0].mxu0
      %v2323 = vpop.f32.mrb[0].mxu0
      %v2324 = vadd.f32 0.0, %v2323
      %v2325 = vpop.f32.mrb[0].mxu0
      %2326 = vmatprep.mubr.bf16.mxu0 0
      %2327 = vmatmul.mubr.bf16.gmra.mrb[0].mxu0 %v2143
      %v2328 = vpop.f32.mrb[0].mxu0
      %v2329 = vadd.f32 0.0, %v2328
      %v2330 = vpop.f32.mrb[0].mxu0
      %v2331 = vpop.f32.mrb[0].mxu0
      %v2332 = vadd.f32 0.0, %v2331
      %v2333 = vpop.f32.mrb[0].mxu0
      %2334 = vmatprep.mubr.bf16.mxu0 0
      %2335 = vmatmul.mubr.bf16.gmra.mrb[0].mxu0 %v2144
      %v2336 = vpop.f32.mrb[0].mxu0
      %v2337 = vadd.f32 0.0, %v2336
      %v2338 = vpop.f32.mrb[0].mxu0
      %v2339 = vpop.f32.mrb[0].mxu0
      %v2340 = vadd.f32 0.0, %v2339
      %v2341 = vpop.f32.mrb[0].mxu0
      %2342 = vmatprep.mubr.bf16.mxu0 0
      %2343 = vmatmul.mubr.bf16.gmra.mrb[0].mxu0 %v2145
      %v2344 = vpop.f32.mrb[0].mxu0
      %v2345 = vadd.f32 0.0, %v2344
      %v2346 = vpop.f32.mrb[0].mxu0
      %v2347 = vpop.f32.mrb[0].mxu0
      %v2348 = vadd.f32 0.0, %v2347
      %v2349 = vpop.f32.mrb[0].mxu0
      %2350 = vmatprep.mubr.bf16.mxu0 0
      %2351 = vmatmul.mubr.bf16.gmra.mrb[0].mxu0 %v2146
      %v2352 = vpop.f32.mrb[0].mxu0
      %v2353 = vadd.f32 0.0, %v2352
      %v2354 = vpop.f32.mrb[0].mxu0
      %v2355 = vpop.f32.mrb[0].mxu0
      %v2356 = vadd.f32 0.0, %v2355
      %v2357 = vpop.f32.mrb[0].mxu0
      %2358 = vmatprep.mubr.bf16.mxu0 0
      %2359 = vmatmul.mubr.bf16.gmra.mrb[0].mxu0 %v2147
      %v2360 = vpop.f32.mrb[0].mxu0
      %v2361 = vadd.f32 0.0, %v2360
      %v2362 = vpop.f32.mrb[0].mxu0
      %v2363 = vpop.f32.mrb[0].mxu0
      %v2364 = vadd.f32 0.0, %v2363
      %v2365 = vpop.f32.mrb[0].mxu0
      %2366 = vmatprep.mubr.bf16.mxu0 0
      %2367 = vmatmul.mubr.bf16.gmra.mrb[0].mxu0 %v2148
      %v2368 = vpop.f32.mrb[0].mxu0
      %v2369 = vadd.f32 0.0, %v2368
      %v2370 = vpop.f32.mrb[0].mxu0
      %v2371 = vpop.f32.mrb[0].mxu0
      %v2372 = vadd.f32 0.0, %v2371
      %v2373 = vpop.f32.mrb[0].mxu0
      %2374 = vdwg.mxu0
      %v2375 = vld [vmem:[#allocation2] sm:$0xff]
      %v2376 = vld [vmem:[#allocation2 + $0x8] sm:$0xff]
      %v2377 = vld [vmem:[#allocation2 + $0x10] sm:$0xff]
      %v2378 = vld [vmem:[#allocation2 + $0x18] sm:$0xff]
      %v2379 = vld [vmem:[#allocation2 + $0x20] sm:$0xff]
      %v2380 = vld [vmem:[#allocation2 + $0x28] sm:$0xff]
      %v2381 = vld [vmem:[#allocation2 + $0x30] sm:$0xff]
      %v2382 = vld [vmem:[#allocation2 + $0x38] sm:$0xff]
      %v2383 = vld [vmem:[#allocation2 + $0x40] sm:$0xff]
      %v2384 = vld [vmem:[#allocation2 + $0x48] sm:$0xff]
      %v2385 = vld [vmem:[#allocation2 + $0x50] sm:$0xff]
      %v2386 = vld [vmem:[#allocation2 + $0x58] sm:$0xff]
      %v2387 = vld [vmem:[#allocation2 + $0x60] sm:$0xff]
      %v2388 = vld [vmem:[#allocation2 + $0x68] sm:$0xff]
      %v2389 = vld [vmem:[#allocation2 + $0x70] sm:$0xff]
      %v2390 = vld [vmem:[#allocation2 + $0x78] sm:$0xff]
      %v2391 = vld [vmem:[#allocation2 + $0x80] sm:$0xff]
      %v2392 = vld [vmem:[#allocation2 + $0x88] sm:$0xff]
      %v2393 = vld [vmem:[#allocation2 + $0x90] sm:$0xff]
      %v2394 = vld [vmem:[#allocation2 + $0x98] sm:$0xff]
      %v2395 = vld [vmem:[#allocation2 + $0xa0] sm:$0xff]
      %v2396 = vld [vmem:[#allocation2 + $0xa8] sm:$0xff]
      %v2397 = vld [vmem:[#allocation2 + $0xb0] sm:$0xff]
      %v2398 = vld [vmem:[#allocation2 + $0xb8] sm:$0xff]
      %v2399 = vld [vmem:[#allocation2 + $0xc0] sm:$0xff]
      %v2400 = vld [vmem:[#allocation2 + $0xc8] sm:$0xff]
      %v2401 = vld [vmem:[#allocation2 + $0xd0] sm:$0xff]
      %v2402 = vld [vmem:[#allocation2 + $0xd8] sm:$0xff]
      %v2403 = vld [vmem:[#allocation2 + $0xe0] sm:$0xff]
      %v2404 = vld [vmem:[#allocation2 + $0xe8] sm:$0xff]
      %v2405 = vld [vmem:[#allocation2 + $0xf0] sm:$0xff]
      %v2406 = vld [vmem:[#allocation2 + $0xf8] sm:$0xff]
      %v2407 = vadd.f32 %v2375, %v2249
      %v2408 = vadd.f32 %v2376, %v2252
      %v2409 = vadd.f32 %v2377, %v2257
      %v2410 = vadd.f32 %v2378, %v2260
      %v2411 = vadd.f32 %v2379, %v2265
      %v2412 = vadd.f32 %v2380, %v2268
      %v2413 = vadd.f32 %v2381, %v2273
      %v2414 = vadd.f32 %v2382, %v2276
      %v2415 = vadd.f32 %v2383, %v2281
      %v2416 = vadd.f32 %v2384, %v2284
      %v2417 = vadd.f32 %v2385, %v2289
      %v2418 = vadd.f32 %v2386, %v2292
      %v2419 = vadd.f32 %v2387, %v2297
      %v2420 = vadd.f32 %v2388, %v2300
      %v2421 = vadd.f32 %v2389, %v2305
      %v2422 = vadd.f32 %v2390, %v2308
      %v2423 = vadd.f32 %v2391, %v2313
      %v2424 = vadd.f32 %v2392, %v2316
      %v2425 = vadd.f32 %v2393, %v2321
      %v2426 = vadd.f32 %v2394, %v2324
      %v2427 = vadd.f32 %v2395, %v2329
      %v2428 = vadd.f32 %v2396, %v2332
      %v2429 = vadd.f32 %v2397, %v2337
      %v2430 = vadd.f32 %v2398, %v2340
      %v2431 = vadd.f32 %v2399, %v2345
      %v2432 = vadd.f32 %v2400, %v2348
      %v2433 = vadd.f32 %v2401, %v2353
      %v2434 = vadd.f32 %v2402, %v2356
      %v2435 = vadd.f32 %v2403, %v2361
      %v2436 = vadd.f32 %v2404, %v2364
      %v2437 = vadd.f32 %v2405, %v2369
      %v2438 = vadd.f32 %v2406, %v2372
      %2439 = vst [vmem:[#allocation2] sm:$0xff] %v2407
      %2440 = vst [vmem:[#allocation2 + $0x8] sm:$0xff] %v2408
      %2441 = vst [vmem:[#allocation2 + $0x10] sm:$0xff] %v2409
      %2442 = vst [vmem:[#allocation2 + $0x18] sm:$0xff] %v2410
      %2443 = vst [vmem:[#allocation2 + $0x20] sm:$0xff] %v2411
      %2444 = vst [vmem:[#allocation2 + $0x28] sm:$0xff] %v2412
      %2445 = vst [vmem:[#allocation2 + $0x30] sm:$0xff] %v2413
      %2446 = vst [vmem:[#allocation2 + $0x38] sm:$0xff] %v2414
      %2447 = vst [vmem:[#allocation2 + $0x40] sm:$0xff] %v2415
      %2448 = vst [vmem:[#allocation2 + $0x48] sm:$0xff] %v2416
      %2449 = vst [vmem:[#allocation2 + $0x50] sm:$0xff] %v2417
      %2450 = vst [vmem:[#allocation2 + $0x58] sm:$0xff] %v2418
      %2451 = vst [vmem:[#allocation2 + $0x60] sm:$0xff] %v2419
      %2452 = vst [vmem:[#allocation2 + $0x68] sm:$0xff] %v2420
      %2453 = vst [vmem:[#allocation2 + $0x70] sm:$0xff] %v2421
      %2454 = vst [vmem:[#allocation2 + $0x78] sm:$0xff] %v2422
      %2455 = vst [vmem:[#allocation2 + $0x80] sm:$0xff] %v2423
      %2456 = vst [vmem:[#allocation2 + $0x88] sm:$0xff] %v2424
      %2457 = vst [vmem:[#allocation2 + $0x90] sm:$0xff] %v2425
      %2458 = vst [vmem:[#allocation2 + $0x98] sm:$0xff] %v2426
      %2459 = vst [vmem:[#allocation2 + $0xa0] sm:$0xff] %v2427
      %2460 = vst [vmem:[#allocation2 + $0xa8] sm:$0xff] %v2428
      %2461 = vst [vmem:[#allocation2 + $0xb0] sm:$0xff] %v2429
      %2462 = vst [vmem:[#allocation2 + $0xb8] sm:$0xff] %v2430
      %2463 = vst [vmem:[#allocation2 + $0xc0] sm:$0xff] %v2431
      %2464 = vst [vmem:[#allocation2 + $0xc8] sm:$0xff] %v2432
      %2465 = vst [vmem:[#allocation2 + $0xd0] sm:$0xff] %v2433
      %2466 = vst [vmem:[#allocation2 + $0xd8] sm:$0xff] %v2434
      %2467 = vst [vmem:[#allocation2 + $0xe0] sm:$0xff] %v2435
      %2468 = vst [vmem:[#allocation2 + $0xe8] sm:$0xff] %v2436
      %2469 = vst [vmem:[#allocation2 + $0xf0] sm:$0xff] %v2437
      %2470 = vst [vmem:[#allocation2 + $0xf8] sm:$0xff] %v2438
      %s2471 = sadd.s32 %s304, 15
      %s2472 = scalar_lea.vmem %s268, %s2471
      %v2473 = vld [vmem:[%s2472] sm:$0xff]
      %v2474 = vld [vmem:[%s2472 + $0x8] sm:$0xff]
      %v2475 = vld [vmem:[%s2472 + $0x10] sm:$0xff]
      %v2476 = vld [vmem:[%s2472 + $0x18] sm:$0xff]
      %v2477 = vld [vmem:[%s2472 + $0x20] sm:$0xff]
      %v2478 = vld [vmem:[%s2472 + $0x28] sm:$0xff]
      %v2479 = vld [vmem:[%s2472 + $0x30] sm:$0xff]
      %v2480 = vld [vmem:[%s2472 + $0x38] sm:$0xff]
      %v2481 = vld [vmem:[%s2472 + $0x40] sm:$0xff]
      %v2482 = vld [vmem:[%s2472 + $0x48] sm:$0xff]
      %v2483 = vld [vmem:[%s2472 + $0x50] sm:$0xff]
      %v2484 = vld [vmem:[%s2472 + $0x58] sm:$0xff]
      %v2485 = vld [vmem:[%s2472 + $0x60] sm:$0xff]
      %v2486 = vld [vmem:[%s2472 + $0x68] sm:$0xff]
      %v2487 = vld [vmem:[%s2472 + $0x70] sm:$0xff]
      %v2488 = vld [vmem:[%s2472 + $0x78] sm:$0xff]
      %v2489 = vld [vmem:[%s2472 + $0x80] sm:$0xff]
      %v2490 = vld [vmem:[%s2472 + $0x88] sm:$0xff]
      %v2491 = vld [vmem:[%s2472 + $0x90] sm:$0xff]
      %v2492 = vld [vmem:[%s2472 + $0x98] sm:$0xff]
      %v2493 = vld [vmem:[%s2472 + $0xa0] sm:$0xff]
      %v2494 = vld [vmem:[%s2472 + $0xa8] sm:$0xff]
      %v2495 = vld [vmem:[%s2472 + $0xb0] sm:$0xff]
      %v2496 = vld [vmem:[%s2472 + $0xb8] sm:$0xff]
      %v2497 = vld [vmem:[%s2472 + $0xc0] sm:$0xff]
      %v2498 = vld [vmem:[%s2472 + $0xc8] sm:$0xff]
      %v2499 = vld [vmem:[%s2472 + $0xd0] sm:$0xff]
      %v2500 = vld [vmem:[%s2472 + $0xd8] sm:$0xff]
      %v2501 = vld [vmem:[%s2472 + $0xe0] sm:$0xff]
      %v2502 = vld [vmem:[%s2472 + $0xe8] sm:$0xff]
      %v2503 = vld [vmem:[%s2472 + $0xf0] sm:$0xff]
      %v2504 = vld [vmem:[%s2472 + $0xf8] sm:$0xff]
      %v2505 = vpack.c.bf16 %v2474, %v2473
      %v2506 = vpack.c.bf16 %v2476, %v2475
      %v2507 = vpack.c.bf16 %v2478, %v2477
      %v2508 = vpack.c.bf16 %v2480, %v2479
      %v2509 = vpack.c.bf16 %v2482, %v2481
      %v2510 = vpack.c.bf16 %v2484, %v2483
      %v2511 = vpack.c.bf16 %v2486, %v2485
      %v2512 = vpack.c.bf16 %v2488, %v2487
      %v2513 = vpack.c.bf16 %v2490, %v2489
      %v2514 = vpack.c.bf16 %v2492, %v2491
      %v2515 = vpack.c.bf16 %v2494, %v2493
      %v2516 = vpack.c.bf16 %v2496, %v2495
      %v2517 = vpack.c.bf16 %v2498, %v2497
      %v2518 = vpack.c.bf16 %v2500, %v2499
      %v2519 = vpack.c.bf16 %v2502, %v2501
      %v2520 = vpack.c.bf16 %v2504, %v2503
      %s2521 = scalar_lea.vmem %s272, 384
      %v2522 = vld [vmem:[%s2521] sm:$0xf]
      %v2523 = vld [vmem:[%s2521 + $0x4] sm:$0xf]
      %v2524 = vld [vmem:[%s2521 + $0x8] sm:$0xf]
      %v2525 = vld [vmem:[%s2521 + $0xc] sm:$0xf]
      %v2526 = vld [vmem:[%s2521 + $0x10] sm:$0xf]
      %v2527 = vld [vmem:[%s2521 + $0x14] sm:$0xf]
      %v2528 = vld [vmem:[%s2521 + $0x18] sm:$0xf]
      %v2529 = vld [vmem:[%s2521 + $0x1c] sm:$0xf]
      %v2530 = vld [vmem:[%s2521 + $0x20] sm:$0xf]
      %v2531 = vld [vmem:[%s2521 + $0x24] sm:$0xf]
      %v2532 = vld [vmem:[%s2521 + $0x28] sm:$0xf]
      %v2533 = vld [vmem:[%s2521 + $0x2c] sm:$0xf]
      %v2534 = vld [vmem:[%s2521 + $0x30] sm:$0xf]
      %v2535 = vld [vmem:[%s2521 + $0x34] sm:$0xf]
      %v2536 = vld [vmem:[%s2521 + $0x38] sm:$0xf]
      %v2537 = vld [vmem:[%s2521 + $0x3c] sm:$0xf]
      %v2554 = vunpack.c.l.b16 %v2522
      %v2555 = vunpack.c.l.b16 %v2523
      %v2556 = vunpack.c.l.b16 %v2524
      %v2557 = vunpack.c.l.b16 %v2525
      %v2558 = vunpack.c.l.b16 %v2526
      %v2559 = vunpack.c.l.b16 %v2527
      %v2560 = vunpack.c.l.b16 %v2528
      %v2561 = vunpack.c.l.b16 %v2529
      %v2562 = vunpack.c.l.b16 %v2530
      %v2563 = vunpack.c.l.b16 %v2531
      %v2564 = vunpack.c.l.b16 %v2532
      %v2565 = vunpack.c.l.b16 %v2533
      %v2566 = vunpack.c.l.b16 %v2534
      %v2567 = vunpack.c.l.b16 %v2535
      %v2568 = vunpack.c.l.b16 %v2536
      %v2569 = vunpack.c.l.b16 %v2537
      %v2570 = vpack.c.b16 %v2555, %v2554
      %v2571 = vpack.c.b16 %v2557, %v2556
      %v2572 = vpack.c.b16 %v2559, %v2558
      %v2573 = vpack.c.b16 %v2561, %v2560
      %v2574 = vpack.c.b16 %v2563, %v2562
      %v2575 = vpack.c.b16 %v2565, %v2564
      %v2576 = vpack.c.b16 %v2567, %v2566
      %v2577 = vpack.c.b16 %v2569, %v2568
      %2586 = vmatprep.subr.bf16.mxu0 0
      %2587 = vmatpush1.bf16.msra.mxu0 %v2570
      %2588 = vmatprep.subr.bf16.mxu0 0
      %2589 = vmatpush1.bf16.msra.mxu0 %v2571
      %2590 = vmatprep.subr.bf16.mxu0 0
      %2591 = vmatpush1.bf16.msra.mxu0 %v2572
      %2592 = vmatprep.subr.bf16.mxu0 0
      %2593 = vmatpush1.bf16.msra.mxu0 %v2573
      %2594 = vmatprep.subr.bf16.mxu0 0
      %2595 = vmatpush1.bf16.msra.mxu0 %v2574
      %2596 = vmatprep.subr.bf16.mxu0 0
      %2597 = vmatpush1.bf16.msra.mxu0 %v2575
      %2598 = vmatprep.subr.bf16.mxu0 0
      %2599 = vmatpush1.bf16.msra.mxu0 %v2576
      %2600 = vmatprep.subr.bf16.mxu0 0
      %2601 = vmatpush1.bf16.msra.mxu0 %v2577
      %2602 = vmatprep.subr.bf16.mxu0 0
      %2603 = vmatpush1.bf16.msra.mxu0 0
      %2604 = vmatprep.subr.bf16.mxu0 0
      %2605 = vmatpush1.bf16.msra.mxu0 0
      %2606 = vmatprep.subr.bf16.mxu0 0
      %2607 = vmatpush1.bf16.msra.mxu0 0
      %2608 = vmatprep.subr.bf16.mxu0 0
      %2609 = vmatpush1.bf16.msra.mxu0 0
      %2610 = vmatprep.subr.bf16.mxu0 0
      %2611 = vmatpush1.bf16.msra.mxu0 0
      %2612 = vmatprep.subr.bf16.mxu0 0
      %2613 = vmatpush1.bf16.msra.mxu0 0
      %2614 = vmatprep.subr.bf16.mxu0 0
      %2615 = vmatpush1.bf16.msra.mxu0 0
      %2616 = vmatprep.subr.bf16.mxu0 0
      %2617 = vmatpush1.bf16.msra.mxu0 0
      %2618 = vmatprep.mubr.bf16.mxu0 0
      %2619 = vmatmul.mubr.bf16.gmra.mrb[0].mxu0 %v2505
      %v2620 = vpop.f32.mrb[0].mxu0
      %v2621 = vadd.f32 0.0, %v2620
      %v2622 = vpop.f32.mrb[0].mxu0
      %v2623 = vpop.f32.mrb[0].mxu0
      %v2624 = vadd.f32 0.0, %v2623
      %v2625 = vpop.f32.mrb[0].mxu0
      %2626 = vmatprep.mubr.bf16.mxu0 0
      %2627 = vmatmul.mubr.bf16.gmra.mrb[0].mxu0 %v2506
      %v2628 = vpop.f32.mrb[0].mxu0
      %v2629 = vadd.f32 0.0, %v2628
      %v2630 = vpop.f32.mrb[0].mxu0
      %v2631 = vpop.f32.mrb[0].mxu0
      %v2632 = vadd.f32 0.0, %v2631
      %v2633 = vpop.f32.mrb[0].mxu0
      %2634 = vmatprep.mubr.bf16.mxu0 0
      %2635 = vmatmul.mubr.bf16.gmra.mrb[0].mxu0 %v2507
      %v2636 = vpop.f32.mrb[0].mxu0
      %v2637 = vadd.f32 0.0, %v2636
      %v2638 = vpop.f32.mrb[0].mxu0
      %v2639 = vpop.f32.mrb[0].mxu0
      %v2640 = vadd.f32 0.0, %v2639
      %v2641 = vpop.f32.mrb[0].mxu0
      %2642 = vmatprep.mubr.bf16.mxu0 0
      %2643 = vmatmul.mubr.bf16.gmra.mrb[0].mxu0 %v2508
      %v2644 = vpop.f32.mrb[0].mxu0
      %v2645 = vadd.f32 0.0, %v2644
      %v2646 = vpop.f32.mrb[0].mxu0
      %v2647 = vpop.f32.mrb[0].mxu0
      %v2648 = vadd.f32 0.0, %v2647
      %v2649 = vpop.f32.mrb[0].mxu0
      %2650 = vmatprep.mubr.bf16.mxu0 0
      %2651 = vmatmul.mubr.bf16.gmra.mrb[0].mxu0 %v2509
      %v2652 = vpop.f32.mrb[0].mxu0
      %v2653 = vadd.f32 0.0, %v2652
      %v2654 = vpop.f32.mrb[0].mxu0
      %v2655 = vpop.f32.mrb[0].mxu0
      %v2656 = vadd.f32 0.0, %v2655
      %v2657 = vpop.f32.mrb[0].mxu0
      %2658 = vmatprep.mubr.bf16.mxu0 0
      %2659 = vmatmul.mubr.bf16.gmra.mrb[0].mxu0 %v2510
      %v2660 = vpop.f32.mrb[0].mxu0
      %v2661 = vadd.f32 0.0, %v2660
      %v2662 = vpop.f32.mrb[0].mxu0
      %v2663 = vpop.f32.mrb[0].mxu0
      %v2664 = vadd.f32 0.0, %v2663
      %v2665 = vpop.f32.mrb[0].mxu0
      %2666 = vmatprep.mubr.bf16.mxu0 0
      %2667 = vmatmul.mubr.bf16.gmra.mrb[0].mxu0 %v2511
      %v2668 = vpop.f32.mrb[0].mxu0
      %v2669 = vadd.f32 0.0, %v2668
      %v2670 = vpop.f32.mrb[0].mxu0
      %v2671 = vpop.f32.mrb[0].mxu0
      %v2672 = vadd.f32 0.0, %v2671
      %v2673 = vpop.f32.mrb[0].mxu0
      %2674 = vmatprep.mubr.bf16.mxu0 0
      %2675 = vmatmul.mubr.bf16.gmra.mrb[0].mxu0 %v2512
      %v2676 = vpop.f32.mrb[0].mxu0
      %v2677 = vadd.f32 0.0, %v2676
      %v2678 = vpop.f32.mrb[0].mxu0
      %v2679 = vpop.f32.mrb[0].mxu0
      %v2680 = vadd.f32 0.0, %v2679
      %v2681 = vpop.f32.mrb[0].mxu0
      %2682 = vmatprep.mubr.bf16.mxu0 0
      %2683 = vmatmul.mubr.bf16.gmra.mrb[0].mxu0 %v2513
      %v2684 = vpop.f32.mrb[0].mxu0
      %v2685 = vadd.f32 0.0, %v2684
      %v2686 = vpop.f32.mrb[0].mxu0
      %v2687 = vpop.f32.mrb[0].mxu0
      %v2688 = vadd.f32 0.0, %v2687
      %v2689 = vpop.f32.mrb[0].mxu0
      %2690 = vmatprep.mubr.bf16.mxu0 0
      %2691 = vmatmul.mubr.bf16.gmra.mrb[0].mxu0 %v2514
      %v2692 = vpop.f32.mrb[0].mxu0
      %v2693 = vadd.f32 0.0, %v2692
      %v2694 = vpop.f32.mrb[0].mxu0
      %v2695 = vpop.f32.mrb[0].mxu0
      %v2696 = vadd.f32 0.0, %v2695
      %v2697 = vpop.f32.mrb[0].mxu0
      %2698 = vmatprep.mubr.bf16.mxu0 0
      %2699 = vmatmul.mubr.bf16.gmra.mrb[0].mxu0 %v2515
      %v2700 = vpop.f32.mrb[0].mxu0
      %v2701 = vadd.f32 0.0, %v2700
      %v2702 = vpop.f32.mrb[0].mxu0
      %v2703 = vpop.f32.mrb[0].mxu0
      %v2704 = vadd.f32 0.0, %v2703
      %v2705 = vpop.f32.mrb[0].mxu0
      %2706 = vmatprep.mubr.bf16.mxu0 0
      %2707 = vmatmul.mubr.bf16.gmra.mrb[0].mxu0 %v2516
      %v2708 = vpop.f32.mrb[0].mxu0
      %v2709 = vadd.f32 0.0, %v2708
      %v2710 = vpop.f32.mrb[0].mxu0
      %v2711 = vpop.f32.mrb[0].mxu0
      %v2712 = vadd.f32 0.0, %v2711
      %v2713 = vpop.f32.mrb[0].mxu0
      %2714 = vmatprep.mubr.bf16.mxu0 0
      %2715 = vmatmul.mubr.bf16.gmra.mrb[0].mxu0 %v2517
      %v2716 = vpop.f32.mrb[0].mxu0
      %v2717 = vadd.f32 0.0, %v2716
      %v2718 = vpop.f32.mrb[0].mxu0
      %v2719 = vpop.f32.mrb[0].mxu0
      %v2720 = vadd.f32 0.0, %v2719
      %v2721 = vpop.f32.mrb[0].mxu0
      %2722 = vmatprep.mubr.bf16.mxu0 0
      %2723 = vmatmul.mubr.bf16.gmra.mrb[0].mxu0 %v2518
      %v2724 = vpop.f32.mrb[0].mxu0
      %v2725 = vadd.f32 0.0, %v2724
      %v2726 = vpop.f32.mrb[0].mxu0
      %v2727 = vpop.f32.mrb[0].mxu0
      %v2728 = vadd.f32 0.0, %v2727
      %v2729 = vpop.f32.mrb[0].mxu0
      %2730 = vmatprep.mubr.bf16.mxu0 0
      %2731 = vmatmul.mubr.bf16.gmra.mrb[0].mxu0 %v2519
      %v2732 = vpop.f32.mrb[0].mxu0
      %v2733 = vadd.f32 0.0, %v2732
      %v2734 = vpop.f32.mrb[0].mxu0
      %v2735 = vpop.f32.mrb[0].mxu0
      %v2736 = vadd.f32 0.0, %v2735
      %v2737 = vpop.f32.mrb[0].mxu0
      %2738 = vmatprep.mubr.bf16.mxu0 0
      %2739 = vmatmul.mubr.bf16.gmra.mrb[0].mxu0 %v2520
      %v2740 = vpop.f32.mrb[0].mxu0
      %v2741 = vadd.f32 0.0, %v2740
      %v2742 = vpop.f32.mrb[0].mxu0
      %v2743 = vpop.f32.mrb[0].mxu0
      %v2744 = vadd.f32 0.0, %v2743
      %v2745 = vpop.f32.mrb[0].mxu0
      %2746 = vdwg.mxu0
      %v2747 = vld [vmem:[#allocation2] sm:$0xff]
      %v2748 = vld [vmem:[#allocation2 + $0x8] sm:$0xff]
      %v2749 = vld [vmem:[#allocation2 + $0x10] sm:$0xff]
      %v2750 = vld [vmem:[#allocation2 + $0x18] sm:$0xff]
      %v2751 = vld [vmem:[#allocation2 + $0x20] sm:$0xff]
      %v2752 = vld [vmem:[#allocation2 + $0x28] sm:$0xff]
      %v2753 = vld [vmem:[#allocation2 + $0x30] sm:$0xff]
      %v2754 = vld [vmem:[#allocation2 + $0x38] sm:$0xff]
      %v2755 = vld [vmem:[#allocation2 + $0x40] sm:$0xff]
      %v2756 = vld [vmem:[#allocation2 + $0x48] sm:$0xff]
      %v2757 = vld [vmem:[#allocation2 + $0x50] sm:$0xff]
      %v2758 = vld [vmem:[#allocation2 + $0x58] sm:$0xff]
      %v2759 = vld [vmem:[#allocation2 + $0x60] sm:$0xff]
      %v2760 = vld [vmem:[#allocation2 + $0x68] sm:$0xff]
      %v2761 = vld [vmem:[#allocation2 + $0x70] sm:$0xff]
      %v2762 = vld [vmem:[#allocation2 + $0x78] sm:$0xff]
      %v2763 = vld [vmem:[#allocation2 + $0x80] sm:$0xff]
      %v2764 = vld [vmem:[#allocation2 + $0x88] sm:$0xff]
      %v2765 = vld [vmem:[#allocation2 + $0x90] sm:$0xff]
      %v2766 = vld [vmem:[#allocation2 + $0x98] sm:$0xff]
      %v2767 = vld [vmem:[#allocation2 + $0xa0] sm:$0xff]
      %v2768 = vld [vmem:[#allocation2 + $0xa8] sm:$0xff]
      %v2769 = vld [vmem:[#allocation2 + $0xb0] sm:$0xff]
      %v2770 = vld [vmem:[#allocation2 + $0xb8] sm:$0xff]
      %v2771 = vld [vmem:[#allocation2 + $0xc0] sm:$0xff]
      %v2772 = vld [vmem:[#allocation2 + $0xc8] sm:$0xff]
      %v2773 = vld [vmem:[#allocation2 + $0xd0] sm:$0xff]
      %v2774 = vld [vmem:[#allocation2 + $0xd8] sm:$0xff]
      %v2775 = vld [vmem:[#allocation2 + $0xe0] sm:$0xff]
      %v2776 = vld [vmem:[#allocation2 + $0xe8] sm:$0xff]
      %v2777 = vld [vmem:[#allocation2 + $0xf0] sm:$0xff]
      %v2778 = vld [vmem:[#allocation2 + $0xf8] sm:$0xff]
      %v2779 = vadd.f32 %v2747, %v2621
      %v2780 = vadd.f32 %v2748, %v2624
      %v2781 = vadd.f32 %v2749, %v2629
      %v2782 = vadd.f32 %v2750, %v2632
      %v2783 = vadd.f32 %v2751, %v2637
      %v2784 = vadd.f32 %v2752, %v2640
      %v2785 = vadd.f32 %v2753, %v2645
      %v2786 = vadd.f32 %v2754, %v2648
      %v2787 = vadd.f32 %v2755, %v2653
      %v2788 = vadd.f32 %v2756, %v2656
      %v2789 = vadd.f32 %v2757, %v2661
      %v2790 = vadd.f32 %v2758, %v2664
      %v2791 = vadd.f32 %v2759, %v2669
      %v2792 = vadd.f32 %v2760, %v2672
      %v2793 = vadd.f32 %v2761, %v2677
      %v2794 = vadd.f32 %v2762, %v2680
      %v2795 = vadd.f32 %v2763, %v2685
      %v2796 = vadd.f32 %v2764, %v2688
      %v2797 = vadd.f32 %v2765, %v2693
      %v2798 = vadd.f32 %v2766, %v2696
      %v2799 = vadd.f32 %v2767, %v2701
      %v2800 = vadd.f32 %v2768, %v2704
      %v2801 = vadd.f32 %v2769, %v2709
      %v2802 = vadd.f32 %v2770, %v2712
      %v2803 = vadd.f32 %v2771, %v2717
      %v2804 = vadd.f32 %v2772, %v2720
      %v2805 = vadd.f32 %v2773, %v2725
      %v2806 = vadd.f32 %v2774, %v2728
      %v2807 = vadd.f32 %v2775, %v2733
      %v2808 = vadd.f32 %v2776, %v2736
      %v2809 = vadd.f32 %v2777, %v2741
      %v2810 = vadd.f32 %v2778, %v2744
      %2811 = vst [vmem:[#allocation2] sm:$0xff] %v2779
      %2812 = vst [vmem:[#allocation2 + $0x8] sm:$0xff] %v2780
      %2813 = vst [vmem:[#allocation2 + $0x10] sm:$0xff] %v2781
      %2814 = vst [vmem:[#allocation2 + $0x18] sm:$0xff] %v2782
      %2815 = vst [vmem:[#allocation2 + $0x20] sm:$0xff] %v2783
      %2816 = vst [vmem:[#allocation2 + $0x28] sm:$0xff] %v2784
      %2817 = vst [vmem:[#allocation2 + $0x30] sm:$0xff] %v2785
      %2818 = vst [vmem:[#allocation2 + $0x38] sm:$0xff] %v2786
      %2819 = vst [vmem:[#allocation2 + $0x40] sm:$0xff] %v2787
      %2820 = vst [vmem:[#allocation2 + $0x48] sm:$0xff] %v2788
      %2821 = vst [vmem:[#allocation2 + $0x50] sm:$0xff] %v2789
      %2822 = vst [vmem:[#allocation2 + $0x58] sm:$0xff] %v2790
      %2823 = vst [vmem:[#allocation2 + $0x60] sm:$0xff] %v2791
      %2824 = vst [vmem:[#allocation2 + $0x68] sm:$0xff] %v2792
      %2825 = vst [vmem:[#allocation2 + $0x70] sm:$0xff] %v2793
      %2826 = vst [vmem:[#allocation2 + $0x78] sm:$0xff] %v2794
      %2827 = vst [vmem:[#allocation2 + $0x80] sm:$0xff] %v2795
      %2828 = vst [vmem:[#allocation2 + $0x88] sm:$0xff] %v2796
      %2829 = vst [vmem:[#allocation2 + $0x90] sm:$0xff] %v2797
      %2830 = vst [vmem:[#allocation2 + $0x98] sm:$0xff] %v2798
      %2831 = vst [vmem:[#allocation2 + $0xa0] sm:$0xff] %v2799
      %2832 = vst [vmem:[#allocation2 + $0xa8] sm:$0xff] %v2800
      %2833 = vst [vmem:[#allocation2 + $0xb0] sm:$0xff] %v2801
      %2834 = vst [vmem:[#allocation2 + $0xb8] sm:$0xff] %v2802
      %2835 = vst [vmem:[#allocation2 + $0xc0] sm:$0xff] %v2803
      %2836 = vst [vmem:[#allocation2 + $0xc8] sm:$0xff] %v2804
      %2837 = vst [vmem:[#allocation2 + $0xd0] sm:$0xff] %v2805
      %2838 = vst [vmem:[#allocation2 + $0xd8] sm:$0xff] %v2806
      %2839 = vst [vmem:[#allocation2 + $0xe0] sm:$0xff] %v2807
      %2840 = vst [vmem:[#allocation2 + $0xe8] sm:$0xff] %v2808
      %2841 = vst [vmem:[#allocation2 + $0xf0] sm:$0xff] %v2809
      %2842 = vst [vmem:[#allocation2 + $0xf8] sm:$0xff] %v2810
      %s2843 = sadd.s32 %s304, 16
      %s2844 = scalar_lea.vmem %s268, %s2843
      %v2845 = vld [vmem:[%s2844] sm:$0xff]
      %v2846 = vld [vmem:[%s2844 + $0x8] sm:$0xff]
      %v2847 = vld [vmem:[%s2844 + $0x10] sm:$0xff]
      %v2848 = vld [vmem:[%s2844 + $0x18] sm:$0xff]
      %v2849 = vld [vmem:[%s2844 + $0x20] sm:$0xff]
      %v2850 = vld [vmem:[%s2844 + $0x28] sm:$0xff]
      %v2851 = vld [vmem:[%s2844 + $0x30] sm:$0xff]
      %v2852 = vld [vmem:[%s2844 + $0x38] sm:$0xff]
      %v2853 = vld [vmem:[%s2844 + $0x40] sm:$0xff]
      %v2854 = vld [vmem:[%s2844 + $0x48] sm:$0xff]
      %v2855 = vld [vmem:[%s2844 + $0x50] sm:$0xff]
      %v2856 = vld [vmem:[%s2844 + $0x58] sm:$0xff]
      %v2857 = vld [vmem:[%s2844 + $0x60] sm:$0xff]
      %v2858 = vld [vmem:[%s2844 + $0x68] sm:$0xff]
      %v2859 = vld [vmem:[%s2844 + $0x70] sm:$0xff]
      %v2860 = vld [vmem:[%s2844 + $0x78] sm:$0xff]
      %v2861 = vld [vmem:[%s2844 + $0x80] sm:$0xff]
      %v2862 = vld [vmem:[%s2844 + $0x88] sm:$0xff]
      %v2863 = vld [vmem:[%s2844 + $0x90] sm:$0xff]
      %v2864 = vld [vmem:[%s2844 + $0x98] sm:$0xff]
      %v2865 = vld [vmem:[%s2844 + $0xa0] sm:$0xff]
      %v2866 = vld [vmem:[%s2844 + $0xa8] sm:$0xff]
      %v2867 = vld [vmem:[%s2844 + $0xb0] sm:$0xff]
      %v2868 = vld [vmem:[%s2844 + $0xb8] sm:$0xff]
      %v2869 = vld [vmem:[%s2844 + $0xc0] sm:$0xff]
      %v2870 = vld [vmem:[%s2844 + $0xc8] sm:$0xff]
      %v2871 = vld [vmem:[%s2844 + $0xd0] sm:$0xff]
      %v2872 = vld [vmem:[%s2844 + $0xd8] sm:$0xff]
      %v2873 = vld [vmem:[%s2844 + $0xe0] sm:$0xff]
      %v2874 = vld [vmem:[%s2844 + $0xe8] sm:$0xff]
      %v2875 = vld [vmem:[%s2844 + $0xf0] sm:$0xff]
      %v2876 = vld [vmem:[%s2844 + $0xf8] sm:$0xff]
      %v2877 = vpack.c.bf16 %v2846, %v2845
      %v2878 = vpack.c.bf16 %v2848, %v2847
      %v2879 = vpack.c.bf16 %v2850, %v2849
      %v2880 = vpack.c.bf16 %v2852, %v2851
      %v2881 = vpack.c.bf16 %v2854, %v2853
      %v2882 = vpack.c.bf16 %v2856, %v2855
      %v2883 = vpack.c.bf16 %v2858, %v2857
      %v2884 = vpack.c.bf16 %v2860, %v2859
      %v2885 = vpack.c.bf16 %v2862, %v2861
      %v2886 = vpack.c.bf16 %v2864, %v2863
      %v2887 = vpack.c.bf16 %v2866, %v2865
      %v2888 = vpack.c.bf16 %v2868, %v2867
      %v2889 = vpack.c.bf16 %v2870, %v2869
      %v2890 = vpack.c.bf16 %v2872, %v2871
      %v2891 = vpack.c.bf16 %v2874, %v2873
      %v2892 = vpack.c.bf16 %v2876, %v2875
      %s2893 = scalar_lea.vmem %s272, 448
      %v2894 = vld [vmem:[%s2893] sm:$0xf]
      %v2895 = vld [vmem:[%s2893 + $0x4] sm:$0xf]
      %v2896 = vld [vmem:[%s2893 + $0x8] sm:$0xf]
      %v2897 = vld [vmem:[%s2893 + $0xc] sm:$0xf]
      %v2898 = vld [vmem:[%s2893 + $0x10] sm:$0xf]
      %v2899 = vld [vmem:[%s2893 + $0x14] sm:$0xf]
      %v2900 = vld [vmem:[%s2893 + $0x18] sm:$0xf]
      %v2901 = vld [vmem:[%s2893 + $0x1c] sm:$0xf]
      %v2902 = vld [vmem:[%s2893 + $0x20] sm:$0xf]
      %v2903 = vld [vmem:[%s2893 + $0x24] sm:$0xf]
      %v2904 = vld [vmem:[%s2893 + $0x28] sm:$0xf]
      %v2905 = vld [vmem:[%s2893 + $0x2c] sm:$0xf]
      %v2906 = vld [vmem:[%s2893 + $0x30] sm:$0xf]
      %v2907 = vld [vmem:[%s2893 + $0x34] sm:$0xf]
      %v2908 = vld [vmem:[%s2893 + $0x38] sm:$0xf]
      %v2909 = vld [vmem:[%s2893 + $0x3c] sm:$0xf]
      %v2926 = vunpack.c.l.b16 %v2894
      %v2927 = vunpack.c.l.b16 %v2895
      %v2928 = vunpack.c.l.b16 %v2896
      %v2929 = vunpack.c.l.b16 %v2897
      %v2930 = vunpack.c.l.b16 %v2898
      %v2931 = vunpack.c.l.b16 %v2899
      %v2932 = vunpack.c.l.b16 %v2900
      %v2933 = vunpack.c.l.b16 %v2901
      %v2934 = vunpack.c.l.b16 %v2902
      %v2935 = vunpack.c.l.b16 %v2903
      %v2936 = vunpack.c.l.b16 %v2904
      %v2937 = vunpack.c.l.b16 %v2905
      %v2938 = vunpack.c.l.b16 %v2906
      %v2939 = vunpack.c.l.b16 %v2907
      %v2940 = vunpack.c.l.b16 %v2908
      %v2941 = vunpack.c.l.b16 %v2909
      %v2942 = vpack.c.b16 %v2927, %v2926
      %v2943 = vpack.c.b16 %v2929, %v2928
      %v2944 = vpack.c.b16 %v2931, %v2930
      %v2945 = vpack.c.b16 %v2933, %v2932
      %v2946 = vpack.c.b16 %v2935, %v2934
      %v2947 = vpack.c.b16 %v2937, %v2936
      %v2948 = vpack.c.b16 %v2939, %v2938
      %v2949 = vpack.c.b16 %v2941, %v2940
      %2958 = vmatprep.subr.bf16.mxu0 0
      %2959 = vmatpush1.bf16.msra.mxu0 %v2942
      %2960 = vmatprep.subr.bf16.mxu0 0
      %2961 = vmatpush1.bf16.msra.mxu0 %v2943
      %2962 = vmatprep.subr.bf16.mxu0 0
      %2963 = vmatpush1.bf16.msra.mxu0 %v2944
      %2964 = vmatprep.subr.bf16.mxu0 0
      %2965 = vmatpush1.bf16.msra.mxu0 %v2945
      %2966 = vmatprep.subr.bf16.mxu0 0
      %2967 = vmatpush1.bf16.msra.mxu0 %v2946
      %2968 = vmatprep.subr.bf16.mxu0 0
      %2969 = vmatpush1.bf16.msra.mxu0 %v2947
      %2970 = vmatprep.subr.bf16.mxu0 0
      %2971 = vmatpush1.bf16.msra.mxu0 %v2948
      %2972 = vmatprep.subr.bf16.mxu0 0
      %2973 = vmatpush1.bf16.msra.mxu0 %v2949
      %2974 = vmatprep.subr.bf16.mxu0 0
      %2975 = vmatpush1.bf16.msra.mxu0 0
      %2976 = vmatprep.subr.bf16.mxu0 0
      %2977 = vmatpush1.bf16.msra.mxu0 0
      %2978 = vmatprep.subr.bf16.mxu0 0
      %2979 = vmatpush1.bf16.msra.mxu0 0
      %2980 = vmatprep.subr.bf16.mxu0 0
      %2981 = vmatpush1.bf16.msra.mxu0 0
      %2982 = vmatprep.subr.bf16.mxu0 0
      %2983 = vmatpush1.bf16.msra.mxu0 0
      %2984 = vmatprep.subr.bf16.mxu0 0
      %2985 = vmatpush1.bf16.msra.mxu0 0
      %2986 = vmatprep.subr.bf16.mxu0 0
      %2987 = vmatpush1.bf16.msra.mxu0 0
      %2988 = vmatprep.subr.bf16.mxu0 0
      %2989 = vmatpush1.bf16.msra.mxu0 0
      %2990 = vmatprep.mubr.bf16.mxu0 0
      %2991 = vmatmul.mubr.bf16.gmra.mrb[0].mxu0 %v2877
      %v2992 = vpop.f32.mrb[0].mxu0
      %v2993 = vadd.f32 0.0, %v2992
      %v2994 = vpop.f32.mrb[0].mxu0
      %v2995 = vpop.f32.mrb[0].mxu0
      %v2996 = vadd.f32 0.0, %v2995
      %v2997 = vpop.f32.mrb[0].mxu0
      %2998 = vmatprep.mubr.bf16.mxu0 0
      %2999 = vmatmul.mubr.bf16.gmra.mrb[0].mxu0 %v2878
      %v3000 = vpop.f32.mrb[0].mxu0
      %v3001 = vadd.f32 0.0, %v3000
      %v3002 = vpop.f32.mrb[0].mxu0
      %v3003 = vpop.f32.mrb[0].mxu0
      %v3004 = vadd.f32 0.0, %v3003
      %v3005 = vpop.f32.mrb[0].mxu0
      %3006 = vmatprep.mubr.bf16.mxu0 0
      %3007 = vmatmul.mubr.bf16.gmra.mrb[0].mxu0 %v2879
      %v3008 = vpop.f32.mrb[0].mxu0
      %v3009 = vadd.f32 0.0, %v3008
      %v3010 = vpop.f32.mrb[0].mxu0
      %v3011 = vpop.f32.mrb[0].mxu0
      %v3012 = vadd.f32 0.0, %v3011
      %v3013 = vpop.f32.mrb[0].mxu0
      %3014 = vmatprep.mubr.bf16.mxu0 0
      %3015 = vmatmul.mubr.bf16.gmra.mrb[0].mxu0 %v2880
      %v3016 = vpop.f32.mrb[0].mxu0
      %v3017 = vadd.f32 0.0, %v3016
      %v3018 = vpop.f32.mrb[0].mxu0
      %v3019 = vpop.f32.mrb[0].mxu0
      %v3020 = vadd.f32 0.0, %v3019
      %v3021 = vpop.f32.mrb[0].mxu0
      %3022 = vmatprep.mubr.bf16.mxu0 0
      %3023 = vmatmul.mubr.bf16.gmra.mrb[0].mxu0 %v2881
      %v3024 = vpop.f32.mrb[0].mxu0
      %v3025 = vadd.f32 0.0, %v3024
      %v3026 = vpop.f32.mrb[0].mxu0
      %v3027 = vpop.f32.mrb[0].mxu0
      %v3028 = vadd.f32 0.0, %v3027
      %v3029 = vpop.f32.mrb[0].mxu0
      %3030 = vmatprep.mubr.bf16.mxu0 0
      %3031 = vmatmul.mubr.bf16.gmra.mrb[0].mxu0 %v2882
      %v3032 = vpop.f32.mrb[0].mxu0
      %v3033 = vadd.f32 0.0, %v3032
      %v3034 = vpop.f32.mrb[0].mxu0
      %v3035 = vpop.f32.mrb[0].mxu0
      %v3036 = vadd.f32 0.0, %v3035
      %v3037 = vpop.f32.mrb[0].mxu0
      %3038 = vmatprep.mubr.bf16.mxu0 0
      %3039 = vmatmul.mubr.bf16.gmra.mrb[0].mxu0 %v2883
      %v3040 = vpop.f32.mrb[0].mxu0
      %v3041 = vadd.f32 0.0, %v3040
      %v3042 = vpop.f32.mrb[0].mxu0
      %v3043 = vpop.f32.mrb[0].mxu0
      %v3044 = vadd.f32 0.0, %v3043
      %v3045 = vpop.f32.mrb[0].mxu0
      %3046 = vmatprep.mubr.bf16.mxu0 0
      %3047 = vmatmul.mubr.bf16.gmra.mrb[0].mxu0 %v2884
      %v3048 = vpop.f32.mrb[0].mxu0
      %v3049 = vadd.f32 0.0, %v3048
      %v3050 = vpop.f32.mrb[0].mxu0
      %v3051 = vpop.f32.mrb[0].mxu0
      %v3052 = vadd.f32 0.0, %v3051
      %v3053 = vpop.f32.mrb[0].mxu0
      %3054 = vmatprep.mubr.bf16.mxu0 0
      %3055 = vmatmul.mubr.bf16.gmra.mrb[0].mxu0 %v2885
      %v3056 = vpop.f32.mrb[0].mxu0
      %v3057 = vadd.f32 0.0, %v3056
      %v3058 = vpop.f32.mrb[0].mxu0
      %v3059 = vpop.f32.mrb[0].mxu0
      %v3060 = vadd.f32 0.0, %v3059
      %v3061 = vpop.f32.mrb[0].mxu0
      %3062 = vmatprep.mubr.bf16.mxu0 0
      %3063 = vmatmul.mubr.bf16.gmra.mrb[0].mxu0 %v2886
      %v3064 = vpop.f32.mrb[0].mxu0
      %v3065 = vadd.f32 0.0, %v3064
      %v3066 = vpop.f32.mrb[0].mxu0
      %v3067 = vpop.f32.mrb[0].mxu0
      %v3068 = vadd.f32 0.0, %v3067
      %v3069 = vpop.f32.mrb[0].mxu0
      %3070 = vmatprep.mubr.bf16.mxu0 0
      %3071 = vmatmul.mubr.bf16.gmra.mrb[0].mxu0 %v2887
      %v3072 = vpop.f32.mrb[0].mxu0
      %v3073 = vadd.f32 0.0, %v3072
      %v3074 = vpop.f32.mrb[0].mxu0
      %v3075 = vpop.f32.mrb[0].mxu0
      %v3076 = vadd.f32 0.0, %v3075
      %v3077 = vpop.f32.mrb[0].mxu0
      %3078 = vmatprep.mubr.bf16.mxu0 0
      %3079 = vmatmul.mubr.bf16.gmra.mrb[0].mxu0 %v2888
      %v3080 = vpop.f32.mrb[0].mxu0
      %v3081 = vadd.f32 0.0, %v3080
      %v3082 = vpop.f32.mrb[0].mxu0
      %v3083 = vpop.f32.mrb[0].mxu0
      %v3084 = vadd.f32 0.0, %v3083
      %v3085 = vpop.f32.mrb[0].mxu0
      %3086 = vmatprep.mubr.bf16.mxu0 0
      %3087 = vmatmul.mubr.bf16.gmra.mrb[0].mxu0 %v2889
      %v3088 = vpop.f32.mrb[0].mxu0
      %v3089 = vadd.f32 0.0, %v3088
      %v3090 = vpop.f32.mrb[0].mxu0
      %v3091 = vpop.f32.mrb[0].mxu0
      %v3092 = vadd.f32 0.0, %v3091
      %v3093 = vpop.f32.mrb[0].mxu0
      %3094 = vmatprep.mubr.bf16.mxu0 0
      %3095 = vmatmul.mubr.bf16.gmra.mrb[0].mxu0 %v2890
      %v3096 = vpop.f32.mrb[0].mxu0
      %v3097 = vadd.f32 0.0, %v3096
      %v3098 = vpop.f32.mrb[0].mxu0
      %v3099 = vpop.f32.mrb[0].mxu0
      %v3100 = vadd.f32 0.0, %v3099
      %v3101 = vpop.f32.mrb[0].mxu0
      %3102 = vmatprep.mubr.bf16.mxu0 0
      %3103 = vmatmul.mubr.bf16.gmra.mrb[0].mxu0 %v2891
      %v3104 = vpop.f32.mrb[0].mxu0
      %v3105 = vadd.f32 0.0, %v3104
      %v3106 = vpop.f32.mrb[0].mxu0
      %v3107 = vpop.f32.mrb[0].mxu0
      %v3108 = vadd.f32 0.0, %v3107
      %v3109 = vpop.f32.mrb[0].mxu0
      %3110 = vmatprep.mubr.bf16.mxu0 0
      %3111 = vmatmul.mubr.bf16.gmra.mrb[0].mxu0 %v2892
      %v3112 = vpop.f32.mrb[0].mxu0
      %v3113 = vadd.f32 0.0, %v3112
      %v3114 = vpop.f32.mrb[0].mxu0
      %v3115 = vpop.f32.mrb[0].mxu0
      %v3116 = vadd.f32 0.0, %v3115
      %v3117 = vpop.f32.mrb[0].mxu0
      %3118 = vdwg.mxu0
      %v3119 = vld [vmem:[#allocation2] sm:$0xff]
      %v3120 = vld [vmem:[#allocation2 + $0x8] sm:$0xff]
      %v3121 = vld [vmem:[#allocation2 + $0x10] sm:$0xff]
      %v3122 = vld [vmem:[#allocation2 + $0x18] sm:$0xff]
      %v3123 = vld [vmem:[#allocation2 + $0x20] sm:$0xff]
      %v3124 = vld [vmem:[#allocation2 + $0x28] sm:$0xff]
      %v3125 = vld [vmem:[#allocation2 + $0x30] sm:$0xff]
      %v3126 = vld [vmem:[#allocation2 + $0x38] sm:$0xff]
      %v3127 = vld [vmem:[#allocation2 + $0x40] sm:$0xff]
      %v3128 = vld [vmem:[#allocation2 + $0x48] sm:$0xff]
      %v3129 = vld [vmem:[#allocation2 + $0x50] sm:$0xff]
      %v3130 = vld [vmem:[#allocation2 + $0x58] sm:$0xff]
      %v3131 = vld [vmem:[#allocation2 + $0x60] sm:$0xff]
      %v3132 = vld [vmem:[#allocation2 + $0x68] sm:$0xff]
      %v3133 = vld [vmem:[#allocation2 + $0x70] sm:$0xff]
      %v3134 = vld [vmem:[#allocation2 + $0x78] sm:$0xff]
      %v3135 = vld [vmem:[#allocation2 + $0x80] sm:$0xff]
      %v3136 = vld [vmem:[#allocation2 + $0x88] sm:$0xff]
      %v3137 = vld [vmem:[#allocation2 + $0x90] sm:$0xff]
      %v3138 = vld [vmem:[#allocation2 + $0x98] sm:$0xff]
      %v3139 = vld [vmem:[#allocation2 + $0xa0] sm:$0xff]
      %v3140 = vld [vmem:[#allocation2 + $0xa8] sm:$0xff]
      %v3141 = vld [vmem:[#allocation2 + $0xb0] sm:$0xff]
      %v3142 = vld [vmem:[#allocation2 + $0xb8] sm:$0xff]
      %v3143 = vld [vmem:[#allocation2 + $0xc0] sm:$0xff]
      %v3144 = vld [vmem:[#allocation2 + $0xc8] sm:$0xff]
      %v3145 = vld [vmem:[#allocation2 + $0xd0] sm:$0xff]
      %v3146 = vld [vmem:[#allocation2 + $0xd8] sm:$0xff]
      %v3147 = vld [vmem:[#allocation2 + $0xe0] sm:$0xff]
      %v3148 = vld [vmem:[#allocation2 + $0xe8] sm:$0xff]
      %v3149 = vld [vmem:[#allocation2 + $0xf0] sm:$0xff]
      %v3150 = vld [vmem:[#allocation2 + $0xf8] sm:$0xff]
      %v3151 = vadd.f32 %v3119, %v2993
      %v3152 = vadd.f32 %v3120, %v2996
      %v3153 = vadd.f32 %v3121, %v3001
      %v3154 = vadd.f32 %v3122, %v3004
      %v3155 = vadd.f32 %v3123, %v3009
      %v3156 = vadd.f32 %v3124, %v3012
      %v3157 = vadd.f32 %v3125, %v3017
      %v3158 = vadd.f32 %v3126, %v3020
      %v3159 = vadd.f32 %v3127, %v3025
      %v3160 = vadd.f32 %v3128, %v3028
      %v3161 = vadd.f32 %v3129, %v3033
      %v3162 = vadd.f32 %v3130, %v3036
      %v3163 = vadd.f32 %v3131, %v3041
      %v3164 = vadd.f32 %v3132, %v3044
      %v3165 = vadd.f32 %v3133, %v3049
      %v3166 = vadd.f32 %v3134, %v3052
      %v3167 = vadd.f32 %v3135, %v3057
      %v3168 = vadd.f32 %v3136, %v3060
      %v3169 = vadd.f32 %v3137, %v3065
      %v3170 = vadd.f32 %v3138, %v3068
      %v3171 = vadd.f32 %v3139, %v3073
      %v3172 = vadd.f32 %v3140, %v3076
      %v3173 = vadd.f32 %v3141, %v3081
      %v3174 = vadd.f32 %v3142, %v3084
      %v3175 = vadd.f32 %v3143, %v3089
      %v3176 = vadd.f32 %v3144, %v3092
      %v3177 = vadd.f32 %v3145, %v3097
      %v3178 = vadd.f32 %v3146, %v3100
      %v3179 = vadd.f32 %v3147, %v3105
      %v3180 = vadd.f32 %v3148, %v3108
      %v3181 = vadd.f32 %v3149, %v3113
      %v3182 = vadd.f32 %v3150, %v3116
      %3183 = vst [vmem:[#allocation2] sm:$0xff] %v3151
      %3184 = vst [vmem:[#allocation2 + $0x8] sm:$0xff] %v3152
      %3185 = vst [vmem:[#allocation2 + $0x10] sm:$0xff] %v3153
      %3186 = vst [vmem:[#allocation2 + $0x18] sm:$0xff] %v3154
      %3187 = vst [vmem:[#allocation2 + $0x20] sm:$0xff] %v3155
      %3188 = vst [vmem:[#allocation2 + $0x28] sm:$0xff] %v3156
      %3189 = vst [vmem:[#allocation2 + $0x30] sm:$0xff] %v3157
      %3190 = vst [vmem:[#allocation2 + $0x38] sm:$0xff] %v3158
      %3191 = vst [vmem:[#allocation2 + $0x40] sm:$0xff] %v3159
      %3192 = vst [vmem:[#allocation2 + $0x48] sm:$0xff] %v3160
      %3193 = vst [vmem:[#allocation2 + $0x50] sm:$0xff] %v3161
      %3194 = vst [vmem:[#allocation2 + $0x58] sm:$0xff] %v3162
      %3195 = vst [vmem:[#allocation2 + $0x60] sm:$0xff] %v3163
      %3196 = vst [vmem:[#allocation2 + $0x68] sm:$0xff] %v3164
      %3197 = vst [vmem:[#allocation2 + $0x70] sm:$0xff] %v3165
      %3198 = vst [vmem:[#allocation2 + $0x78] sm:$0xff] %v3166
      %3199 = vst [vmem:[#allocation2 + $0x80] sm:$0xff] %v3167
      %3200 = vst [vmem:[#allocation2 + $0x88] sm:$0xff] %v3168
      %3201 = vst [vmem:[#allocation2 + $0x90] sm:$0xff] %v3169
      %3202 = vst [vmem:[#allocation2 + $0x98] sm:$0xff] %v3170
      %3203 = vst [vmem:[#allocation2 + $0xa0] sm:$0xff] %v3171
      %3204 = vst [vmem:[#allocation2 + $0xa8] sm:$0xff] %v3172
      %3205 = vst [vmem:[#allocation2 + $0xb0] sm:$0xff] %v3173
      %3206 = vst [vmem:[#allocation2 + $0xb8] sm:$0xff] %v3174
      %3207 = vst [vmem:[#allocation2 + $0xc0] sm:$0xff] %v3175
      %3208 = vst [vmem:[#allocation2 + $0xc8] sm:$0xff] %v3176
      %3209 = vst [vmem:[#allocation2 + $0xd0] sm:$0xff] %v3177
      %3210 = vst [vmem:[#allocation2 + $0xd8] sm:$0xff] %v3178
      %3211 = vst [vmem:[#allocation2 + $0xe0] sm:$0xff] %v3179
      %3212 = vst [vmem:[#allocation2 + $0xe8] sm:$0xff] %v3180
      %3213 = vst [vmem:[#allocation2 + $0xf0] sm:$0xff] %v3181
      %3214 = vst [vmem:[#allocation2 + $0xf8] sm:$0xff] %v3182
      %s3215 = sadd.s32 %s304, 17
      %s3216 = scalar_lea.vmem %s268, %s3215
      %v3217 = vld [vmem:[%s3216] sm:$0xff]
      %v3218 = vld [vmem:[%s3216 + $0x8] sm:$0xff]
      %v3219 = vld [vmem:[%s3216 + $0x10] sm:$0xff]
      %v3220 = vld [vmem:[%s3216 + $0x18] sm:$0xff]
      %v3221 = vld [vmem:[%s3216 + $0x20] sm:$0xff]
      %v3222 = vld [vmem:[%s3216 + $0x28] sm:$0xff]
      %v3223 = vld [vmem:[%s3216 + $0x30] sm:$0xff]
      %v3224 = vld [vmem:[%s3216 + $0x38] sm:$0xff]
      %v3225 = vld [vmem:[%s3216 + $0x40] sm:$0xff]
      %v3226 = vld [vmem:[%s3216 + $0x48] sm:$0xff]
      %v3227 = vld [vmem:[%s3216 + $0x50] sm:$0xff]
      %v3228 = vld [vmem:[%s3216 + $0x58] sm:$0xff]
      %v3229 = vld [vmem:[%s3216 + $0x60] sm:$0xff]
      %v3230 = vld [vmem:[%s3216 + $0x68] sm:$0xff]
      %v3231 = vld [vmem:[%s3216 + $0x70] sm:$0xff]
      %v3232 = vld [vmem:[%s3216 + $0x78] sm:$0xff]
      %v3233 = vld [vmem:[%s3216 + $0x80] sm:$0xff]
      %v3234 = vld [vmem:[%s3216 + $0x88] sm:$0xff]
      %v3235 = vld [vmem:[%s3216 + $0x90] sm:$0xff]
      %v3236 = vld [vmem:[%s3216 + $0x98] sm:$0xff]
      %v3237 = vld [vmem:[%s3216 + $0xa0] sm:$0xff]
      %v3238 = vld [vmem:[%s3216 + $0xa8] sm:$0xff]
      %v3239 = vld [vmem:[%s3216 + $0xb0] sm:$0xff]
      %v3240 = vld [vmem:[%s3216 + $0xb8] sm:$0xff]
      %v3241 = vld [vmem:[%s3216 + $0xc0] sm:$0xff]
      %v3242 = vld [vmem:[%s3216 + $0xc8] sm:$0xff]
      %v3243 = vld [vmem:[%s3216 + $0xd0] sm:$0xff]
      %v3244 = vld [vmem:[%s3216 + $0xd8] sm:$0xff]
      %v3245 = vld [vmem:[%s3216 + $0xe0] sm:$0xff]
      %v3246 = vld [vmem:[%s3216 + $0xe8] sm:$0xff]
      %v3247 = vld [vmem:[%s3216 + $0xf0] sm:$0xff]
      %v3248 = vld [vmem:[%s3216 + $0xf8] sm:$0xff]
      %v3249 = vpack.c.bf16 %v3218, %v3217
      %v3250 = vpack.c.bf16 %v3220, %v3219
      %v3251 = vpack.c.bf16 %v3222, %v3221
      %v3252 = vpack.c.bf16 %v3224, %v3223
      %v3253 = vpack.c.bf16 %v3226, %v3225
      %v3254 = vpack.c.bf16 %v3228, %v3227
      %v3255 = vpack.c.bf16 %v3230, %v3229
      %v3256 = vpack.c.bf16 %v3232, %v3231
      %v3257 = vpack.c.bf16 %v3234, %v3233
      %v3258 = vpack.c.bf16 %v3236, %v3235
      %v3259 = vpack.c.bf16 %v3238, %v3237
      %v3260 = vpack.c.bf16 %v3240, %v3239
      %v3261 = vpack.c.bf16 %v3242, %v3241
      %v3262 = vpack.c.bf16 %v3244, %v3243
      %v3263 = vpack.c.bf16 %v3246, %v3245
      %v3264 = vpack.c.bf16 %v3248, %v3247
      %s3265 = scalar_lea.vmem %s272, 512
      %v3266 = vld [vmem:[%s3265] sm:$0xf]
      %v3267 = vld [vmem:[%s3265 + $0x4] sm:$0xf]
      %v3268 = vld [vmem:[%s3265 + $0x8] sm:$0xf]
      %v3269 = vld [vmem:[%s3265 + $0xc] sm:$0xf]
      %v3270 = vld [vmem:[%s3265 + $0x10] sm:$0xf]
      %v3271 = vld [vmem:[%s3265 + $0x14] sm:$0xf]
      %v3272 = vld [vmem:[%s3265 + $0x18] sm:$0xf]
      %v3273 = vld [vmem:[%s3265 + $0x1c] sm:$0xf]
      %v3274 = vld [vmem:[%s3265 + $0x20] sm:$0xf]
      %v3275 = vld [vmem:[%s3265 + $0x24] sm:$0xf]
      %v3276 = vld [vmem:[%s3265 + $0x28] sm:$0xf]
      %v3277 = vld [vmem:[%s3265 + $0x2c] sm:$0xf]
      %v3278 = vld [vmem:[%s3265 + $0x30] sm:$0xf]
      %v3279 = vld [vmem:[%s3265 + $0x34] sm:$0xf]
      %v3280 = vld [vmem:[%s3265 + $0x38] sm:$0xf]
      %v3281 = vld [vmem:[%s3265 + $0x3c] sm:$0xf]
      %v3298 = vunpack.c.l.b16 %v3266
      %v3299 = vunpack.c.l.b16 %v3267
      %v3300 = vunpack.c.l.b16 %v3268
      %v3301 = vunpack.c.l.b16 %v3269
      %v3302 = vunpack.c.l.b16 %v3270
      %v3303 = vunpack.c.l.b16 %v3271
      %v3304 = vunpack.c.l.b16 %v3272
      %v3305 = vunpack.c.l.b16 %v3273
      %v3306 = vunpack.c.l.b16 %v3274
      %v3307 = vunpack.c.l.b16 %v3275
      %v3308 = vunpack.c.l.b16 %v3276
      %v3309 = vunpack.c.l.b16 %v3277
      %v3310 = vunpack.c.l.b16 %v3278
      %v3311 = vunpack.c.l.b16 %v3279
      %v3312 = vunpack.c.l.b16 %v3280
      %v3313 = vunpack.c.l.b16 %v3281
      %v3314 = vpack.c.b16 %v3299, %v3298
      %v3315 = vpack.c.b16 %v3301, %v3300
      %v3316 = vpack.c.b16 %v3303, %v3302
      %v3317 = vpack.c.b16 %v3305, %v3304
      %v3318 = vpack.c.b16 %v3307, %v3306
      %v3319 = vpack.c.b16 %v3309, %v3308
      %v3320 = vpack.c.b16 %v3311, %v3310
      %v3321 = vpack.c.b16 %v3313, %v3312
      %3330 = vmatprep.subr.bf16.mxu0 0
      %3331 = vmatpush1.bf16.msra.mxu0 %v3314
      %3332 = vmatprep.subr.bf16.mxu0 0
      %3333 = vmatpush1.bf16.msra.mxu0 %v3315
      %3334 = vmatprep.subr.bf16.mxu0 0
      %3335 = vmatpush1.bf16.msra.mxu0 %v3316
      %3336 = vmatprep.subr.bf16.mxu0 0
      %3337 = vmatpush1.bf16.msra.mxu0 %v3317
      %3338 = vmatprep.subr.bf16.mxu0 0
      %3339 = vmatpush1.bf16.msra.mxu0 %v3318
      %3340 = vmatprep.subr.bf16.mxu0 0
      %3341 = vmatpush1.bf16.msra.mxu0 %v3319
      %3342 = vmatprep.subr.bf16.mxu0 0
      %3343 = vmatpush1.bf16.msra.mxu0 %v3320
      %3344 = vmatprep.subr.bf16.mxu0 0
      %3345 = vmatpush1.bf16.msra.mxu0 %v3321
      %3346 = vmatprep.subr.bf16.mxu0 0
      %3347 = vmatpush1.bf16.msra.mxu0 0
      %3348 = vmatprep.subr.bf16.mxu0 0
      %3349 = vmatpush1.bf16.msra.mxu0 0
      %3350 = vmatprep.subr.bf16.mxu0 0
      %3351 = vmatpush1.bf16.msra.mxu0 0
      %3352 = vmatprep.subr.bf16.mxu0 0
      %3353 = vmatpush1.bf16.msra.mxu0 0
      %3354 = vmatprep.subr.bf16.mxu0 0
      %3355 = vmatpush1.bf16.msra.mxu0 0
      %3356 = vmatprep.subr.bf16.mxu0 0
      %3357 = vmatpush1.bf16.msra.mxu0 0
      %3358 = vmatprep.subr.bf16.mxu0 0
      %3359 = vmatpush1.bf16.msra.mxu0 0
      %3360 = vmatprep.subr.bf16.mxu0 0
      %3361 = vmatpush1.bf16.msra.mxu0 0
      %3362 = vmatprep.mubr.bf16.mxu0 0
      %3363 = vmatmul.mubr.bf16.gmra.mrb[0].mxu0 %v3249
      %v3364 = vpop.f32.mrb[0].mxu0
      %v3365 = vadd.f32 0.0, %v3364
      %v3366 = vpop.f32.mrb[0].mxu0
      %v3367 = vpop.f32.mrb[0].mxu0
      %v3368 = vadd.f32 0.0, %v3367
      %v3369 = vpop.f32.mrb[0].mxu0
      %3370 = vmatprep.mubr.bf16.mxu0 0
      %3371 = vmatmul.mubr.bf16.gmra.mrb[0].mxu0 %v3250
      %v3372 = vpop.f32.mrb[0].mxu0
      %v3373 = vadd.f32 0.0, %v3372
      %v3374 = vpop.f32.mrb[0].mxu0
      %v3375 = vpop.f32.mrb[0].mxu0
      %v3376 = vadd.f32 0.0, %v3375
      %v3377 = vpop.f32.mrb[0].mxu0
      %3378 = vmatprep.mubr.bf16.mxu0 0
      %3379 = vmatmul.mubr.bf16.gmra.mrb[0].mxu0 %v3251
      %v3380 = vpop.f32.mrb[0].mxu0
      %v3381 = vadd.f32 0.0, %v3380
      %v3382 = vpop.f32.mrb[0].mxu0
      %v3383 = vpop.f32.mrb[0].mxu0
      %v3384 = vadd.f32 0.0, %v3383
      %v3385 = vpop.f32.mrb[0].mxu0
      %3386 = vmatprep.mubr.bf16.mxu0 0
      %3387 = vmatmul.mubr.bf16.gmra.mrb[0].mxu0 %v3252
      %v3388 = vpop.f32.mrb[0].mxu0
      %v3389 = vadd.f32 0.0, %v3388
      %v3390 = vpop.f32.mrb[0].mxu0
      %v3391 = vpop.f32.mrb[0].mxu0
      %v3392 = vadd.f32 0.0, %v3391
      %v3393 = vpop.f32.mrb[0].mxu0
      %3394 = vmatprep.mubr.bf16.mxu0 0
      %3395 = vmatmul.mubr.bf16.gmra.mrb[0].mxu0 %v3253
      %v3396 = vpop.f32.mrb[0].mxu0
      %v3397 = vadd.f32 0.0, %v3396
      %v3398 = vpop.f32.mrb[0].mxu0
      %v3399 = vpop.f32.mrb[0].mxu0
      %v3400 = vadd.f32 0.0, %v3399
      %v3401 = vpop.f32.mrb[0].mxu0
      %3402 = vmatprep.mubr.bf16.mxu0 0
      %3403 = vmatmul.mubr.bf16.gmra.mrb[0].mxu0 %v3254
      %v3404 = vpop.f32.mrb[0].mxu0
      %v3405 = vadd.f32 0.0, %v3404
      %v3406 = vpop.f32.mrb[0].mxu0
      %v3407 = vpop.f32.mrb[0].mxu0
      %v3408 = vadd.f32 0.0, %v3407
      %v3409 = vpop.f32.mrb[0].mxu0
      %3410 = vmatprep.mubr.bf16.mxu0 0
      %3411 = vmatmul.mubr.bf16.gmra.mrb[0].mxu0 %v3255
      %v3412 = vpop.f32.mrb[0].mxu0
      %v3413 = vadd.f32 0.0, %v3412
      %v3414 = vpop.f32.mrb[0].mxu0
      %v3415 = vpop.f32.mrb[0].mxu0
      %v3416 = vadd.f32 0.0, %v3415
      %v3417 = vpop.f32.mrb[0].mxu0
      %3418 = vmatprep.mubr.bf16.mxu0 0
      %3419 = vmatmul.mubr.bf16.gmra.mrb[0].mxu0 %v3256
      %v3420 = vpop.f32.mrb[0].mxu0
      %v3421 = vadd.f32 0.0, %v3420
      %v3422 = vpop.f32.mrb[0].mxu0
      %v3423 = vpop.f32.mrb[0].mxu0
      %v3424 = vadd.f32 0.0, %v3423
      %v3425 = vpop.f32.mrb[0].mxu0
      %3426 = vmatprep.mubr.bf16.mxu0 0
      %3427 = vmatmul.mubr.bf16.gmra.mrb[0].mxu0 %v3257
      %v3428 = vpop.f32.mrb[0].mxu0
      %v3429 = vadd.f32 0.0, %v3428
      %v3430 = vpop.f32.mrb[0].mxu0
      %v3431 = vpop.f32.mrb[0].mxu0
      %v3432 = vadd.f32 0.0, %v3431
      %v3433 = vpop.f32.mrb[0].mxu0
      %3434 = vmatprep.mubr.bf16.mxu0 0
      %3435 = vmatmul.mubr.bf16.gmra.mrb[0].mxu0 %v3258
      %v3436 = vpop.f32.mrb[0].mxu0
      %v3437 = vadd.f32 0.0, %v3436
      %v3438 = vpop.f32.mrb[0].mxu0
      %v3439 = vpop.f32.mrb[0].mxu0
      %v3440 = vadd.f32 0.0, %v3439
      %v3441 = vpop.f32.mrb[0].mxu0
      %3442 = vmatprep.mubr.bf16.mxu0 0
      %3443 = vmatmul.mubr.bf16.gmra.mrb[0].mxu0 %v3259
      %v3444 = vpop.f32.mrb[0].mxu0
      %v3445 = vadd.f32 0.0, %v3444
      %v3446 = vpop.f32.mrb[0].mxu0
      %v3447 = vpop.f32.mrb[0].mxu0
      %v3448 = vadd.f32 0.0, %v3447
      %v3449 = vpop.f32.mrb[0].mxu0
      %3450 = vmatprep.mubr.bf16.mxu0 0
      %3451 = vmatmul.mubr.bf16.gmra.mrb[0].mxu0 %v3260
      %v3452 = vpop.f32.mrb[0].mxu0
      %v3453 = vadd.f32 0.0, %v3452
      %v3454 = vpop.f32.mrb[0].mxu0
      %v3455 = vpop.f32.mrb[0].mxu0
      %v3456 = vadd.f32 0.0, %v3455
      %v3457 = vpop.f32.mrb[0].mxu0
      %3458 = vmatprep.mubr.bf16.mxu0 0
      %3459 = vmatmul.mubr.bf16.gmra.mrb[0].mxu0 %v3261
      %v3460 = vpop.f32.mrb[0].mxu0
      %v3461 = vadd.f32 0.0, %v3460
      %v3462 = vpop.f32.mrb[0].mxu0
      %v3463 = vpop.f32.mrb[0].mxu0
      %v3464 = vadd.f32 0.0, %v3463
      %v3465 = vpop.f32.mrb[0].mxu0
      %3466 = vmatprep.mubr.bf16.mxu0 0
      %3467 = vmatmul.mubr.bf16.gmra.mrb[0].mxu0 %v3262
      %v3468 = vpop.f32.mrb[0].mxu0
      %v3469 = vadd.f32 0.0, %v3468
      %v3470 = vpop.f32.mrb[0].mxu0
      %v3471 = vpop.f32.mrb[0].mxu0
      %v3472 = vadd.f32 0.0, %v3471
      %v3473 = vpop.f32.mrb[0].mxu0
      %3474 = vmatprep.mubr.bf16.mxu0 0
      %3475 = vmatmul.mubr.bf16.gmra.mrb[0].mxu0 %v3263
      %v3476 = vpop.f32.mrb[0].mxu0
      %v3477 = vadd.f32 0.0, %v3476
      %v3478 = vpop.f32.mrb[0].mxu0
      %v3479 = vpop.f32.mrb[0].mxu0
      %v3480 = vadd.f32 0.0, %v3479
      %v3481 = vpop.f32.mrb[0].mxu0
      %3482 = vmatprep.mubr.bf16.mxu0 0
      %3483 = vmatmul.mubr.bf16.gmra.mrb[0].mxu0 %v3264
      %v3484 = vpop.f32.mrb[0].mxu0
      %v3485 = vadd.f32 0.0, %v3484
      %v3486 = vpop.f32.mrb[0].mxu0
      %v3487 = vpop.f32.mrb[0].mxu0
      %v3488 = vadd.f32 0.0, %v3487
      %v3489 = vpop.f32.mrb[0].mxu0
      %3490 = vdwg.mxu0
      %v3491 = vld [vmem:[#allocation2] sm:$0xff]
      %v3492 = vld [vmem:[#allocation2 + $0x8] sm:$0xff]
      %v3493 = vld [vmem:[#allocation2 + $0x10] sm:$0xff]
      %v3494 = vld [vmem:[#allocation2 + $0x18] sm:$0xff]
      %v3495 = vld [vmem:[#allocation2 + $0x20] sm:$0xff]
      %v3496 = vld [vmem:[#allocation2 + $0x28] sm:$0xff]
      %v3497 = vld [vmem:[#allocation2 + $0x30] sm:$0xff]
      %v3498 = vld [vmem:[#allocation2 + $0x38] sm:$0xff]
      %v3499 = vld [vmem:[#allocation2 + $0x40] sm:$0xff]
      %v3500 = vld [vmem:[#allocation2 + $0x48] sm:$0xff]
      %v3501 = vld [vmem:[#allocation2 + $0x50] sm:$0xff]
      %v3502 = vld [vmem:[#allocation2 + $0x58] sm:$0xff]
      %v3503 = vld [vmem:[#allocation2 + $0x60] sm:$0xff]
      %v3504 = vld [vmem:[#allocation2 + $0x68] sm:$0xff]
      %v3505 = vld [vmem:[#allocation2 + $0x70] sm:$0xff]
      %v3506 = vld [vmem:[#allocation2 + $0x78] sm:$0xff]
      %v3507 = vld [vmem:[#allocation2 + $0x80] sm:$0xff]
      %v3508 = vld [vmem:[#allocation2 + $0x88] sm:$0xff]
      %v3509 = vld [vmem:[#allocation2 + $0x90] sm:$0xff]
      %v3510 = vld [vmem:[#allocation2 + $0x98] sm:$0xff]
      %v3511 = vld [vmem:[#allocation2 + $0xa0] sm:$0xff]
      %v3512 = vld [vmem:[#allocation2 + $0xa8] sm:$0xff]
      %v3513 = vld [vmem:[#allocation2 + $0xb0] sm:$0xff]
      %v3514 = vld [vmem:[#allocation2 + $0xb8] sm:$0xff]
      %v3515 = vld [vmem:[#allocation2 + $0xc0] sm:$0xff]
      %v3516 = vld [vmem:[#allocation2 + $0xc8] sm:$0xff]
      %v3517 = vld [vmem:[#allocation2 + $0xd0] sm:$0xff]
      %v3518 = vld [vmem:[#allocation2 + $0xd8] sm:$0xff]
      %v3519 = vld [vmem:[#allocation2 + $0xe0] sm:$0xff]
      %v3520 = vld [vmem:[#allocation2 + $0xe8] sm:$0xff]
      %v3521 = vld [vmem:[#allocation2 + $0xf0] sm:$0xff]
      %v3522 = vld [vmem:[#allocation2 + $0xf8] sm:$0xff]
      %v3523 = vadd.f32 %v3491, %v3365
      %v3524 = vadd.f32 %v3492, %v3368
      %v3525 = vadd.f32 %v3493, %v3373
      %v3526 = vadd.f32 %v3494, %v3376
      %v3527 = vadd.f32 %v3495, %v3381
      %v3528 = vadd.f32 %v3496, %v3384
      %v3529 = vadd.f32 %v3497, %v3389
      %v3530 = vadd.f32 %v3498, %v3392
      %v3531 = vadd.f32 %v3499, %v3397
      %v3532 = vadd.f32 %v3500, %v3400
      %v3533 = vadd.f32 %v3501, %v3405
      %v3534 = vadd.f32 %v3502, %v3408
      %v3535 = vadd.f32 %v3503, %v3413
      %v3536 = vadd.f32 %v3504, %v3416
      %v3537 = vadd.f32 %v3505, %v3421
      %v3538 = vadd.f32 %v3506, %v3424
      %v3539 = vadd.f32 %v3507, %v3429
      %v3540 = vadd.f32 %v3508, %v3432
      %v3541 = vadd.f32 %v3509, %v3437
      %v3542 = vadd.f32 %v3510, %v3440
      %v3543 = vadd.f32 %v3511, %v3445
      %v3544 = vadd.f32 %v3512, %v3448
      %v3545 = vadd.f32 %v3513, %v3453
      %v3546 = vadd.f32 %v3514, %v3456
      %v3547 = vadd.f32 %v3515, %v3461
      %v3548 = vadd.f32 %v3516, %v3464
      %v3549 = vadd.f32 %v3517, %v3469
      %v3550 = vadd.f32 %v3518, %v3472
      %v3551 = vadd.f32 %v3519, %v3477
      %v3552 = vadd.f32 %v3520, %v3480
      %v3553 = vadd.f32 %v3521, %v3485
      %v3554 = vadd.f32 %v3522, %v3488
      %3555 = vst [vmem:[#allocation2] sm:$0xff] %v3523
      %3556 = vst [vmem:[#allocation2 + $0x8] sm:$0xff] %v3524
      %3557 = vst [vmem:[#allocation2 + $0x10] sm:$0xff] %v3525
      %3558 = vst [vmem:[#allocation2 + $0x18] sm:$0xff] %v3526
      %3559 = vst [vmem:[#allocation2 + $0x20] sm:$0xff] %v3527
      %3560 = vst [vmem:[#allocation2 + $0x28] sm:$0xff] %v3528
      %3561 = vst [vmem:[#allocation2 + $0x30] sm:$0xff] %v3529
      %3562 = vst [vmem:[#allocation2 + $0x38] sm:$0xff] %v3530
      %3563 = vst [vmem:[#allocation2 + $0x40] sm:$0xff] %v3531
      %3564 = vst [vmem:[#allocation2 + $0x48] sm:$0xff] %v3532
      %3565 = vst [vmem:[#allocation2 + $0x50] sm:$0xff] %v3533
      %3566 = vst [vmem:[#allocation2 + $0x58] sm:$0xff] %v3534
      %3567 = vst [vmem:[#allocation2 + $0x60] sm:$0xff] %v3535
      %3568 = vst [vmem:[#allocation2 + $0x68] sm:$0xff] %v3536
      %3569 = vst [vmem:[#allocation2 + $0x70] sm:$0xff] %v3537
      %3570 = vst [vmem:[#allocation2 + $0x78] sm:$0xff] %v3538
      %3571 = vst [vmem:[#allocation2 + $0x80] sm:$0xff] %v3539
      %3572 = vst [vmem:[#allocation2 + $0x88] sm:$0xff] %v3540
      %3573 = vst [vmem:[#allocation2 + $0x90] sm:$0xff] %v3541
      %3574 = vst [vmem:[#allocation2 + $0x98] sm:$0xff] %v3542
      %3575 = vst [vmem:[#allocation2 + $0xa0] sm:$0xff] %v3543
      %3576 = vst [vmem:[#allocation2 + $0xa8] sm:$0xff] %v3544
      %3577 = vst [vmem:[#allocation2 + $0xb0] sm:$0xff] %v3545
      %3578 = vst [vmem:[#allocation2 + $0xb8] sm:$0xff] %v3546
      %3579 = vst [vmem:[#allocation2 + $0xc0] sm:$0xff] %v3547
      %3580 = vst [vmem:[#allocation2 + $0xc8] sm:$0xff] %v3548
      %3581 = vst [vmem:[#allocation2 + $0xd0] sm:$0xff] %v3549
      %3582 = vst [vmem:[#allocation2 + $0xd8] sm:$0xff] %v3550
      %3583 = vst [vmem:[#allocation2 + $0xe0] sm:$0xff] %v3551
      %3584 = vst [vmem:[#allocation2 + $0xe8] sm:$0xff] %v3552
      %3585 = vst [vmem:[#allocation2 + $0xf0] sm:$0xff] %v3553
      %3586 = vst [vmem:[#allocation2 + $0xf8] sm:$0xff] %v3554
      %v3587 = vld [vmem:[#allocation2] sm:$0xff]
      %v3588 = vld [vmem:[#allocation2 + $0x8] sm:$0xff]
      %v3589 = vld [vmem:[#allocation2 + $0x10] sm:$0xff]
      %v3590 = vld [vmem:[#allocation2 + $0x18] sm:$0xff]
      %v3591 = vld [vmem:[#allocation2 + $0x20] sm:$0xff]
      %v3592 = vld [vmem:[#allocation2 + $0x28] sm:$0xff]
      %v3593 = vld [vmem:[#allocation2 + $0x30] sm:$0xff]
      %v3594 = vld [vmem:[#allocation2 + $0x38] sm:$0xff]
      %v3595 = vld [vmem:[#allocation2 + $0x40] sm:$0xff]
      %v3596 = vld [vmem:[#allocation2 + $0x48] sm:$0xff]
      %v3597 = vld [vmem:[#allocation2 + $0x50] sm:$0xff]
      %v3598 = vld [vmem:[#allocation2 + $0x58] sm:$0xff]
      %v3599 = vld [vmem:[#allocation2 + $0x60] sm:$0xff]
      %v3600 = vld [vmem:[#allocation2 + $0x68] sm:$0xff]
      %v3601 = vld [vmem:[#allocation2 + $0x70] sm:$0xff]
      %v3602 = vld [vmem:[#allocation2 + $0x78] sm:$0xff]
      %v3603 = vld [vmem:[#allocation2 + $0x80] sm:$0xff]
      %v3604 = vld [vmem:[#allocation2 + $0x88] sm:$0xff]
      %v3605 = vld [vmem:[#allocation2 + $0x90] sm:$0xff]
      %v3606 = vld [vmem:[#allocation2 + $0x98] sm:$0xff]
      %v3607 = vld [vmem:[#allocation2 + $0xa0] sm:$0xff]
      %v3608 = vld [vmem:[#allocation2 + $0xa8] sm:$0xff]
      %v3609 = vld [vmem:[#allocation2 + $0xb0] sm:$0xff]
      %v3610 = vld [vmem:[#allocation2 + $0xb8] sm:$0xff]
      %v3611 = vld [vmem:[#allocation2 + $0xc0] sm:$0xff]
      %v3612 = vld [vmem:[#allocation2 + $0xc8] sm:$0xff]
      %v3613 = vld [vmem:[#allocation2 + $0xd0] sm:$0xff]
      %v3614 = vld [vmem:[#allocation2 + $0xd8] sm:$0xff]
      %v3615 = vld [vmem:[#allocation2 + $0xe0] sm:$0xff]
      %v3616 = vld [vmem:[#allocation2 + $0xe8] sm:$0xff]
      %v3617 = vld [vmem:[#allocation2 + $0xf0] sm:$0xff]
      %v3618 = vld [vmem:[#allocation2 + $0xf8] sm:$0xff]
      %v3619 = vld [vmem:[%s277] sm:$0xff]
      %v3620 = vld [vmem:[%s277 + $0x8] sm:$0xff]
      %v3621 = vld [vmem:[%s277 + $0x10] sm:$0xff]
      %v3622 = vld [vmem:[%s277 + $0x18] sm:$0xff]
      %v3623 = vld [vmem:[%s277 + $0x20] sm:$0xff]
      %v3624 = vld [vmem:[%s277 + $0x28] sm:$0xff]
      %v3625 = vld [vmem:[%s277 + $0x30] sm:$0xff]
      %v3626 = vld [vmem:[%s277 + $0x38] sm:$0xff]
      %v3627 = vld [vmem:[%s277 + $0x40] sm:$0xff]
      %v3628 = vld [vmem:[%s277 + $0x48] sm:$0xff]
      %v3629 = vld [vmem:[%s277 + $0x50] sm:$0xff]
      %v3630 = vld [vmem:[%s277 + $0x58] sm:$0xff]
      %v3631 = vld [vmem:[%s277 + $0x60] sm:$0xff]
      %v3632 = vld [vmem:[%s277 + $0x68] sm:$0xff]
      %v3633 = vld [vmem:[%s277 + $0x70] sm:$0xff]
      %v3634 = vld [vmem:[%s277 + $0x78] sm:$0xff]
      %v3635 = vld [vmem:[%s277 + $0x80] sm:$0xff]
      %v3636 = vld [vmem:[%s277 + $0x88] sm:$0xff]
      %v3637 = vld [vmem:[%s277 + $0x90] sm:$0xff]
      %v3638 = vld [vmem:[%s277 + $0x98] sm:$0xff]
      %v3639 = vld [vmem:[%s277 + $0xa0] sm:$0xff]
      %v3640 = vld [vmem:[%s277 + $0xa8] sm:$0xff]
      %v3641 = vld [vmem:[%s277 + $0xb0] sm:$0xff]
      %v3642 = vld [vmem:[%s277 + $0xb8] sm:$0xff]
      %v3643 = vld [vmem:[%s277 + $0xc0] sm:$0xff]
      %v3644 = vld [vmem:[%s277 + $0xc8] sm:$0xff]
      %v3645 = vld [vmem:[%s277 + $0xd0] sm:$0xff]
      %v3646 = vld [vmem:[%s277 + $0xd8] sm:$0xff]
      %v3647 = vld [vmem:[%s277 + $0xe0] sm:$0xff]
      %v3648 = vld [vmem:[%s277 + $0xe8] sm:$0xff]
      %v3649 = vld [vmem:[%s277 + $0xf0] sm:$0xff]
      %v3650 = vld [vmem:[%s277 + $0xf8] sm:$0xff]
      %v3651 = vpack.c.bf16 %v3588, %v3587
      %v3652 = vpack.c.bf16 %v3590, %v3589
      %v3653 = vpack.c.bf16 %v3592, %v3591
      %v3654 = vpack.c.bf16 %v3594, %v3593
      %v3655 = vpack.c.bf16 %v3596, %v3595
      %v3656 = vpack.c.bf16 %v3598, %v3597
      %v3657 = vpack.c.bf16 %v3600, %v3599
      %v3658 = vpack.c.bf16 %v3602, %v3601
      %v3659 = vpack.c.bf16 %v3604, %v3603
      %v3660 = vpack.c.bf16 %v3606, %v3605
      %v3661 = vpack.c.bf16 %v3608, %v3607
      %v3662 = vpack.c.bf16 %v3610, %v3609
      %v3663 = vpack.c.bf16 %v3612, %v3611
      %v3664 = vpack.c.bf16 %v3614, %v3613
      %v3665 = vpack.c.bf16 %v3616, %v3615
      %v3666 = vpack.c.bf16 %v3618, %v3617
      %v3683 = vunpack.c.l.b16 %v3651
      %v3684 = vunpack.c.h.b16 %v3651
      %v3685 = vunpack.c.l.b16 %v3652
      %v3686 = vunpack.c.h.b16 %v3652
      %v3687 = vunpack.c.l.b16 %v3653
      %v3688 = vunpack.c.h.b16 %v3653
      %v3689 = vunpack.c.l.b16 %v3654
      %v3690 = vunpack.c.h.b16 %v3654
      %v3691 = vunpack.c.l.b16 %v3655
      %v3692 = vunpack.c.h.b16 %v3655
      %v3693 = vunpack.c.l.b16 %v3656
      %v3694 = vunpack.c.h.b16 %v3656
      %v3695 = vunpack.c.l.b16 %v3657
      %v3696 = vunpack.c.h.b16 %v3657
      %v3697 = vunpack.c.l.b16 %v3658
      %v3698 = vunpack.c.h.b16 %v3658
      %v3699 = vunpack.c.l.b16 %v3659
      %v3700 = vunpack.c.h.b16 %v3659
      %v3701 = vunpack.c.l.b16 %v3660
      %v3702 = vunpack.c.h.b16 %v3660
      %v3703 = vunpack.c.l.b16 %v3661
      %v3704 = vunpack.c.h.b16 %v3661
      %v3705 = vunpack.c.l.b16 %v3662
      %v3706 = vunpack.c.h.b16 %v3662
      %v3707 = vunpack.c.l.b16 %v3663
      %v3708 = vunpack.c.h.b16 %v3663
      %v3709 = vunpack.c.l.b16 %v3664
      %v3710 = vunpack.c.h.b16 %v3664
      %v3711 = vunpack.c.l.b16 %v3665
      %v3712 = vunpack.c.h.b16 %v3665
      %v3713 = vunpack.c.l.b16 %v3666
      %v3714 = vunpack.c.h.b16 %v3666
      %v3715 = vpack.c.b16 %v3683, %v3683
      %v3716 = vpack.c.b16 %v3684, %v3684
      %v3717 = vpack.c.b16 %v3685, %v3685
      %v3718 = vpack.c.b16 %v3686, %v3686
      %v3719 = vpack.c.b16 %v3687, %v3687
      %v3720 = vpack.c.b16 %v3688, %v3688
      %v3721 = vpack.c.b16 %v3689, %v3689
      %v3722 = vpack.c.b16 %v3690, %v3690
      %v3723 = vpack.c.b16 %v3691, %v3691
      %v3724 = vpack.c.b16 %v3692, %v3692
      %v3725 = vpack.c.b16 %v3693, %v3693
      %v3726 = vpack.c.b16 %v3694, %v3694
      %v3727 = vpack.c.b16 %v3695, %v3695
      %v3728 = vpack.c.b16 %v3696, %v3696
      %v3729 = vpack.c.b16 %v3697, %v3697
      %v3730 = vpack.c.b16 %v3698, %v3698
      %v3731 = vpack.c.b16 %v3699, %v3699
      %v3732 = vpack.c.b16 %v3700, %v3700
      %v3733 = vpack.c.b16 %v3701, %v3701
      %v3734 = vpack.c.b16 %v3702, %v3702
      %v3735 = vpack.c.b16 %v3703, %v3703
      %v3736 = vpack.c.b16 %v3704, %v3704
      %v3737 = vpack.c.b16 %v3705, %v3705
      %v3738 = vpack.c.b16 %v3706, %v3706
      %v3739 = vpack.c.b16 %v3707, %v3707
      %v3740 = vpack.c.b16 %v3708, %v3708
      %v3741 = vpack.c.b16 %v3709, %v3709
      %v3742 = vpack.c.b16 %v3710, %v3710
      %v3743 = vpack.c.b16 %v3711, %v3711
      %v3744 = vpack.c.b16 %v3712, %v3712
      %v3745 = vpack.c.b16 %v3713, %v3713
      %v3746 = vpack.c.b16 %v3714, %v3714
      %3779 = vst [vmem:[%s290] sm:$0xf] %v3715
      %3780 = vst [vmem:[%s290 + $0x4] sm:$0xf] %v3716
      %3781 = vst [vmem:[%s290 + $0x8] sm:$0xf] %v3717
      %3782 = vst [vmem:[%s290 + $0xc] sm:$0xf] %v3718
      %3783 = vst [vmem:[%s290 + $0x10] sm:$0xf] %v3719
      %3784 = vst [vmem:[%s290 + $0x14] sm:$0xf] %v3720
      %3785 = vst [vmem:[%s290 + $0x18] sm:$0xf] %v3721
      %3786 = vst [vmem:[%s290 + $0x1c] sm:$0xf] %v3722
      %3787 = vst [vmem:[%s290 + $0x20] sm:$0xf] %v3723
      %3788 = vst [vmem:[%s290 + $0x24] sm:$0xf] %v3724
      %3789 = vst [vmem:[%s290 + $0x28] sm:$0xf] %v3725
      %3790 = vst [vmem:[%s290 + $0x2c] sm:$0xf] %v3726
      %3791 = vst [vmem:[%s290 + $0x30] sm:$0xf] %v3727
      %3792 = vst [vmem:[%s290 + $0x34] sm:$0xf] %v3728
      %3793 = vst [vmem:[%s290 + $0x38] sm:$0xf] %v3729
      %3794 = vst [vmem:[%s290 + $0x3c] sm:$0xf] %v3730
      %3795 = vst [vmem:[%s290 + $0x40] sm:$0xf] %v3731
      %3796 = vst [vmem:[%s290 + $0x44] sm:$0xf] %v3732
      %3797 = vst [vmem:[%s290 + $0x48] sm:$0xf] %v3733
      %3798 = vst [vmem:[%s290 + $0x4c] sm:$0xf] %v3734
      %3799 = vst [vmem:[%s290 + $0x50] sm:$0xf] %v3735
      %3800 = vst [vmem:[%s290 + $0x54] sm:$0xf] %v3736
      %3801 = vst [vmem:[%s290 + $0x58] sm:$0xf] %v3737
      %3802 = vst [vmem:[%s290 + $0x5c] sm:$0xf] %v3738
      %3803 = vst [vmem:[%s290 + $0x60] sm:$0xf] %v3739
      %3804 = vst [vmem:[%s290 + $0x64] sm:$0xf] %v3740
      %3805 = vst [vmem:[%s290 + $0x68] sm:$0xf] %v3741
      %3806 = vst [vmem:[%s290 + $0x6c] sm:$0xf] %v3742
      %3807 = vst [vmem:[%s290 + $0x70] sm:$0xf] %v3743
      %3808 = vst [vmem:[%s290 + $0x74] sm:$0xf] %v3744
      %3809 = vst [vmem:[%s290 + $0x78] sm:$0xf] %v3745
      %3810 = vst [vmem:[%s290 + $0x7c] sm:$0xf] %v3746
      %3812 = vset.pattern.permute.xlu0 0
      %3813 = vperm.xlu0 %3812, %v3619
      %v3814 = vpop.permute.xlu0 %3813
      %3817 = vset.pattern.permute.xlu0 0
      %3818 = vperm.xlu0 %3817, %v3620
      %v3819 = vpop.permute.xlu0 %3818
      %3822 = vset.pattern.permute.xlu0 0
      %3823 = vperm.xlu0 %3822, %v3621
      %v3824 = vpop.permute.xlu0 %3823
      %3827 = vset.pattern.permute.xlu0 0
      %3828 = vperm.xlu0 %3827, %v3622
      %v3829 = vpop.permute.xlu0 %3828
      %3832 = vset.pattern.permute.xlu0 0
      %3833 = vperm.xlu0 %3832, %v3623
      %v3834 = vpop.permute.xlu0 %3833
      %3837 = vset.pattern.permute.xlu0 0
      %3838 = vperm.xlu0 %3837, %v3624
      %v3839 = vpop.permute.xlu0 %3838
      %3842 = vset.pattern.permute.xlu0 0
      %3843 = vperm.xlu0 %3842, %v3625
      %v3844 = vpop.permute.xlu0 %3843
      %3847 = vset.pattern.permute.xlu0 0
      %3848 = vperm.xlu0 %3847, %v3626
      %v3849 = vpop.permute.xlu0 %3848
      %3852 = vset.pattern.permute.xlu0 0
      %3853 = vperm.xlu0 %3852, %v3627
      %v3854 = vpop.permute.xlu0 %3853
      %3857 = vset.pattern.permute.xlu0 0
      %3858 = vperm.xlu0 %3857, %v3628
      %v3859 = vpop.permute.xlu0 %3858
      %3862 = vset.pattern.permute.xlu0 0
      %3863 = vperm.xlu0 %3862, %v3629
      %v3864 = vpop.permute.xlu0 %3863
      %3867 = vset.pattern.permute.xlu0 0
      %3868 = vperm.xlu0 %3867, %v3630
      %v3869 = vpop.permute.xlu0 %3868
      %3872 = vset.pattern.permute.xlu0 0
      %3873 = vperm.xlu0 %3872, %v3631
      %v3874 = vpop.permute.xlu0 %3873
      %3877 = vset.pattern.permute.xlu0 0
      %3878 = vperm.xlu0 %3877, %v3632
      %v3879 = vpop.permute.xlu0 %3878
      %3882 = vset.pattern.permute.xlu0 0
      %3883 = vperm.xlu0 %3882, %v3633
      %v3884 = vpop.permute.xlu0 %3883
      %3887 = vset.pattern.permute.xlu0 0
      %3888 = vperm.xlu0 %3887, %v3634
      %v3889 = vpop.permute.xlu0 %3888
      %3892 = vset.pattern.permute.xlu0 0
      %3893 = vperm.xlu0 %3892, %v3635
      %v3894 = vpop.permute.xlu0 %3893
      %3897 = vset.pattern.permute.xlu0 0
      %3898 = vperm.xlu0 %3897, %v3636
      %v3899 = vpop.permute.xlu0 %3898
      %3902 = vset.pattern.permute.xlu0 0
      %3903 = vperm.xlu0 %3902, %v3637
      %v3904 = vpop.permute.xlu0 %3903
      %3907 = vset.pattern.permute.xlu0 0
      %3908 = vperm.xlu0 %3907, %v3638
      %v3909 = vpop.permute.xlu0 %3908
      %3912 = vset.pattern.permute.xlu0 0
      %3913 = vperm.xlu0 %3912, %v3639
      %v3914 = vpop.permute.xlu0 %3913
      %3917 = vset.pattern.permute.xlu0 0
      %3918 = vperm.xlu0 %3917, %v3640
      %v3919 = vpop.permute.xlu0 %3918
      %3922 = vset.pattern.permute.xlu0 0
      %3923 = vperm.xlu0 %3922, %v3641
      %v3924 = vpop.permute.xlu0 %3923
      %3927 = vset.pattern.permute.xlu0 0
      %3928 = vperm.xlu0 %3927, %v3642
      %v3929 = vpop.permute.xlu0 %3928
      %3932 = vset.pattern.permute.xlu0 0
      %3933 = vperm.xlu0 %3932, %v3643
      %v3934 = vpop.permute.xlu0 %3933
      %3937 = vset.pattern.permute.xlu0 0
      %3938 = vperm.xlu0 %3937, %v3644
      %v3939 = vpop.permute.xlu0 %3938
      %3942 = vset.pattern.permute.xlu0 0
      %3943 = vperm.xlu0 %3942, %v3645
      %v3944 = vpop.permute.xlu0 %3943
      %3947 = vset.pattern.permute.xlu0 0
      %3948 = vperm.xlu0 %3947, %v3646
      %v3949 = vpop.permute.xlu0 %3948
      %3952 = vset.pattern.permute.xlu0 0
      %3953 = vperm.xlu0 %3952, %v3647
      %v3954 = vpop.permute.xlu0 %3953
      %3957 = vset.pattern.permute.xlu0 0
      %3958 = vperm.xlu0 %3957, %v3648
      %v3959 = vpop.permute.xlu0 %3958
      %3962 = vset.pattern.permute.xlu0 0
      %3963 = vperm.xlu0 %3962, %v3649
      %v3964 = vpop.permute.xlu0 %3963
      %3967 = vset.pattern.permute.xlu0 0
      %3968 = vperm.xlu0 %3967, %v3650
      %v3969 = vpop.permute.xlu0 %3968
      %v3971 = vmul.f32 %v3587, %v3814
      %v3972 = vmul.f32 %v3588, %v3819
      %v3973 = vmul.f32 %v3589, %v3824
      %v3974 = vmul.f32 %v3590, %v3829
      %v3975 = vmul.f32 %v3591, %v3834
      %v3976 = vmul.f32 %v3592, %v3839
      %v3977 = vmul.f32 %v3593, %v3844
      %v3978 = vmul.f32 %v3594, %v3849
      %v3979 = vmul.f32 %v3595, %v3854
      %v3980 = vmul.f32 %v3596, %v3859
      %v3981 = vmul.f32 %v3597, %v3864
      %v3982 = vmul.f32 %v3598, %v3869
      %v3983 = vmul.f32 %v3599, %v3874
      %v3984 = vmul.f32 %v3600, %v3879
      %v3985 = vmul.f32 %v3601, %v3884
      %v3986 = vmul.f32 %v3602, %v3889
      %v3987 = vmul.f32 %v3603, %v3894
      %v3988 = vmul.f32 %v3604, %v3899
      %v3989 = vmul.f32 %v3605, %v3904
      %v3990 = vmul.f32 %v3606, %v3909
      %v3991 = vmul.f32 %v3607, %v3914
      %v3992 = vmul.f32 %v3608, %v3919
      %v3993 = vmul.f32 %v3609, %v3924
      %v3994 = vmul.f32 %v3610, %v3929
      %v3995 = vmul.f32 %v3611, %v3934
      %v3996 = vmul.f32 %v3612, %v3939
      %v3997 = vmul.f32 %v3613, %v3944
      %v3998 = vmul.f32 %v3614, %v3949
      %v3999 = vmul.f32 %v3615, %v3954
      %v4000 = vmul.f32 %v3616, %v3959
      %v4001 = vmul.f32 %v3617, %v3964
      %v4002 = vmul.f32 %v3618, %v3969
      %v4003 = vadd.f32 %v3971, %v3972
      %v4004 = vadd.f32 %v4003, %v3973
      %v4005 = vadd.f32 %v4004, %v3974
      %v4006 = vadd.f32 %v4005, %v3975
      %v4007 = vadd.f32 %v4006, %v3976
      %v4008 = vadd.f32 %v4007, %v3977
      %v4009 = vadd.f32 %v4008, %v3978
      %v4010 = vadd.f32 %v4009, %v3979
      %v4011 = vadd.f32 %v4010, %v3980
      %v4012 = vadd.f32 %v4011, %v3981
      %v4013 = vadd.f32 %v4012, %v3982
      %v4014 = vadd.f32 %v4013, %v3983
      %v4015 = vadd.f32 %v4014, %v3984
      %v4016 = vadd.f32 %v4015, %v3985
      %v4017 = vadd.f32 %v4016, %v3986
      %v4018 = vadd.f32 %v4017, %v3987
      %v4019 = vadd.f32 %v4018, %v3988
      %v4020 = vadd.f32 %v4019, %v3989
      %v4021 = vadd.f32 %v4020, %v3990
      %v4022 = vadd.f32 %v4021, %v3991
      %v4023 = vadd.f32 %v4022, %v3992
      %v4024 = vadd.f32 %v4023, %v3993
      %v4025 = vadd.f32 %v4024, %v3994
      %v4026 = vadd.f32 %v4025, %v3995
      %v4027 = vadd.f32 %v4026, %v3996
      %v4028 = vadd.f32 %v4027, %v3997
      %v4029 = vadd.f32 %v4028, %v3998
      %v4030 = vadd.f32 %v4029, %v3999
      %v4031 = vadd.f32 %v4030, %v4000
      %v4032 = vadd.f32 %v4031, %v4001
      %v4033 = vadd.f32 %v4032, %v4002
      %v4034 = vrot.slane %v4033, 4
      %v4035 = vadd.f32 %v4033, %v4034
      %v4036 = vrot.slane %v4035, 2
      %v4037 = vadd.f32 %v4035, %v4036
      %v4038 = vrot.slane %v4037, 1
      %v4039 = vadd.f32 %v4037, %v4038
      %v4040 = vmul.f32 %v3587, %v3587
      %v4041 = vmul.f32 %v3588, %v3588
      %v4042 = vmul.f32 %v3589, %v3589
      %v4043 = vmul.f32 %v3590, %v3590
      %v4044 = vmul.f32 %v3591, %v3591
      %v4045 = vmul.f32 %v3592, %v3592
      %v4046 = vmul.f32 %v3593, %v3593
      %v4047 = vmul.f32 %v3594, %v3594
      %v4048 = vmul.f32 %v3595, %v3595
      %v4049 = vmul.f32 %v3596, %v3596
      %v4050 = vmul.f32 %v3597, %v3597
      %v4051 = vmul.f32 %v3598, %v3598
      %v4052 = vmul.f32 %v3599, %v3599
      %v4053 = vmul.f32 %v3600, %v3600
      %v4054 = vmul.f32 %v3601, %v3601
      %v4055 = vmul.f32 %v3602, %v3602
      %v4056 = vmul.f32 %v3603, %v3603
      %v4057 = vmul.f32 %v3604, %v3604
      %v4058 = vmul.f32 %v3605, %v3605
      %v4059 = vmul.f32 %v3606, %v3606
      %v4060 = vmul.f32 %v3607, %v3607
      %v4061 = vmul.f32 %v3608, %v3608
      %v4062 = vmul.f32 %v3609, %v3609
      %v4063 = vmul.f32 %v3610, %v3610
      %v4064 = vmul.f32 %v3611, %v3611
      %v4065 = vmul.f32 %v3612, %v3612
      %v4066 = vmul.f32 %v3613, %v3613
      %v4067 = vmul.f32 %v3614, %v3614
      %v4068 = vmul.f32 %v3615, %v3615
      %v4069 = vmul.f32 %v3616, %v3616
      %v4070 = vmul.f32 %v3617, %v3617
      %v4071 = vmul.f32 %v3618, %v3618
      %v4072 = vmul.f32 %v4040, %v3814
      %v4073 = vmul.f32 %v4041, %v3819
      %v4074 = vmul.f32 %v4042, %v3824
      %v4075 = vmul.f32 %v4043, %v3829
      %v4076 = vmul.f32 %v4044, %v3834
      %v4077 = vmul.f32 %v4045, %v3839
      %v4078 = vmul.f32 %v4046, %v3844
      %v4079 = vmul.f32 %v4047, %v3849
      %v4080 = vmul.f32 %v4048, %v3854
      %v4081 = vmul.f32 %v4049, %v3859
      %v4082 = vmul.f32 %v4050, %v3864
      %v4083 = vmul.f32 %v4051, %v3869
      %v4084 = vmul.f32 %v4052, %v3874
      %v4085 = vmul.f32 %v4053, %v3879
      %v4086 = vmul.f32 %v4054, %v3884
      %v4087 = vmul.f32 %v4055, %v3889
      %v4088 = vmul.f32 %v4056, %v3894
      %v4089 = vmul.f32 %v4057, %v3899
      %v4090 = vmul.f32 %v4058, %v3904
      %v4091 = vmul.f32 %v4059, %v3909
      %v4092 = vmul.f32 %v4060, %v3914
      %v4093 = vmul.f32 %v4061, %v3919
      %v4094 = vmul.f32 %v4062, %v3924
      %v4095 = vmul.f32 %v4063, %v3929
      %v4096 = vmul.f32 %v4064, %v3934
      %v4097 = vmul.f32 %v4065, %v3939
      %v4098 = vmul.f32 %v4066, %v3944
      %v4099 = vmul.f32 %v4067, %v3949
      %v4100 = vmul.f32 %v4068, %v3954
      %v4101 = vmul.f32 %v4069, %v3959
      %v4102 = vmul.f32 %v4070, %v3964
      %v4103 = vmul.f32 %v4071, %v3969
      %v4104 = vadd.f32 %v4072, %v4073
      %v4105 = vadd.f32 %v4104, %v4074
      %v4106 = vadd.f32 %v4105, %v4075
      %v4107 = vadd.f32 %v4106, %v4076
      %v4108 = vadd.f32 %v4107, %v4077
      %v4109 = vadd.f32 %v4108, %v4078
      %v4110 = vadd.f32 %v4109, %v4079
      %v4111 = vadd.f32 %v4110, %v4080
      %v4112 = vadd.f32 %v4111, %v4081
      %v4113 = vadd.f32 %v4112, %v4082
      %v4114 = vadd.f32 %v4113, %v4083
      %v4115 = vadd.f32 %v4114, %v4084
      %v4116 = vadd.f32 %v4115, %v4085
      %v4117 = vadd.f32 %v4116, %v4086
      %v4118 = vadd.f32 %v4117, %v4087
      %v4119 = vadd.f32 %v4118, %v4088
      %v4120 = vadd.f32 %v4119, %v4089
      %v4121 = vadd.f32 %v4120, %v4090
      %v4122 = vadd.f32 %v4121, %v4091
      %v4123 = vadd.f32 %v4122, %v4092
      %v4124 = vadd.f32 %v4123, %v4093
      %v4125 = vadd.f32 %v4124, %v4094
      %v4126 = vadd.f32 %v4125, %v4095
      %v4127 = vadd.f32 %v4126, %v4096
      %v4128 = vadd.f32 %v4127, %v4097
      %v4129 = vadd.f32 %v4128, %v4098
      %v4130 = vadd.f32 %v4129, %v4099
      %v4131 = vadd.f32 %v4130, %v4100
      %v4132 = vadd.f32 %v4131, %v4101
      %v4133 = vadd.f32 %v4132, %v4102
      %v4134 = vadd.f32 %v4133, %v4103
      %v4135 = vrot.slane %v4134, 4
      %v4136 = vadd.f32 %v4134, %v4135
      %v4137 = vrot.slane %v4136, 2
      %v4138 = vadd.f32 %v4136, %v4137
      %v4139 = vrot.slane %v4138, 1
      %v4140 = vadd.f32 %v4138, %v4139
      %v4141 = vlaneseq
      %v4142 = vshrl.u32 %v4141, 7
      %vm4143 = vcmp.eq.s32.totalorder %v4142, 0
      %vm4144 = vcmp.eq.s32.totalorder %v4142, 1
      %v4145 = vsel %vm4144, %v4140, 0.0
      %v4146 = vsel %vm4143, %v4039, %v4145
      %4147 = vst [vmem:[%s301] sm:$0xff] %v4146
      %s4148 = smul.u32 32, %s23
      %p4149 = scmp.lt.s32.totalorder %s21, 1
      %s4150 = scalar_select %p4149, %s21, 1
      %p4151 = scmp.lt.s32.totalorder %s4148, 31
      %s4152 = scalar_select %p4151, %s4148, 31
      %p4153 = scmp.lt.s32.totalorder %s22, 0
      %s4154 = scalar_select %p4153, %s22, 0
      %s4155 = sadd.s32 %s4154, %s4152
      %s4156 = smul.addr %s4150, 32
      %s4157 = sadd.s32 %s4155, %s4156
      %s4158 = smul.addr %s4157, 4
      %s4159 = scalar_lea.vmem %s3, %s4158
      %p4160 = scmp.lt.s32.totalorder %s21, 1
      %s4161 = scalar_select %p4160, %s21, 1
      %p4162 = scmp.lt.s32.totalorder %s23, 0
      %s4163 = scalar_select %p4162, %s23, 0
      %p4164 = scmp.lt.s32.totalorder %s22, 0
      %s4165 = scalar_select %p4164, %s22, 0
      %s4166 = sadd.s32 %s4165, %s4163
      %s4167 = sadd.s32 %s4166, %s4161
      %s4168 = smul.addr %s4167, 8
      %s4169 = scalar_lea.vmem %s4, %s4168
      // Predicated region
      $region33: #{basic_block_forward.6} parent=31 // pred_check
        %p4170 = pneg %p135
      $region34: #{basic_block_forward.6} parent=31 // pred_check_branch
        %4172 = sbr.rel (%p4170) target = $region36
      $region35: #{basic_block_forward.6} parent=31 // pred_region
        %s4173 = smul.u32 32, %s23
      $region36: #{basic_block_forward.6} parent=31 // pred_fallthru
        _
      // Predicated region
      $region37: #{basic_block_forward.6} parent=31 // pred_check
        %p4174 = pneg %p165
      $region38: #{basic_block_forward.6} parent=31 // pred_check_branch
        %4176 = sbr.rel (%p4174) target = $region40
      $region39: #{basic_block_forward.6} parent=31 // pred_region
        _
      $region40: #{basic_block_forward.6} parent=31 // pred_fallthru
        _
    $region32: #{basic_block_forward.6} parent=5 // pred_fallthru
      _
    %p4177 = scmp.le.s32.totalorder 2, %s11
    // Predicated region
    $region41: #{basic_block_forward.6} parent=5 // pred_check
      %p4178 = pneg %p4177
    $region42: #{basic_block_forward.6} parent=5 // pred_check_branch
      %4180 = sbr.rel (%p4178) target = $region44
    $region43: #{basic_block_forward.6} parent=5 // pred_region
      %s4181 = ssub.s32 %s11, 2
      // Predicated region
      $region45: #{basic_block_forward.6} parent=43 // pred_check
        %p4182 = pneg %p141
      $region46: #{basic_block_forward.6} parent=43 // pred_check_branch
        %4184 = sbr.rel (%p4182) target = $region48
      $region47: #{basic_block_forward.6} parent=43 // pred_region
        %s4185 = smul.u32 32, %s26
        %p4186 = scmp.lt.s32.totalorder %s24, 1
        %s4187 = scalar_select %p4186, %s24, 1
        %p4188 = scmp.lt.s32.totalorder %s4185, 31
        %s4189 = scalar_select %p4188, %s4185, 31
        %p4190 = scmp.lt.s32.totalorder %s25, 0
        %s4191 = scalar_select %p4190, %s25, 0
        %s4192 = sadd.s32 %s4191, %s4189
        %s4193 = smul.addr %s4187, 32
        %s4194 = sadd.s32 %s4192, %s4193
        %s4195 = smul.addr %s4194, 4
        %s4196 = scalar_lea.vmem %s3, %s4195
      $region48: #{basic_block_forward.6} parent=43 // pred_fallthru
        _
      // Predicated region
      $region49: #{basic_block_forward.6} parent=43 // pred_check
        %p4197 = pneg %p171
      $region50: #{basic_block_forward.6} parent=43 // pred_check_branch
        %4199 = sbr.rel (%p4197) target = $region52
      $region51: #{basic_block_forward.6} parent=43 // pred_region
        %p4200 = scmp.lt.s32.totalorder %s24, 1
        %s4201 = scalar_select %p4200, %s24, 1
        %p4202 = scmp.lt.s32.totalorder %s26, 0
        %s4203 = scalar_select %p4202, %s26, 0
        %p4204 = scmp.lt.s32.totalorder %s25, 0
        %s4205 = scalar_select %p4204, %s25, 0
        %s4206 = sadd.s32 %s4205, %s4203
        %s4207 = sadd.s32 %s4206, %s4201
        %s4208 = smul.addr %s4207, 8
        %s4209 = scalar_lea.vmem %s4, %s4208
      $region52: #{basic_block_forward.6} parent=43 // pred_fallthru
        _
    $region44: #{basic_block_forward.6} parent=5 // pred_fallthru
      _
  $region6: #{basic_block_forward.6} parent=0 // loop_footer
    %s15 = sadd.s32 1, %s11
  $region7: #{basic_block_forward.6} parent=0 // loop_footer_branch
    %10 = sbr.rel target = $region3
  $region8: #{basic_block_forward.6} parent=0 // loop_exit
    _

</llo_original>
